<compile_context>
chip_gen: v7x
topology: tpu7x:2x2x1
jax: 0.10.0
libtpu: 0.0.40
codegen_flags: <defaults>
</compile_context>

<pallas_src>
import functools

import numpy as np
import jax
import jax.numpy as jnp
from jax import lax
from jax.experimental import pallas as pl
from jax.experimental.pallas import tpu as pltpu

MATMUL_DTYPE = jnp.bfloat16      # MXU operand dtype; accumulation stays fp32
TIME_CHUNK = 32                  # LSTM timesteps processed per grid invocation
MM_TILE_ROWS = 256               # matmul row tile (multiple of 256 for the MXU)
MM_TILE_COLS = 1024              # matmul column tile (multiple of 256)


def _round_up(x, m):
    return (x + m - 1) // m * m


@functools.lru_cache(maxsize=None)
def _vmem_limit_bytes():
    """~75% of physical VMEM: ~96 MiB on v5e/v6e (128 MiB), ~48 MiB on v7x (64 MiB)."""
    try:
        return int(pltpu.get_tpu_info().vmem_capacity_bytes * 3 // 4)
    except Exception:
        return 64 * 1024 * 1024


# ----------------------------------------------------------------------------
# Kernel 1: tiled matmul + bias   o = x @ w + b
# Used for (a) the layer-0 hoisted LSTM input projection and (b) the vocab proj.
# Column (weight) axis is the OUTER grid dim -> W is DMA'd once per column tile
# regardless of how many row tiles there are.
# ----------------------------------------------------------------------------
def matmul_bias_kernel(x_ref, w_ref, b_ref, o_ref):
    o_ref[...] = (
        jnp.dot(x_ref[...].astype(w_ref.dtype), w_ref[...],
                preferred_element_type=jnp.float32)
        + b_ref[...]
    ).astype(o_ref.dtype)


def matmul_bias(x, w, b, *, tile_rows=MM_TILE_ROWS, tile_cols=MM_TILE_COLS):
    """x: [N, K] (f32 or bf16), w: [K, V] bf16, b: [1, V] f32 -> [N, V] f32.

    N is a multiple of 16 and K, V multiples of 128 (guaranteed by padding).
    The operand cast to bf16 happens inside the kernel (no wrapper convert pass).
    """
    N, K = x.shape
    V = w.shape[1]
    tn = min(tile_rows, N)
    tv = min(tile_cols, V)
    grid = (pl.cdiv(V, tv), pl.cdiv(N, tn))          # columns OUTER, rows inner
    return pl.pallas_call(
        matmul_bias_kernel,
        out_shape=jax.ShapeDtypeStruct((N, V), jnp.float32),
        grid_spec=pltpu.PrefetchScalarGridSpec(
            num_scalar_prefetch=0,
            grid=grid,
            in_specs=[
                pl.BlockSpec((tn, K), lambda j, i: (i, 0)),
                pl.BlockSpec((K, tv), lambda j, i: (0, j)),   # constant over rows
                pl.BlockSpec((1, tv), lambda j, i: (0, j)),
            ],
            out_specs=pl.BlockSpec((tn, tv), lambda j, i: (i, j)),
        ),
        compiler_params=pltpu.CompilerParams(
            dimension_semantics=("parallel", "parallel"),
            vmem_limit_bytes=_vmem_limit_bytes(),
        ),
    )(x, w, b)


# ----------------------------------------------------------------------------
# LSTM step shared by both recurrence kernels (f32 state, bf16 MXU operands)
# ----------------------------------------------------------------------------
def _lstm_step(gx_t, whh, h_sc, c_sc):
    hp = h_sc.shape[-1]
    gates = gx_t + jnp.dot(h_sc[...].astype(whh.dtype), whh,
                           preferred_element_type=jnp.float32)
    # Gate boundaries are multiples of Hp (a multiple of 128) -> lane-aligned.
    i_g = jax.nn.sigmoid(gates[:, 0:hp])
    f_g = jax.nn.sigmoid(gates[:, hp:2 * hp])
    g_g = jnp.tanh(gates[:, 2 * hp:3 * hp])
    o_g = jax.nn.sigmoid(gates[:, 3 * hp:4 * hp])
    c_new = f_g * c_sc[...] + i_g * g_g
    h_new = o_g * jnp.tanh(c_new)
    c_sc[...] = c_new
    h_sc[...] = h_new
    return h_new


# ----------------------------------------------------------------------------
# Kernel 2a: LSTM recurrence (last layer) -> bf16 hiddens
# ----------------------------------------------------------------------------
def lstm_recurrence_kernel(gx_ref, whh_ref, out_ref, h_sc, c_sc):
    """gx_ref : [Tc, Bp, 4*Hp] f32  precomputed x @ W_ih + (b_ih + b_hh)
       whh_ref: [Hp, 4*Hp]     bf16 recurrent weight
       out_ref: [Tc, Bp, Hp]   bf16 hidden outputs for this time chunk
       h_sc/c_sc: [Bp, Hp] f32 state carried across grid steps (time chunks)"""
    @pl.when(pl.program_id(0) == 0)
    def _():
        h_sc[...] = jnp.zeros_like(h_sc)
        c_sc[...] = jnp.zeros_like(c_sc)

    whh = whh_ref[...]                           # hoisted: constant across the chunk

    def step(t, carry):
        h_new = _lstm_step(gx_ref[t], whh, h_sc, c_sc)
        out_ref[t] = h_new.astype(out_ref.dtype)        # bf16 store (lane-dense)
        return carry

    lax.fori_loop(0, out_ref.shape[0], step, 0, unroll=True)


def lstm_recurrence(gates_x, w_hh_t, hidden_pad, *, time_chunk):
    Tpad, Bp, H4 = gates_x.shape
    Hp = hidden_pad
    assert Tpad % time_chunk == 0
    return pl.pallas_call(
        lstm_recurrence_kernel,
        out_shape=jax.ShapeDtypeStruct((Tpad, Bp, Hp), MATMUL_DTYPE),
        grid_spec=pltpu.PrefetchScalarGridSpec(
            num_scalar_prefetch=0,
            grid=(Tpad // time_chunk,),
            in_specs=[
                pl.BlockSpec((time_chunk, Bp, H4), lambda t: (t, 0, 0)),
                pl.BlockSpec((Hp, H4), lambda t: (0, 0)),
            ],
            out_specs=pl.BlockSpec((time_chunk, Bp, Hp), lambda t: (t, 0, 0)),
            scratch_shapes=[
                pltpu.VMEM((Bp, Hp), jnp.float32),
                pltpu.VMEM((Bp, Hp), jnp.float32),
            ],
        ),
        compiler_params=pltpu.CompilerParams(
            dimension_semantics=("arbitrary",),          # sequential recurrence
            vmem_limit_bytes=_vmem_limit_bytes(),
        ),
    )(gates_x, w_hh_t)


# ----------------------------------------------------------------------------
# Kernel 2b: LSTM recurrence FUSED with next layer's input projection.
# Outputs gx_next = hiddens @ W_ih_next + b_next directly (no HBM round trip of
# the hiddens, no separate pallas_call), using one chunk-sized MXU matmul.
# ----------------------------------------------------------------------------
def lstm_recurrence_fused_kernel(gx_ref, whh_ref, wih_n_ref, b_n_ref,
                                 gxn_ref, h_sc, c_sc, hchunk_sc):
    """gx_ref   : [Tc, Bp, 4*Hp]  f32
       whh_ref  : [Hp, 4*Hp]      bf16
       wih_n_ref: [Hp, 4*Hpn]     bf16 (next layer input weight)
       b_n_ref  : [1, 4*Hpn]      f32  (next layer folded bias)
       gxn_ref  : [Tc, Bp, 4*Hpn] f32  (next layer's precomputed input gates)
       hchunk_sc: [Tc, Bp, Hp]    f32  per-chunk hidden staging"""
    @pl.when(pl.program_id(0) == 0)
    def _():
        h_sc[...] = jnp.zeros_like(h_sc)
        c_sc[...] = jnp.zeros_like(c_sc)

    whh = whh_ref[...]
    tc, bp, _ = gx_ref.shape
    hp = h_sc.shape[-1]

    def step(t, carry):
        h_new = _lstm_step(gx_ref[t], whh, h_sc, c_sc)
        hchunk_sc[t] = h_new
        return carry

    lax.fori_loop(0, tc, step, 0, unroll=True)

    # Fused next-layer input projection over Tc*Bp rows (good MXU utilization,
    # bf16 operands / fp32 accumulation, bias folded in).
    hflat = hchunk_sc[...].reshape(tc * bp, hp).astype(wih_n_ref.dtype)
    gxn = jnp.dot(hflat, wih_n_ref[...],
                  preferred_element_type=jnp.float32) + b_n_ref[...]
    gxn_ref[...] = gxn.reshape(gxn_ref.shape)


def lstm_recurrence_fused(gates_x, w_hh_t, w_ih_next_t, b_next, hidden_pad,
                          *, time_chunk):
    Tpad, Bp, H4 = gates_x.shape
    Hp = hidden_pad
    H4n = w_ih_next_t.shape[1]
    assert Tpad % time_chunk == 0
    return pl.pallas_call(
        lstm_recurrence_fused_kernel,
        out_shape=jax.ShapeDtypeStruct((Tpad, Bp, H4n), jnp.float32),
        grid_spec=pltpu.PrefetchScalarGridSpec(
            num_scalar_prefetch=0,
            grid=(Tpad // time_chunk,),
            in_specs=[
                pl.BlockSpec((time_chunk, Bp, H4), lambda t: (t, 0, 0)),
                pl.BlockSpec((Hp, H4), lambda t: (0, 0)),
                pl.BlockSpec((Hp, H4n), lambda t: (0, 0)),
                pl.BlockSpec((1, H4n), lambda t: (0, 0)),
            ],
            out_specs=pl.BlockSpec((time_chunk, Bp, H4n), lambda t: (t, 0, 0)),
            scratch_shapes=[
                pltpu.VMEM((Bp, Hp), jnp.float32),
                pltpu.VMEM((Bp, Hp), jnp.float32),
                pltpu.VMEM((time_chunk, Bp, Hp), jnp.float32),
            ],
        ),
        compiler_params=pltpu.CompilerParams(
            dimension_semantics=("arbitrary",),
            vmem_limit_bytes=_vmem_limit_bytes(),
        ),
    )(gates_x, w_hh_t, w_ih_next_t, b_next)


# ----------------------------------------------------------------------------
# Parameter preparation: pad to tile-aligned shapes, cast matmul weights bf16
# ----------------------------------------------------------------------------
def prepare_params(params):
    """Gate blocks stay contiguous [i|f|g|o], each padded H -> Hp, so gate slice
    boundaries inside the kernel are multiples of 128 lanes. All padding is zero,
    which keeps padded hidden/cell lanes identically zero through the recurrence."""
    E = params["embed"].shape[1]
    H = params["lin_w_t"].shape[0]
    V = params["lin_w_t"].shape[1]
    Ep, Hp, Vp = _round_up(E, 128), _round_up(H, 128), _round_up(V, 128)

    def pad_gate_mat(w, in_dim, in_pad):
        w4 = w.reshape(in_dim, 4, H)
        w4 = jnp.pad(w4, ((0, in_pad - in_dim), (0, 0), (0, Hp - H)))
        return w4.reshape(in_pad, 4 * Hp)

    pp = {
        "embed": jnp.pad(params["embed"], ((0, 0), (0, Ep - E))),
        "lin_w_t": jnp.pad(params["lin_w_t"],
                           ((0, Hp - H), (0, Vp - V))).astype(MATMUL_DTYPE),
        "lin_b": jnp.pad(params["lin_b"], ((0, 0), (0, Vp - V))),
        "lstm": [],
    }
    for layer, lw in enumerate(params["lstm"]):
        in_dim = lw["w_ih_t"].shape[0]
        in_pad = Ep if layer == 0 else Hp
        pp["lstm"].append({
            "w_ih_t": pad_gate_mat(lw["w_ih_t"], in_dim, in_pad).astype(MATMUL_DTYPE),
            "w_hh_t": pad_gate_mat(lw["w_hh_t"], H, Hp).astype(MATMUL_DTYPE),
            "b": pad_gate_mat(lw["b"], 1, 1),     # fp32, folded b_ih + b_hh
        })
    return pp


# ----------------------------------------------------------------------------
# Forward pass
# ----------------------------------------------------------------------------
def decoder_forward(pp, feature, captions, *, time_chunk=TIME_CHUNK):
    """feature: [B, E] f32, captions: [T, B] int32 -> logits [T+1, B, V] f32."""
    B, E = feature.shape
    T = captions.shape[0]
    V = pp["embed"].shape[0]
    Hp = pp["lin_w_t"].shape[0]
    Vp = pp["lin_w_t"].shape[1]
    Ep = pp["embed"].shape[1]

    Bp = _round_up(B, 16)          # 16 keeps both f32 and bf16 blocks tile-aligned
    Tp1 = T + 1
    Tc = min(time_chunk, Tp1)
    Tpad = _round_up(Tp1, Tc)

    # Embedding gather stays in plain JAX (data-dependent row gather).
    emb = jnp.take(pp["embed"], captions, axis=0)            # [T, B, Ep]
    # TODO(synk): nn.Dropout(0.5) implemented as identity (eval-mode semantics).

    # Write feature + embeddings straight into one padded [Tpad, Bp, Ep] buffer
    # (replaces jnp.concatenate; padded rows/lanes stay exactly zero).
    x = jnp.zeros((Tpad, Bp, Ep), jnp.float32)
    x = x.at[0, :B, :E].set(feature)
    x = x.at[1:Tp1, :B, :].set(emb)

    n_rows = Tpad * Bp
    num_layers = len(pp["lstm"])

    # Layer-0 hoisted input projection + bias fold: one big tiled MXU matmul.
    gx = matmul_bias(x.reshape(n_rows, Ep),
                     pp["lstm"][0]["w_ih_t"], pp["lstm"][0]["b"])
    gx = gx.reshape(Tpad, Bp, 4 * Hp)

    hiddens = None
    for layer in range(num_layers):
        lw = pp["lstm"][layer]
        if layer + 1 < num_layers:
            nxt = pp["lstm"][layer + 1]
            # Recurrence + fused next-layer input projection (no HBM round trip).
            gx = lstm_recurrence_fused(gx, lw["w_hh_t"], nxt["w_ih_t"], nxt["b"],
                                       Hp, time_chunk=Tc)
        else:
            # Last layer: emit bf16 hiddens directly for the vocab projection.
            hiddens = lstm_recurrence(gx, lw["w_hh_t"], Hp, time_chunk=Tc)

    # Tiled output projection over (rows, vocab) with W streamed once per column
    # tile; then strip padding.
    logits = matmul_bias(hiddens.reshape(n_rows, Hp), pp["lin_w_t"], pp["lin_b"])
    return logits.reshape(Tpad, Bp, Vp)[:Tp1, :B, :V]


# ----------------------------------------------------------------------------
# Pure-JAX reference (same bf16-matmul / fp32-accumulate policy as the kernels)
# ----------------------------------------------------------------------------
def _mm(a, w):
    return jnp.dot(a.astype(MATMUL_DTYPE), w.astype(MATMUL_DTYPE),
                   preferred_element_type=jnp.float32)


def lstm_layer_ref(x, w_ih_t, w_hh_t, b):
    H = w_hh_t.shape[0]
    Bsz = x.shape[1]

    def step(carry, xt):
        h, c = carry
        gates = _mm(xt, w_ih_t) + _mm(h, w_hh_t) + b[0]
        i_g = jax.nn.sigmoid(gates[:, :H])
        f_g = jax.nn.sigmoid(gates[:, H:2 * H])
        g_g = jnp.tanh(gates[:, 2 * H:3 * H])
        o_g = jax.nn.sigmoid(gates[:, 3 * H:])
        c = f_g * c + i_g * g_g
        h = o_g * jnp.tanh(c)
        return (h, c), h

    init = (jnp.zeros((Bsz, H), jnp.float32), jnp.zeros((Bsz, H), jnp.float32))
    _, hs = lax.scan(step, init, x)
    return hs


def decoder_ref(params, feature, captions):
    emb = jnp.take(params["embed"], captions, axis=0)
    x = jnp.concatenate([feature[None, :, :], emb], axis=0)
    for lw in params["lstm"]:
        x = lstm_layer_ref(x, lw["w_ih_t"], lw["w_hh_t"], lw["b"])
    return _mm(x, params["lin_w_t"]) + params["lin_b"][0]


# ----------------------------------------------------------------------------
# Parameter init (deterministic, shapes per the PyTorch module)
# ----------------------------------------------------------------------------
def init_params(key, embed_size, hidden_size, vocab_size, num_layers):
    keys = jax.random.split(key, 3 + 4 * num_layers)
    scale = 1.0 / np.sqrt(hidden_size)
    params = {
        "embed": jax.random.normal(keys[0], (vocab_size, embed_size), jnp.float32) * 0.1,
        "lin_w_t": jax.random.uniform(keys[1], (hidden_size, vocab_size), jnp.float32,
                                      -scale, scale),
        "lin_b": jax.random.uniform(keys[2], (1, vocab_size), jnp.float32, -scale, scale),
        "lstm": [],
    }
    for layer in range(num_layers):
        in_size = embed_size if layer == 0 else hidden_size
        k = keys[3 + 4 * layer: 3 + 4 * (layer + 1)]
        w_ih_t = jax.random.uniform(k[0], (in_size, 4 * hidden_size), jnp.float32,
                                    -scale, scale)
        w_hh_t = jax.random.uniform(k[1], (hidden_size, 4 * hidden_size), jnp.float32,
                                    -scale, scale)
        b_ih = jax.random.uniform(k[2], (1, 4 * hidden_size), jnp.float32, -scale, scale)
        b_hh = jax.random.uniform(k[3], (1, 4 * hidden_size), jnp.float32, -scale, scale)
        params["lstm"].append({"w_ih_t": w_ih_t, "w_hh_t": w_hh_t, "b": b_ih + b_hh})
    return params


# ----------------------------------------------------------------------------
# Main
# ----------------------------------------------------------------------------
if __name__ == "__main__":
    embed_size, hidden_size, vocab_size, num_layers = 16, 32, 32, 2
    batch, seq = 2, 8

    key = jax.random.PRNGKey(0)
    k_param, k_feat, k_cap = jax.random.split(key, 3)

    params = init_params(k_param, embed_size, hidden_size, vocab_size, num_layers)
    feature = jax.random.normal(k_feat, (batch, embed_size), jnp.float32)
    captions = jax.random.randint(k_cap, (seq, batch), 0, vocab_size, jnp.int32)

    padded_params = prepare_params(params)
    fwd = jax.jit(functools.partial(decoder_forward, time_chunk=TIME_CHUNK))
    out = jax.block_until_ready(fwd(padded_params, feature, captions))

    # Reference uses the same bf16-operand / fp32-accumulate matmul policy, so the
    # check validates the kernel math tightly; bf16 weight/hidden rounding is the
    # only (deliberate) deviation from the exact fp32 PyTorch forward.
    ref = jax.block_until_ready(decoder_ref(params, feature, captions))

    assert out.shape == (seq + 1, batch, vocab_size), out.shape
    np.testing.assert_allclose(np.asarray(out), np.asarray(ref), rtol=2e-3, atol=2e-3)

    print("KERNEL_OK")
</pallas_src>

<mosaic_0001>
module attributes {stable_mosaic.version = 11 : i64} {
  func.func @lstm_recurrence_kernel(%arg0: i32, %arg1: memref<9x16x512xf32, #tpu.memory_space<vmem>>, %arg2: memref<128x512xbf16, #tpu.memory_space<vmem>>, %arg3: memref<9x16x128xbf16, #tpu.memory_space<vmem>>, %arg4: memref<16x128xf32, #tpu.memory_space<vmem>>, %arg5: memref<16x128xf32, #tpu.memory_space<vmem>>) attributes {dimension_semantics = [#tpu.dimension_semantics<arbitrary>], iteration_bounds = array<i64: 1>, scalar_prefetch = 0 : i64, scratch_operands = 2 : i64, tpu.core_type = #tpu.core_type<tc>, window_params = [{transform_indices = @transform_0, window_bounds = array<i64: 9, 16, 512>}, {pipeline_mode = #tpu.pipeline_mode<synchronous>, transform_indices = @transform_1, window_bounds = array<i64: 128, 512>}, {transform_indices = @transform_2, window_bounds = array<i64: 9, 16, 128>}]} {
    %c0_i32 = arith.constant 0 : i32
    %0 = arith.cmpi eq, %arg0, %c0_i32 : i32
    %1 = arith.extui %0 : i1 to i32
    %c0_i32_0 = arith.constant 0 : i32
    %2 = arith.cmpi ne, %1, %c0_i32_0 : i32
    scf.if %2 {
      %cst_146 = arith.constant 0.000000e+00 : f32
      %364 = vector.broadcast %cst_146 : f32 to vector<16x128xf32>
      %c0_147 = arith.constant 0 : index
      %c0_148 = arith.constant 0 : index
      %365 = vector.load %arg4[%c0_147, %c0_148] : memref<16x128xf32, #tpu.memory_space<vmem>>, vector<16x128xf32>
      tpu.vector_store %arg4[%c0_147, %c0_148], %364 {strides = array<i32>} : memref<16x128xf32, #tpu.memory_space<vmem>>, vector<16x128xf32>,
      %cst_149 = arith.constant 0.000000e+00 : f32
      %366 = vector.broadcast %cst_149 : f32 to vector<16x128xf32>
      %c0_150 = arith.constant 0 : index
      %c0_151 = arith.constant 0 : index
      %367 = vector.load %arg5[%c0_150, %c0_151] : memref<16x128xf32, #tpu.memory_space<vmem>>, vector<16x128xf32>
      tpu.vector_store %arg5[%c0_150, %c0_151], %366 {strides = array<i32>} : memref<16x128xf32, #tpu.memory_space<vmem>>, vector<16x128xf32>,
    } else {
    }
    %c0 = arith.constant 0 : index
    %c0_1 = arith.constant 0 : index
    %3 = vector.load %arg2[%c0, %c0_1] : memref<128x512xbf16, #tpu.memory_space<vmem>>, vector<128x512xbf16>
    %c0_i32_2 = arith.constant 0 : i32
    %4 = arith.index_cast %c0_i32_2 : i32 to index
    %c0_3 = arith.constant 0 : index
    %c0_4 = arith.constant 0 : index
    %5 = vector.load %arg1[%4, %c0_3, %c0_4] : memref<9x16x512xf32, #tpu.memory_space<vmem>>, vector<1x16x512xf32>
    %6 = vector.shape_cast %5 : vector<1x16x512xf32> to vector<16x512xf32>
    %c0_5 = arith.constant 0 : index
    %c0_6 = arith.constant 0 : index
    %7 = vector.load %arg4[%c0_5, %c0_6] : memref<16x128xf32, #tpu.memory_space<vmem>>, vector<16x128xf32>
    %8 = arith.truncf %7 : vector<16x128xf32> to vector<16x128xbf16>
    %cst = arith.constant dense<0.000000e+00> : vector<16x512xf32>
    %9 = tpu.matmul %8, %3, %cst {dimension_numbers = #tpu.dot_dimension_numbers<[1], [0], [0], [1], [0, 0, 1, 1], [], []>} : vector<16x128xbf16>, vector<128x512xbf16>, vector<16x512xf32> -> vector<16x512xf32>
    %10 = arith.addf %6, %9 : vector<16x512xf32>
    %11 = vector.extract_strided_slice %10 {offsets = [0, 0], sizes = [16, 128], strides = [1, 1]} : vector<16x512xf32> to vector<16x128xf32>
    %12 = arith.negf %11 : vector<16x128xf32>
    %13 = math.exp %12 : vector<16x128xf32>
    %cst_7 = arith.constant 1.000000e+00 : f32
    %14 = vector.broadcast %cst_7 : f32 to vector<16x128xf32>
    %15 = arith.addf %14, %13 : vector<16x128xf32>
    %16 = arith.divf %14, %15 : vector<16x128xf32>
    %17 = vector.extract_strided_slice %10 {offsets = [0, 128], sizes = [16, 128], strides = [1, 1]} : vector<16x512xf32> to vector<16x128xf32>
    %18 = arith.negf %17 : vector<16x128xf32>
    %19 = math.exp %18 : vector<16x128xf32>
    %cst_8 = arith.constant 1.000000e+00 : f32
    %20 = vector.broadcast %cst_8 : f32 to vector<16x128xf32>
    %21 = arith.addf %20, %19 : vector<16x128xf32>
    %22 = arith.divf %20, %21 : vector<16x128xf32>
    %23 = vector.extract_strided_slice %10 {offsets = [0, 256], sizes = [16, 128], strides = [1, 1]} : vector<16x512xf32> to vector<16x128xf32>
    %24 = math.tanh %23 : vector<16x128xf32>
    %25 = vector.extract_strided_slice %10 {offsets = [0, 384], sizes = [16, 128], strides = [1, 1]} : vector<16x512xf32> to vector<16x128xf32>
    %26 = arith.negf %25 : vector<16x128xf32>
    %27 = math.exp %26 : vector<16x128xf32>
    %cst_9 = arith.constant 1.000000e+00 : f32
    %28 = vector.broadcast %cst_9 : f32 to vector<16x128xf32>
    %29 = arith.addf %28, %27 : vector<16x128xf32>
    %30 = arith.divf %28, %29 : vector<16x128xf32>
    %c0_10 = arith.constant 0 : index
    %c0_11 = arith.constant 0 : index
    %31 = vector.load %arg5[%c0_10, %c0_11] : memref<16x128xf32, #tpu.memory_space<vmem>>, vector<16x128xf32>
    %32 = arith.mulf %22, %31 : vector<16x128xf32>
    %33 = arith.mulf %16, %24 : vector<16x128xf32>
    %34 = arith.addf %32, %33 : vector<16x128xf32>
    %35 = math.tanh %34 : vector<16x128xf32>
    %36 = arith.mulf %30, %35 : vector<16x128xf32>
    %c0_12 = arith.constant 0 : index
    %c0_13 = arith.constant 0 : index
    %37 = vector.load %arg5[%c0_12, %c0_13] : memref<16x128xf32, #tpu.memory_space<vmem>>, vector<16x128xf32>
    tpu.vector_store %arg5[%c0_12, %c0_13], %34 {strides = array<i32>} : memref<16x128xf32, #tpu.memory_space<vmem>>, vector<16x128xf32>,
    %c0_14 = arith.constant 0 : index
    %c0_15 = arith.constant 0 : index
    %38 = vector.load %arg4[%c0_14, %c0_15] : memref<16x128xf32, #tpu.memory_space<vmem>>, vector<16x128xf32>
    tpu.vector_store %arg4[%c0_14, %c0_15], %36 {strides = array<i32>} : memref<16x128xf32, #tpu.memory_space<vmem>>, vector<16x128xf32>,
    %39 = arith.truncf %36 : vector<16x128xf32> to vector<16x128xbf16>
    %40 = arith.index_cast %c0_i32_2 : i32 to index
    %c0_16 = arith.constant 0 : index
    %c0_17 = arith.constant 0 : index
    %41 = vector.load %arg3[%40, %c0_16, %c0_17] : memref<9x16x128xbf16, #tpu.memory_space<vmem>>, vector<1x16x128xbf16>
    %42 = vector.shape_cast %41 : vector<1x16x128xbf16> to vector<16x128xbf16>
    %43 = vector.shape_cast %39 : vector<16x128xbf16> to vector<1x16x128xbf16>
    tpu.vector_store %arg3[%40, %c0_16, %c0_17], %43 {strides = array<i32>} : memref<9x16x128xbf16, #tpu.memory_space<vmem>>, vector<1x16x128xbf16>,
    %c1_i32 = arith.constant 1 : i32
    %44 = arith.index_cast %c1_i32 : i32 to index
    %c0_18 = arith.constant 0 : index
    %c0_19 = arith.constant 0 : index
    %45 = vector.load %arg1[%44, %c0_18, %c0_19] : memref<9x16x512xf32, #tpu.memory_space<vmem>>, vector<1x16x512xf32>
    %46 = vector.shape_cast %45 : vector<1x16x512xf32> to vector<16x512xf32>
    %c0_20 = arith.constant 0 : index
    %c0_21 = arith.constant 0 : index
    %47 = vector.load %arg4[%c0_20, %c0_21] : memref<16x128xf32, #tpu.memory_space<vmem>>, vector<16x128xf32>
    %48 = arith.truncf %47 : vector<16x128xf32> to vector<16x128xbf16>
    %cst_22 = arith.constant dense<0.000000e+00> : vector<16x512xf32>
    %49 = tpu.matmul %48, %3, %cst_22 {dimension_numbers = #tpu.dot_dimension_numbers<[1], [0], [0], [1], [0, 0, 1, 1], [], []>} : vector<16x128xbf16>, vector<128x512xbf16>, vector<16x512xf32> -> vector<16x512xf32>
    %50 = arith.addf %46, %49 : vector<16x512xf32>
    %51 = vector.extract_strided_slice %50 {offsets = [0, 0], sizes = [16, 128], strides = [1, 1]} : vector<16x512xf32> to vector<16x128xf32>
    %52 = arith.negf %51 : vector<16x128xf32>
    %53 = math.exp %52 : vector<16x128xf32>
    %cst_23 = arith.constant 1.000000e+00 : f32
    %54 = vector.broadcast %cst_23 : f32 to vector<16x128xf32>
    %55 = arith.addf %54, %53 : vector<16x128xf32>
    %56 = arith.divf %54, %55 : vector<16x128xf32>
    %57 = vector.extract_strided_slice %50 {offsets = [0, 128], sizes = [16, 128], strides = [1, 1]} : vector<16x512xf32> to vector<16x128xf32>
    %58 = arith.negf %57 : vector<16x128xf32>
    %59 = math.exp %58 : vector<16x128xf32>
    %cst_24 = arith.constant 1.000000e+00 : f32
    %60 = vector.broadcast %cst_24 : f32 to vector<16x128xf32>
    %61 = arith.addf %60, %59 : vector<16x128xf32>
    %62 = arith.divf %60, %61 : vector<16x128xf32>
    %63 = vector.extract_strided_slice %50 {offsets = [0, 256], sizes = [16, 128], strides = [1, 1]} : vector<16x512xf32> to vector<16x128xf32>
    %64 = math.tanh %63 : vector<16x128xf32>
    %65 = vector.extract_strided_slice %50 {offsets = [0, 384], sizes = [16, 128], strides = [1, 1]} : vector<16x512xf32> to vector<16x128xf32>
    %66 = arith.negf %65 : vector<16x128xf32>
    %67 = math.exp %66 : vector<16x128xf32>
    %cst_25 = arith.constant 1.000000e+00 : f32
    %68 = vector.broadcast %cst_25 : f32 to vector<16x128xf32>
    %69 = arith.addf %68, %67 : vector<16x128xf32>
    %70 = arith.divf %68, %69 : vector<16x128xf32>
    %c0_26 = arith.constant 0 : index
    %c0_27 = arith.constant 0 : index
    %71 = vector.load %arg5[%c0_26, %c0_27] : memref<16x128xf32, #tpu.memory_space<vmem>>, vector<16x128xf32>
    %72 = arith.mulf %62, %71 : vector<16x128xf32>
    %73 = arith.mulf %56, %64 : vector<16x128xf32>
    %74 = arith.addf %72, %73 : vector<16x128xf32>
    %75 = math.tanh %74 : vector<16x128xf32>
    %76 = arith.mulf %70, %75 : vector<16x128xf32>
    %c0_28 = arith.constant 0 : index
    %c0_29 = arith.constant 0 : index
    %77 = vector.load %arg5[%c0_28, %c0_29] : memref<16x128xf32, #tpu.memory_space<vmem>>, vector<16x128xf32>
    tpu.vector_store %arg5[%c0_28, %c0_29], %74 {strides = array<i32>} : memref<16x128xf32, #tpu.memory_space<vmem>>, vector<16x128xf32>,
    %c0_30 = arith.constant 0 : index
    %c0_31 = arith.constant 0 : index
    %78 = vector.load %arg4[%c0_30, %c0_31] : memref<16x128xf32, #tpu.memory_space<vmem>>, vector<16x128xf32>
    tpu.vector_store %arg4[%c0_30, %c0_31], %76 {strides = array<i32>} : memref<16x128xf32, #tpu.memory_space<vmem>>, vector<16x128xf32>,
    %79 = arith.truncf %76 : vector<16x128xf32> to vector<16x128xbf16>
    %80 = arith.index_cast %c1_i32 : i32 to index
    %c0_32 = arith.constant 0 : index
    %c0_33 = arith.constant 0 : index
    %81 = vector.load %arg3[%80, %c0_32, %c0_33] : memref<9x16x128xbf16, #tpu.memory_space<vmem>>, vector<1x16x128xbf16>
    %82 = vector.shape_cast %81 : vector<1x16x128xbf16> to vector<16x128xbf16>
    %83 = vector.shape_cast %79 : vector<16x128xbf16> to vector<1x16x128xbf16>
    tpu.vector_store %arg3[%80, %c0_32, %c0_33], %83 {strides = array<i32>} : memref<9x16x128xbf16, #tpu.memory_space<vmem>>, vector<1x16x128xbf16>,
    %c2_i32 = arith.constant 2 : i32
    %84 = arith.index_cast %c2_i32 : i32 to index
    %c0_34 = arith.constant 0 : index
    %c0_35 = arith.constant 0 : index
    %85 = vector.load %arg1[%84, %c0_34, %c0_35] : memref<9x16x512xf32, #tpu.memory_space<vmem>>, vector<1x16x512xf32>
    %86 = vector.shape_cast %85 : vector<1x16x512xf32> to vector<16x512xf32>
    %c0_36 = arith.constant 0 : index
    %c0_37 = arith.constant 0 : index
    %87 = vector.load %arg4[%c0_36, %c0_37] : memref<16x128xf32, #tpu.memory_space<vmem>>, vector<16x128xf32>
    %88 = arith.truncf %87 : vector<16x128xf32> to vector<16x128xbf16>
    %cst_38 = arith.constant dense<0.000000e+00> : vector<16x512xf32>
    %89 = tpu.matmul %88, %3, %cst_38 {dimension_numbers = #tpu.dot_dimension_numbers<[1], [0], [0], [1], [0, 0, 1, 1], [], []>} : vector<16x128xbf16>, vector<128x512xbf16>, vector<16x512xf32> -> vector<16x512xf32>
    %90 = arith.addf %86, %89 : vector<16x512xf32>
    %91 = vector.extract_strided_slice %90 {offsets = [0, 0], sizes = [16, 128], strides = [1, 1]} : vector<16x512xf32> to vector<16x128xf32>
    %92 = arith.negf %91 : vector<16x128xf32>
    %93 = math.exp %92 : vector<16x128xf32>
    %cst_39 = arith.constant 1.000000e+00 : f32
    %94 = vector.broadcast %cst_39 : f32 to vector<16x128xf32>
    %95 = arith.addf %94, %93 : vector<16x128xf32>
    %96 = arith.divf %94, %95 : vector<16x128xf32>
    %97 = vector.extract_strided_slice %90 {offsets = [0, 128], sizes = [16, 128], strides = [1, 1]} : vector<16x512xf32> to vector<16x128xf32>
    %98 = arith.negf %97 : vector<16x128xf32>
    %99 = math.exp %98 : vector<16x128xf32>
    %cst_40 = arith.constant 1.000000e+00 : f32
    %100 = vector.broadcast %cst_40 : f32 to vector<16x128xf32>
    %101 = arith.addf %100, %99 : vector<16x128xf32>
    %102 = arith.divf %100, %101 : vector<16x128xf32>
    %103 = vector.extract_strided_slice %90 {offsets = [0, 256], sizes = [16, 128], strides = [1, 1]} : vector<16x512xf32> to vector<16x128xf32>
    %104 = math.tanh %103 : vector<16x128xf32>
    %105 = vector.extract_strided_slice %90 {offsets = [0, 384], sizes = [16, 128], strides = [1, 1]} : vector<16x512xf32> to vector<16x128xf32>
    %106 = arith.negf %105 : vector<16x128xf32>
    %107 = math.exp %106 : vector<16x128xf32>
    %cst_41 = arith.constant 1.000000e+00 : f32
    %108 = vector.broadcast %cst_41 : f32 to vector<16x128xf32>
    %109 = arith.addf %108, %107 : vector<16x128xf32>
    %110 = arith.divf %108, %109 : vector<16x128xf32>
    %c0_42 = arith.constant 0 : index
    %c0_43 = arith.constant 0 : index
    %111 = vector.load %arg5[%c0_42, %c0_43] : memref<16x128xf32, #tpu.memory_space<vmem>>, vector<16x128xf32>
    %112 = arith.mulf %102, %111 : vector<16x128xf32>
    %113 = arith.mulf %96, %104 : vector<16x128xf32>
    %114 = arith.addf %112, %113 : vector<16x128xf32>
    %115 = math.tanh %114 : vector<16x128xf32>
    %116 = arith.mulf %110, %115 : vector<16x128xf32>
    %c0_44 = arith.constant 0 : index
    %c0_45 = arith.constant 0 : index
    %117 = vector.load %arg5[%c0_44, %c0_45] : memref<16x128xf32, #tpu.memory_space<vmem>>, vector<16x128xf32>
    tpu.vector_store %arg5[%c0_44, %c0_45], %114 {strides = array<i32>} : memref<16x128xf32, #tpu.memory_space<vmem>>, vector<16x128xf32>,
    %c0_46 = arith.constant 0 : index
    %c0_47 = arith.constant 0 : index
    %118 = vector.load %arg4[%c0_46, %c0_47] : memref<16x128xf32, #tpu.memory_space<vmem>>, vector<16x128xf32>
    tpu.vector_store %arg4[%c0_46, %c0_47], %116 {strides = array<i32>} : memref<16x128xf32, #tpu.memory_space<vmem>>, vector<16x128xf32>,
    %119 = arith.truncf %116 : vector<16x128xf32> to vector<16x128xbf16>
    %120 = arith.index_cast %c2_i32 : i32 to index
    %c0_48 = arith.constant 0 : index
    %c0_49 = arith.constant 0 : index
    %121 = vector.load %arg3[%120, %c0_48, %c0_49] : memref<9x16x128xbf16, #tpu.memory_space<vmem>>, vector<1x16x128xbf16>
    %122 = vector.shape_cast %121 : vector<1x16x128xbf16> to vector<16x128xbf16>
    %123 = vector.shape_cast %119 : vector<16x128xbf16> to vector<1x16x128xbf16>
    tpu.vector_store %arg3[%120, %c0_48, %c0_49], %123 {strides = array<i32>} : memref<9x16x128xbf16, #tpu.memory_space<vmem>>, vector<1x16x128xbf16>,
    %c3_i32 = arith.constant 3 : i32
    %124 = arith.index_cast %c3_i32 : i32 to index
    %c0_50 = arith.constant 0 : index
    %c0_51 = arith.constant 0 : index
    %125 = vector.load %arg1[%124, %c0_50, %c0_51] : memref<9x16x512xf32, #tpu.memory_space<vmem>>, vector<1x16x512xf32>
    %126 = vector.shape_cast %125 : vector<1x16x512xf32> to vector<16x512xf32>
    %c0_52 = arith.constant 0 : index
    %c0_53 = arith.constant 0 : index
    %127 = vector.load %arg4[%c0_52, %c0_53] : memref<16x128xf32, #tpu.memory_space<vmem>>, vector<16x128xf32>
    %128 = arith.truncf %127 : vector<16x128xf32> to vector<16x128xbf16>
    %cst_54 = arith.constant dense<0.000000e+00> : vector<16x512xf32>
    %129 = tpu.matmul %128, %3, %cst_54 {dimension_numbers = #tpu.dot_dimension_numbers<[1], [0], [0], [1], [0, 0, 1, 1], [], []>} : vector<16x128xbf16>, vector<128x512xbf16>, vector<16x512xf32> -> vector<16x512xf32>
    %130 = arith.addf %126, %129 : vector<16x512xf32>
    %131 = vector.extract_strided_slice %130 {offsets = [0, 0], sizes = [16, 128], strides = [1, 1]} : vector<16x512xf32> to vector<16x128xf32>
    %132 = arith.negf %131 : vector<16x128xf32>
    %133 = math.exp %132 : vector<16x128xf32>
    %cst_55 = arith.constant 1.000000e+00 : f32
    %134 = vector.broadcast %cst_55 : f32 to vector<16x128xf32>
    %135 = arith.addf %134, %133 : vector<16x128xf32>
    %136 = arith.divf %134, %135 : vector<16x128xf32>
    %137 = vector.extract_strided_slice %130 {offsets = [0, 128], sizes = [16, 128], strides = [1, 1]} : vector<16x512xf32> to vector<16x128xf32>
    %138 = arith.negf %137 : vector<16x128xf32>
    %139 = math.exp %138 : vector<16x128xf32>
    %cst_56 = arith.constant 1.000000e+00 : f32
    %140 = vector.broadcast %cst_56 : f32 to vector<16x128xf32>
    %141 = arith.addf %140, %139 : vector<16x128xf32>
    %142 = arith.divf %140, %141 : vector<16x128xf32>
    %143 = vector.extract_strided_slice %130 {offsets = [0, 256], sizes = [16, 128], strides = [1, 1]} : vector<16x512xf32> to vector<16x128xf32>
    %144 = math.tanh %143 : vector<16x128xf32>
    %145 = vector.extract_strided_slice %130 {offsets = [0, 384], sizes = [16, 128], strides = [1, 1]} : vector<16x512xf32> to vector<16x128xf32>
    %146 = arith.negf %145 : vector<16x128xf32>
    %147 = math.exp %146 : vector<16x128xf32>
    %cst_57 = arith.constant 1.000000e+00 : f32
    %148 = vector.broadcast %cst_57 : f32 to vector<16x128xf32>
    %149 = arith.addf %148, %147 : vector<16x128xf32>
    %150 = arith.divf %148, %149 : vector<16x128xf32>
    %c0_58 = arith.constant 0 : index
    %c0_59 = arith.constant 0 : index
    %151 = vector.load %arg5[%c0_58, %c0_59] : memref<16x128xf32, #tpu.memory_space<vmem>>, vector<16x128xf32>
    %152 = arith.mulf %142, %151 : vector<16x128xf32>
    %153 = arith.mulf %136, %144 : vector<16x128xf32>
    %154 = arith.addf %152, %153 : vector<16x128xf32>
    %155 = math.tanh %154 : vector<16x128xf32>
    %156 = arith.mulf %150, %155 : vector<16x128xf32>
    %c0_60 = arith.constant 0 : index
    %c0_61 = arith.constant 0 : index
    %157 = vector.load %arg5[%c0_60, %c0_61] : memref<16x128xf32, #tpu.memory_space<vmem>>, vector<16x128xf32>
    tpu.vector_store %arg5[%c0_60, %c0_61], %154 {strides = array<i32>} : memref<16x128xf32, #tpu.memory_space<vmem>>, vector<16x128xf32>,
    %c0_62 = arith.constant 0 : index
    %c0_63 = arith.constant 0 : index
    %158 = vector.load %arg4[%c0_62, %c0_63] : memref<16x128xf32, #tpu.memory_space<vmem>>, vector<16x128xf32>
    tpu.vector_store %arg4[%c0_62, %c0_63], %156 {strides = array<i32>} : memref<16x128xf32, #tpu.memory_space<vmem>>, vector<16x128xf32>,
    %159 = arith.truncf %156 : vector<16x128xf32> to vector<16x128xbf16>
    %160 = arith.index_cast %c3_i32 : i32 to index
    %c0_64 = arith.constant 0 : index
    %c0_65 = arith.constant 0 : index
    %161 = vector.load %arg3[%160, %c0_64, %c0_65] : memref<9x16x128xbf16, #tpu.memory_space<vmem>>, vector<1x16x128xbf16>
    %162 = vector.shape_cast %161 : vector<1x16x128xbf16> to vector<16x128xbf16>
    %163 = vector.shape_cast %159 : vector<16x128xbf16> to vector<1x16x128xbf16>
    tpu.vector_store %arg3[%160, %c0_64, %c0_65], %163 {strides = array<i32>} : memref<9x16x128xbf16, #tpu.memory_space<vmem>>, vector<1x16x128xbf16>,
    %c4_i32 = arith.constant 4 : i32
    %164 = arith.index_cast %c4_i32 : i32 to index
    %c0_66 = arith.constant 0 : index
    %c0_67 = arith.constant 0 : index
    %165 = vector.load %arg1[%164, %c0_66, %c0_67] : memref<9x16x512xf32, #tpu.memory_space<vmem>>, vector<1x16x512xf32>
    %166 = vector.shape_cast %165 : vector<1x16x512xf32> to vector<16x512xf32>
    %c0_68 = arith.constant 0 : index
    %c0_69 = arith.constant 0 : index
    %167 = vector.load %arg4[%c0_68, %c0_69] : memref<16x128xf32, #tpu.memory_space<vmem>>, vector<16x128xf32>
    %168 = arith.truncf %167 : vector<16x128xf32> to vector<16x128xbf16>
    %cst_70 = arith.constant dense<0.000000e+00> : vector<16x512xf32>
    %169 = tpu.matmul %168, %3, %cst_70 {dimension_numbers = #tpu.dot_dimension_numbers<[1], [0], [0], [1], [0, 0, 1, 1], [], []>} : vector<16x128xbf16>, vector<128x512xbf16>, vector<16x512xf32> -> vector<16x512xf32>
    %170 = arith.addf %166, %169 : vector<16x512xf32>
    %171 = vector.extract_strided_slice %170 {offsets = [0, 0], sizes = [16, 128], strides = [1, 1]} : vector<16x512xf32> to vector<16x128xf32>
    %172 = arith.negf %171 : vector<16x128xf32>
    %173 = math.exp %172 : vector<16x128xf32>
    %cst_71 = arith.constant 1.000000e+00 : f32
    %174 = vector.broadcast %cst_71 : f32 to vector<16x128xf32>
    %175 = arith.addf %174, %173 : vector<16x128xf32>
    %176 = arith.divf %174, %175 : vector<16x128xf32>
    %177 = vector.extract_strided_slice %170 {offsets = [0, 128], sizes = [16, 128], strides = [1, 1]} : vector<16x512xf32> to vector<16x128xf32>
    %178 = arith.negf %177 : vector<16x128xf32>
    %179 = math.exp %178 : vector<16x128xf32>
    %cst_72 = arith.constant 1.000000e+00 : f32
    %180 = vector.broadcast %cst_72 : f32 to vector<16x128xf32>
    %181 = arith.addf %180, %179 : vector<16x128xf32>
    %182 = arith.divf %180, %181 : vector<16x128xf32>
    %183 = vector.extract_strided_slice %170 {offsets = [0, 256], sizes = [16, 128], strides = [1, 1]} : vector<16x512xf32> to vector<16x128xf32>
    %184 = math.tanh %183 : vector<16x128xf32>
    %185 = vector.extract_strided_slice %170 {offsets = [0, 384], sizes = [16, 128], strides = [1, 1]} : vector<16x512xf32> to vector<16x128xf32>
    %186 = arith.negf %185 : vector<16x128xf32>
    %187 = math.exp %186 : vector<16x128xf32>
    %cst_73 = arith.constant 1.000000e+00 : f32
    %188 = vector.broadcast %cst_73 : f32 to vector<16x128xf32>
    %189 = arith.addf %188, %187 : vector<16x128xf32>
    %190 = arith.divf %188, %189 : vector<16x128xf32>
    %c0_74 = arith.constant 0 : index
    %c0_75 = arith.constant 0 : index
    %191 = vector.load %arg5[%c0_74, %c0_75] : memref<16x128xf32, #tpu.memory_space<vmem>>, vector<16x128xf32>
    %192 = arith.mulf %182, %191 : vector<16x128xf32>
    %193 = arith.mulf %176, %184 : vector<16x128xf32>
    %194 = arith.addf %192, %193 : vector<16x128xf32>
    %195 = math.tanh %194 : vector<16x128xf32>
    %196 = arith.mulf %190, %195 : vector<16x128xf32>
    %c0_76 = arith.constant 0 : index
    %c0_77 = arith.constant 0 : index
    %197 = vector.load %arg5[%c0_76, %c0_77] : memref<16x128xf32, #tpu.memory_space<vmem>>, vector<16x128xf32>
    tpu.vector_store %arg5[%c0_76, %c0_77], %194 {strides = array<i32>} : memref<16x128xf32, #tpu.memory_space<vmem>>, vector<16x128xf32>,
    %c0_78 = arith.constant 0 : index
    %c0_79 = arith.constant 0 : index
    %198 = vector.load %arg4[%c0_78, %c0_79] : memref<16x128xf32, #tpu.memory_space<vmem>>, vector<16x128xf32>
    tpu.vector_store %arg4[%c0_78, %c0_79], %196 {strides = array<i32>} : memref<16x128xf32, #tpu.memory_space<vmem>>, vector<16x128xf32>,
    %199 = arith.truncf %196 : vector<16x128xf32> to vector<16x128xbf16>
    %200 = arith.index_cast %c4_i32 : i32 to index
    %c0_80 = arith.constant 0 : index
    %c0_81 = arith.constant 0 : index
    %201 = vector.load %arg3[%200, %c0_80, %c0_81] : memref<9x16x128xbf16, #tpu.memory_space<vmem>>, vector<1x16x128xbf16>
    %202 = vector.shape_cast %201 : vector<1x16x128xbf16> to vector<16x128xbf16>
    %203 = vector.shape_cast %199 : vector<16x128xbf16> to vector<1x16x128xbf16>
    tpu.vector_store %arg3[%200, %c0_80, %c0_81], %203 {strides = array<i32>} : memref<9x16x128xbf16, #tpu.memory_space<vmem>>, vector<1x16x128xbf16>,
    %c5_i32 = arith.constant 5 : i32
    %204 = arith.index_cast %c5_i32 : i32 to index
    %c0_82 = arith.constant 0 : index
    %c0_83 = arith.constant 0 : index
    %205 = vector.load %arg1[%204, %c0_82, %c0_83] : memref<9x16x512xf32, #tpu.memory_space<vmem>>, vector<1x16x512xf32>
    %206 = vector.shape_cast %205 : vector<1x16x512xf32> to vector<16x512xf32>
    %c0_84 = arith.constant 0 : index
    %c0_85 = arith.constant 0 : index
    %207 = vector.load %arg4[%c0_84, %c0_85] : memref<16x128xf32, #tpu.memory_space<vmem>>, vector<16x128xf32>
    %208 = arith.truncf %207 : vector<16x128xf32> to vector<16x128xbf16>
    %cst_86 = arith.constant dense<0.000000e+00> : vector<16x512xf32>
    %209 = tpu.matmul %208, %3, %cst_86 {dimension_numbers = #tpu.dot_dimension_numbers<[1], [0], [0], [1], [0, 0, 1, 1], [], []>} : vector<16x128xbf16>, vector<128x512xbf16>, vector<16x512xf32> -> vector<16x512xf32>
    %210 = arith.addf %206, %209 : vector<16x512xf32>
    %211 = vector.extract_strided_slice %210 {offsets = [0, 0], sizes = [16, 128], strides = [1, 1]} : vector<16x512xf32> to vector<16x128xf32>
    %212 = arith.negf %211 : vector<16x128xf32>
    %213 = math.exp %212 : vector<16x128xf32>
    %cst_87 = arith.constant 1.000000e+00 : f32
    %214 = vector.broadcast %cst_87 : f32 to vector<16x128xf32>
    %215 = arith.addf %214, %213 : vector<16x128xf32>
    %216 = arith.divf %214, %215 : vector<16x128xf32>
    %217 = vector.extract_strided_slice %210 {offsets = [0, 128], sizes = [16, 128], strides = [1, 1]} : vector<16x512xf32> to vector<16x128xf32>
    %218 = arith.negf %217 : vector<16x128xf32>
    %219 = math.exp %218 : vector<16x128xf32>
    %cst_88 = arith.constant 1.000000e+00 : f32
    %220 = vector.broadcast %cst_88 : f32 to vector<16x128xf32>
    %221 = arith.addf %220, %219 : vector<16x128xf32>
    %222 = arith.divf %220, %221 : vector<16x128xf32>
    %223 = vector.extract_strided_slice %210 {offsets = [0, 256], sizes = [16, 128], strides = [1, 1]} : vector<16x512xf32> to vector<16x128xf32>
    %224 = math.tanh %223 : vector<16x128xf32>
    %225 = vector.extract_strided_slice %210 {offsets = [0, 384], sizes = [16, 128], strides = [1, 1]} : vector<16x512xf32> to vector<16x128xf32>
    %226 = arith.negf %225 : vector<16x128xf32>
    %227 = math.exp %226 : vector<16x128xf32>
    %cst_89 = arith.constant 1.000000e+00 : f32
    %228 = vector.broadcast %cst_89 : f32 to vector<16x128xf32>
    %229 = arith.addf %228, %227 : vector<16x128xf32>
    %230 = arith.divf %228, %229 : vector<16x128xf32>
    %c0_90 = arith.constant 0 : index
    %c0_91 = arith.constant 0 : index
    %231 = vector.load %arg5[%c0_90, %c0_91] : memref<16x128xf32, #tpu.memory_space<vmem>>, vector<16x128xf32>
    %232 = arith.mulf %222, %231 : vector<16x128xf32>
    %233 = arith.mulf %216, %224 : vector<16x128xf32>
    %234 = arith.addf %232, %233 : vector<16x128xf32>
    %235 = math.tanh %234 : vector<16x128xf32>
    %236 = arith.mulf %230, %235 : vector<16x128xf32>
    %c0_92 = arith.constant 0 : index
    %c0_93 = arith.constant 0 : index
    %237 = vector.load %arg5[%c0_92, %c0_93] : memref<16x128xf32, #tpu.memory_space<vmem>>, vector<16x128xf32>
    tpu.vector_store %arg5[%c0_92, %c0_93], %234 {strides = array<i32>} : memref<16x128xf32, #tpu.memory_space<vmem>>, vector<16x128xf32>,
    %c0_94 = arith.constant 0 : index
    %c0_95 = arith.constant 0 : index
    %238 = vector.load %arg4[%c0_94, %c0_95] : memref<16x128xf32, #tpu.memory_space<vmem>>, vector<16x128xf32>
    tpu.vector_store %arg4[%c0_94, %c0_95], %236 {strides = array<i32>} : memref<16x128xf32, #tpu.memory_space<vmem>>, vector<16x128xf32>,
    %239 = arith.truncf %236 : vector<16x128xf32> to vector<16x128xbf16>
    %240 = arith.index_cast %c5_i32 : i32 to index
    %c0_96 = arith.constant 0 : index
    %c0_97 = arith.constant 0 : index
    %241 = vector.load %arg3[%240, %c0_96, %c0_97] : memref<9x16x128xbf16, #tpu.memory_space<vmem>>, vector<1x16x128xbf16>
    %242 = vector.shape_cast %241 : vector<1x16x128xbf16> to vector<16x128xbf16>
    %243 = vector.shape_cast %239 : vector<16x128xbf16> to vector<1x16x128xbf16>
    tpu.vector_store %arg3[%240, %c0_96, %c0_97], %243 {strides = array<i32>} : memref<9x16x128xbf16, #tpu.memory_space<vmem>>, vector<1x16x128xbf16>,
    %c6_i32 = arith.constant 6 : i32
    %244 = arith.index_cast %c6_i32 : i32 to index
    %c0_98 = arith.constant 0 : index
    %c0_99 = arith.constant 0 : index
    %245 = vector.load %arg1[%244, %c0_98, %c0_99] : memref<9x16x512xf32, #tpu.memory_space<vmem>>, vector<1x16x512xf32>
    %246 = vector.shape_cast %245 : vector<1x16x512xf32> to vector<16x512xf32>
    %c0_100 = arith.constant 0 : index
    %c0_101 = arith.constant 0 : index
    %247 = vector.load %arg4[%c0_100, %c0_101] : memref<16x128xf32, #tpu.memory_space<vmem>>, vector<16x128xf32>
    %248 = arith.truncf %247 : vector<16x128xf32> to vector<16x128xbf16>
    %cst_102 = arith.constant dense<0.000000e+00> : vector<16x512xf32>
    %249 = tpu.matmul %248, %3, %cst_102 {dimension_numbers = #tpu.dot_dimension_numbers<[1], [0], [0], [1], [0, 0, 1, 1], [], []>} : vector<16x128xbf16>, vector<128x512xbf16>, vector<16x512xf32> -> vector<16x512xf32>
    %250 = arith.addf %246, %249 : vector<16x512xf32>
    %251 = vector.extract_strided_slice %250 {offsets = [0, 0], sizes = [16, 128], strides = [1, 1]} : vector<16x512xf32> to vector<16x128xf32>
    %252 = arith.negf %251 : vector<16x128xf32>
    %253 = math.exp %252 : vector<16x128xf32>
    %cst_103 = arith.constant 1.000000e+00 : f32
    %254 = vector.broadcast %cst_103 : f32 to vector<16x128xf32>
    %255 = arith.addf %254, %253 : vector<16x128xf32>
    %256 = arith.divf %254, %255 : vector<16x128xf32>
    %257 = vector.extract_strided_slice %250 {offsets = [0, 128], sizes = [16, 128], strides = [1, 1]} : vector<16x512xf32> to vector<16x128xf32>
    %258 = arith.negf %257 : vector<16x128xf32>
    %259 = math.exp %258 : vector<16x128xf32>
    %cst_104 = arith.constant 1.000000e+00 : f32
    %260 = vector.broadcast %cst_104 : f32 to vector<16x128xf32>
    %261 = arith.addf %260, %259 : vector<16x128xf32>
    %262 = arith.divf %260, %261 : vector<16x128xf32>
    %263 = vector.extract_strided_slice %250 {offsets = [0, 256], sizes = [16, 128], strides = [1, 1]} : vector<16x512xf32> to vector<16x128xf32>
    %264 = math.tanh %263 : vector<16x128xf32>
    %265 = vector.extract_strided_slice %250 {offsets = [0, 384], sizes = [16, 128], strides = [1, 1]} : vector<16x512xf32> to vector<16x128xf32>
    %266 = arith.negf %265 : vector<16x128xf32>
    %267 = math.exp %266 : vector<16x128xf32>
    %cst_105 = arith.constant 1.000000e+00 : f32
    %268 = vector.broadcast %cst_105 : f32 to vector<16x128xf32>
    %269 = arith.addf %268, %267 : vector<16x128xf32>
    %270 = arith.divf %268, %269 : vector<16x128xf32>
    %c0_106 = arith.constant 0 : index
    %c0_107 = arith.constant 0 : index
    %271 = vector.load %arg5[%c0_106, %c0_107] : memref<16x128xf32, #tpu.memory_space<vmem>>, vector<16x128xf32>
    %272 = arith.mulf %262, %271 : vector<16x128xf32>
    %273 = arith.mulf %256, %264 : vector<16x128xf32>
    %274 = arith.addf %272, %273 : vector<16x128xf32>
    %275 = math.tanh %274 : vector<16x128xf32>
    %276 = arith.mulf %270, %275 : vector<16x128xf32>
    %c0_108 = arith.constant 0 : index
    %c0_109 = arith.constant 0 : index
    %277 = vector.load %arg5[%c0_108, %c0_109] : memref<16x128xf32, #tpu.memory_space<vmem>>, vector<16x128xf32>
    tpu.vector_store %arg5[%c0_108, %c0_109], %274 {strides = array<i32>} : memref<16x128xf32, #tpu.memory_space<vmem>>, vector<16x128xf32>,
    %c0_110 = arith.constant 0 : index
    %c0_111 = arith.constant 0 : index
    %278 = vector.load %arg4[%c0_110, %c0_111] : memref<16x128xf32, #tpu.memory_space<vmem>>, vector<16x128xf32>
    tpu.vector_store %arg4[%c0_110, %c0_111], %276 {strides = array<i32>} : memref<16x128xf32, #tpu.memory_space<vmem>>, vector<16x128xf32>,
    %279 = arith.truncf %276 : vector<16x128xf32> to vector<16x128xbf16>
    %280 = arith.index_cast %c6_i32 : i32 to index
    %c0_112 = arith.constant 0 : index
    %c0_113 = arith.constant 0 : index
    %281 = vector.load %arg3[%280, %c0_112, %c0_113] : memref<9x16x128xbf16, #tpu.memory_space<vmem>>, vector<1x16x128xbf16>
    %282 = vector.shape_cast %281 : vector<1x16x128xbf16> to vector<16x128xbf16>
    %283 = vector.shape_cast %279 : vector<16x128xbf16> to vector<1x16x128xbf16>
    tpu.vector_store %arg3[%280, %c0_112, %c0_113], %283 {strides = array<i32>} : memref<9x16x128xbf16, #tpu.memory_space<vmem>>, vector<1x16x128xbf16>,
    %c7_i32 = arith.constant 7 : i32
    %284 = arith.index_cast %c7_i32 : i32 to index
    %c0_114 = arith.constant 0 : index
    %c0_115 = arith.constant 0 : index
    %285 = vector.load %arg1[%284, %c0_114, %c0_115] : memref<9x16x512xf32, #tpu.memory_space<vmem>>, vector<1x16x512xf32>
    %286 = vector.shape_cast %285 : vector<1x16x512xf32> to vector<16x512xf32>
    %c0_116 = arith.constant 0 : index
    %c0_117 = arith.constant 0 : index
    %287 = vector.load %arg4[%c0_116, %c0_117] : memref<16x128xf32, #tpu.memory_space<vmem>>, vector<16x128xf32>
    %288 = arith.truncf %287 : vector<16x128xf32> to vector<16x128xbf16>
    %cst_118 = arith.constant dense<0.000000e+00> : vector<16x512xf32>
    %289 = tpu.matmul %288, %3, %cst_118 {dimension_numbers = #tpu.dot_dimension_numbers<[1], [0], [0], [1], [0, 0, 1, 1], [], []>} : vector<16x128xbf16>, vector<128x512xbf16>, vector<16x512xf32> -> vector<16x512xf32>
    %290 = arith.addf %286, %289 : vector<16x512xf32>
    %291 = vector.extract_strided_slice %290 {offsets = [0, 0], sizes = [16, 128], strides = [1, 1]} : vector<16x512xf32> to vector<16x128xf32>
    %292 = arith.negf %291 : vector<16x128xf32>
    %293 = math.exp %292 : vector<16x128xf32>
    %cst_119 = arith.constant 1.000000e+00 : f32
    %294 = vector.broadcast %cst_119 : f32 to vector<16x128xf32>
    %295 = arith.addf %294, %293 : vector<16x128xf32>
    %296 = arith.divf %294, %295 : vector<16x128xf32>
    %297 = vector.extract_strided_slice %290 {offsets = [0, 128], sizes = [16, 128], strides = [1, 1]} : vector<16x512xf32> to vector<16x128xf32>
    %298 = arith.negf %297 : vector<16x128xf32>
    %299 = math.exp %298 : vector<16x128xf32>
    %cst_120 = arith.constant 1.000000e+00 : f32
    %300 = vector.broadcast %cst_120 : f32 to vector<16x128xf32>
    %301 = arith.addf %300, %299 : vector<16x128xf32>
    %302 = arith.divf %300, %301 : vector<16x128xf32>
    %303 = vector.extract_strided_slice %290 {offsets = [0, 256], sizes = [16, 128], strides = [1, 1]} : vector<16x512xf32> to vector<16x128xf32>
    %304 = math.tanh %303 : vector<16x128xf32>
    %305 = vector.extract_strided_slice %290 {offsets = [0, 384], sizes = [16, 128], strides = [1, 1]} : vector<16x512xf32> to vector<16x128xf32>
    %306 = arith.negf %305 : vector<16x128xf32>
    %307 = math.exp %306 : vector<16x128xf32>
    %cst_121 = arith.constant 1.000000e+00 : f32
    %308 = vector.broadcast %cst_121 : f32 to vector<16x128xf32>
    %309 = arith.addf %308, %307 : vector<16x128xf32>
    %310 = arith.divf %308, %309 : vector<16x128xf32>
    %c0_122 = arith.constant 0 : index
    %c0_123 = arith.constant 0 : index
    %311 = vector.load %arg5[%c0_122, %c0_123] : memref<16x128xf32, #tpu.memory_space<vmem>>, vector<16x128xf32>
    %312 = arith.mulf %302, %311 : vector<16x128xf32>
    %313 = arith.mulf %296, %304 : vector<16x128xf32>
    %314 = arith.addf %312, %313 : vector<16x128xf32>
    %315 = math.tanh %314 : vector<16x128xf32>
    %316 = arith.mulf %310, %315 : vector<16x128xf32>
    %c0_124 = arith.constant 0 : index
    %c0_125 = arith.constant 0 : index
    %317 = vector.load %arg5[%c0_124, %c0_125] : memref<16x128xf32, #tpu.memory_space<vmem>>, vector<16x128xf32>
    tpu.vector_store %arg5[%c0_124, %c0_125], %314 {strides = array<i32>} : memref<16x128xf32, #tpu.memory_space<vmem>>, vector<16x128xf32>,
    %c0_126 = arith.constant 0 : index
    %c0_127 = arith.constant 0 : index
    %318 = vector.load %arg4[%c0_126, %c0_127] : memref<16x128xf32, #tpu.memory_space<vmem>>, vector<16x128xf32>
    tpu.vector_store %arg4[%c0_126, %c0_127], %316 {strides = array<i32>} : memref<16x128xf32, #tpu.memory_space<vmem>>, vector<16x128xf32>,
    %319 = arith.truncf %316 : vector<16x128xf32> to vector<16x128xbf16>
    %320 = arith.index_cast %c7_i32 : i32 to index
    %c0_128 = arith.constant 0 : index
    %c0_129 = arith.constant 0 : index
    %321 = vector.load %arg3[%320, %c0_128, %c0_129] : memref<9x16x128xbf16, #tpu.memory_space<vmem>>, vector<1x16x128xbf16>
    %322 = vector.shape_cast %321 : vector<1x16x128xbf16> to vector<16x128xbf16>
    %323 = vector.shape_cast %319 : vector<16x128xbf16> to vector<1x16x128xbf16>
    tpu.vector_store %arg3[%320, %c0_128, %c0_129], %323 {strides = array<i32>} : memref<9x16x128xbf16, #tpu.memory_space<vmem>>, vector<1x16x128xbf16>,
    %c8_i32 = arith.constant 8 : i32
    %324 = arith.index_cast %c8_i32 : i32 to index
    %c0_130 = arith.constant 0 : index
    %c0_131 = arith.constant 0 : index
    %325 = vector.load %arg1[%324, %c0_130, %c0_131] : memref<9x16x512xf32, #tpu.memory_space<vmem>>, vector<1x16x512xf32>
    %326 = vector.shape_cast %325 : vector<1x16x512xf32> to vector<16x512xf32>
    %c0_132 = arith.constant 0 : index
    %c0_133 = arith.constant 0 : index
    %327 = vector.load %arg4[%c0_132, %c0_133] : memref<16x128xf32, #tpu.memory_space<vmem>>, vector<16x128xf32>
    %328 = arith.truncf %327 : vector<16x128xf32> to vector<16x128xbf16>
    %cst_134 = arith.constant dense<0.000000e+00> : vector<16x512xf32>
    %329 = tpu.matmul %328, %3, %cst_134 {dimension_numbers = #tpu.dot_dimension_numbers<[1], [0], [0], [1], [0, 0, 1, 1], [], []>} : vector<16x128xbf16>, vector<128x512xbf16>, vector<16x512xf32> -> vector<16x512xf32>
    %330 = arith.addf %326, %329 : vector<16x512xf32>
    %331 = vector.extract_strided_slice %330 {offsets = [0, 0], sizes = [16, 128], strides = [1, 1]} : vector<16x512xf32> to vector<16x128xf32>
    %332 = arith.negf %331 : vector<16x128xf32>
    %333 = math.exp %332 : vector<16x128xf32>
    %cst_135 = arith.constant 1.000000e+00 : f32
    %334 = vector.broadcast %cst_135 : f32 to vector<16x128xf32>
    %335 = arith.addf %334, %333 : vector<16x128xf32>
    %336 = arith.divf %334, %335 : vector<16x128xf32>
    %337 = vector.extract_strided_slice %330 {offsets = [0, 128], sizes = [16, 128], strides = [1, 1]} : vector<16x512xf32> to vector<16x128xf32>
    %338 = arith.negf %337 : vector<16x128xf32>
    %339 = math.exp %338 : vector<16x128xf32>
    %cst_136 = arith.constant 1.000000e+00 : f32
    %340 = vector.broadcast %cst_136 : f32 to vector<16x128xf32>
    %341 = arith.addf %340, %339 : vector<16x128xf32>
    %342 = arith.divf %340, %341 : vector<16x128xf32>
    %343 = vector.extract_strided_slice %330 {offsets = [0, 256], sizes = [16, 128], strides = [1, 1]} : vector<16x512xf32> to vector<16x128xf32>
    %344 = math.tanh %343 : vector<16x128xf32>
    %345 = vector.extract_strided_slice %330 {offsets = [0, 384], sizes = [16, 128], strides = [1, 1]} : vector<16x512xf32> to vector<16x128xf32>
    %346 = arith.negf %345 : vector<16x128xf32>
    %347 = math.exp %346 : vector<16x128xf32>
    %cst_137 = arith.constant 1.000000e+00 : f32
    %348 = vector.broadcast %cst_137 : f32 to vector<16x128xf32>
    %349 = arith.addf %348, %347 : vector<16x128xf32>
    %350 = arith.divf %348, %349 : vector<16x128xf32>
    %c0_138 = arith.constant 0 : index
    %c0_139 = arith.constant 0 : index
    %351 = vector.load %arg5[%c0_138, %c0_139] : memref<16x128xf32, #tpu.memory_space<vmem>>, vector<16x128xf32>
    %352 = arith.mulf %342, %351 : vector<16x128xf32>
    %353 = arith.mulf %336, %344 : vector<16x128xf32>
    %354 = arith.addf %352, %353 : vector<16x128xf32>
    %355 = math.tanh %354 : vector<16x128xf32>
    %356 = arith.mulf %350, %355 : vector<16x128xf32>
    %c0_140 = arith.constant 0 : index
    %c0_141 = arith.constant 0 : index
    %357 = vector.load %arg5[%c0_140, %c0_141] : memref<16x128xf32, #tpu.memory_space<vmem>>, vector<16x128xf32>
    tpu.vector_store %arg5[%c0_140, %c0_141], %354 {strides = array<i32>} : memref<16x128xf32, #tpu.memory_space<vmem>>, vector<16x128xf32>,
    %c0_142 = arith.constant 0 : index
    %c0_143 = arith.constant 0 : index
    %358 = vector.load %arg4[%c0_142, %c0_143] : memref<16x128xf32, #tpu.memory_space<vmem>>, vector<16x128xf32>
    tpu.vector_store %arg4[%c0_142, %c0_143], %356 {strides = array<i32>} : memref<16x128xf32, #tpu.memory_space<vmem>>, vector<16x128xf32>,
    %359 = arith.truncf %356 : vector<16x128xf32> to vector<16x128xbf16>
    %360 = arith.index_cast %c8_i32 : i32 to index
    %c0_144 = arith.constant 0 : index
    %c0_145 = arith.constant 0 : index
    %361 = vector.load %arg3[%360, %c0_144, %c0_145] : memref<9x16x128xbf16, #tpu.memory_space<vmem>>, vector<1x16x128xbf16>
    %362 = vector.shape_cast %361 : vector<1x16x128xbf16> to vector<16x128xbf16>
    %363 = vector.shape_cast %359 : vector<16x128xbf16> to vector<1x16x128xbf16>
    tpu.vector_store %arg3[%360, %c0_144, %c0_145], %363 {strides = array<i32>} : memref<9x16x128xbf16, #tpu.memory_space<vmem>>, vector<1x16x128xbf16>,
    %c9_i32 = arith.constant 9 : i32
    return
  }
  func.func @transform_0(%arg0: i32) -> (i32, i32, i32) {
    %c0_i32 = arith.constant 0 : i32
    %c0_i32_0 = arith.constant 0 : i32
    %c0_i32_1 = arith.constant 0 : i32
    return %arg0, %c0_i32, %c0_i32_0 : i32, i32, i32
  }
  func.func @transform_1(%arg0: i32) -> (i32, i32) {
    %c0_i32 = arith.constant 0 : i32
    %c0_i32_0 = arith.constant 0 : i32
    %c0_i32_1 = arith.constant 0 : i32
    return %c0_i32, %c0_i32_0 : i32, i32
  }
  func.func @transform_2(%arg0: i32) -> (i32, i32, i32) {
    %c0_i32 = arith.constant 0 : i32
    %c0_i32_0 = arith.constant 0 : i32
    %c0_i32_1 = arith.constant 0 : i32
    return %arg0, %c0_i32, %c0_i32_0 : i32, i32, i32
  }
}

module attributes {stable_mosaic.version = 11 : i64} {
  func.func @matmul_bias_kernel(%arg0: i32, %arg1: i32, %arg2: memref<144x128xbf16, #tpu.memory_space<vmem>>, %arg3: memref<128x128xbf16, #tpu.memory_space<vmem>>, %arg4: memref<1x128xf32, #tpu.memory_space<vmem>>, %arg5: memref<144x128xf32, #tpu.memory_space<vmem>>) attributes {dimension_semantics = [#tpu.dimension_semantics<parallel>, #tpu.dimension_semantics<parallel>], iteration_bounds = array<i64: 1, 1>, scalar_prefetch = 0 : i64, scratch_operands = 0 : i64, tpu.core_type = #tpu.core_type<tc>, window_params = [{transform_indices = @transform_0, window_bounds = array<i64: 144, 128>}, {transform_indices = @transform_1, window_bounds = array<i64: 128, 128>}, {transform_indices = @transform_2, window_bounds = array<i64: 1, 128>}, {transform_indices = @transform_3, window_bounds = array<i64: 144, 128>}]} {
    %c0 = arith.constant 0 : index
    %c0_0 = arith.constant 0 : index
    %0 = vector.load %arg2[%c0, %c0_0] : memref<144x128xbf16, #tpu.memory_space<vmem>>, vector<144x128xbf16>
    %c0_1 = arith.constant 0 : index
    %c0_2 = arith.constant 0 : index
    %1 = vector.load %arg3[%c0_1, %c0_2] : memref<128x128xbf16, #tpu.memory_space<vmem>>, vector<128x128xbf16>
    %cst = arith.constant dense<0.000000e+00> : vector<144x128xf32>
    %2 = tpu.matmul %0, %1, %cst {dimension_numbers = #tpu.dot_dimension_numbers<[1], [0], [0], [1], [0, 0, 1, 1], [], []>} : vector<144x128xbf16>, vector<128x128xbf16>, vector<144x128xf32> -> vector<144x128xf32>
    %c0_3 = arith.constant 0 : index
    %c0_4 = arith.constant 0 : index
    %3 = vector.load %arg4[%c0_3, %c0_4] : memref<1x128xf32, #tpu.memory_space<vmem>>, vector<1x128xf32>
    %4 = vector.broadcast %3 : vector<1x128xf32> to vector<144x128xf32>
    %5 = arith.addf %2, %4 : vector<144x128xf32>
    %c0_5 = arith.constant 0 : index
    %c0_6 = arith.constant 0 : index
    %6 = vector.load %arg5[%c0_5, %c0_6] : memref<144x128xf32, #tpu.memory_space<vmem>>, vector<144x128xf32>
    tpu.vector_store %arg5[%c0_5, %c0_6], %5 {strides = array<i32>} : memref<144x128xf32, #tpu.memory_space<vmem>>, vector<144x128xf32>,
    return
  }
  func.func @transform_0(%arg0: i32, %arg1: i32) -> (i32, i32) {
    %c0_i32 = arith.constant 0 : i32
    %c0_i32_0 = arith.constant 0 : i32
    return %arg1, %c0_i32 : i32, i32
  }
  func.func @transform_1(%arg0: i32, %arg1: i32) -> (i32, i32) {
    %c0_i32 = arith.constant 0 : i32
    %c0_i32_0 = arith.constant 0 : i32
    return %c0_i32, %arg0 : i32, i32
  }
  func.func @transform_2(%arg0: i32, %arg1: i32) -> (i32, i32) {
    %c0_i32 = arith.constant 0 : i32
    %c0_i32_0 = arith.constant 0 : i32
    return %c0_i32, %arg0 : i32, i32
  }
  func.func @transform_3(%arg0: i32, %arg1: i32) -> (i32, i32) {
    %c0_i32 = arith.constant 0 : i32
    return %arg1, %arg0 : i32, i32
  }
}

module attributes {stable_mosaic.version = 11 : i64} {
  func.func @matmul_bias_kernel(%arg0: i32, %arg1: i32, %arg2: memref<144x128xf32, #tpu.memory_space<vmem>>, %arg3: memref<128x512xbf16, #tpu.memory_space<vmem>>, %arg4: memref<1x512xf32, #tpu.memory_space<vmem>>, %arg5: memref<144x512xf32, #tpu.memory_space<vmem>>) attributes {dimension_semantics = [#tpu.dimension_semantics<parallel>, #tpu.dimension_semantics<parallel>], iteration_bounds = array<i64: 1, 1>, scalar_prefetch = 0 : i64, scratch_operands = 0 : i64, tpu.core_type = #tpu.core_type<tc>, window_params = [{transform_indices = @transform_0, window_bounds = array<i64: 144, 128>}, {transform_indices = @transform_1, window_bounds = array<i64: 128, 512>}, {transform_indices = @transform_2, window_bounds = array<i64: 1, 512>}, {transform_indices = @transform_3, window_bounds = array<i64: 144, 512>}]} {
    %c0 = arith.constant 0 : index
    %c0_0 = arith.constant 0 : index
    %0 = vector.load %arg2[%c0, %c0_0] : memref<144x128xf32, #tpu.memory_space<vmem>>, vector<144x128xf32>
    %1 = arith.truncf %0 : vector<144x128xf32> to vector<144x128xbf16>
    %c0_1 = arith.constant 0 : index
    %c0_2 = arith.constant 0 : index
    %2 = vector.load %arg3[%c0_1, %c0_2] : memref<128x512xbf16, #tpu.memory_space<vmem>>, vector<128x512xbf16>
    %cst = arith.constant dense<0.000000e+00> : vector<144x512xf32>
    %3 = tpu.matmul %1, %2, %cst {dimension_numbers = #tpu.dot_dimension_numbers<[1], [0], [0], [1], [0, 0, 1, 1], [], []>} : vector<144x128xbf16>, vector<128x512xbf16>, vector<144x512xf32> -> vector<144x512xf32>
    %c0_3 = arith.constant 0 : index
    %c0_4 = arith.constant 0 : index
    %4 = vector.load %arg4[%c0_3, %c0_4] : memref<1x512xf32, #tpu.memory_space<vmem>>, vector<1x512xf32>
    %5 = vector.broadcast %4 : vector<1x512xf32> to vector<144x512xf32>
    %6 = arith.addf %3, %5 : vector<144x512xf32>
    %c0_5 = arith.constant 0 : index
    %c0_6 = arith.constant 0 : index
    %7 = vector.load %arg5[%c0_5, %c0_6] : memref<144x512xf32, #tpu.memory_space<vmem>>, vector<144x512xf32>
    tpu.vector_store %arg5[%c0_5, %c0_6], %6 {strides = array<i32>} : memref<144x512xf32, #tpu.memory_space<vmem>>, vector<144x512xf32>,
    return
  }
  func.func @transform_0(%arg0: i32, %arg1: i32) -> (i32, i32) {
    %c0_i32 = arith.constant 0 : i32
    %c0_i32_0 = arith.constant 0 : i32
    return %arg1, %c0_i32 : i32, i32
  }
  func.func @transform_1(%arg0: i32, %arg1: i32) -> (i32, i32) {
    %c0_i32 = arith.constant 0 : i32
    %c0_i32_0 = arith.constant 0 : i32
    return %c0_i32, %arg0 : i32, i32
  }
  func.func @transform_2(%arg0: i32, %arg1: i32) -> (i32, i32) {
    %c0_i32 = arith.constant 0 : i32
    %c0_i32_0 = arith.constant 0 : i32
    return %c0_i32, %arg0 : i32, i32
  }
  func.func @transform_3(%arg0: i32, %arg1: i32) -> (i32, i32) {
    %c0_i32 = arith.constant 0 : i32
    return %arg1, %arg0 : i32, i32
  }
}

module attributes {stable_mosaic.version = 11 : i64} {
  func.func @lstm_recurrence_fused_kernel(%arg0: i32, %arg1: memref<9x16x512xf32, #tpu.memory_space<vmem>>, %arg2: memref<128x512xbf16, #tpu.memory_space<vmem>>, %arg3: memref<128x512xbf16, #tpu.memory_space<vmem>>, %arg4: memref<1x512xf32, #tpu.memory_space<vmem>>, %arg5: memref<9x16x512xf32, #tpu.memory_space<vmem>>, %arg6: memref<16x128xf32, #tpu.memory_space<vmem>>, %arg7: memref<16x128xf32, #tpu.memory_space<vmem>>, %arg8: memref<9x16x128xf32, #tpu.memory_space<vmem>>) attributes {dimension_semantics = [#tpu.dimension_semantics<arbitrary>], iteration_bounds = array<i64: 1>, scalar_prefetch = 0 : i64, scratch_operands = 3 : i64, tpu.core_type = #tpu.core_type<tc>, window_params = [{transform_indices = @transform_0, window_bounds = array<i64: 9, 16, 512>}, {pipeline_mode = #tpu.pipeline_mode<synchronous>, transform_indices = @transform_1, window_bounds = array<i64: 128, 512>}, {pipeline_mode = #tpu.pipeline_mode<synchronous>, transform_indices = @transform_2, window_bounds = array<i64: 128, 512>}, {pipeline_mode = #tpu.pipeline_mode<synchronous>, transform_indices = @transform_3, window_bounds = array<i64: 1, 512>}, {transform_indices = @transform_4, window_bounds = array<i64: 9, 16, 512>}]} {
    %c0_i32 = arith.constant 0 : i32
    %0 = arith.cmpi eq, %arg0, %c0_i32 : i32
    %1 = arith.extui %0 : i1 to i32
    %c0_i32_0 = arith.constant 0 : i32
    %2 = arith.cmpi ne, %1, %c0_i32_0 : i32
    scf.if %2 {
      %cst_157 = arith.constant 0.000000e+00 : f32
      %365 = vector.broadcast %cst_157 : f32 to vector<16x128xf32>
      %c0_158 = arith.constant 0 : index
      %c0_159 = arith.constant 0 : index
      %366 = vector.load %arg6[%c0_158, %c0_159] : memref<16x128xf32, #tpu.memory_space<vmem>>, vector<16x128xf32>
      tpu.vector_store %arg6[%c0_158, %c0_159], %365 {strides = array<i32>} : memref<16x128xf32, #tpu.memory_space<vmem>>, vector<16x128xf32>,
      %cst_160 = arith.constant 0.000000e+00 : f32
      %367 = vector.broadcast %cst_160 : f32 to vector<16x128xf32>
      %c0_161 = arith.constant 0 : index
      %c0_162 = arith.constant 0 : index
      %368 = vector.load %arg7[%c0_161, %c0_162] : memref<16x128xf32, #tpu.memory_space<vmem>>, vector<16x128xf32>
      tpu.vector_store %arg7[%c0_161, %c0_162], %367 {strides = array<i32>} : memref<16x128xf32, #tpu.memory_space<vmem>>, vector<16x128xf32>,
    } else {
    }
    %c0 = arith.constant 0 : index
    %c0_1 = arith.constant 0 : index
    %3 = vector.load %arg2[%c0, %c0_1] : memref<128x512xbf16, #tpu.memory_space<vmem>>, vector<128x512xbf16>
    %c0_i32_2 = arith.constant 0 : i32
    %4 = arith.index_cast %c0_i32_2 : i32 to index
    %c0_3 = arith.constant 0 : index
    %c0_4 = arith.constant 0 : index
    %5 = vector.load %arg1[%4, %c0_3, %c0_4] : memref<9x16x512xf32, #tpu.memory_space<vmem>>, vector<1x16x512xf32>
    %6 = vector.shape_cast %5 : vector<1x16x512xf32> to vector<16x512xf32>
    %c0_5 = arith.constant 0 : index
    %c0_6 = arith.constant 0 : index
    %7 = vector.load %arg6[%c0_5, %c0_6] : memref<16x128xf32, #tpu.memory_space<vmem>>, vector<16x128xf32>
    %8 = arith.truncf %7 : vector<16x128xf32> to vector<16x128xbf16>
    %cst = arith.constant dense<0.000000e+00> : vector<16x512xf32>
    %9 = tpu.matmul %8, %3, %cst {dimension_numbers = #tpu.dot_dimension_numbers<[1], [0], [0], [1], [0, 0, 1, 1], [], []>} : vector<16x128xbf16>, vector<128x512xbf16>, vector<16x512xf32> -> vector<16x512xf32>
    %10 = arith.addf %6, %9 : vector<16x512xf32>
    %11 = vector.extract_strided_slice %10 {offsets = [0, 0], sizes = [16, 128], strides = [1, 1]} : vector<16x512xf32> to vector<16x128xf32>
    %12 = arith.negf %11 : vector<16x128xf32>
    %13 = math.exp %12 : vector<16x128xf32>
    %cst_7 = arith.constant 1.000000e+00 : f32
    %14 = vector.broadcast %cst_7 : f32 to vector<16x128xf32>
    %15 = arith.addf %14, %13 : vector<16x128xf32>
    %16 = arith.divf %14, %15 : vector<16x128xf32>
    %17 = vector.extract_strided_slice %10 {offsets = [0, 128], sizes = [16, 128], strides = [1, 1]} : vector<16x512xf32> to vector<16x128xf32>
    %18 = arith.negf %17 : vector<16x128xf32>
    %19 = math.exp %18 : vector<16x128xf32>
    %cst_8 = arith.constant 1.000000e+00 : f32
    %20 = vector.broadcast %cst_8 : f32 to vector<16x128xf32>
    %21 = arith.addf %20, %19 : vector<16x128xf32>
    %22 = arith.divf %20, %21 : vector<16x128xf32>
    %23 = vector.extract_strided_slice %10 {offsets = [0, 256], sizes = [16, 128], strides = [1, 1]} : vector<16x512xf32> to vector<16x128xf32>
    %24 = math.tanh %23 : vector<16x128xf32>
    %25 = vector.extract_strided_slice %10 {offsets = [0, 384], sizes = [16, 128], strides = [1, 1]} : vector<16x512xf32> to vector<16x128xf32>
    %26 = arith.negf %25 : vector<16x128xf32>
    %27 = math.exp %26 : vector<16x128xf32>
    %cst_9 = arith.constant 1.000000e+00 : f32
    %28 = vector.broadcast %cst_9 : f32 to vector<16x128xf32>
    %29 = arith.addf %28, %27 : vector<16x128xf32>
    %30 = arith.divf %28, %29 : vector<16x128xf32>
    %c0_10 = arith.constant 0 : index
    %c0_11 = arith.constant 0 : index
    %31 = vector.load %arg7[%c0_10, %c0_11] : memref<16x128xf32, #tpu.memory_space<vmem>>, vector<16x128xf32>
    %32 = arith.mulf %22, %31 : vector<16x128xf32>
    %33 = arith.mulf %16, %24 : vector<16x128xf32>
    %34 = arith.addf %32, %33 : vector<16x128xf32>
    %35 = math.tanh %34 : vector<16x128xf32>
    %36 = arith.mulf %30, %35 : vector<16x128xf32>
    %c0_12 = arith.constant 0 : index
    %c0_13 = arith.constant 0 : index
    %37 = vector.load %arg7[%c0_12, %c0_13] : memref<16x128xf32, #tpu.memory_space<vmem>>, vector<16x128xf32>
    tpu.vector_store %arg7[%c0_12, %c0_13], %34 {strides = array<i32>} : memref<16x128xf32, #tpu.memory_space<vmem>>, vector<16x128xf32>,
    %c0_14 = arith.constant 0 : index
    %c0_15 = arith.constant 0 : index
    %38 = vector.load %arg6[%c0_14, %c0_15] : memref<16x128xf32, #tpu.memory_space<vmem>>, vector<16x128xf32>
    tpu.vector_store %arg6[%c0_14, %c0_15], %36 {strides = array<i32>} : memref<16x128xf32, #tpu.memory_space<vmem>>, vector<16x128xf32>,
    %39 = arith.index_cast %c0_i32_2 : i32 to index
    %c0_16 = arith.constant 0 : index
    %c0_17 = arith.constant 0 : index
    %40 = vector.load %arg8[%39, %c0_16, %c0_17] : memref<9x16x128xf32, #tpu.memory_space<vmem>>, vector<1x16x128xf32>
    %41 = vector.shape_cast %40 : vector<1x16x128xf32> to vector<16x128xf32>
    %42 = vector.shape_cast %36 : vector<16x128xf32> to vector<1x16x128xf32>
    tpu.vector_store %arg8[%39, %c0_16, %c0_17], %42 {strides = array<i32>} : memref<9x16x128xf32, #tpu.memory_space<vmem>>, vector<1x16x128xf32>,
    %c1_i32 = arith.constant 1 : i32
    %43 = arith.index_cast %c1_i32 : i32 to index
    %c0_18 = arith.constant 0 : index
    %c0_19 = arith.constant 0 : index
    %44 = vector.load %arg1[%43, %c0_18, %c0_19] : memref<9x16x512xf32, #tpu.memory_space<vmem>>, vector<1x16x512xf32>
    %45 = vector.shape_cast %44 : vector<1x16x512xf32> to vector<16x512xf32>
    %c0_20 = arith.constant 0 : index
    %c0_21 = arith.constant 0 : index
    %46 = vector.load %arg6[%c0_20, %c0_21] : memref<16x128xf32, #tpu.memory_space<vmem>>, vector<16x128xf32>
    %47 = arith.truncf %46 : vector<16x128xf32> to vector<16x128xbf16>
    %cst_22 = arith.constant dense<0.000000e+00> : vector<16x512xf32>
    %48 = tpu.matmul %47, %3, %cst_22 {dimension_numbers = #tpu.dot_dimension_numbers<[1], [0], [0], [1], [0, 0, 1, 1], [], []>} : vector<16x128xbf16>, vector<128x512xbf16>, vector<16x512xf32> -> vector<16x512xf32>
    %49 = arith.addf %45, %48 : vector<16x512xf32>
    %50 = vector.extract_strided_slice %49 {offsets = [0, 0], sizes = [16, 128], strides = [1, 1]} : vector<16x512xf32> to vector<16x128xf32>
    %51 = arith.negf %50 : vector<16x128xf32>
    %52 = math.exp %51 : vector<16x128xf32>
    %cst_23 = arith.constant 1.000000e+00 : f32
    %53 = vector.broadcast %cst_23 : f32 to vector<16x128xf32>
    %54 = arith.addf %53, %52 : vector<16x128xf32>
    %55 = arith.divf %53, %54 : vector<16x128xf32>
    %56 = vector.extract_strided_slice %49 {offsets = [0, 128], sizes = [16, 128], strides = [1, 1]} : vector<16x512xf32> to vector<16x128xf32>
    %57 = arith.negf %56 : vector<16x128xf32>
    %58 = math.exp %57 : vector<16x128xf32>
    %cst_24 = arith.constant 1.000000e+00 : f32
    %59 = vector.broadcast %cst_24 : f32 to vector<16x128xf32>
    %60 = arith.addf %59, %58 : vector<16x128xf32>
    %61 = arith.divf %59, %60 : vector<16x128xf32>
    %62 = vector.extract_strided_slice %49 {offsets = [0, 256], sizes = [16, 128], strides = [1, 1]} : vector<16x512xf32> to vector<16x128xf32>
    %63 = math.tanh %62 : vector<16x128xf32>
    %64 = vector.extract_strided_slice %49 {offsets = [0, 384], sizes = [16, 128], strides = [1, 1]} : vector<16x512xf32> to vector<16x128xf32>
    %65 = arith.negf %64 : vector<16x128xf32>
    %66 = math.exp %65 : vector<16x128xf32>
    %cst_25 = arith.constant 1.000000e+00 : f32
    %67 = vector.broadcast %cst_25 : f32 to vector<16x128xf32>
    %68 = arith.addf %67, %66 : vector<16x128xf32>
    %69 = arith.divf %67, %68 : vector<16x128xf32>
    %c0_26 = arith.constant 0 : index
    %c0_27 = arith.constant 0 : index
    %70 = vector.load %arg7[%c0_26, %c0_27] : memref<16x128xf32, #tpu.memory_space<vmem>>, vector<16x128xf32>
    %71 = arith.mulf %61, %70 : vector<16x128xf32>
    %72 = arith.mulf %55, %63 : vector<16x128xf32>
    %73 = arith.addf %71, %72 : vector<16x128xf32>
    %74 = math.tanh %73 : vector<16x128xf32>
    %75 = arith.mulf %69, %74 : vector<16x128xf32>
    %c0_28 = arith.constant 0 : index
    %c0_29 = arith.constant 0 : index
    %76 = vector.load %arg7[%c0_28, %c0_29] : memref<16x128xf32, #tpu.memory_space<vmem>>, vector<16x128xf32>
    tpu.vector_store %arg7[%c0_28, %c0_29], %73 {strides = array<i32>} : memref<16x128xf32, #tpu.memory_space<vmem>>, vector<16x128xf32>,
    %c0_30 = arith.constant 0 : index
    %c0_31 = arith.constant 0 : index
    %77 = vector.load %arg6[%c0_30, %c0_31] : memref<16x128xf32, #tpu.memory_space<vmem>>, vector<16x128xf32>
    tpu.vector_store %arg6[%c0_30, %c0_31], %75 {strides = array<i32>} : memref<16x128xf32, #tpu.memory_space<vmem>>, vector<16x128xf32>,
    %78 = arith.index_cast %c1_i32 : i32 to index
    %c0_32 = arith.constant 0 : index
    %c0_33 = arith.constant 0 : index
    %79 = vector.load %arg8[%78, %c0_32, %c0_33] : memref<9x16x128xf32, #tpu.memory_space<vmem>>, vector<1x16x128xf32>
    %80 = vector.shape_cast %79 : vector<1x16x128xf32> to vector<16x128xf32>
    %81 = vector.shape_cast %75 : vector<16x128xf32> to vector<1x16x128xf32>
    tpu.vector_store %arg8[%78, %c0_32, %c0_33], %81 {strides = array<i32>} : memref<9x16x128xf32, #tpu.memory_space<vmem>>, vector<1x16x128xf32>,
    %c2_i32 = arith.constant 2 : i32
    %82 = arith.index_cast %c2_i32 : i32 to index
    %c0_34 = arith.constant 0 : index
    %c0_35 = arith.constant 0 : index
    %83 = vector.load %arg1[%82, %c0_34, %c0_35] : memref<9x16x512xf32, #tpu.memory_space<vmem>>, vector<1x16x512xf32>
    %84 = vector.shape_cast %83 : vector<1x16x512xf32> to vector<16x512xf32>
    %c0_36 = arith.constant 0 : index
    %c0_37 = arith.constant 0 : index
    %85 = vector.load %arg6[%c0_36, %c0_37] : memref<16x128xf32, #tpu.memory_space<vmem>>, vector<16x128xf32>
    %86 = arith.truncf %85 : vector<16x128xf32> to vector<16x128xbf16>
    %cst_38 = arith.constant dense<0.000000e+00> : vector<16x512xf32>
    %87 = tpu.matmul %86, %3, %cst_38 {dimension_numbers = #tpu.dot_dimension_numbers<[1], [0], [0], [1], [0, 0, 1, 1], [], []>} : vector<16x128xbf16>, vector<128x512xbf16>, vector<16x512xf32> -> vector<16x512xf32>
    %88 = arith.addf %84, %87 : vector<16x512xf32>
    %89 = vector.extract_strided_slice %88 {offsets = [0, 0], sizes = [16, 128], strides = [1, 1]} : vector<16x512xf32> to vector<16x128xf32>
    %90 = arith.negf %89 : vector<16x128xf32>
    %91 = math.exp %90 : vector<16x128xf32>
    %cst_39 = arith.constant 1.000000e+00 : f32
    %92 = vector.broadcast %cst_39 : f32 to vector<16x128xf32>
    %93 = arith.addf %92, %91 : vector<16x128xf32>
    %94 = arith.divf %92, %93 : vector<16x128xf32>
    %95 = vector.extract_strided_slice %88 {offsets = [0, 128], sizes = [16, 128], strides = [1, 1]} : vector<16x512xf32> to vector<16x128xf32>
    %96 = arith.negf %95 : vector<16x128xf32>
    %97 = math.exp %96 : vector<16x128xf32>
    %cst_40 = arith.constant 1.000000e+00 : f32
    %98 = vector.broadcast %cst_40 : f32 to vector<16x128xf32>
    %99 = arith.addf %98, %97 : vector<16x128xf32>
    %100 = arith.divf %98, %99 : vector<16x128xf32>
    %101 = vector.extract_strided_slice %88 {offsets = [0, 256], sizes = [16, 128], strides = [1, 1]} : vector<16x512xf32> to vector<16x128xf32>
    %102 = math.tanh %101 : vector<16x128xf32>
    %103 = vector.extract_strided_slice %88 {offsets = [0, 384], sizes = [16, 128], strides = [1, 1]} : vector<16x512xf32> to vector<16x128xf32>
    %104 = arith.negf %103 : vector<16x128xf32>
    %105 = math.exp %104 : vector<16x128xf32>
    %cst_41 = arith.constant 1.000000e+00 : f32
    %106 = vector.broadcast %cst_41 : f32 to vector<16x128xf32>
    %107 = arith.addf %106, %105 : vector<16x128xf32>
    %108 = arith.divf %106, %107 : vector<16x128xf32>
    %c0_42 = arith.constant 0 : index
    %c0_43 = arith.constant 0 : index
    %109 = vector.load %arg7[%c0_42, %c0_43] : memref<16x128xf32, #tpu.memory_space<vmem>>, vector<16x128xf32>
    %110 = arith.mulf %100, %109 : vector<16x128xf32>
    %111 = arith.mulf %94, %102 : vector<16x128xf32>
    %112 = arith.addf %110, %111 : vector<16x128xf32>
    %113 = math.tanh %112 : vector<16x128xf32>
    %114 = arith.mulf %108, %113 : vector<16x128xf32>
    %c0_44 = arith.constant 0 : index
    %c0_45 = arith.constant 0 : index
    %115 = vector.load %arg7[%c0_44, %c0_45] : memref<16x128xf32, #tpu.memory_space<vmem>>, vector<16x128xf32>
    tpu.vector_store %arg7[%c0_44, %c0_45], %112 {strides = array<i32>} : memref<16x128xf32, #tpu.memory_space<vmem>>, vector<16x128xf32>,
    %c0_46 = arith.constant 0 : index
    %c0_47 = arith.constant 0 : index
    %116 = vector.load %arg6[%c0_46, %c0_47] : memref<16x128xf32, #tpu.memory_space<vmem>>, vector<16x128xf32>
    tpu.vector_store %arg6[%c0_46, %c0_47], %114 {strides = array<i32>} : memref<16x128xf32, #tpu.memory_space<vmem>>, vector<16x128xf32>,
    %117 = arith.index_cast %c2_i32 : i32 to index
    %c0_48 = arith.constant 0 : index
    %c0_49 = arith.constant 0 : index
    %118 = vector.load %arg8[%117, %c0_48, %c0_49] : memref<9x16x128xf32, #tpu.memory_space<vmem>>, vector<1x16x128xf32>
    %119 = vector.shape_cast %118 : vector<1x16x128xf32> to vector<16x128xf32>
    %120 = vector.shape_cast %114 : vector<16x128xf32> to vector<1x16x128xf32>
    tpu.vector_store %arg8[%117, %c0_48, %c0_49], %120 {strides = array<i32>} : memref<9x16x128xf32, #tpu.memory_space<vmem>>, vector<1x16x128xf32>,
    %c3_i32 = arith.constant 3 : i32
    %121 = arith.index_cast %c3_i32 : i32 to index
    %c0_50 = arith.constant 0 : index
    %c0_51 = arith.constant 0 : index
    %122 = vector.load %arg1[%121, %c0_50, %c0_51] : memref<9x16x512xf32, #tpu.memory_space<vmem>>, vector<1x16x512xf32>
    %123 = vector.shape_cast %122 : vector<1x16x512xf32> to vector<16x512xf32>
    %c0_52 = arith.constant 0 : index
    %c0_53 = arith.constant 0 : index
    %124 = vector.load %arg6[%c0_52, %c0_53] : memref<16x128xf32, #tpu.memory_space<vmem>>, vector<16x128xf32>
    %125 = arith.truncf %124 : vector<16x128xf32> to vector<16x128xbf16>
    %cst_54 = arith.constant dense<0.000000e+00> : vector<16x512xf32>
    %126 = tpu.matmul %125, %3, %cst_54 {dimension_numbers = #tpu.dot_dimension_numbers<[1], [0], [0], [1], [0, 0, 1, 1], [], []>} : vector<16x128xbf16>, vector<128x512xbf16>, vector<16x512xf32> -> vector<16x512xf32>
    %127 = arith.addf %123, %126 : vector<16x512xf32>
    %128 = vector.extract_strided_slice %127 {offsets = [0, 0], sizes = [16, 128], strides = [1, 1]} : vector<16x512xf32> to vector<16x128xf32>
    %129 = arith.negf %128 : vector<16x128xf32>
    %130 = math.exp %129 : vector<16x128xf32>
    %cst_55 = arith.constant 1.000000e+00 : f32
    %131 = vector.broadcast %cst_55 : f32 to vector<16x128xf32>
    %132 = arith.addf %131, %130 : vector<16x128xf32>
    %133 = arith.divf %131, %132 : vector<16x128xf32>
    %134 = vector.extract_strided_slice %127 {offsets = [0, 128], sizes = [16, 128], strides = [1, 1]} : vector<16x512xf32> to vector<16x128xf32>
    %135 = arith.negf %134 : vector<16x128xf32>
    %136 = math.exp %135 : vector<16x128xf32>
    %cst_56 = arith.constant 1.000000e+00 : f32
    %137 = vector.broadcast %cst_56 : f32 to vector<16x128xf32>
    %138 = arith.addf %137, %136 : vector<16x128xf32>
    %139 = arith.divf %137, %138 : vector<16x128xf32>
    %140 = vector.extract_strided_slice %127 {offsets = [0, 256], sizes = [16, 128], strides = [1, 1]} : vector<16x512xf32> to vector<16x128xf32>
    %141 = math.tanh %140 : vector<16x128xf32>
    %142 = vector.extract_strided_slice %127 {offsets = [0, 384], sizes = [16, 128], strides = [1, 1]} : vector<16x512xf32> to vector<16x128xf32>
    %143 = arith.negf %142 : vector<16x128xf32>
    %144 = math.exp %143 : vector<16x128xf32>
    %cst_57 = arith.constant 1.000000e+00 : f32
    %145 = vector.broadcast %cst_57 : f32 to vector<16x128xf32>
    %146 = arith.addf %145, %144 : vector<16x128xf32>
    %147 = arith.divf %145, %146 : vector<16x128xf32>
    %c0_58 = arith.constant 0 : index
    %c0_59 = arith.constant 0 : index
    %148 = vector.load %arg7[%c0_58, %c0_59] : memref<16x128xf32, #tpu.memory_space<vmem>>, vector<16x128xf32>
    %149 = arith.mulf %139, %148 : vector<16x128xf32>
    %150 = arith.mulf %133, %141 : vector<16x128xf32>
    %151 = arith.addf %149, %150 : vector<16x128xf32>
    %152 = math.tanh %151 : vector<16x128xf32>
    %153 = arith.mulf %147, %152 : vector<16x128xf32>
    %c0_60 = arith.constant 0 : index
    %c0_61 = arith.constant 0 : index
    %154 = vector.load %arg7[%c0_60, %c0_61] : memref<16x128xf32, #tpu.memory_space<vmem>>, vector<16x128xf32>
    tpu.vector_store %arg7[%c0_60, %c0_61], %151 {strides = array<i32>} : memref<16x128xf32, #tpu.memory_space<vmem>>, vector<16x128xf32>,
    %c0_62 = arith.constant 0 : index
    %c0_63 = arith.constant 0 : index
    %155 = vector.load %arg6[%c0_62, %c0_63] : memref<16x128xf32, #tpu.memory_space<vmem>>, vector<16x128xf32>
    tpu.vector_store %arg6[%c0_62, %c0_63], %153 {strides = array<i32>} : memref<16x128xf32, #tpu.memory_space<vmem>>, vector<16x128xf32>,
    %156 = arith.index_cast %c3_i32 : i32 to index
    %c0_64 = arith.constant 0 : index
    %c0_65 = arith.constant 0 : index
    %157 = vector.load %arg8[%156, %c0_64, %c0_65] : memref<9x16x128xf32, #tpu.memory_space<vmem>>, vector<1x16x128xf32>
    %158 = vector.shape_cast %157 : vector<1x16x128xf32> to vector<16x128xf32>
    %159 = vector.shape_cast %153 : vector<16x128xf32> to vector<1x16x128xf32>
    tpu.vector_store %arg8[%156, %c0_64, %c0_65], %159 {strides = array<i32>} : memref<9x16x128xf32, #tpu.memory_space<vmem>>, vector<1x16x128xf32>,
    %c4_i32 = arith.constant 4 : i32
    %160 = arith.index_cast %c4_i32 : i32 to index
    %c0_66 = arith.constant 0 : index
    %c0_67 = arith.constant 0 : index
    %161 = vector.load %arg1[%160, %c0_66, %c0_67] : memref<9x16x512xf32, #tpu.memory_space<vmem>>, vector<1x16x512xf32>
    %162 = vector.shape_cast %161 : vector<1x16x512xf32> to vector<16x512xf32>
    %c0_68 = arith.constant 0 : index
    %c0_69 = arith.constant 0 : index
    %163 = vector.load %arg6[%c0_68, %c0_69] : memref<16x128xf32, #tpu.memory_space<vmem>>, vector<16x128xf32>
    %164 = arith.truncf %163 : vector<16x128xf32> to vector<16x128xbf16>
    %cst_70 = arith.constant dense<0.000000e+00> : vector<16x512xf32>
    %165 = tpu.matmul %164, %3, %cst_70 {dimension_numbers = #tpu.dot_dimension_numbers<[1], [0], [0], [1], [0, 0, 1, 1], [], []>} : vector<16x128xbf16>, vector<128x512xbf16>, vector<16x512xf32> -> vector<16x512xf32>
    %166 = arith.addf %162, %165 : vector<16x512xf32>
    %167 = vector.extract_strided_slice %166 {offsets = [0, 0], sizes = [16, 128], strides = [1, 1]} : vector<16x512xf32> to vector<16x128xf32>
    %168 = arith.negf %167 : vector<16x128xf32>
    %169 = math.exp %168 : vector<16x128xf32>
    %cst_71 = arith.constant 1.000000e+00 : f32
    %170 = vector.broadcast %cst_71 : f32 to vector<16x128xf32>
    %171 = arith.addf %170, %169 : vector<16x128xf32>
    %172 = arith.divf %170, %171 : vector<16x128xf32>
    %173 = vector.extract_strided_slice %166 {offsets = [0, 128], sizes = [16, 128], strides = [1, 1]} : vector<16x512xf32> to vector<16x128xf32>
    %174 = arith.negf %173 : vector<16x128xf32>
    %175 = math.exp %174 : vector<16x128xf32>
    %cst_72 = arith.constant 1.000000e+00 : f32
    %176 = vector.broadcast %cst_72 : f32 to vector<16x128xf32>
    %177 = arith.addf %176, %175 : vector<16x128xf32>
    %178 = arith.divf %176, %177 : vector<16x128xf32>
    %179 = vector.extract_strided_slice %166 {offsets = [0, 256], sizes = [16, 128], strides = [1, 1]} : vector<16x512xf32> to vector<16x128xf32>
    %180 = math.tanh %179 : vector<16x128xf32>
    %181 = vector.extract_strided_slice %166 {offsets = [0, 384], sizes = [16, 128], strides = [1, 1]} : vector<16x512xf32> to vector<16x128xf32>
    %182 = arith.negf %181 : vector<16x128xf32>
    %183 = math.exp %182 : vector<16x128xf32>
    %cst_73 = arith.constant 1.000000e+00 : f32
    %184 = vector.broadcast %cst_73 : f32 to vector<16x128xf32>
    %185 = arith.addf %184, %183 : vector<16x128xf32>
    %186 = arith.divf %184, %185 : vector<16x128xf32>
    %c0_74 = arith.constant 0 : index
    %c0_75 = arith.constant 0 : index
    %187 = vector.load %arg7[%c0_74, %c0_75] : memref<16x128xf32, #tpu.memory_space<vmem>>, vector<16x128xf32>
    %188 = arith.mulf %178, %187 : vector<16x128xf32>
    %189 = arith.mulf %172, %180 : vector<16x128xf32>
    %190 = arith.addf %188, %189 : vector<16x128xf32>
    %191 = math.tanh %190 : vector<16x128xf32>
    %192 = arith.mulf %186, %191 : vector<16x128xf32>
    %c0_76 = arith.constant 0 : index
    %c0_77 = arith.constant 0 : index
    %193 = vector.load %arg7[%c0_76, %c0_77] : memref<16x128xf32, #tpu.memory_space<vmem>>, vector<16x128xf32>
    tpu.vector_store %arg7[%c0_76, %c0_77], %190 {strides = array<i32>} : memref<16x128xf32, #tpu.memory_space<vmem>>, vector<16x128xf32>,
    %c0_78 = arith.constant 0 : index
    %c0_79 = arith.constant 0 : index
    %194 = vector.load %arg6[%c0_78, %c0_79] : memref<16x128xf32, #tpu.memory_space<vmem>>, vector<16x128xf32>
    tpu.vector_store %arg6[%c0_78, %c0_79], %192 {strides = array<i32>} : memref<16x128xf32, #tpu.memory_space<vmem>>, vector<16x128xf32>,
    %195 = arith.index_cast %c4_i32 : i32 to index
    %c0_80 = arith.constant 0 : index
    %c0_81 = arith.constant 0 : index
    %196 = vector.load %arg8[%195, %c0_80, %c0_81] : memref<9x16x128xf32, #tpu.memory_space<vmem>>, vector<1x16x128xf32>
    %197 = vector.shape_cast %196 : vector<1x16x128xf32> to vector<16x128xf32>
    %198 = vector.shape_cast %192 : vector<16x128xf32> to vector<1x16x128xf32>
    tpu.vector_store %arg8[%195, %c0_80, %c0_81], %198 {strides = array<i32>} : memref<9x16x128xf32, #tpu.memory_space<vmem>>, vector<1x16x128xf32>,
    %c5_i32 = arith.constant 5 : i32
    %199 = arith.index_cast %c5_i32 : i32 to index
    %c0_82 = arith.constant 0 : index
    %c0_83 = arith.constant 0 : index
    %200 = vector.load %arg1[%199, %c0_82, %c0_83] : memref<9x16x512xf32, #tpu.memory_space<vmem>>, vector<1x16x512xf32>
    %201 = vector.shape_cast %200 : vector<1x16x512xf32> to vector<16x512xf32>
    %c0_84 = arith.constant 0 : index
    %c0_85 = arith.constant 0 : index
    %202 = vector.load %arg6[%c0_84, %c0_85] : memref<16x128xf32, #tpu.memory_space<vmem>>, vector<16x128xf32>
    %203 = arith.truncf %202 : vector<16x128xf32> to vector<16x128xbf16>
    %cst_86 = arith.constant dense<0.000000e+00> : vector<16x512xf32>
    %204 = tpu.matmul %203, %3, %cst_86 {dimension_numbers = #tpu.dot_dimension_numbers<[1], [0], [0], [1], [0, 0, 1, 1], [], []>} : vector<16x128xbf16>, vector<128x512xbf16>, vector<16x512xf32> -> vector<16x512xf32>
    %205 = arith.addf %201, %204 : vector<16x512xf32>
    %206 = vector.extract_strided_slice %205 {offsets = [0, 0], sizes = [16, 128], strides = [1, 1]} : vector<16x512xf32> to vector<16x128xf32>
    %207 = arith.negf %206 : vector<16x128xf32>
    %208 = math.exp %207 : vector<16x128xf32>
    %cst_87 = arith.constant 1.000000e+00 : f32
    %209 = vector.broadcast %cst_87 : f32 to vector<16x128xf32>
    %210 = arith.addf %209, %208 : vector<16x128xf32>
    %211 = arith.divf %209, %210 : vector<16x128xf32>
    %212 = vector.extract_strided_slice %205 {offsets = [0, 128], sizes = [16, 128], strides = [1, 1]} : vector<16x512xf32> to vector<16x128xf32>
    %213 = arith.negf %212 : vector<16x128xf32>
    %214 = math.exp %213 : vector<16x128xf32>
    %cst_88 = arith.constant 1.000000e+00 : f32
    %215 = vector.broadcast %cst_88 : f32 to vector<16x128xf32>
    %216 = arith.addf %215, %214 : vector<16x128xf32>
    %217 = arith.divf %215, %216 : vector<16x128xf32>
    %218 = vector.extract_strided_slice %205 {offsets = [0, 256], sizes = [16, 128], strides = [1, 1]} : vector<16x512xf32> to vector<16x128xf32>
    %219 = math.tanh %218 : vector<16x128xf32>
    %220 = vector.extract_strided_slice %205 {offsets = [0, 384], sizes = [16, 128], strides = [1, 1]} : vector<16x512xf32> to vector<16x128xf32>
    %221 = arith.negf %220 : vector<16x128xf32>
    %222 = math.exp %221 : vector<16x128xf32>
    %cst_89 = arith.constant 1.000000e+00 : f32
    %223 = vector.broadcast %cst_89 : f32 to vector<16x128xf32>
    %224 = arith.addf %223, %222 : vector<16x128xf32>
    %225 = arith.divf %223, %224 : vector<16x128xf32>
    %c0_90 = arith.constant 0 : index
    %c0_91 = arith.constant 0 : index
    %226 = vector.load %arg7[%c0_90, %c0_91] : memref<16x128xf32, #tpu.memory_space<vmem>>, vector<16x128xf32>
    %227 = arith.mulf %217, %226 : vector<16x128xf32>
    %228 = arith.mulf %211, %219 : vector<16x128xf32>
    %229 = arith.addf %227, %228 : vector<16x128xf32>
    %230 = math.tanh %229 : vector<16x128xf32>
    %231 = arith.mulf %225, %230 : vector<16x128xf32>
    %c0_92 = arith.constant 0 : index
    %c0_93 = arith.constant 0 : index
    %232 = vector.load %arg7[%c0_92, %c0_93] : memref<16x128xf32, #tpu.memory_space<vmem>>, vector<16x128xf32>
    tpu.vector_store %arg7[%c0_92, %c0_93], %229 {strides = array<i32>} : memref<16x128xf32, #tpu.memory_space<vmem>>, vector<16x128xf32>,
    %c0_94 = arith.constant 0 : index
    %c0_95 = arith.constant 0 : index
    %233 = vector.load %arg6[%c0_94, %c0_95] : memref<16x128xf32, #tpu.memory_space<vmem>>, vector<16x128xf32>
    tpu.vector_store %arg6[%c0_94, %c0_95], %231 {strides = array<i32>} : memref<16x128xf32, #tpu.memory_space<vmem>>, vector<16x128xf32>,
    %234 = arith.index_cast %c5_i32 : i32 to index
    %c0_96 = arith.constant 0 : index
    %c0_97 = arith.constant 0 : index
    %235 = vector.load %arg8[%234, %c0_96, %c0_97] : memref<9x16x128xf32, #tpu.memory_space<vmem>>, vector<1x16x128xf32>
    %236 = vector.shape_cast %235 : vector<1x16x128xf32> to vector<16x128xf32>
    %237 = vector.shape_cast %231 : vector<16x128xf32> to vector<1x16x128xf32>
    tpu.vector_store %arg8[%234, %c0_96, %c0_97], %237 {strides = array<i32>} : memref<9x16x128xf32, #tpu.memory_space<vmem>>, vector<1x16x128xf32>,
    %c6_i32 = arith.constant 6 : i32
    %238 = arith.index_cast %c6_i32 : i32 to index
    %c0_98 = arith.constant 0 : index
    %c0_99 = arith.constant 0 : index
    %239 = vector.load %arg1[%238, %c0_98, %c0_99] : memref<9x16x512xf32, #tpu.memory_space<vmem>>, vector<1x16x512xf32>
    %240 = vector.shape_cast %239 : vector<1x16x512xf32> to vector<16x512xf32>
    %c0_100 = arith.constant 0 : index
    %c0_101 = arith.constant 0 : index
    %241 = vector.load %arg6[%c0_100, %c0_101] : memref<16x128xf32, #tpu.memory_space<vmem>>, vector<16x128xf32>
    %242 = arith.truncf %241 : vector<16x128xf32> to vector<16x128xbf16>
    %cst_102 = arith.constant dense<0.000000e+00> : vector<16x512xf32>
    %243 = tpu.matmul %242, %3, %cst_102 {dimension_numbers = #tpu.dot_dimension_numbers<[1], [0], [0], [1], [0, 0, 1, 1], [], []>} : vector<16x128xbf16>, vector<128x512xbf16>, vector<16x512xf32> -> vector<16x512xf32>
    %244 = arith.addf %240, %243 : vector<16x512xf32>
    %245 = vector.extract_strided_slice %244 {offsets = [0, 0], sizes = [16, 128], strides = [1, 1]} : vector<16x512xf32> to vector<16x128xf32>
    %246 = arith.negf %245 : vector<16x128xf32>
    %247 = math.exp %246 : vector<16x128xf32>
    %cst_103 = arith.constant 1.000000e+00 : f32
    %248 = vector.broadcast %cst_103 : f32 to vector<16x128xf32>
    %249 = arith.addf %248, %247 : vector<16x128xf32>
    %250 = arith.divf %248, %249 : vector<16x128xf32>
    %251 = vector.extract_strided_slice %244 {offsets = [0, 128], sizes = [16, 128], strides = [1, 1]} : vector<16x512xf32> to vector<16x128xf32>
    %252 = arith.negf %251 : vector<16x128xf32>
    %253 = math.exp %252 : vector<16x128xf32>
    %cst_104 = arith.constant 1.000000e+00 : f32
    %254 = vector.broadcast %cst_104 : f32 to vector<16x128xf32>
    %255 = arith.addf %254, %253 : vector<16x128xf32>
    %256 = arith.divf %254, %255 : vector<16x128xf32>
    %257 = vector.extract_strided_slice %244 {offsets = [0, 256], sizes = [16, 128], strides = [1, 1]} : vector<16x512xf32> to vector<16x128xf32>
    %258 = math.tanh %257 : vector<16x128xf32>
    %259 = vector.extract_strided_slice %244 {offsets = [0, 384], sizes = [16, 128], strides = [1, 1]} : vector<16x512xf32> to vector<16x128xf32>
    %260 = arith.negf %259 : vector<16x128xf32>
    %261 = math.exp %260 : vector<16x128xf32>
    %cst_105 = arith.constant 1.000000e+00 : f32
    %262 = vector.broadcast %cst_105 : f32 to vector<16x128xf32>
    %263 = arith.addf %262, %261 : vector<16x128xf32>
    %264 = arith.divf %262, %263 : vector<16x128xf32>
    %c0_106 = arith.constant 0 : index
    %c0_107 = arith.constant 0 : index
    %265 = vector.load %arg7[%c0_106, %c0_107] : memref<16x128xf32, #tpu.memory_space<vmem>>, vector<16x128xf32>
    %266 = arith.mulf %256, %265 : vector<16x128xf32>
    %267 = arith.mulf %250, %258 : vector<16x128xf32>
    %268 = arith.addf %266, %267 : vector<16x128xf32>
    %269 = math.tanh %268 : vector<16x128xf32>
    %270 = arith.mulf %264, %269 : vector<16x128xf32>
    %c0_108 = arith.constant 0 : index
    %c0_109 = arith.constant 0 : index
    %271 = vector.load %arg7[%c0_108, %c0_109] : memref<16x128xf32, #tpu.memory_space<vmem>>, vector<16x128xf32>
    tpu.vector_store %arg7[%c0_108, %c0_109], %268 {strides = array<i32>} : memref<16x128xf32, #tpu.memory_space<vmem>>, vector<16x128xf32>,
    %c0_110 = arith.constant 0 : index
    %c0_111 = arith.constant 0 : index
    %272 = vector.load %arg6[%c0_110, %c0_111] : memref<16x128xf32, #tpu.memory_space<vmem>>, vector<16x128xf32>
    tpu.vector_store %arg6[%c0_110, %c0_111], %270 {strides = array<i32>} : memref<16x128xf32, #tpu.memory_space<vmem>>, vector<16x128xf32>,
    %273 = arith.index_cast %c6_i32 : i32 to index
    %c0_112 = arith.constant 0 : index
    %c0_113 = arith.constant 0 : index
    %274 = vector.load %arg8[%273, %c0_112, %c0_113] : memref<9x16x128xf32, #tpu.memory_space<vmem>>, vector<1x16x128xf32>
    %275 = vector.shape_cast %274 : vector<1x16x128xf32> to vector<16x128xf32>
    %276 = vector.shape_cast %270 : vector<16x128xf32> to vector<1x16x128xf32>
    tpu.vector_store %arg8[%273, %c0_112, %c0_113], %276 {strides = array<i32>} : memref<9x16x128xf32, #tpu.memory_space<vmem>>, vector<1x16x128xf32>,
    %c7_i32 = arith.constant 7 : i32
    %277 = arith.index_cast %c7_i32 : i32 to index
    %c0_114 = arith.constant 0 : index
    %c0_115 = arith.constant 0 : index
    %278 = vector.load %arg1[%277, %c0_114, %c0_115] : memref<9x16x512xf32, #tpu.memory_space<vmem>>, vector<1x16x512xf32>
    %279 = vector.shape_cast %278 : vector<1x16x512xf32> to vector<16x512xf32>
    %c0_116 = arith.constant 0 : index
    %c0_117 = arith.constant 0 : index
    %280 = vector.load %arg6[%c0_116, %c0_117] : memref<16x128xf32, #tpu.memory_space<vmem>>, vector<16x128xf32>
    %281 = arith.truncf %280 : vector<16x128xf32> to vector<16x128xbf16>
    %cst_118 = arith.constant dense<0.000000e+00> : vector<16x512xf32>
    %282 = tpu.matmul %281, %3, %cst_118 {dimension_numbers = #tpu.dot_dimension_numbers<[1], [0], [0], [1], [0, 0, 1, 1], [], []>} : vector<16x128xbf16>, vector<128x512xbf16>, vector<16x512xf32> -> vector<16x512xf32>
    %283 = arith.addf %279, %282 : vector<16x512xf32>
    %284 = vector.extract_strided_slice %283 {offsets = [0, 0], sizes = [16, 128], strides = [1, 1]} : vector<16x512xf32> to vector<16x128xf32>
    %285 = arith.negf %284 : vector<16x128xf32>
    %286 = math.exp %285 : vector<16x128xf32>
    %cst_119 = arith.constant 1.000000e+00 : f32
    %287 = vector.broadcast %cst_119 : f32 to vector<16x128xf32>
    %288 = arith.addf %287, %286 : vector<16x128xf32>
    %289 = arith.divf %287, %288 : vector<16x128xf32>
    %290 = vector.extract_strided_slice %283 {offsets = [0, 128], sizes = [16, 128], strides = [1, 1]} : vector<16x512xf32> to vector<16x128xf32>
    %291 = arith.negf %290 : vector<16x128xf32>
    %292 = math.exp %291 : vector<16x128xf32>
    %cst_120 = arith.constant 1.000000e+00 : f32
    %293 = vector.broadcast %cst_120 : f32 to vector<16x128xf32>
    %294 = arith.addf %293, %292 : vector<16x128xf32>
    %295 = arith.divf %293, %294 : vector<16x128xf32>
    %296 = vector.extract_strided_slice %283 {offsets = [0, 256], sizes = [16, 128], strides = [1, 1]} : vector<16x512xf32> to vector<16x128xf32>
    %297 = math.tanh %296 : vector<16x128xf32>
    %298 = vector.extract_strided_slice %283 {offsets = [0, 384], sizes = [16, 128], strides = [1, 1]} : vector<16x512xf32> to vector<16x128xf32>
    %299 = arith.negf %298 : vector<16x128xf32>
    %300 = math.exp %299 : vector<16x128xf32>
    %cst_121 = arith.constant 1.000000e+00 : f32
    %301 = vector.broadcast %cst_121 : f32 to vector<16x128xf32>
    %302 = arith.addf %301, %300 : vector<16x128xf32>
    %303 = arith.divf %301, %302 : vector<16x128xf32>
    %c0_122 = arith.constant 0 : index
    %c0_123 = arith.constant 0 : index
    %304 = vector.load %arg7[%c0_122, %c0_123] : memref<16x128xf32, #tpu.memory_space<vmem>>, vector<16x128xf32>
    %305 = arith.mulf %295, %304 : vector<16x128xf32>
    %306 = arith.mulf %289, %297 : vector<16x128xf32>
    %307 = arith.addf %305, %306 : vector<16x128xf32>
    %308 = math.tanh %307 : vector<16x128xf32>
    %309 = arith.mulf %303, %308 : vector<16x128xf32>
    %c0_124 = arith.constant 0 : index
    %c0_125 = arith.constant 0 : index
    %310 = vector.load %arg7[%c0_124, %c0_125] : memref<16x128xf32, #tpu.memory_space<vmem>>, vector<16x128xf32>
    tpu.vector_store %arg7[%c0_124, %c0_125], %307 {strides = array<i32>} : memref<16x128xf32, #tpu.memory_space<vmem>>, vector<16x128xf32>,
    %c0_126 = arith.constant 0 : index
    %c0_127 = arith.constant 0 : index
    %311 = vector.load %arg6[%c0_126, %c0_127] : memref<16x128xf32, #tpu.memory_space<vmem>>, vector<16x128xf32>
    tpu.vector_store %arg6[%c0_126, %c0_127], %309 {strides = array<i32>} : memref<16x128xf32, #tpu.memory_space<vmem>>, vector<16x128xf32>,
    %312 = arith.index_cast %c7_i32 : i32 to index
    %c0_128 = arith.constant 0 : index
    %c0_129 = arith.constant 0 : index
    %313 = vector.load %arg8[%312, %c0_128, %c0_129] : memref<9x16x128xf32, #tpu.memory_space<vmem>>, vector<1x16x128xf32>
    %314 = vector.shape_cast %313 : vector<1x16x128xf32> to vector<16x128xf32>
    %315 = vector.shape_cast %309 : vector<16x128xf32> to vector<1x16x128xf32>
    tpu.vector_store %arg8[%312, %c0_128, %c0_129], %315 {strides = array<i32>} : memref<9x16x128xf32, #tpu.memory_space<vmem>>, vector<1x16x128xf32>,
    %c8_i32 = arith.constant 8 : i32
    %316 = arith.index_cast %c8_i32 : i32 to index
    %c0_130 = arith.constant 0 : index
    %c0_131 = arith.constant 0 : index
    %317 = vector.load %arg1[%316, %c0_130, %c0_131] : memref<9x16x512xf32, #tpu.memory_space<vmem>>, vector<1x16x512xf32>
    %318 = vector.shape_cast %317 : vector<1x16x512xf32> to vector<16x512xf32>
    %c0_132 = arith.constant 0 : index
    %c0_133 = arith.constant 0 : index
    %319 = vector.load %arg6[%c0_132, %c0_133] : memref<16x128xf32, #tpu.memory_space<vmem>>, vector<16x128xf32>
    %320 = arith.truncf %319 : vector<16x128xf32> to vector<16x128xbf16>
    %cst_134 = arith.constant dense<0.000000e+00> : vector<16x512xf32>
    %321 = tpu.matmul %320, %3, %cst_134 {dimension_numbers = #tpu.dot_dimension_numbers<[1], [0], [0], [1], [0, 0, 1, 1], [], []>} : vector<16x128xbf16>, vector<128x512xbf16>, vector<16x512xf32> -> vector<16x512xf32>
    %322 = arith.addf %318, %321 : vector<16x512xf32>
    %323 = vector.extract_strided_slice %322 {offsets = [0, 0], sizes = [16, 128], strides = [1, 1]} : vector<16x512xf32> to vector<16x128xf32>
    %324 = arith.negf %323 : vector<16x128xf32>
    %325 = math.exp %324 : vector<16x128xf32>
    %cst_135 = arith.constant 1.000000e+00 : f32
    %326 = vector.broadcast %cst_135 : f32 to vector<16x128xf32>
    %327 = arith.addf %326, %325 : vector<16x128xf32>
    %328 = arith.divf %326, %327 : vector<16x128xf32>
    %329 = vector.extract_strided_slice %322 {offsets = [0, 128], sizes = [16, 128], strides = [1, 1]} : vector<16x512xf32> to vector<16x128xf32>
    %330 = arith.negf %329 : vector<16x128xf32>
    %331 = math.exp %330 : vector<16x128xf32>
    %cst_136 = arith.constant 1.000000e+00 : f32
    %332 = vector.broadcast %cst_136 : f32 to vector<16x128xf32>
    %333 = arith.addf %332, %331 : vector<16x128xf32>
    %334 = arith.divf %332, %333 : vector<16x128xf32>
    %335 = vector.extract_strided_slice %322 {offsets = [0, 256], sizes = [16, 128], strides = [1, 1]} : vector<16x512xf32> to vector<16x128xf32>
    %336 = math.tanh %335 : vector<16x128xf32>
    %337 = vector.extract_strided_slice %322 {offsets = [0, 384], sizes = [16, 128], strides = [1, 1]} : vector<16x512xf32> to vector<16x128xf32>
    %338 = arith.negf %337 : vector<16x128xf32>
    %339 = math.exp %338 : vector<16x128xf32>
    %cst_137 = arith.constant 1.000000e+00 : f32
    %340 = vector.broadcast %cst_137 : f32 to vector<16x128xf32>
    %341 = arith.addf %340, %339 : vector<16x128xf32>
    %342 = arith.divf %340, %341 : vector<16x128xf32>
    %c0_138 = arith.constant 0 : index
    %c0_139 = arith.constant 0 : index
    %343 = vector.load %arg7[%c0_138, %c0_139] : memref<16x128xf32, #tpu.memory_space<vmem>>, vector<16x128xf32>
    %344 = arith.mulf %334, %343 : vector<16x128xf32>
    %345 = arith.mulf %328, %336 : vector<16x128xf32>
    %346 = arith.addf %344, %345 : vector<16x128xf32>
    %347 = math.tanh %346 : vector<16x128xf32>
    %348 = arith.mulf %342, %347 : vector<16x128xf32>
    %c0_140 = arith.constant 0 : index
    %c0_141 = arith.constant 0 : index
    %349 = vector.load %arg7[%c0_140, %c0_141] : memref<16x128xf32, #tpu.memory_space<vmem>>, vector<16x128xf32>
    tpu.vector_store %arg7[%c0_140, %c0_141], %346 {strides = array<i32>} : memref<16x128xf32, #tpu.memory_space<vmem>>, vector<16x128xf32>,
    %c0_142 = arith.constant 0 : index
    %c0_143 = arith.constant 0 : index
    %350 = vector.load %arg6[%c0_142, %c0_143] : memref<16x128xf32, #tpu.memory_space<vmem>>, vector<16x128xf32>
    tpu.vector_store %arg6[%c0_142, %c0_143], %348 {strides = array<i32>} : memref<16x128xf32, #tpu.memory_space<vmem>>, vector<16x128xf32>,
    %351 = arith.index_cast %c8_i32 : i32 to index
    %c0_144 = arith.constant 0 : index
    %c0_145 = arith.constant 0 : index
    %352 = vector.load %arg8[%351, %c0_144, %c0_145] : memref<9x16x128xf32, #tpu.memory_space<vmem>>, vector<1x16x128xf32>
    %353 = vector.shape_cast %352 : vector<1x16x128xf32> to vector<16x128xf32>
    %354 = vector.shape_cast %348 : vector<16x128xf32> to vector<1x16x128xf32>
    tpu.vector_store %arg8[%351, %c0_144, %c0_145], %354 {strides = array<i32>} : memref<9x16x128xf32, #tpu.memory_space<vmem>>, vector<1x16x128xf32>,
    %c9_i32 = arith.constant 9 : i32
    %c0_146 = arith.constant 0 : index
    %c0_147 = arith.constant 0 : index
    %c0_148 = arith.constant 0 : index
    %355 = vector.load %arg8[%c0_146, %c0_147, %c0_148] : memref<9x16x128xf32, #tpu.memory_space<vmem>>, vector<9x16x128xf32>
    %356 = vector.shape_cast %355 : vector<9x16x128xf32> to vector<144x128xf32>
    %357 = arith.truncf %356 : vector<144x128xf32> to vector<144x128xbf16>
    %c0_149 = arith.constant 0 : index
    %c0_150 = arith.constant 0 : index
    %358 = vector.load %arg3[%c0_149, %c0_150] : memref<128x512xbf16, #tpu.memory_space<vmem>>, vector<128x512xbf16>
    %cst_151 = arith.constant dense<0.000000e+00> : vector<144x512xf32>
    %359 = tpu.matmul %357, %358, %cst_151 {dimension_numbers = #tpu.dot_dimension_numbers<[1], [0], [0], [1], [0, 0, 1, 1], [], []>} : vector<144x128xbf16>, vector<128x512xbf16>, vector<144x512xf32> -> vector<144x512xf32>
    %c0_152 = arith.constant 0 : index
    %c0_153 = arith.constant 0 : index
    %360 = vector.load %arg4[%c0_152, %c0_153] : memref<1x512xf32, #tpu.memory_space<vmem>>, vector<1x512xf32>
    %361 = vector.broadcast %360 : vector<1x512xf32> to vector<144x512xf32>
    %362 = arith.addf %359, %361 : vector<144x512xf32>
    %363 = vector.shape_cast %362 : vector<144x512xf32> to vector<9x16x512xf32>
    %c0_154 = arith.constant 0 : index
    %c0_155 = arith.constant 0 : index
    %c0_156 = arith.constant 0 : index
    %364 = vector.load %arg5[%c0_154, %c0_155, %c0_156] : memref<9x16x512xf32, #tpu.memory_space<vmem>>, vector<9x16x512xf32>
    tpu.vector_store %arg5[%c0_154, %c0_155, %c0_156], %363 {strides = array<i32>} : memref<9x16x512xf32, #tpu.memory_space<vmem>>, vector<9x16x512xf32>,
    return
  }
  func.func @transform_0(%arg0: i32) -> (i32, i32, i32) {
    %c0_i32 = arith.constant 0 : i32
    %c0_i32_0 = arith.constant 0 : i32
    %c0_i32_1 = arith.constant 0 : i32
    return %arg0, %c0_i32, %c0_i32_0 : i32, i32, i32
  }
  func.func @transform_1(%arg0: i32) -> (i32, i32) {
    %c0_i32 = arith.constant 0 : i32
    %c0_i32_0 = arith.constant 0 : i32
    %c0_i32_1 = arith.constant 0 : i32
    return %c0_i32, %c0_i32_0 : i32, i32
  }
  func.func @transform_2(%arg0: i32) -> (i32, i32) {
    %c0_i32 = arith.constant 0 : i32
    %c0_i32_0 = arith.constant 0 : i32
    %c0_i32_1 = arith.constant 0 : i32
    return %c0_i32, %c0_i32_0 : i32, i32
  }
  func.func @transform_3(%arg0: i32) -> (i32, i32) {
    %c0_i32 = arith.constant 0 : i32
    %c0_i32_0 = arith.constant 0 : i32
    %c0_i32_1 = arith.constant 0 : i32
    return %c0_i32, %c0_i32_0 : i32, i32
  }
  func.func @transform_4(%arg0: i32) -> (i32, i32, i32) {
    %c0_i32 = arith.constant 0 : i32
    %c0_i32_0 = arith.constant 0 : i32
    %c0_i32_1 = arith.constant 0 : i32
    return %arg0, %c0_i32, %c0_i32_0 : i32, i32, i32
  }
}

</mosaic_0001>

<llo_original>
// kernel: decoder_forward.7
$region0: #{decoder_forward.7}
  #allocation0 [shape = 'u32[]', space=smem, size = 0x4, offset = 0x4, fixed_abs, tag = 'smem constant byte address 0x4 - core index']
  #allocation1 [shape = 'u32[144,128]{1,0:T(1,128)}', space=vmem, size = 0x12000, scoped, tag = 'internal scratch']
  %s0 = inlined_call_operand.hbm [shape: bf16[144,128], index: 0, kind: input, shape index: {}]
  %s1 = inlined_call_operand.hbm [shape: bf16[128,128], index: 1, kind: input, shape index: {}]
  %s2 = inlined_call_operand.hbm [shape: f32[1,128], index: 2, kind: input, shape index: {}]
  %s3 = inlined_call_operand.hbm [shape: f32[144,128], index: 3, kind: output, shape index: {}]
  %s4 = sld [smem:[#allocation0]]
  $region34: #{decoder_forward.7} parent=0
    _
  %s6 = ssub.s32 1, %s4
  %s7 = scalar_select 0, %s6, %s4
  $region1: #{decoder_forward.7} parent=0
    #allocation2 [shape = 'u8[36864]{0}', space=vmem, size = 0x9000, scoped, tag = 'input window, operand 0, single buffered']
    #allocation3 [shape = 's32[1]{0}', space=sflag, size = 0x4, scoped, tag = 'scoped memory for decoder_forward.7']
    #allocation4 [shape = 's32[1]{0}', space=sflag, size = 0x4, scoped, tag = 'scoped memory for decoder_forward.7']
    #allocation5 [shape = 'u8[32768]{0}', space=vmem, size = 0x8000, scoped, tag = 'input window, operand 1, single buffered']
    #allocation6 [shape = 's32[1]{0}', space=sflag, size = 0x4, scoped, tag = 'scoped memory for decoder_forward.7']
    #allocation7 [shape = 'u8[512]{0}', space=vmem, size = 0x400, scoped, tag = 'input window, operand 2, single buffered']
    #allocation8 [shape = 'u8[73728]{0}', space=vmem, size = 0x12000, scoped, tag = 'output window, operand 0, single buffered']
    %8 = vsyncpa [#allocation3], 0
    %9 = vsyncpa [#allocation6], 0
    %10 = vsyncpa [#allocation4], 0
    // Predicated region
    $region2: #{decoder_forward.7} parent=1 // pred_check
      _
    $region3: #{decoder_forward.7} parent=1 // pred_check_branch
      %12 = sbr.rel (0) target = $region5
    $region4: #{decoder_forward.7} parent=1 // pred_region
      %s14 = ssub.s32 1152, 1152
      %15 = vsyncadd [#allocation3], %s14
      %s16 = sshll.u32 [#allocation2], 4
      %s17 = int_to_ptr.vmem [resolvable:$true] %s16
      %22 = dma.hbm_to_vmem [thread:$0]  %s0, 1152, %s17, [#allocation3], 64, 64, 4
    $region5: #{decoder_forward.7} parent=1 // pred_fallthru
      _
    // Predicated region
    $region6: #{decoder_forward.7} parent=1 // pred_check
      _
    $region7: #{decoder_forward.7} parent=1 // pred_check_branch
      %24 = sbr.rel (0) target = $region9
    $region8: #{decoder_forward.7} parent=1 // pred_region
      %s26 = ssub.s32 1024, 1024
      %27 = vsyncadd [#allocation6], %s26
      %s28 = sshll.u32 [#allocation5], 4
      %s29 = int_to_ptr.vmem [resolvable:$true] %s28
      %34 = dma.hbm_to_vmem [thread:$0]  %s1, 1024, %s29, [#allocation6], 64, 64, 4
    $region9: #{decoder_forward.7} parent=1 // pred_fallthru
      _
    // Predicated region
    $region10: #{decoder_forward.7} parent=1 // pred_check
      _
    $region11: #{decoder_forward.7} parent=1 // pred_check_branch
      %36 = sbr.rel (0) target = $region13
    $region12: #{decoder_forward.7} parent=1 // pred_region
      %s38 = ssub.s32 16, 16
      %39 = vsyncadd [#allocation6], %s38
      %s41 = sshll.u32 [#allocation7], 4
      %s42 = int_to_ptr.vmem [resolvable:$true] %s41
      %44 = dma.hbm_to_vmem [thread:$0]  %s2, 16, %s42, [#allocation6]
    $region13: #{decoder_forward.7} parent=1 // pred_fallthru
      _
    // Predicated region
    $region14: #{decoder_forward.7} parent=1 // pred_check
      _
    $region15: #{decoder_forward.7} parent=1 // pred_check_branch
      %46 = sbr.rel (0) target = $region17
    $region16: #{decoder_forward.7} parent=1 // pred_region
      %47 = dma.done [#allocation3], 1152
    $region17: #{decoder_forward.7} parent=1 // pred_fallthru
      _
    // Predicated region
    $region18: #{decoder_forward.7} parent=1 // pred_check
      _
    $region19: #{decoder_forward.7} parent=1 // pred_check_branch
      %49 = sbr.rel (0) target = $region21
    $region20: #{decoder_forward.7} parent=1 // pred_region
      %50 = dma.done [#allocation6], 1024
    $region21: #{decoder_forward.7} parent=1 // pred_fallthru
      _
    // Predicated region
    $region22: #{decoder_forward.7} parent=1 // pred_check
      _
    $region23: #{decoder_forward.7} parent=1 // pred_check_branch
      %52 = sbr.rel (0) target = $region25
    $region24: #{decoder_forward.7} parent=1 // pred_region
      %53 = dma.done [#allocation6], 16
    $region25: #{decoder_forward.7} parent=1 // pred_fallthru
      _
    %v55 = vld [vmem:[#allocation2] sm:$0xf]
    %v56 = vld [vmem:[#allocation2 + $0x4] sm:$0xf]
    %v57 = vld [vmem:[#allocation2 + $0x8] sm:$0xf]
    %v58 = vld [vmem:[#allocation2 + $0xc] sm:$0xf]
    %v59 = vld [vmem:[#allocation2 + $0x10] sm:$0xf]
    %v60 = vld [vmem:[#allocation2 + $0x14] sm:$0xf]
    %v61 = vld [vmem:[#allocation2 + $0x18] sm:$0xf]
    %v62 = vld [vmem:[#allocation2 + $0x1c] sm:$0xf]
    %v63 = vld [vmem:[#allocation2 + $0x20] sm:$0xf]
    %v64 = vld [vmem:[#allocation2 + $0x24] sm:$0xf]
    %v65 = vld [vmem:[#allocation2 + $0x28] sm:$0xf]
    %v66 = vld [vmem:[#allocation2 + $0x2c] sm:$0xf]
    %v67 = vld [vmem:[#allocation2 + $0x30] sm:$0xf]
    %v68 = vld [vmem:[#allocation2 + $0x34] sm:$0xf]
    %v69 = vld [vmem:[#allocation2 + $0x38] sm:$0xf]
    %v70 = vld [vmem:[#allocation2 + $0x3c] sm:$0xf]
    %v71 = vld [vmem:[#allocation2 + $0x40] sm:$0xf]
    %v72 = vld [vmem:[#allocation2 + $0x44] sm:$0xf]
    %v73 = vld [vmem:[#allocation5] sm:$0xf]
    %v74 = vld [vmem:[#allocation5 + $0x4] sm:$0xf]
    %v75 = vld [vmem:[#allocation5 + $0x8] sm:$0xf]
    %v76 = vld [vmem:[#allocation5 + $0xc] sm:$0xf]
    %v77 = vld [vmem:[#allocation5 + $0x10] sm:$0xf]
    %v78 = vld [vmem:[#allocation5 + $0x14] sm:$0xf]
    %v79 = vld [vmem:[#allocation5 + $0x18] sm:$0xf]
    %v80 = vld [vmem:[#allocation5 + $0x1c] sm:$0xf]
    %v81 = vld [vmem:[#allocation5 + $0x20] sm:$0xf]
    %v82 = vld [vmem:[#allocation5 + $0x24] sm:$0xf]
    %v83 = vld [vmem:[#allocation5 + $0x28] sm:$0xf]
    %v84 = vld [vmem:[#allocation5 + $0x2c] sm:$0xf]
    %v85 = vld [vmem:[#allocation5 + $0x30] sm:$0xf]
    %v86 = vld [vmem:[#allocation5 + $0x34] sm:$0xf]
    %v87 = vld [vmem:[#allocation5 + $0x38] sm:$0xf]
    %v88 = vld [vmem:[#allocation5 + $0x3c] sm:$0xf]
    %v89 = vld [vmem:[#allocation7] sm:$0x1]
    %v91 = vlaneseq
    %v92 = vshrl.u32 %v91, 7
    %v93 = vsub.s32 0, %v92
    %v94 = vrot.slane %v89, %v93
    %v114 = vunpack.c.l.b16 %v55
    %v115 = vunpack.c.l.b16 %v56
    %v116 = vunpack.c.l.b16 %v57
    %v117 = vunpack.c.l.b16 %v58
    %v118 = vunpack.c.l.b16 %v59
    %v119 = vunpack.c.l.b16 %v60
    %v120 = vunpack.c.l.b16 %v61
    %v121 = vunpack.c.l.b16 %v62
    %v122 = vunpack.c.l.b16 %v63
    %v123 = vunpack.c.l.b16 %v64
    %v124 = vunpack.c.l.b16 %v65
    %v125 = vunpack.c.l.b16 %v66
    %v126 = vunpack.c.l.b16 %v67
    %v127 = vunpack.c.l.b16 %v68
    %v128 = vunpack.c.l.b16 %v69
    %v129 = vunpack.c.l.b16 %v70
    %v130 = vunpack.c.l.b16 %v71
    %v131 = vunpack.c.l.b16 %v72
    %v132 = vpack.c.b16 %v115, %v114
    %v133 = vpack.c.b16 %v117, %v116
    %v134 = vpack.c.b16 %v119, %v118
    %v135 = vpack.c.b16 %v121, %v120
    %v136 = vpack.c.b16 %v123, %v122
    %v137 = vpack.c.b16 %v125, %v124
    %v138 = vpack.c.b16 %v127, %v126
    %v139 = vpack.c.b16 %v129, %v128
    %v140 = vpack.c.b16 %v131, %v130
    %v166 = vunpack.c.l.b16 %v73
    %v167 = vunpack.c.l.b16 %v74
    %v168 = vunpack.c.l.b16 %v75
    %v169 = vunpack.c.l.b16 %v76
    %v170 = vunpack.c.l.b16 %v77
    %v171 = vunpack.c.l.b16 %v78
    %v172 = vunpack.c.l.b16 %v79
    %v173 = vunpack.c.l.b16 %v80
    %v174 = vunpack.c.l.b16 %v81
    %v175 = vunpack.c.l.b16 %v82
    %v176 = vunpack.c.l.b16 %v83
    %v177 = vunpack.c.l.b16 %v84
    %v178 = vunpack.c.l.b16 %v85
    %v179 = vunpack.c.l.b16 %v86
    %v180 = vunpack.c.l.b16 %v87
    %v181 = vunpack.c.l.b16 %v88
    %v182 = vpack.c.b16 %v167, %v166
    %v183 = vpack.c.b16 %v169, %v168
    %v184 = vpack.c.b16 %v171, %v170
    %v185 = vpack.c.b16 %v173, %v172
    %v186 = vpack.c.b16 %v175, %v174
    %v187 = vpack.c.b16 %v177, %v176
    %v188 = vpack.c.b16 %v179, %v178
    %v189 = vpack.c.b16 %v181, %v180
    %198 = vmatprep.subr.bf16.mxu0 0
    %199 = vmatpush1.bf16.msra.mxu0 %v182
    %200 = vmatprep.subr.bf16.mxu0 0
    %201 = vmatpush1.bf16.msra.mxu0 %v183
    %202 = vmatprep.subr.bf16.mxu0 0
    %203 = vmatpush1.bf16.msra.mxu0 %v184
    %204 = vmatprep.subr.bf16.mxu0 0
    %205 = vmatpush1.bf16.msra.mxu0 %v185
    %206 = vmatprep.subr.bf16.mxu0 0
    %207 = vmatpush1.bf16.msra.mxu0 %v186
    %208 = vmatprep.subr.bf16.mxu0 0
    %209 = vmatpush1.bf16.msra.mxu0 %v187
    %210 = vmatprep.subr.bf16.mxu0 0
    %211 = vmatpush1.bf16.msra.mxu0 %v188
    %212 = vmatprep.subr.bf16.mxu0 0
    %213 = vmatpush1.bf16.msra.mxu0 %v189
    %214 = vmatprep.subr.bf16.mxu0 0
    %215 = vmatpush1.bf16.msra.mxu0 0
    %216 = vmatprep.subr.bf16.mxu0 0
    %217 = vmatpush1.bf16.msra.mxu0 0
    %218 = vmatprep.subr.bf16.mxu0 0
    %219 = vmatpush1.bf16.msra.mxu0 0
    %220 = vmatprep.subr.bf16.mxu0 0
    %221 = vmatpush1.bf16.msra.mxu0 0
    %222 = vmatprep.subr.bf16.mxu0 0
    %223 = vmatpush1.bf16.msra.mxu0 0
    %224 = vmatprep.subr.bf16.mxu0 0
    %225 = vmatpush1.bf16.msra.mxu0 0
    %226 = vmatprep.subr.bf16.mxu0 0
    %227 = vmatpush1.bf16.msra.mxu0 0
    %228 = vmatprep.subr.bf16.mxu0 0
    %229 = vmatpush1.bf16.msra.mxu0 0
    %230 = vmatprep.mubr.bf16.mxu0 0
    %231 = vmatmul.mubr.bf16.gmra.mrb[0].mxu0 %v132
    %v232 = vpop.f32.mrb[0].mxu0
    %v233 = vadd.f32 %v94, %v232
    %v234 = vpop.f32.mrb[0].mxu0
    %v235 = vpop.f32.mrb[0].mxu0
    %v236 = vadd.f32 %v94, %v235
    %v237 = vpop.f32.mrb[0].mxu0
    %238 = vmatprep.mubr.bf16.mxu0 0
    %239 = vmatmul.mubr.bf16.gmra.mrb[0].mxu0 %v133
    %v240 = vpop.f32.mrb[0].mxu0
    %v241 = vadd.f32 %v94, %v240
    %v242 = vpop.f32.mrb[0].mxu0
    %v243 = vpop.f32.mrb[0].mxu0
    %v244 = vadd.f32 %v94, %v243
    %v245 = vpop.f32.mrb[0].mxu0
    %246 = vmatprep.mubr.bf16.mxu0 0
    %247 = vmatmul.mubr.bf16.gmra.mrb[0].mxu0 %v134
    %v248 = vpop.f32.mrb[0].mxu0
    %v249 = vadd.f32 %v94, %v248
    %v250 = vpop.f32.mrb[0].mxu0
    %v251 = vpop.f32.mrb[0].mxu0
    %v252 = vadd.f32 %v94, %v251
    %v253 = vpop.f32.mrb[0].mxu0
    %254 = vmatprep.mubr.bf16.mxu0 0
    %255 = vmatmul.mubr.bf16.gmra.mrb[0].mxu0 %v135
    %v256 = vpop.f32.mrb[0].mxu0
    %v257 = vadd.f32 %v94, %v256
    %v258 = vpop.f32.mrb[0].mxu0
    %v259 = vpop.f32.mrb[0].mxu0
    %v260 = vadd.f32 %v94, %v259
    %v261 = vpop.f32.mrb[0].mxu0
    %262 = vmatprep.mubr.bf16.mxu0 0
    %263 = vmatmul.mubr.bf16.gmra.mrb[0].mxu0 %v136
    %v264 = vpop.f32.mrb[0].mxu0
    %v265 = vadd.f32 %v94, %v264
    %v266 = vpop.f32.mrb[0].mxu0
    %v267 = vpop.f32.mrb[0].mxu0
    %v268 = vadd.f32 %v94, %v267
    %v269 = vpop.f32.mrb[0].mxu0
    %270 = vmatprep.mubr.bf16.mxu0 0
    %271 = vmatmul.mubr.bf16.gmra.mrb[0].mxu0 %v137
    %v272 = vpop.f32.mrb[0].mxu0
    %v273 = vadd.f32 %v94, %v272
    %v274 = vpop.f32.mrb[0].mxu0
    %v275 = vpop.f32.mrb[0].mxu0
    %v276 = vadd.f32 %v94, %v275
    %v277 = vpop.f32.mrb[0].mxu0
    %278 = vmatprep.mubr.bf16.mxu0 0
    %279 = vmatmul.mubr.bf16.gmra.mrb[0].mxu0 %v138
    %v280 = vpop.f32.mrb[0].mxu0
    %v281 = vadd.f32 %v94, %v280
    %v282 = vpop.f32.mrb[0].mxu0
    %v283 = vpop.f32.mrb[0].mxu0
    %v284 = vadd.f32 %v94, %v283
    %v285 = vpop.f32.mrb[0].mxu0
    %286 = vmatprep.mubr.bf16.mxu0 0
    %287 = vmatmul.mubr.bf16.gmra.mrb[0].mxu0 %v139
    %v288 = vpop.f32.mrb[0].mxu0
    %v289 = vadd.f32 %v94, %v288
    %v290 = vpop.f32.mrb[0].mxu0
    %v291 = vpop.f32.mrb[0].mxu0
    %v292 = vadd.f32 %v94, %v291
    %v293 = vpop.f32.mrb[0].mxu0
    %294 = vmatprep.mubr.bf16.mxu0 0
    %295 = vmatmul.mubr.bf16.gmra.mrb[0].mxu0 %v140
    %v296 = vpop.f32.mrb[0].mxu0
    %v297 = vadd.f32 %v94, %v296
    %v298 = vpop.f32.mrb[0].mxu0
    %v299 = vpop.f32.mrb[0].mxu0
    %v300 = vadd.f32 %v94, %v299
    %v301 = vpop.f32.mrb[0].mxu0
    %302 = vdwg.mxu0
    %303 = vst [vmem:[#allocation8] sm:$0xff] %v233
    %304 = vst [vmem:[#allocation8 + $0x8] sm:$0xff] %v236
    %305 = vst [vmem:[#allocation8 + $0x10] sm:$0xff] %v241
    %306 = vst [vmem:[#allocation8 + $0x18] sm:$0xff] %v244
    %307 = vst [vmem:[#allocation8 + $0x20] sm:$0xff] %v249
    %308 = vst [vmem:[#allocation8 + $0x28] sm:$0xff] %v252
    %309 = vst [vmem:[#allocation8 + $0x30] sm:$0xff] %v257
    %310 = vst [vmem:[#allocation8 + $0x38] sm:$0xff] %v260
    %311 = vst [vmem:[#allocation8 + $0x40] sm:$0xff] %v265
    %312 = vst [vmem:[#allocation8 + $0x48] sm:$0xff] %v268
    %313 = vst [vmem:[#allocation8 + $0x50] sm:$0xff] %v273
    %314 = vst [vmem:[#allocation8 + $0x58] sm:$0xff] %v276
    %315 = vst [vmem:[#allocation8 + $0x60] sm:$0xff] %v281
    %316 = vst [vmem:[#allocation8 + $0x68] sm:$0xff] %v284
    %317 = vst [vmem:[#allocation8 + $0x70] sm:$0xff] %v289
    %318 = vst [vmem:[#allocation8 + $0x78] sm:$0xff] %v292
    %319 = vst [vmem:[#allocation8 + $0x80] sm:$0xff] %v297
    %320 = vst [vmem:[#allocation8 + $0x88] sm:$0xff] %v300
    // Predicated region
    $region26: #{decoder_forward.7} parent=1 // pred_check
      _
    $region27: #{decoder_forward.7} parent=1 // pred_check_branch
      %322 = sbr.rel (0) target = $region29
    $region28: #{decoder_forward.7} parent=1 // pred_region
      %s324 = ssub.s32 2304, 2304
      %325 = vsyncadd [#allocation4], %s324
      %s326 = sshll.u32 [#allocation8], 4
      %s327 = int_to_ptr.vmem [resolvable:$true] %s326
      %332 = dma.vmem_to_hbm [thread:$0]  %s327, 2304, %s3, [#allocation4], 128, 128, 8
    $region29: #{decoder_forward.7} parent=1 // pred_fallthru
      _
    // Predicated region
    $region30: #{decoder_forward.7} parent=1 // pred_check
      _
    $region31: #{decoder_forward.7} parent=1 // pred_check_branch
      %334 = sbr.rel (0) target = $region33
    $region32: #{decoder_forward.7} parent=1 // pred_region
      %335 = dma.done [#allocation4], 2304
    $region33: #{decoder_forward.7} parent=1 // pred_fallthru
      _
    %336 = vsyncpa [#allocation3], 1
    %337 = vsyncpa [#allocation6], 1
    %338 = vsyncpa [#allocation4], 1

// kernel: decoder_forward.4
$region0: #{decoder_forward.4}
  #allocation0 [shape = 'u32[]', space=smem, size = 0x4, offset = 0x4, fixed_abs, tag = 'smem constant byte address 0x4 - core index']
  #allocation1 [shape = 'u32[144,128]{1,0:T(1,128)}', space=vmem, size = 0x12000, scoped, tag = 'internal scratch']
  %s0 = inlined_call_operand.hbm [shape: f32[144,128], index: 0, kind: input, shape index: {}]
  %s1 = inlined_call_operand.hbm [shape: bf16[128,512], index: 1, kind: input, shape index: {}]
  %s2 = inlined_call_operand.hbm [shape: f32[1,512], index: 2, kind: input, shape index: {}]
  %s3 = inlined_call_operand.hbm [shape: f32[144,512], index: 3, kind: output, shape index: {}]
  %s4 = sld [smem:[#allocation0]]
  $region34: #{decoder_forward.4} parent=0
    _
  %s6 = ssub.s32 1, %s4
  %s7 = scalar_select 0, %s6, %s4
  $region1: #{decoder_forward.4} parent=0
    #allocation2 [shape = 'u8[73728]{0}', space=vmem, size = 0x12000, scoped, tag = 'input window, operand 0, single buffered']
    #allocation3 [shape = 's32[1]{0}', space=sflag, size = 0x4, scoped, tag = 'scoped memory for decoder_forward.4']
    #allocation4 [shape = 's32[1]{0}', space=sflag, size = 0x4, scoped, tag = 'scoped memory for decoder_forward.4']
    #allocation5 [shape = 'u8[131072]{0}', space=vmem, size = 0x20000, scoped, tag = 'input window, operand 1, single buffered']
    #allocation6 [shape = 's32[1]{0}', space=sflag, size = 0x4, scoped, tag = 'scoped memory for decoder_forward.4']
    #allocation7 [shape = 'u8[2048]{0}', space=vmem, size = 0x800, scoped, tag = 'input window, operand 2, single buffered']
    #allocation8 [shape = 'u8[294912]{0}', space=vmem, size = 0x48000, scoped, tag = 'output window, operand 0, single buffered']
    %8 = vsyncpa [#allocation3], 0
    %9 = vsyncpa [#allocation6], 0
    %10 = vsyncpa [#allocation4], 0
    // Predicated region
    $region2: #{decoder_forward.4} parent=1 // pred_check
      _
    $region3: #{decoder_forward.4} parent=1 // pred_check_branch
      %12 = sbr.rel (0) target = $region5
    $region4: #{decoder_forward.4} parent=1 // pred_region
      %s14 = ssub.s32 2304, 2304
      %15 = vsyncadd [#allocation3], %s14
      %s16 = sshll.u32 [#allocation2], 4
      %s17 = int_to_ptr.vmem [resolvable:$true] %s16
      %22 = dma.hbm_to_vmem [thread:$0]  %s0, 2304, %s17, [#allocation3], 128, 128, 8
    $region5: #{decoder_forward.4} parent=1 // pred_fallthru
      _
    // Predicated region
    $region6: #{decoder_forward.4} parent=1 // pred_check
      _
    $region7: #{decoder_forward.4} parent=1 // pred_check_branch
      %24 = sbr.rel (0) target = $region9
    $region8: #{decoder_forward.4} parent=1 // pred_region
      %s26 = ssub.s32 4096, 4096
      %27 = vsyncadd [#allocation6], %s26
      %s28 = sshll.u32 [#allocation5], 4
      %s29 = int_to_ptr.vmem [resolvable:$true] %s28
      %34 = dma.hbm_to_vmem [thread:$0]  %s1, 4096, %s29, [#allocation6], 256, 256, 16
    $region9: #{decoder_forward.4} parent=1 // pred_fallthru
      _
    // Predicated region
    $region10: #{decoder_forward.4} parent=1 // pred_check
      _
    $region11: #{decoder_forward.4} parent=1 // pred_check_branch
      %36 = sbr.rel (0) target = $region13
    $region12: #{decoder_forward.4} parent=1 // pred_region
      %s38 = ssub.s32 64, 64
      %39 = vsyncadd [#allocation6], %s38
      %s41 = sshll.u32 [#allocation7], 4
      %s42 = int_to_ptr.vmem [resolvable:$true] %s41
      %44 = dma.hbm_to_vmem [thread:$0]  %s2, 64, %s42, [#allocation6]
    $region13: #{decoder_forward.4} parent=1 // pred_fallthru
      _
    // Predicated region
    $region14: #{decoder_forward.4} parent=1 // pred_check
      _
    $region15: #{decoder_forward.4} parent=1 // pred_check_branch
      %46 = sbr.rel (0) target = $region17
    $region16: #{decoder_forward.4} parent=1 // pred_region
      %47 = dma.done [#allocation3], 2304
    $region17: #{decoder_forward.4} parent=1 // pred_fallthru
      _
    // Predicated region
    $region18: #{decoder_forward.4} parent=1 // pred_check
      _
    $region19: #{decoder_forward.4} parent=1 // pred_check_branch
      %49 = sbr.rel (0) target = $region21
    $region20: #{decoder_forward.4} parent=1 // pred_region
      %50 = dma.done [#allocation6], 4096
    $region21: #{decoder_forward.4} parent=1 // pred_fallthru
      _
    // Predicated region
    $region22: #{decoder_forward.4} parent=1 // pred_check
      _
    $region23: #{decoder_forward.4} parent=1 // pred_check_branch
      %52 = sbr.rel (0) target = $region25
    $region24: #{decoder_forward.4} parent=1 // pred_region
      %53 = dma.done [#allocation6], 64
    $region25: #{decoder_forward.4} parent=1 // pred_fallthru
      _
    %v55 = vld [vmem:[#allocation2] sm:$0xff]
    %v56 = vld [vmem:[#allocation2 + $0x8] sm:$0xff]
    %v57 = vld [vmem:[#allocation2 + $0x10] sm:$0xff]
    %v58 = vld [vmem:[#allocation2 + $0x18] sm:$0xff]
    %v59 = vld [vmem:[#allocation2 + $0x20] sm:$0xff]
    %v60 = vld [vmem:[#allocation2 + $0x28] sm:$0xff]
    %v61 = vld [vmem:[#allocation2 + $0x30] sm:$0xff]
    %v62 = vld [vmem:[#allocation2 + $0x38] sm:$0xff]
    %v63 = vld [vmem:[#allocation2 + $0x40] sm:$0xff]
    %v64 = vld [vmem:[#allocation2 + $0x48] sm:$0xff]
    %v65 = vld [vmem:[#allocation2 + $0x50] sm:$0xff]
    %v66 = vld [vmem:[#allocation2 + $0x58] sm:$0xff]
    %v67 = vld [vmem:[#allocation2 + $0x60] sm:$0xff]
    %v68 = vld [vmem:[#allocation2 + $0x68] sm:$0xff]
    %v69 = vld [vmem:[#allocation2 + $0x70] sm:$0xff]
    %v70 = vld [vmem:[#allocation2 + $0x78] sm:$0xff]
    %v71 = vld [vmem:[#allocation2 + $0x80] sm:$0xff]
    %v72 = vld [vmem:[#allocation2 + $0x88] sm:$0xff]
    %v73 = vpack.c.bf16 %v56, %v55
    %v74 = vpack.c.bf16 %v58, %v57
    %v75 = vpack.c.bf16 %v60, %v59
    %v76 = vpack.c.bf16 %v62, %v61
    %v77 = vpack.c.bf16 %v64, %v63
    %v78 = vpack.c.bf16 %v66, %v65
    %v79 = vpack.c.bf16 %v68, %v67
    %v80 = vpack.c.bf16 %v70, %v69
    %v81 = vpack.c.bf16 %v72, %v71
    %v82 = vld [vmem:[#allocation5] sm:$0xff]
    %v83 = vld [vmem:[#allocation5 + $0x8] sm:$0xff]
    %v84 = vld [vmem:[#allocation5 + $0x10] sm:$0xff]
    %v85 = vld [vmem:[#allocation5 + $0x18] sm:$0xff]
    %v86 = vld [vmem:[#allocation5 + $0x20] sm:$0xff]
    %v87 = vld [vmem:[#allocation5 + $0x28] sm:$0xff]
    %v88 = vld [vmem:[#allocation5 + $0x30] sm:$0xff]
    %v89 = vld [vmem:[#allocation5 + $0x38] sm:$0xff]
    %v90 = vld [vmem:[#allocation5 + $0x40] sm:$0xff]
    %v91 = vld [vmem:[#allocation5 + $0x48] sm:$0xff]
    %v92 = vld [vmem:[#allocation5 + $0x50] sm:$0xff]
    %v93 = vld [vmem:[#allocation5 + $0x58] sm:$0xff]
    %v94 = vld [vmem:[#allocation5 + $0x60] sm:$0xff]
    %v95 = vld [vmem:[#allocation5 + $0x68] sm:$0xff]
    %v96 = vld [vmem:[#allocation5 + $0x70] sm:$0xff]
    %v97 = vld [vmem:[#allocation5 + $0x78] sm:$0xff]
    %v98 = vld [vmem:[#allocation5 + $0x80] sm:$0xff]
    %v99 = vld [vmem:[#allocation5 + $0x88] sm:$0xff]
    %v100 = vld [vmem:[#allocation5 + $0x90] sm:$0xff]
    %v101 = vld [vmem:[#allocation5 + $0x98] sm:$0xff]
    %v102 = vld [vmem:[#allocation5 + $0xa0] sm:$0xff]
    %v103 = vld [vmem:[#allocation5 + $0xa8] sm:$0xff]
    %v104 = vld [vmem:[#allocation5 + $0xb0] sm:$0xff]
    %v105 = vld [vmem:[#allocation5 + $0xb8] sm:$0xff]
    %v106 = vld [vmem:[#allocation5 + $0xc0] sm:$0xff]
    %v107 = vld [vmem:[#allocation5 + $0xc8] sm:$0xff]
    %v108 = vld [vmem:[#allocation5 + $0xd0] sm:$0xff]
    %v109 = vld [vmem:[#allocation5 + $0xd8] sm:$0xff]
    %v110 = vld [vmem:[#allocation5 + $0xe0] sm:$0xff]
    %v111 = vld [vmem:[#allocation5 + $0xe8] sm:$0xff]
    %v112 = vld [vmem:[#allocation5 + $0xf0] sm:$0xff]
    %v113 = vld [vmem:[#allocation5 + $0xf8] sm:$0xff]
    %v114 = vld [vmem:[#allocation7] sm:$0xf]
    %v116 = vlaneseq
    %v117 = vshrl.u32 %v116, 7
    %v118 = vsub.s32 0, %v117
    %v119 = vrot.slane %v114, %v118
    %v120 = vlaneseq
    %v121 = vshrl.u32 %v120, 7
    %v122 = vsub.s32 1, %v121
    %v123 = vrot.slane %v114, %v122
    %v124 = vlaneseq
    %v125 = vshrl.u32 %v124, 7
    %v126 = vsub.s32 2, %v125
    %v127 = vrot.slane %v114, %v126
    %v128 = vlaneseq
    %v129 = vshrl.u32 %v128, 7
    %v130 = vsub.s32 3, %v129
    %v131 = vrot.slane %v114, %v130
    %v168 = vunpack.c.l.b16 %v82
    %v169 = vunpack.c.h.b16 %v82
    %v170 = vunpack.c.l.b16 %v83
    %v171 = vunpack.c.h.b16 %v83
    %v172 = vunpack.c.l.b16 %v84
    %v173 = vunpack.c.h.b16 %v84
    %v174 = vunpack.c.l.b16 %v85
    %v175 = vunpack.c.h.b16 %v85
    %v176 = vunpack.c.l.b16 %v86
    %v177 = vunpack.c.h.b16 %v86
    %v178 = vunpack.c.l.b16 %v87
    %v179 = vunpack.c.h.b16 %v87
    %v180 = vunpack.c.l.b16 %v88
    %v181 = vunpack.c.h.b16 %v88
    %v182 = vunpack.c.l.b16 %v89
    %v183 = vunpack.c.h.b16 %v89
    %v184 = vunpack.c.l.b16 %v90
    %v185 = vunpack.c.h.b16 %v90
    %v186 = vunpack.c.l.b16 %v91
    %v187 = vunpack.c.h.b16 %v91
    %v188 = vunpack.c.l.b16 %v92
    %v189 = vunpack.c.h.b16 %v92
    %v190 = vunpack.c.l.b16 %v93
    %v191 = vunpack.c.h.b16 %v93
    %v192 = vunpack.c.l.b16 %v94
    %v193 = vunpack.c.h.b16 %v94
    %v194 = vunpack.c.l.b16 %v95
    %v195 = vunpack.c.h.b16 %v95
    %v196 = vunpack.c.l.b16 %v96
    %v197 = vunpack.c.h.b16 %v96
    %v198 = vunpack.c.l.b16 %v97
    %v199 = vunpack.c.h.b16 %v97
    %v200 = vunpack.c.l.b16 %v98
    %v201 = vunpack.c.h.b16 %v98
    %v202 = vunpack.c.l.b16 %v99
    %v203 = vunpack.c.h.b16 %v99
    %v204 = vunpack.c.l.b16 %v100
    %v205 = vunpack.c.h.b16 %v100
    %v206 = vunpack.c.l.b16 %v101
    %v207 = vunpack.c.h.b16 %v101
    %v208 = vunpack.c.l.b16 %v102
    %v209 = vunpack.c.h.b16 %v102
    %v210 = vunpack.c.l.b16 %v103
    %v211 = vunpack.c.h.b16 %v103
    %v212 = vunpack.c.l.b16 %v104
    %v213 = vunpack.c.h.b16 %v104
    %v214 = vunpack.c.l.b16 %v105
    %v215 = vunpack.c.h.b16 %v105
    %v216 = vunpack.c.l.b16 %v106
    %v217 = vunpack.c.h.b16 %v106
    %v218 = vunpack.c.l.b16 %v107
    %v219 = vunpack.c.h.b16 %v107
    %v220 = vunpack.c.l.b16 %v108
    %v221 = vunpack.c.h.b16 %v108
    %v222 = vunpack.c.l.b16 %v109
    %v223 = vunpack.c.h.b16 %v109
    %v224 = vunpack.c.l.b16 %v110
    %v225 = vunpack.c.h.b16 %v110
    %v226 = vunpack.c.l.b16 %v111
    %v227 = vunpack.c.h.b16 %v111
    %v228 = vunpack.c.l.b16 %v112
    %v229 = vunpack.c.h.b16 %v112
    %v230 = vunpack.c.l.b16 %v113
    %v231 = vunpack.c.h.b16 %v113
    %v232 = vpack.c.b16 %v172, %v168
    %v233 = vpack.c.b16 %v173, %v169
    %v234 = vpack.c.b16 %v174, %v170
    %v235 = vpack.c.b16 %v175, %v171
    %v236 = vpack.c.b16 %v180, %v176
    %v237 = vpack.c.b16 %v181, %v177
    %v238 = vpack.c.b16 %v182, %v178
    %v239 = vpack.c.b16 %v183, %v179
    %v240 = vpack.c.b16 %v188, %v184
    %v241 = vpack.c.b16 %v189, %v185
    %v242 = vpack.c.b16 %v190, %v186
    %v243 = vpack.c.b16 %v191, %v187
    %v244 = vpack.c.b16 %v196, %v192
    %v245 = vpack.c.b16 %v197, %v193
    %v246 = vpack.c.b16 %v198, %v194
    %v247 = vpack.c.b16 %v199, %v195
    %v248 = vpack.c.b16 %v204, %v200
    %v249 = vpack.c.b16 %v205, %v201
    %v250 = vpack.c.b16 %v206, %v202
    %v251 = vpack.c.b16 %v207, %v203
    %v252 = vpack.c.b16 %v212, %v208
    %v253 = vpack.c.b16 %v213, %v209
    %v254 = vpack.c.b16 %v214, %v210
    %v255 = vpack.c.b16 %v215, %v211
    %v256 = vpack.c.b16 %v220, %v216
    %v257 = vpack.c.b16 %v221, %v217
    %v258 = vpack.c.b16 %v222, %v218
    %v259 = vpack.c.b16 %v223, %v219
    %v260 = vpack.c.b16 %v228, %v224
    %v261 = vpack.c.b16 %v229, %v225
    %v262 = vpack.c.b16 %v230, %v226
    %v263 = vpack.c.b16 %v231, %v227
    %296 = vmatprep.subr.bf16.mxu0 %v233
    %297 = vmatpush1.bf16.msra.mxu0 %v232
    %298 = vmatprep.subr.bf16.mxu0 %v237
    %299 = vmatpush1.bf16.msra.mxu0 %v236
    %300 = vmatprep.subr.bf16.mxu0 %v241
    %301 = vmatpush1.bf16.msra.mxu0 %v240
    %302 = vmatprep.subr.bf16.mxu0 %v245
    %303 = vmatpush1.bf16.msra.mxu0 %v244
    %304 = vmatprep.subr.bf16.mxu0 %v249
    %305 = vmatpush1.bf16.msra.mxu0 %v248
    %306 = vmatprep.subr.bf16.mxu0 %v253
    %307 = vmatpush1.bf16.msra.mxu0 %v252
    %308 = vmatprep.subr.bf16.mxu0 %v257
    %309 = vmatpush1.bf16.msra.mxu0 %v256
    %310 = vmatprep.subr.bf16.mxu0 %v261
    %311 = vmatpush1.bf16.msra.mxu0 %v260
    %312 = vmatprep.subr.bf16.mxu0 0
    %313 = vmatpush1.bf16.msra.mxu0 0
    %314 = vmatprep.subr.bf16.mxu0 0
    %315 = vmatpush1.bf16.msra.mxu0 0
    %316 = vmatprep.subr.bf16.mxu0 0
    %317 = vmatpush1.bf16.msra.mxu0 0
    %318 = vmatprep.subr.bf16.mxu0 0
    %319 = vmatpush1.bf16.msra.mxu0 0
    %320 = vmatprep.subr.bf16.mxu0 0
    %321 = vmatpush1.bf16.msra.mxu0 0
    %322 = vmatprep.subr.bf16.mxu0 0
    %323 = vmatpush1.bf16.msra.mxu0 0
    %324 = vmatprep.subr.bf16.mxu0 0
    %325 = vmatpush1.bf16.msra.mxu0 0
    %326 = vmatprep.subr.bf16.mxu0 0
    %327 = vmatpush1.bf16.msra.mxu0 0
    %328 = vmatprep.mubr.bf16.mxu0 0
    %329 = vmatmul.mubr.bf16.gmra.mrb[0].mxu0 %v73
    %v330 = vpop.f32.mrb[0].mxu0
    %v331 = vadd.f32 %v119, %v330
    %v332 = vpop.f32.mrb[0].mxu0
    %v333 = vadd.f32 %v123, %v332
    %v334 = vpop.f32.mrb[0].mxu0
    %v335 = vadd.f32 %v119, %v334
    %v336 = vpop.f32.mrb[0].mxu0
    %v337 = vadd.f32 %v123, %v336
    %338 = vmatprep.mubr.bf16.mxu0 0
    %339 = vmatmul.mubr.bf16.gmra.mrb[0].mxu0 %v74
    %v340 = vpop.f32.mrb[0].mxu0
    %v341 = vadd.f32 %v119, %v340
    %v342 = vpop.f32.mrb[0].mxu0
    %v343 = vadd.f32 %v123, %v342
    %v344 = vpop.f32.mrb[0].mxu0
    %v345 = vadd.f32 %v119, %v344
    %v346 = vpop.f32.mrb[0].mxu0
    %v347 = vadd.f32 %v123, %v346
    %348 = vmatprep.mubr.bf16.mxu0 0
    %349 = vmatmul.mubr.bf16.gmra.mrb[0].mxu0 %v75
    %v350 = vpop.f32.mrb[0].mxu0
    %v351 = vadd.f32 %v119, %v350
    %v352 = vpop.f32.mrb[0].mxu0
    %v353 = vadd.f32 %v123, %v352
    %v354 = vpop.f32.mrb[0].mxu0
    %v355 = vadd.f32 %v119, %v354
    %v356 = vpop.f32.mrb[0].mxu0
    %v357 = vadd.f32 %v123, %v356
    %358 = vmatprep.mubr.bf16.mxu0 0
    %359 = vmatmul.mubr.bf16.gmra.mrb[0].mxu0 %v76
    %v360 = vpop.f32.mrb[0].mxu0
    %v361 = vadd.f32 %v119, %v360
    %v362 = vpop.f32.mrb[0].mxu0
    %v363 = vadd.f32 %v123, %v362
    %v364 = vpop.f32.mrb[0].mxu0
    %v365 = vadd.f32 %v119, %v364
    %v366 = vpop.f32.mrb[0].mxu0
    %v367 = vadd.f32 %v123, %v366
    %368 = vmatprep.mubr.bf16.mxu0 0
    %369 = vmatmul.mubr.bf16.gmra.mrb[0].mxu0 %v77
    %v370 = vpop.f32.mrb[0].mxu0
    %v371 = vadd.f32 %v119, %v370
    %v372 = vpop.f32.mrb[0].mxu0
    %v373 = vadd.f32 %v123, %v372
    %v374 = vpop.f32.mrb[0].mxu0
    %v375 = vadd.f32 %v119, %v374
    %v376 = vpop.f32.mrb[0].mxu0
    %v377 = vadd.f32 %v123, %v376
    %378 = vmatprep.mubr.bf16.mxu0 0
    %379 = vmatmul.mubr.bf16.gmra.mrb[0].mxu0 %v78
    %v380 = vpop.f32.mrb[0].mxu0
    %v381 = vadd.f32 %v119, %v380
    %v382 = vpop.f32.mrb[0].mxu0
    %v383 = vadd.f32 %v123, %v382
    %v384 = vpop.f32.mrb[0].mxu0
    %v385 = vadd.f32 %v119, %v384
    %v386 = vpop.f32.mrb[0].mxu0
    %v387 = vadd.f32 %v123, %v386
    %388 = vmatprep.mubr.bf16.mxu0 0
    %389 = vmatmul.mubr.bf16.gmra.mrb[0].mxu0 %v79
    %v390 = vpop.f32.mrb[0].mxu0
    %v391 = vadd.f32 %v119, %v390
    %v392 = vpop.f32.mrb[0].mxu0
    %v393 = vadd.f32 %v123, %v392
    %v394 = vpop.f32.mrb[0].mxu0
    %v395 = vadd.f32 %v119, %v394
    %v396 = vpop.f32.mrb[0].mxu0
    %v397 = vadd.f32 %v123, %v396
    %398 = vmatprep.mubr.bf16.mxu0 0
    %399 = vmatmul.mubr.bf16.gmra.mrb[0].mxu0 %v80
    %v400 = vpop.f32.mrb[0].mxu0
    %v401 = vadd.f32 %v119, %v400
    %v402 = vpop.f32.mrb[0].mxu0
    %v403 = vadd.f32 %v123, %v402
    %v404 = vpop.f32.mrb[0].mxu0
    %v405 = vadd.f32 %v119, %v404
    %v406 = vpop.f32.mrb[0].mxu0
    %v407 = vadd.f32 %v123, %v406
    %408 = vmatprep.mubr.bf16.mxu0 0
    %409 = vmatmul.mubr.bf16.gmra.mrb[0].mxu0 %v81
    %v410 = vpop.f32.mrb[0].mxu0
    %v411 = vadd.f32 %v119, %v410
    %v412 = vpop.f32.mrb[0].mxu0
    %v413 = vadd.f32 %v123, %v412
    %v414 = vpop.f32.mrb[0].mxu0
    %v415 = vadd.f32 %v119, %v414
    %v416 = vpop.f32.mrb[0].mxu0
    %v417 = vadd.f32 %v123, %v416
    %418 = vdwg.mxu0
    %419 = vmatprep.subr.bf16.mxu0 %v235
    %420 = vmatpush1.bf16.msra.mxu0 %v234
    %421 = vmatprep.subr.bf16.mxu0 %v239
    %422 = vmatpush1.bf16.msra.mxu0 %v238
    %423 = vmatprep.subr.bf16.mxu0 %v243
    %424 = vmatpush1.bf16.msra.mxu0 %v242
    %425 = vmatprep.subr.bf16.mxu0 %v247
    %426 = vmatpush1.bf16.msra.mxu0 %v246
    %427 = vmatprep.subr.bf16.mxu0 %v251
    %428 = vmatpush1.bf16.msra.mxu0 %v250
    %429 = vmatprep.subr.bf16.mxu0 %v255
    %430 = vmatpush1.bf16.msra.mxu0 %v254
    %431 = vmatprep.subr.bf16.mxu0 %v259
    %432 = vmatpush1.bf16.msra.mxu0 %v258
    %433 = vmatprep.subr.bf16.mxu0 %v263
    %434 = vmatpush1.bf16.msra.mxu0 %v262
    %435 = vmatprep.subr.bf16.mxu0 0
    %436 = vmatpush1.bf16.msra.mxu0 0
    %437 = vmatprep.subr.bf16.mxu0 0
    %438 = vmatpush1.bf16.msra.mxu0 0
    %439 = vmatprep.subr.bf16.mxu0 0
    %440 = vmatpush1.bf16.msra.mxu0 0
    %441 = vmatprep.subr.bf16.mxu0 0
    %442 = vmatpush1.bf16.msra.mxu0 0
    %443 = vmatprep.subr.bf16.mxu0 0
    %444 = vmatpush1.bf16.msra.mxu0 0
    %445 = vmatprep.subr.bf16.mxu0 0
    %446 = vmatpush1.bf16.msra.mxu0 0
    %447 = vmatprep.subr.bf16.mxu0 0
    %448 = vmatpush1.bf16.msra.mxu0 0
    %449 = vmatprep.subr.bf16.mxu0 0
    %450 = vmatpush1.bf16.msra.mxu0 0
    %451 = vmatprep.mubr.bf16.mxu0 0
    %452 = vmatmul.mubr.bf16.gmra.mrb[0].mxu0 %v73
    %v453 = vpop.f32.mrb[0].mxu0
    %v454 = vadd.f32 %v127, %v453
    %v455 = vpop.f32.mrb[0].mxu0
    %v456 = vadd.f32 %v131, %v455
    %v457 = vpop.f32.mrb[0].mxu0
    %v458 = vadd.f32 %v127, %v457
    %v459 = vpop.f32.mrb[0].mxu0
    %v460 = vadd.f32 %v131, %v459
    %461 = vmatprep.mubr.bf16.mxu0 0
    %462 = vmatmul.mubr.bf16.gmra.mrb[0].mxu0 %v74
    %v463 = vpop.f32.mrb[0].mxu0
    %v464 = vadd.f32 %v127, %v463
    %v465 = vpop.f32.mrb[0].mxu0
    %v466 = vadd.f32 %v131, %v465
    %v467 = vpop.f32.mrb[0].mxu0
    %v468 = vadd.f32 %v127, %v467
    %v469 = vpop.f32.mrb[0].mxu0
    %v470 = vadd.f32 %v131, %v469
    %471 = vmatprep.mubr.bf16.mxu0 0
    %472 = vmatmul.mubr.bf16.gmra.mrb[0].mxu0 %v75
    %v473 = vpop.f32.mrb[0].mxu0
    %v474 = vadd.f32 %v127, %v473
    %v475 = vpop.f32.mrb[0].mxu0
    %v476 = vadd.f32 %v131, %v475
    %v477 = vpop.f32.mrb[0].mxu0
    %v478 = vadd.f32 %v127, %v477
    %v479 = vpop.f32.mrb[0].mxu0
    %v480 = vadd.f32 %v131, %v479
    %481 = vmatprep.mubr.bf16.mxu0 0
    %482 = vmatmul.mubr.bf16.gmra.mrb[0].mxu0 %v76
    %v483 = vpop.f32.mrb[0].mxu0
    %v484 = vadd.f32 %v127, %v483
    %v485 = vpop.f32.mrb[0].mxu0
    %v486 = vadd.f32 %v131, %v485
    %v487 = vpop.f32.mrb[0].mxu0
    %v488 = vadd.f32 %v127, %v487
    %v489 = vpop.f32.mrb[0].mxu0
    %v490 = vadd.f32 %v131, %v489
    %491 = vmatprep.mubr.bf16.mxu0 0
    %492 = vmatmul.mubr.bf16.gmra.mrb[0].mxu0 %v77
    %v493 = vpop.f32.mrb[0].mxu0
    %v494 = vadd.f32 %v127, %v493
    %v495 = vpop.f32.mrb[0].mxu0
    %v496 = vadd.f32 %v131, %v495
    %v497 = vpop.f32.mrb[0].mxu0
    %v498 = vadd.f32 %v127, %v497
    %v499 = vpop.f32.mrb[0].mxu0
    %v500 = vadd.f32 %v131, %v499
    %501 = vmatprep.mubr.bf16.mxu0 0
    %502 = vmatmul.mubr.bf16.gmra.mrb[0].mxu0 %v78
    %v503 = vpop.f32.mrb[0].mxu0
    %v504 = vadd.f32 %v127, %v503
    %v505 = vpop.f32.mrb[0].mxu0
    %v506 = vadd.f32 %v131, %v505
    %v507 = vpop.f32.mrb[0].mxu0
    %v508 = vadd.f32 %v127, %v507
    %v509 = vpop.f32.mrb[0].mxu0
    %v510 = vadd.f32 %v131, %v509
    %511 = vmatprep.mubr.bf16.mxu0 0
    %512 = vmatmul.mubr.bf16.gmra.mrb[0].mxu0 %v79
    %v513 = vpop.f32.mrb[0].mxu0
    %v514 = vadd.f32 %v127, %v513
    %v515 = vpop.f32.mrb[0].mxu0
    %v516 = vadd.f32 %v131, %v515
    %v517 = vpop.f32.mrb[0].mxu0
    %v518 = vadd.f32 %v127, %v517
    %v519 = vpop.f32.mrb[0].mxu0
    %v520 = vadd.f32 %v131, %v519
    %521 = vmatprep.mubr.bf16.mxu0 0
    %522 = vmatmul.mubr.bf16.gmra.mrb[0].mxu0 %v80
    %v523 = vpop.f32.mrb[0].mxu0
    %v524 = vadd.f32 %v127, %v523
    %v525 = vpop.f32.mrb[0].mxu0
    %v526 = vadd.f32 %v131, %v525
    %v527 = vpop.f32.mrb[0].mxu0
    %v528 = vadd.f32 %v127, %v527
    %v529 = vpop.f32.mrb[0].mxu0
    %v530 = vadd.f32 %v131, %v529
    %531 = vmatprep.mubr.bf16.mxu0 0
    %532 = vmatmul.mubr.bf16.gmra.mrb[0].mxu0 %v81
    %v533 = vpop.f32.mrb[0].mxu0
    %v534 = vadd.f32 %v127, %v533
    %v535 = vpop.f32.mrb[0].mxu0
    %v536 = vadd.f32 %v131, %v535
    %v537 = vpop.f32.mrb[0].mxu0
    %v538 = vadd.f32 %v127, %v537
    %v539 = vpop.f32.mrb[0].mxu0
    %v540 = vadd.f32 %v131, %v539
    %541 = vdwg.mxu0
    %542 = vst [vmem:[#allocation8] sm:$0xff] %v331
    %543 = vst [vmem:[#allocation8 + $0x8] sm:$0xff] %v333
    %544 = vst [vmem:[#allocation8 + $0x10] sm:$0xff] %v454
    %545 = vst [vmem:[#allocation8 + $0x18] sm:$0xff] %v456
    %546 = vst [vmem:[#allocation8 + $0x20] sm:$0xff] %v335
    %547 = vst [vmem:[#allocation8 + $0x28] sm:$0xff] %v337
    %548 = vst [vmem:[#allocation8 + $0x30] sm:$0xff] %v458
    %549 = vst [vmem:[#allocation8 + $0x38] sm:$0xff] %v460
    %550 = vst [vmem:[#allocation8 + $0x40] sm:$0xff] %v341
    %551 = vst [vmem:[#allocation8 + $0x48] sm:$0xff] %v343
    %552 = vst [vmem:[#allocation8 + $0x50] sm:$0xff] %v464
    %553 = vst [vmem:[#allocation8 + $0x58] sm:$0xff] %v466
    %554 = vst [vmem:[#allocation8 + $0x60] sm:$0xff] %v345
    %555 = vst [vmem:[#allocation8 + $0x68] sm:$0xff] %v347
    %556 = vst [vmem:[#allocation8 + $0x70] sm:$0xff] %v468
    %557 = vst [vmem:[#allocation8 + $0x78] sm:$0xff] %v470
    %558 = vst [vmem:[#allocation8 + $0x80] sm:$0xff] %v351
    %559 = vst [vmem:[#allocation8 + $0x88] sm:$0xff] %v353
    %560 = vst [vmem:[#allocation8 + $0x90] sm:$0xff] %v474
    %561 = vst [vmem:[#allocation8 + $0x98] sm:$0xff] %v476
    %562 = vst [vmem:[#allocation8 + $0xa0] sm:$0xff] %v355
    %563 = vst [vmem:[#allocation8 + $0xa8] sm:$0xff] %v357
    %564 = vst [vmem:[#allocation8 + $0xb0] sm:$0xff] %v478
    %565 = vst [vmem:[#allocation8 + $0xb8] sm:$0xff] %v480
    %566 = vst [vmem:[#allocation8 + $0xc0] sm:$0xff] %v361
    %567 = vst [vmem:[#allocation8 + $0xc8] sm:$0xff] %v363
    %568 = vst [vmem:[#allocation8 + $0xd0] sm:$0xff] %v484
    %569 = vst [vmem:[#allocation8 + $0xd8] sm:$0xff] %v486
    %570 = vst [vmem:[#allocation8 + $0xe0] sm:$0xff] %v365
    %571 = vst [vmem:[#allocation8 + $0xe8] sm:$0xff] %v367
    %572 = vst [vmem:[#allocation8 + $0xf0] sm:$0xff] %v488
    %573 = vst [vmem:[#allocation8 + $0xf8] sm:$0xff] %v490
    %574 = vst [vmem:[#allocation8 + $0x100] sm:$0xff] %v371
    %575 = vst [vmem:[#allocation8 + $0x108] sm:$0xff] %v373
    %576 = vst [vmem:[#allocation8 + $0x110] sm:$0xff] %v494
    %577 = vst [vmem:[#allocation8 + $0x118] sm:$0xff] %v496
    %578 = vst [vmem:[#allocation8 + $0x120] sm:$0xff] %v375
    %579 = vst [vmem:[#allocation8 + $0x128] sm:$0xff] %v377
    %580 = vst [vmem:[#allocation8 + $0x130] sm:$0xff] %v498
    %581 = vst [vmem:[#allocation8 + $0x138] sm:$0xff] %v500
    %582 = vst [vmem:[#allocation8 + $0x140] sm:$0xff] %v381
    %583 = vst [vmem:[#allocation8 + $0x148] sm:$0xff] %v383
    %584 = vst [vmem:[#allocation8 + $0x150] sm:$0xff] %v504
    %585 = vst [vmem:[#allocation8 + $0x158] sm:$0xff] %v506
    %586 = vst [vmem:[#allocation8 + $0x160] sm:$0xff] %v385
    %587 = vst [vmem:[#allocation8 + $0x168] sm:$0xff] %v387
    %588 = vst [vmem:[#allocation8 + $0x170] sm:$0xff] %v508
    %589 = vst [vmem:[#allocation8 + $0x178] sm:$0xff] %v510
    %590 = vst [vmem:[#allocation8 + $0x180] sm:$0xff] %v391
    %591 = vst [vmem:[#allocation8 + $0x188] sm:$0xff] %v393
    %592 = vst [vmem:[#allocation8 + $0x190] sm:$0xff] %v514
    %593 = vst [vmem:[#allocation8 + $0x198] sm:$0xff] %v516
    %594 = vst [vmem:[#allocation8 + $0x1a0] sm:$0xff] %v395
    %595 = vst [vmem:[#allocation8 + $0x1a8] sm:$0xff] %v397
    %596 = vst [vmem:[#allocation8 + $0x1b0] sm:$0xff] %v518
    %597 = vst [vmem:[#allocation8 + $0x1b8] sm:$0xff] %v520
    %598 = vst [vmem:[#allocation8 + $0x1c0] sm:$0xff] %v401
    %599 = vst [vmem:[#allocation8 + $0x1c8] sm:$0xff] %v403
    %600 = vst [vmem:[#allocation8 + $0x1d0] sm:$0xff] %v524
    %601 = vst [vmem:[#allocation8 + $0x1d8] sm:$0xff] %v526
    %602 = vst [vmem:[#allocation8 + $0x1e0] sm:$0xff] %v405
    %603 = vst [vmem:[#allocation8 + $0x1e8] sm:$0xff] %v407
    %604 = vst [vmem:[#allocation8 + $0x1f0] sm:$0xff] %v528
    %605 = vst [vmem:[#allocation8 + $0x1f8] sm:$0xff] %v530
    %606 = vst [vmem:[#allocation8 + $0x200] sm:$0xff] %v411
    %607 = vst [vmem:[#allocation8 + $0x208] sm:$0xff] %v413
    %608 = vst [vmem:[#allocation8 + $0x210] sm:$0xff] %v534
    %609 = vst [vmem:[#allocation8 + $0x218] sm:$0xff] %v536
    %610 = vst [vmem:[#allocation8 + $0x220] sm:$0xff] %v415
    %611 = vst [vmem:[#allocation8 + $0x228] sm:$0xff] %v417
    %612 = vst [vmem:[#allocation8 + $0x230] sm:$0xff] %v538
    %613 = vst [vmem:[#allocation8 + $0x238] sm:$0xff] %v540
    // Predicated region
    $region26: #{decoder_forward.4} parent=1 // pred_check
      _
    $region27: #{decoder_forward.4} parent=1 // pred_check_branch
      %615 = sbr.rel (0) target = $region29
    $region28: #{decoder_forward.4} parent=1 // pred_region
      %s617 = ssub.s32 9216, 9216
      %618 = vsyncadd [#allocation4], %s617
      %s619 = sshll.u32 [#allocation8], 4
      %s620 = int_to_ptr.vmem [resolvable:$true] %s619
      %625 = dma.vmem_to_hbm [thread:$0]  %s620, 9216, %s3, [#allocation4], 512, 512, 32
    $region29: #{decoder_forward.4} parent=1 // pred_fallthru
      _
    // Predicated region
    $region30: #{decoder_forward.4} parent=1 // pred_check
      _
    $region31: #{decoder_forward.4} parent=1 // pred_check_branch
      %627 = sbr.rel (0) target = $region33
    $region32: #{decoder_forward.4} parent=1 // pred_region
      %628 = dma.done [#allocation4], 9216
    $region33: #{decoder_forward.4} parent=1 // pred_fallthru
      _
    %629 = vsyncpa [#allocation3], 1
    %630 = vsyncpa [#allocation6], 1
    %631 = vsyncpa [#allocation4], 1

// kernel: decoder_forward.6
$region0: #{decoder_forward.6}
  #allocation0 [shape = 'u32[]', space=smem, size = 0x4, offset = 0x4, fixed_abs, tag = 'smem constant byte address 0x4 - core index']
  #allocation1 [shape = 'u32[144,128]{1,0:T(1,128)}', space=vmem, size = 0x12000, scoped, tag = 'internal scratch']
  #allocation2 [shape = 'f32[16,128]{1,0:T(8,128)}', space=vmem, size = 0x2000, scoped, tag = 'scratch operand']
  #allocation3 [shape = 'f32[16,128]{1,0:T(8,128)}', space=vmem, size = 0x2000, scoped, tag = 'scratch operand']
  %s0 = inlined_call_operand.hbm [shape: f32[9,16,512], index: 0, kind: input, shape index: {}]
  %s1 = inlined_call_operand.hbm [shape: bf16[128,512], index: 1, kind: input, shape index: {}]
  %s2 = inlined_call_operand.hbm [shape: bf16[9,16,128], index: 2, kind: output, shape index: {}]
  %s3 = sld [smem:[#allocation0]]
  $region30: #{decoder_forward.6} parent=0
    _
  %s5 = ssub.s32 1, %s3
  %s6 = scalar_select 0, %s5, %s3
  $region1: #{decoder_forward.6} parent=0
    #allocation4 [shape = 'u8[294912]{0}', space=vmem, size = 0x48000, scoped, tag = 'input window, operand 0, single buffered']
    #allocation5 [shape = 's32[1]{0}', space=sflag, size = 0x4, scoped, tag = 'scoped memory for decoder_forward.6']
    #allocation6 [shape = 's32[1]{0}', space=sflag, size = 0x4, scoped, tag = 'scoped memory for decoder_forward.6']
    #allocation7 [shape = 'u8[131072]{0}', space=vmem, size = 0x20000, scoped, tag = 'input window, operand 1, single buffered']
    #allocation8 [shape = 's32[1]{0}', space=sflag, size = 0x4, scoped, tag = 'scoped memory for decoder_forward.6']
    #allocation9 [shape = 'u8[36864]{0}', space=vmem, size = 0x9000, scoped, tag = 'output window, operand 0, single buffered']
    %7 = vsyncpa [#allocation5], 0
    %8 = vsyncpa [#allocation8], 0
    %9 = vsyncpa [#allocation6], 0
    // Predicated region
    $region2: #{decoder_forward.6} parent=1 // pred_check
      _
    $region3: #{decoder_forward.6} parent=1 // pred_check_branch
      %11 = sbr.rel (0) target = $region5
    $region4: #{decoder_forward.6} parent=1 // pred_region
      %s13 = ssub.s32 9216, 9216
      %14 = vsyncadd [#allocation5], %s13
      %s15 = sshll.u32 [#allocation4], 4
      %s16 = int_to_ptr.vmem [resolvable:$true] %s15
      %21 = dma.hbm_to_vmem [thread:$0]  %s0, 9216, %s16, [#allocation5], 512, 512, 32
    $region5: #{decoder_forward.6} parent=1 // pred_fallthru
      _
    // Predicated region
    $region6: #{decoder_forward.6} parent=1 // pred_check
      _
    $region7: #{decoder_forward.6} parent=1 // pred_check_branch
      %23 = sbr.rel (0) target = $region9
    $region8: #{decoder_forward.6} parent=1 // pred_region
      %s25 = ssub.s32 4096, 4096
      %26 = vsyncadd [#allocation8], %s25
      %s27 = sshll.u32 [#allocation7], 4
      %s28 = int_to_ptr.vmem [resolvable:$true] %s27
      %33 = dma.hbm_to_vmem [thread:$0]  %s1, 4096, %s28, [#allocation8], 256, 256, 16
    $region9: #{decoder_forward.6} parent=1 // pred_fallthru
      _
    // Predicated region
    $region10: #{decoder_forward.6} parent=1 // pred_check
      _
    $region11: #{decoder_forward.6} parent=1 // pred_check_branch
      %35 = sbr.rel (0) target = $region13
    $region12: #{decoder_forward.6} parent=1 // pred_region
      %36 = dma.done [#allocation5], 9216
    $region13: #{decoder_forward.6} parent=1 // pred_fallthru
      _
    // Predicated region
    $region14: #{decoder_forward.6} parent=1 // pred_check
      _
    $region15: #{decoder_forward.6} parent=1 // pred_check_branch
      %38 = sbr.rel (0) target = $region17
    $region16: #{decoder_forward.6} parent=1 // pred_region
      %39 = dma.done [#allocation8], 4096
    $region17: #{decoder_forward.6} parent=1 // pred_fallthru
      _
    %p41 = scmp.eq.s32.totalorder 0, 0
    // Predicated region
    $region18: #{decoder_forward.6} parent=1 // pred_check
      %p42 = pneg %p41
    $region19: #{decoder_forward.6} parent=1 // pred_check_branch
      %44 = sbr.rel (%p42) target = $region21
    $region20: #{decoder_forward.6} parent=1 // pred_region
      %45 = vst [vmem:[#allocation2] sm:$0xff] 0.0
      %46 = vst [vmem:[#allocation2 + $0x8] sm:$0xff] 0.0
      %47 = vst [vmem:[#allocation3] sm:$0xff] 0.0
      %48 = vst [vmem:[#allocation3 + $0x8] sm:$0xff] 0.0
    $region21: #{decoder_forward.6} parent=1 // pred_fallthru
      _
    %v49 = vld [vmem:[#allocation7] sm:$0xff]
    %v50 = vld [vmem:[#allocation7 + $0x8] sm:$0xff]
    %v51 = vld [vmem:[#allocation7 + $0x10] sm:$0xff]
    %v52 = vld [vmem:[#allocation7 + $0x18] sm:$0xff]
    %v53 = vld [vmem:[#allocation7 + $0x20] sm:$0xff]
    %v54 = vld [vmem:[#allocation7 + $0x28] sm:$0xff]
    %v55 = vld [vmem:[#allocation7 + $0x30] sm:$0xff]
    %v56 = vld [vmem:[#allocation7 + $0x38] sm:$0xff]
    %v57 = vld [vmem:[#allocation7 + $0x40] sm:$0xff]
    %v58 = vld [vmem:[#allocation7 + $0x48] sm:$0xff]
    %v59 = vld [vmem:[#allocation7 + $0x50] sm:$0xff]
    %v60 = vld [vmem:[#allocation7 + $0x58] sm:$0xff]
    %v61 = vld [vmem:[#allocation7 + $0x60] sm:$0xff]
    %v62 = vld [vmem:[#allocation7 + $0x68] sm:$0xff]
    %v63 = vld [vmem:[#allocation7 + $0x70] sm:$0xff]
    %v64 = vld [vmem:[#allocation7 + $0x78] sm:$0xff]
    %v65 = vld [vmem:[#allocation7 + $0x80] sm:$0xff]
    %v66 = vld [vmem:[#allocation7 + $0x88] sm:$0xff]
    %v67 = vld [vmem:[#allocation7 + $0x90] sm:$0xff]
    %v68 = vld [vmem:[#allocation7 + $0x98] sm:$0xff]
    %v69 = vld [vmem:[#allocation7 + $0xa0] sm:$0xff]
    %v70 = vld [vmem:[#allocation7 + $0xa8] sm:$0xff]
    %v71 = vld [vmem:[#allocation7 + $0xb0] sm:$0xff]
    %v72 = vld [vmem:[#allocation7 + $0xb8] sm:$0xff]
    %v73 = vld [vmem:[#allocation7 + $0xc0] sm:$0xff]
    %v74 = vld [vmem:[#allocation7 + $0xc8] sm:$0xff]
    %v75 = vld [vmem:[#allocation7 + $0xd0] sm:$0xff]
    %v76 = vld [vmem:[#allocation7 + $0xd8] sm:$0xff]
    %v77 = vld [vmem:[#allocation7 + $0xe0] sm:$0xff]
    %v78 = vld [vmem:[#allocation7 + $0xe8] sm:$0xff]
    %v79 = vld [vmem:[#allocation7 + $0xf0] sm:$0xff]
    %v80 = vld [vmem:[#allocation7 + $0xf8] sm:$0xff]
    %v81 = vld [vmem:[#allocation4] sm:$0xff]
    %v82 = vld [vmem:[#allocation4 + $0x8] sm:$0xff]
    %v83 = vld [vmem:[#allocation4 + $0x10] sm:$0xff]
    %v84 = vld [vmem:[#allocation4 + $0x18] sm:$0xff]
    %v85 = vld [vmem:[#allocation4 + $0x20] sm:$0xff]
    %v86 = vld [vmem:[#allocation4 + $0x28] sm:$0xff]
    %v87 = vld [vmem:[#allocation4 + $0x30] sm:$0xff]
    %v88 = vld [vmem:[#allocation4 + $0x38] sm:$0xff]
    %v89 = vld [vmem:[#allocation2] sm:$0xff]
    %v90 = vld [vmem:[#allocation2 + $0x8] sm:$0xff]
    %v91 = vpack.c.bf16 %v90, %v89
    %v124 = vunpack.c.l.b16 %v49
    %v125 = vunpack.c.h.b16 %v49
    %v126 = vunpack.c.l.b16 %v50
    %v127 = vunpack.c.h.b16 %v50
    %v128 = vunpack.c.l.b16 %v51
    %v129 = vunpack.c.h.b16 %v51
    %v130 = vunpack.c.l.b16 %v52
    %v131 = vunpack.c.h.b16 %v52
    %v132 = vunpack.c.l.b16 %v53
    %v133 = vunpack.c.h.b16 %v53
    %v134 = vunpack.c.l.b16 %v54
    %v135 = vunpack.c.h.b16 %v54
    %v136 = vunpack.c.l.b16 %v55
    %v137 = vunpack.c.h.b16 %v55
    %v138 = vunpack.c.l.b16 %v56
    %v139 = vunpack.c.h.b16 %v56
    %v140 = vunpack.c.l.b16 %v57
    %v141 = vunpack.c.h.b16 %v57
    %v142 = vunpack.c.l.b16 %v58
    %v143 = vunpack.c.h.b16 %v58
    %v144 = vunpack.c.l.b16 %v59
    %v145 = vunpack.c.h.b16 %v59
    %v146 = vunpack.c.l.b16 %v60
    %v147 = vunpack.c.h.b16 %v60
    %v148 = vunpack.c.l.b16 %v61
    %v149 = vunpack.c.h.b16 %v61
    %v150 = vunpack.c.l.b16 %v62
    %v151 = vunpack.c.h.b16 %v62
    %v152 = vunpack.c.l.b16 %v63
    %v153 = vunpack.c.h.b16 %v63
    %v154 = vunpack.c.l.b16 %v64
    %v155 = vunpack.c.h.b16 %v64
    %v156 = vunpack.c.l.b16 %v65
    %v157 = vunpack.c.h.b16 %v65
    %v158 = vunpack.c.l.b16 %v66
    %v159 = vunpack.c.h.b16 %v66
    %v160 = vunpack.c.l.b16 %v67
    %v161 = vunpack.c.h.b16 %v67
    %v162 = vunpack.c.l.b16 %v68
    %v163 = vunpack.c.h.b16 %v68
    %v164 = vunpack.c.l.b16 %v69
    %v165 = vunpack.c.h.b16 %v69
    %v166 = vunpack.c.l.b16 %v70
    %v167 = vunpack.c.h.b16 %v70
    %v168 = vunpack.c.l.b16 %v71
    %v169 = vunpack.c.h.b16 %v71
    %v170 = vunpack.c.l.b16 %v72
    %v171 = vunpack.c.h.b16 %v72
    %v172 = vunpack.c.l.b16 %v73
    %v173 = vunpack.c.h.b16 %v73
    %v174 = vunpack.c.l.b16 %v74
    %v175 = vunpack.c.h.b16 %v74
    %v176 = vunpack.c.l.b16 %v75
    %v177 = vunpack.c.h.b16 %v75
    %v178 = vunpack.c.l.b16 %v76
    %v179 = vunpack.c.h.b16 %v76
    %v180 = vunpack.c.l.b16 %v77
    %v181 = vunpack.c.h.b16 %v77
    %v182 = vunpack.c.l.b16 %v78
    %v183 = vunpack.c.h.b16 %v78
    %v184 = vunpack.c.l.b16 %v79
    %v185 = vunpack.c.h.b16 %v79
    %v186 = vunpack.c.l.b16 %v80
    %v187 = vunpack.c.h.b16 %v80
    %v188 = vpack.c.b16 %v128, %v124
    %v189 = vpack.c.b16 %v129, %v125
    %v190 = vpack.c.b16 %v130, %v126
    %v191 = vpack.c.b16 %v131, %v127
    %v192 = vpack.c.b16 %v136, %v132
    %v193 = vpack.c.b16 %v137, %v133
    %v194 = vpack.c.b16 %v138, %v134
    %v195 = vpack.c.b16 %v139, %v135
    %v196 = vpack.c.b16 %v144, %v140
    %v197 = vpack.c.b16 %v145, %v141
    %v198 = vpack.c.b16 %v146, %v142
    %v199 = vpack.c.b16 %v147, %v143
    %v200 = vpack.c.b16 %v152, %v148
    %v201 = vpack.c.b16 %v153, %v149
    %v202 = vpack.c.b16 %v154, %v150
    %v203 = vpack.c.b16 %v155, %v151
    %v204 = vpack.c.b16 %v160, %v156
    %v205 = vpack.c.b16 %v161, %v157
    %v206 = vpack.c.b16 %v162, %v158
    %v207 = vpack.c.b16 %v163, %v159
    %v208 = vpack.c.b16 %v168, %v164
    %v209 = vpack.c.b16 %v169, %v165
    %v210 = vpack.c.b16 %v170, %v166
    %v211 = vpack.c.b16 %v171, %v167
    %v212 = vpack.c.b16 %v176, %v172
    %v213 = vpack.c.b16 %v177, %v173
    %v214 = vpack.c.b16 %v178, %v174
    %v215 = vpack.c.b16 %v179, %v175
    %v216 = vpack.c.b16 %v184, %v180
    %v217 = vpack.c.b16 %v185, %v181
    %v218 = vpack.c.b16 %v186, %v182
    %v219 = vpack.c.b16 %v187, %v183
    %252 = vmatprep.subr.bf16.mxu0 %v189
    %253 = vmatpush1.bf16.msra.mxu0 %v188
    %254 = vmatprep.subr.bf16.mxu0 %v193
    %255 = vmatpush1.bf16.msra.mxu0 %v192
    %256 = vmatprep.subr.bf16.mxu0 %v197
    %257 = vmatpush1.bf16.msra.mxu0 %v196
    %258 = vmatprep.subr.bf16.mxu0 %v201
    %259 = vmatpush1.bf16.msra.mxu0 %v200
    %260 = vmatprep.subr.bf16.mxu0 %v205
    %261 = vmatpush1.bf16.msra.mxu0 %v204
    %262 = vmatprep.subr.bf16.mxu0 %v209
    %263 = vmatpush1.bf16.msra.mxu0 %v208
    %264 = vmatprep.subr.bf16.mxu0 %v213
    %265 = vmatpush1.bf16.msra.mxu0 %v212
    %266 = vmatprep.subr.bf16.mxu0 %v217
    %267 = vmatpush1.bf16.msra.mxu0 %v216
    %268 = vmatprep.subr.bf16.mxu0 0
    %269 = vmatpush1.bf16.msra.mxu0 0
    %270 = vmatprep.subr.bf16.mxu0 0
    %271 = vmatpush1.bf16.msra.mxu0 0
    %272 = vmatprep.subr.bf16.mxu0 0
    %273 = vmatpush1.bf16.msra.mxu0 0
    %274 = vmatprep.subr.bf16.mxu0 0
    %275 = vmatpush1.bf16.msra.mxu0 0
    %276 = vmatprep.subr.bf16.mxu0 0
    %277 = vmatpush1.bf16.msra.mxu0 0
    %278 = vmatprep.subr.bf16.mxu0 0
    %279 = vmatpush1.bf16.msra.mxu0 0
    %280 = vmatprep.subr.bf16.mxu0 0
    %281 = vmatpush1.bf16.msra.mxu0 0
    %282 = vmatprep.subr.bf16.mxu0 0
    %283 = vmatpush1.bf16.msra.mxu0 0
    %284 = vmatprep.mubr.bf16.mxu0 0
    %285 = vmatmul.mubr.bf16.gmra.mrb[0].mxu0 %v91
    %v286 = vpop.f32.mrb[0].mxu0
    %v287 = vadd.f32 0.0, %v286
    %v288 = vpop.f32.mrb[0].mxu0
    %v289 = vadd.f32 0.0, %v288
    %v290 = vpop.f32.mrb[0].mxu0
    %v291 = vadd.f32 0.0, %v290
    %v292 = vpop.f32.mrb[0].mxu0
    %v293 = vadd.f32 0.0, %v292
    %294 = vdwg.mxu0
    %295 = vmatprep.subr.bf16.mxu0 %v191
    %296 = vmatpush1.bf16.msra.mxu0 %v190
    %297 = vmatprep.subr.bf16.mxu0 %v195
    %298 = vmatpush1.bf16.msra.mxu0 %v194
    %299 = vmatprep.subr.bf16.mxu0 %v199
    %300 = vmatpush1.bf16.msra.mxu0 %v198
    %301 = vmatprep.subr.bf16.mxu0 %v203
    %302 = vmatpush1.bf16.msra.mxu0 %v202
    %303 = vmatprep.subr.bf16.mxu0 %v207
    %304 = vmatpush1.bf16.msra.mxu0 %v206
    %305 = vmatprep.subr.bf16.mxu0 %v211
    %306 = vmatpush1.bf16.msra.mxu0 %v210
    %307 = vmatprep.subr.bf16.mxu0 %v215
    %308 = vmatpush1.bf16.msra.mxu0 %v214
    %309 = vmatprep.subr.bf16.mxu0 %v219
    %310 = vmatpush1.bf16.msra.mxu0 %v218
    %311 = vmatprep.subr.bf16.mxu0 0
    %312 = vmatpush1.bf16.msra.mxu0 0
    %313 = vmatprep.subr.bf16.mxu0 0
    %314 = vmatpush1.bf16.msra.mxu0 0
    %315 = vmatprep.subr.bf16.mxu0 0
    %316 = vmatpush1.bf16.msra.mxu0 0
    %317 = vmatprep.subr.bf16.mxu0 0
    %318 = vmatpush1.bf16.msra.mxu0 0
    %319 = vmatprep.subr.bf16.mxu0 0
    %320 = vmatpush1.bf16.msra.mxu0 0
    %321 = vmatprep.subr.bf16.mxu0 0
    %322 = vmatpush1.bf16.msra.mxu0 0
    %323 = vmatprep.subr.bf16.mxu0 0
    %324 = vmatpush1.bf16.msra.mxu0 0
    %325 = vmatprep.subr.bf16.mxu0 0
    %326 = vmatpush1.bf16.msra.mxu0 0
    %327 = vmatprep.mubr.bf16.mxu0 0
    %328 = vmatmul.mubr.bf16.gmra.mrb[0].mxu0 %v91
    %v329 = vpop.f32.mrb[0].mxu0
    %v330 = vadd.f32 0.0, %v329
    %v331 = vpop.f32.mrb[0].mxu0
    %v332 = vadd.f32 0.0, %v331
    %v333 = vpop.f32.mrb[0].mxu0
    %v334 = vadd.f32 0.0, %v333
    %v335 = vpop.f32.mrb[0].mxu0
    %v336 = vadd.f32 0.0, %v335
    %337 = vdwg.mxu0
    %v338 = vadd.f32 %v81, %v287
    %v339 = vadd.f32 %v82, %v289
    %v340 = vadd.f32 %v83, %v330
    %v341 = vadd.f32 %v84, %v332
    %v342 = vadd.f32 %v85, %v291
    %v343 = vadd.f32 %v86, %v293
    %v344 = vadd.f32 %v87, %v334
    %v345 = vadd.f32 %v88, %v336
    %v346 = vxor.u32 %v338, 2147483648
    %v347 = vxor.u32 %v342, 2147483648
    %v348 = vmul.f32 %v346, 1.442695
    %v349 = vpow.pop %v348
    %v350 = vmul.f32 %v347, 1.442695
    %v351 = vpow.pop %v350
    %v352 = vadd.f32 %v349, 1.0
    %v353 = vadd.f32 %v351, 1.0
    %v354 = vrcp.pop %v352
    %v355 = vmul.f32 1.0, %v354
    %v356 = vrcp.pop %v353
    %v357 = vmul.f32 1.0, %v356
    %v358 = vxor.u32 %v339, 2147483648
    %v359 = vxor.u32 %v343, 2147483648
    %v360 = vmul.f32 %v358, 1.442695
    %v361 = vpow.pop %v360
    %v362 = vmul.f32 %v359, 1.442695
    %v363 = vpow.pop %v362
    %v364 = vadd.f32 %v361, 1.0
    %v365 = vadd.f32 %v363, 1.0
    %v366 = vrcp.pop %v364
    %v367 = vmul.f32 1.0, %v366
    %v368 = vrcp.pop %v365
    %v369 = vmul.f32 1.0, %v368
    %v370 = vtanh.pop %v340
    %v371 = vtanh.pop %v344
    %v372 = vxor.u32 %v341, 2147483648
    %v373 = vxor.u32 %v345, 2147483648
    %v374 = vmul.f32 %v372, 1.442695
    %v375 = vpow.pop %v374
    %v376 = vmul.f32 %v373, 1.442695
    %v377 = vpow.pop %v376
    %v378 = vadd.f32 %v375, 1.0
    %v379 = vadd.f32 %v377, 1.0
    %v380 = vrcp.pop %v378
    %v381 = vmul.f32 1.0, %v380
    %v382 = vrcp.pop %v379
    %v383 = vmul.f32 1.0, %v382
    %v384 = vld [vmem:[#allocation3] sm:$0xff]
    %v385 = vld [vmem:[#allocation3 + $0x8] sm:$0xff]
    %v386 = vmul.f32 %v367, %v384
    %v387 = vmul.f32 %v369, %v385
    %v388 = vmul.f32 %v355, %v370
    %v389 = vmul.f32 %v357, %v371
    %v390 = vadd.f32 %v386, %v388
    %v391 = vadd.f32 %v387, %v389
    %v392 = vtanh.pop %v390
    %v393 = vtanh.pop %v391
    %v394 = vmul.f32 %v381, %v392
    %v395 = vmul.f32 %v383, %v393
    %396 = vst [vmem:[#allocation3] sm:$0xff] %v390
    %397 = vst [vmem:[#allocation3 + $0x8] sm:$0xff] %v391
    %398 = vst [vmem:[#allocation2] sm:$0xff] %v394
    %399 = vst [vmem:[#allocation2 + $0x8] sm:$0xff] %v395
    %v400 = vpack.c.bf16 %v395, %v394
    %v402 = vunpack.c.l.b16 %v400
    %v403 = vunpack.c.h.b16 %v400
    %v404 = vpack.c.b16 %v402, %v402
    %v405 = vpack.c.b16 %v403, %v403
    %408 = vst [vmem:[#allocation9] sm:$0xf] %v404
    %409 = vst [vmem:[#allocation9 + $0x4] sm:$0xf] %v405
    %s410 = scalar_lea.vmem [#allocation4], 64
    %v411 = vld [vmem:[%s410] sm:$0xff]
    %v412 = vld [vmem:[%s410 + $0x8] sm:$0xff]
    %v413 = vld [vmem:[%s410 + $0x10] sm:$0xff]
    %v414 = vld [vmem:[%s410 + $0x18] sm:$0xff]
    %v415 = vld [vmem:[%s410 + $0x20] sm:$0xff]
    %v416 = vld [vmem:[%s410 + $0x28] sm:$0xff]
    %v417 = vld [vmem:[%s410 + $0x30] sm:$0xff]
    %v418 = vld [vmem:[%s410 + $0x38] sm:$0xff]
    %v419 = vld [vmem:[#allocation2] sm:$0xff]
    %v420 = vld [vmem:[#allocation2 + $0x8] sm:$0xff]
    %v421 = vpack.c.bf16 %v420, %v419
    %422 = vmatprep.subr.bf16.mxu0 %v189
    %423 = vmatpush1.bf16.msra.mxu0 %v188
    %424 = vmatprep.subr.bf16.mxu0 %v193
    %425 = vmatpush1.bf16.msra.mxu0 %v192
    %426 = vmatprep.subr.bf16.mxu0 %v197
    %427 = vmatpush1.bf16.msra.mxu0 %v196
    %428 = vmatprep.subr.bf16.mxu0 %v201
    %429 = vmatpush1.bf16.msra.mxu0 %v200
    %430 = vmatprep.subr.bf16.mxu0 %v205
    %431 = vmatpush1.bf16.msra.mxu0 %v204
    %432 = vmatprep.subr.bf16.mxu0 %v209
    %433 = vmatpush1.bf16.msra.mxu0 %v208
    %434 = vmatprep.subr.bf16.mxu0 %v213
    %435 = vmatpush1.bf16.msra.mxu0 %v212
    %436 = vmatprep.subr.bf16.mxu0 %v217
    %437 = vmatpush1.bf16.msra.mxu0 %v216
    %438 = vmatprep.subr.bf16.mxu0 0
    %439 = vmatpush1.bf16.msra.mxu0 0
    %440 = vmatprep.subr.bf16.mxu0 0
    %441 = vmatpush1.bf16.msra.mxu0 0
    %442 = vmatprep.subr.bf16.mxu0 0
    %443 = vmatpush1.bf16.msra.mxu0 0
    %444 = vmatprep.subr.bf16.mxu0 0
    %445 = vmatpush1.bf16.msra.mxu0 0
    %446 = vmatprep.subr.bf16.mxu0 0
    %447 = vmatpush1.bf16.msra.mxu0 0
    %448 = vmatprep.subr.bf16.mxu0 0
    %449 = vmatpush1.bf16.msra.mxu0 0
    %450 = vmatprep.subr.bf16.mxu0 0
    %451 = vmatpush1.bf16.msra.mxu0 0
    %452 = vmatprep.subr.bf16.mxu0 0
    %453 = vmatpush1.bf16.msra.mxu0 0
    %454 = vmatprep.mubr.bf16.mxu0 0
    %455 = vmatmul.mubr.bf16.gmra.mrb[0].mxu0 %v421
    %v456 = vpop.f32.mrb[0].mxu0
    %v457 = vadd.f32 0.0, %v456
    %v458 = vpop.f32.mrb[0].mxu0
    %v459 = vadd.f32 0.0, %v458
    %v460 = vpop.f32.mrb[0].mxu0
    %v461 = vadd.f32 0.0, %v460
    %v462 = vpop.f32.mrb[0].mxu0
    %v463 = vadd.f32 0.0, %v462
    %464 = vdwg.mxu0
    %465 = vmatprep.subr.bf16.mxu0 %v191
    %466 = vmatpush1.bf16.msra.mxu0 %v190
    %467 = vmatprep.subr.bf16.mxu0 %v195
    %468 = vmatpush1.bf16.msra.mxu0 %v194
    %469 = vmatprep.subr.bf16.mxu0 %v199
    %470 = vmatpush1.bf16.msra.mxu0 %v198
    %471 = vmatprep.subr.bf16.mxu0 %v203
    %472 = vmatpush1.bf16.msra.mxu0 %v202
    %473 = vmatprep.subr.bf16.mxu0 %v207
    %474 = vmatpush1.bf16.msra.mxu0 %v206
    %475 = vmatprep.subr.bf16.mxu0 %v211
    %476 = vmatpush1.bf16.msra.mxu0 %v210
    %477 = vmatprep.subr.bf16.mxu0 %v215
    %478 = vmatpush1.bf16.msra.mxu0 %v214
    %479 = vmatprep.subr.bf16.mxu0 %v219
    %480 = vmatpush1.bf16.msra.mxu0 %v218
    %481 = vmatprep.subr.bf16.mxu0 0
    %482 = vmatpush1.bf16.msra.mxu0 0
    %483 = vmatprep.subr.bf16.mxu0 0
    %484 = vmatpush1.bf16.msra.mxu0 0
    %485 = vmatprep.subr.bf16.mxu0 0
    %486 = vmatpush1.bf16.msra.mxu0 0
    %487 = vmatprep.subr.bf16.mxu0 0
    %488 = vmatpush1.bf16.msra.mxu0 0
    %489 = vmatprep.subr.bf16.mxu0 0
    %490 = vmatpush1.bf16.msra.mxu0 0
    %491 = vmatprep.subr.bf16.mxu0 0
    %492 = vmatpush1.bf16.msra.mxu0 0
    %493 = vmatprep.subr.bf16.mxu0 0
    %494 = vmatpush1.bf16.msra.mxu0 0
    %495 = vmatprep.subr.bf16.mxu0 0
    %496 = vmatpush1.bf16.msra.mxu0 0
    %497 = vmatprep.mubr.bf16.mxu0 0
    %498 = vmatmul.mubr.bf16.gmra.mrb[0].mxu0 %v421
    %v499 = vpop.f32.mrb[0].mxu0
    %v500 = vadd.f32 0.0, %v499
    %v501 = vpop.f32.mrb[0].mxu0
    %v502 = vadd.f32 0.0, %v501
    %v503 = vpop.f32.mrb[0].mxu0
    %v504 = vadd.f32 0.0, %v503
    %v505 = vpop.f32.mrb[0].mxu0
    %v506 = vadd.f32 0.0, %v505
    %507 = vdwg.mxu0
    %v508 = vadd.f32 %v411, %v457
    %v509 = vadd.f32 %v412, %v459
    %v510 = vadd.f32 %v413, %v500
    %v511 = vadd.f32 %v414, %v502
    %v512 = vadd.f32 %v415, %v461
    %v513 = vadd.f32 %v416, %v463
    %v514 = vadd.f32 %v417, %v504
    %v515 = vadd.f32 %v418, %v506
    %v516 = vxor.u32 %v508, 2147483648
    %v517 = vxor.u32 %v512, 2147483648
    %v518 = vmul.f32 %v516, 1.442695
    %v519 = vpow.pop %v518
    %v520 = vmul.f32 %v517, 1.442695
    %v521 = vpow.pop %v520
    %v522 = vadd.f32 %v519, 1.0
    %v523 = vadd.f32 %v521, 1.0
    %v524 = vrcp.pop %v522
    %v525 = vmul.f32 1.0, %v524
    %v526 = vrcp.pop %v523
    %v527 = vmul.f32 1.0, %v526
    %v528 = vxor.u32 %v509, 2147483648
    %v529 = vxor.u32 %v513, 2147483648
    %v530 = vmul.f32 %v528, 1.442695
    %v531 = vpow.pop %v530
    %v532 = vmul.f32 %v529, 1.442695
    %v533 = vpow.pop %v532
    %v534 = vadd.f32 %v531, 1.0
    %v535 = vadd.f32 %v533, 1.0
    %v536 = vrcp.pop %v534
    %v537 = vmul.f32 1.0, %v536
    %v538 = vrcp.pop %v535
    %v539 = vmul.f32 1.0, %v538
    %v540 = vtanh.pop %v510
    %v541 = vtanh.pop %v514
    %v542 = vxor.u32 %v511, 2147483648
    %v543 = vxor.u32 %v515, 2147483648
    %v544 = vmul.f32 %v542, 1.442695
    %v545 = vpow.pop %v544
    %v546 = vmul.f32 %v543, 1.442695
    %v547 = vpow.pop %v546
    %v548 = vadd.f32 %v545, 1.0
    %v549 = vadd.f32 %v547, 1.0
    %v550 = vrcp.pop %v548
    %v551 = vmul.f32 1.0, %v550
    %v552 = vrcp.pop %v549
    %v553 = vmul.f32 1.0, %v552
    %v554 = vld [vmem:[#allocation3] sm:$0xff]
    %v555 = vld [vmem:[#allocation3 + $0x8] sm:$0xff]
    %v556 = vmul.f32 %v537, %v554
    %v557 = vmul.f32 %v539, %v555
    %v558 = vmul.f32 %v525, %v540
    %v559 = vmul.f32 %v527, %v541
    %v560 = vadd.f32 %v556, %v558
    %v561 = vadd.f32 %v557, %v559
    %v562 = vtanh.pop %v560
    %v563 = vtanh.pop %v561
    %v564 = vmul.f32 %v551, %v562
    %v565 = vmul.f32 %v553, %v563
    %566 = vst [vmem:[#allocation3] sm:$0xff] %v560
    %567 = vst [vmem:[#allocation3 + $0x8] sm:$0xff] %v561
    %568 = vst [vmem:[#allocation2] sm:$0xff] %v564
    %569 = vst [vmem:[#allocation2 + $0x8] sm:$0xff] %v565
    %v570 = vpack.c.bf16 %v565, %v564
    %v572 = vunpack.c.l.b16 %v570
    %v573 = vunpack.c.h.b16 %v570
    %v574 = vpack.c.b16 %v572, %v572
    %v575 = vpack.c.b16 %v573, %v573
    %s578 = scalar_lea.vmem [#allocation9], 8
    %579 = vst [vmem:[%s578] sm:$0xf] %v574
    %580 = vst [vmem:[%s578 + $0x4] sm:$0xf] %v575
    %s581 = scalar_lea.vmem [#allocation4], 128
    %v582 = vld [vmem:[%s581] sm:$0xff]
    %v583 = vld [vmem:[%s581 + $0x8] sm:$0xff]
    %v584 = vld [vmem:[%s581 + $0x10] sm:$0xff]
    %v585 = vld [vmem:[%s581 + $0x18] sm:$0xff]
    %v586 = vld [vmem:[%s581 + $0x20] sm:$0xff]
    %v587 = vld [vmem:[%s581 + $0x28] sm:$0xff]
    %v588 = vld [vmem:[%s581 + $0x30] sm:$0xff]
    %v589 = vld [vmem:[%s581 + $0x38] sm:$0xff]
    %v590 = vld [vmem:[#allocation2] sm:$0xff]
    %v591 = vld [vmem:[#allocation2 + $0x8] sm:$0xff]
    %v592 = vpack.c.bf16 %v591, %v590
    %593 = vmatprep.subr.bf16.mxu0 %v189
    %594 = vmatpush1.bf16.msra.mxu0 %v188
    %595 = vmatprep.subr.bf16.mxu0 %v193
    %596 = vmatpush1.bf16.msra.mxu0 %v192
    %597 = vmatprep.subr.bf16.mxu0 %v197
    %598 = vmatpush1.bf16.msra.mxu0 %v196
    %599 = vmatprep.subr.bf16.mxu0 %v201
    %600 = vmatpush1.bf16.msra.mxu0 %v200
    %601 = vmatprep.subr.bf16.mxu0 %v205
    %602 = vmatpush1.bf16.msra.mxu0 %v204
    %603 = vmatprep.subr.bf16.mxu0 %v209
    %604 = vmatpush1.bf16.msra.mxu0 %v208
    %605 = vmatprep.subr.bf16.mxu0 %v213
    %606 = vmatpush1.bf16.msra.mxu0 %v212
    %607 = vmatprep.subr.bf16.mxu0 %v217
    %608 = vmatpush1.bf16.msra.mxu0 %v216
    %609 = vmatprep.subr.bf16.mxu0 0
    %610 = vmatpush1.bf16.msra.mxu0 0
    %611 = vmatprep.subr.bf16.mxu0 0
    %612 = vmatpush1.bf16.msra.mxu0 0
    %613 = vmatprep.subr.bf16.mxu0 0
    %614 = vmatpush1.bf16.msra.mxu0 0
    %615 = vmatprep.subr.bf16.mxu0 0
    %616 = vmatpush1.bf16.msra.mxu0 0
    %617 = vmatprep.subr.bf16.mxu0 0
    %618 = vmatpush1.bf16.msra.mxu0 0
    %619 = vmatprep.subr.bf16.mxu0 0
    %620 = vmatpush1.bf16.msra.mxu0 0
    %621 = vmatprep.subr.bf16.mxu0 0
    %622 = vmatpush1.bf16.msra.mxu0 0
    %623 = vmatprep.subr.bf16.mxu0 0
    %624 = vmatpush1.bf16.msra.mxu0 0
    %625 = vmatprep.mubr.bf16.mxu0 0
    %626 = vmatmul.mubr.bf16.gmra.mrb[0].mxu0 %v592
    %v627 = vpop.f32.mrb[0].mxu0
    %v628 = vadd.f32 0.0, %v627
    %v629 = vpop.f32.mrb[0].mxu0
    %v630 = vadd.f32 0.0, %v629
    %v631 = vpop.f32.mrb[0].mxu0
    %v632 = vadd.f32 0.0, %v631
    %v633 = vpop.f32.mrb[0].mxu0
    %v634 = vadd.f32 0.0, %v633
    %635 = vdwg.mxu0
    %636 = vmatprep.subr.bf16.mxu0 %v191
    %637 = vmatpush1.bf16.msra.mxu0 %v190
    %638 = vmatprep.subr.bf16.mxu0 %v195
    %639 = vmatpush1.bf16.msra.mxu0 %v194
    %640 = vmatprep.subr.bf16.mxu0 %v199
    %641 = vmatpush1.bf16.msra.mxu0 %v198
    %642 = vmatprep.subr.bf16.mxu0 %v203
    %643 = vmatpush1.bf16.msra.mxu0 %v202
    %644 = vmatprep.subr.bf16.mxu0 %v207
    %645 = vmatpush1.bf16.msra.mxu0 %v206
    %646 = vmatprep.subr.bf16.mxu0 %v211
    %647 = vmatpush1.bf16.msra.mxu0 %v210
    %648 = vmatprep.subr.bf16.mxu0 %v215
    %649 = vmatpush1.bf16.msra.mxu0 %v214
    %650 = vmatprep.subr.bf16.mxu0 %v219
    %651 = vmatpush1.bf16.msra.mxu0 %v218
    %652 = vmatprep.subr.bf16.mxu0 0
    %653 = vmatpush1.bf16.msra.mxu0 0
    %654 = vmatprep.subr.bf16.mxu0 0
    %655 = vmatpush1.bf16.msra.mxu0 0
    %656 = vmatprep.subr.bf16.mxu0 0
    %657 = vmatpush1.bf16.msra.mxu0 0
    %658 = vmatprep.subr.bf16.mxu0 0
    %659 = vmatpush1.bf16.msra.mxu0 0
    %660 = vmatprep.subr.bf16.mxu0 0
    %661 = vmatpush1.bf16.msra.mxu0 0
    %662 = vmatprep.subr.bf16.mxu0 0
    %663 = vmatpush1.bf16.msra.mxu0 0
    %664 = vmatprep.subr.bf16.mxu0 0
    %665 = vmatpush1.bf16.msra.mxu0 0
    %666 = vmatprep.subr.bf16.mxu0 0
    %667 = vmatpush1.bf16.msra.mxu0 0
    %668 = vmatprep.mubr.bf16.mxu0 0
    %669 = vmatmul.mubr.bf16.gmra.mrb[0].mxu0 %v592
    %v670 = vpop.f32.mrb[0].mxu0
    %v671 = vadd.f32 0.0, %v670
    %v672 = vpop.f32.mrb[0].mxu0
    %v673 = vadd.f32 0.0, %v672
    %v674 = vpop.f32.mrb[0].mxu0
    %v675 = vadd.f32 0.0, %v674
    %v676 = vpop.f32.mrb[0].mxu0
    %v677 = vadd.f32 0.0, %v676
    %678 = vdwg.mxu0
    %v679 = vadd.f32 %v582, %v628
    %v680 = vadd.f32 %v583, %v630
    %v681 = vadd.f32 %v584, %v671
    %v682 = vadd.f32 %v585, %v673
    %v683 = vadd.f32 %v586, %v632
    %v684 = vadd.f32 %v587, %v634
    %v685 = vadd.f32 %v588, %v675
    %v686 = vadd.f32 %v589, %v677
    %v687 = vxor.u32 %v679, 2147483648
    %v688 = vxor.u32 %v683, 2147483648
    %v689 = vmul.f32 %v687, 1.442695
    %v690 = vpow.pop %v689
    %v691 = vmul.f32 %v688, 1.442695
    %v692 = vpow.pop %v691
    %v693 = vadd.f32 %v690, 1.0
    %v694 = vadd.f32 %v692, 1.0
    %v695 = vrcp.pop %v693
    %v696 = vmul.f32 1.0, %v695
    %v697 = vrcp.pop %v694
    %v698 = vmul.f32 1.0, %v697
    %v699 = vxor.u32 %v680, 2147483648
    %v700 = vxor.u32 %v684, 2147483648
    %v701 = vmul.f32 %v699, 1.442695
    %v702 = vpow.pop %v701
    %v703 = vmul.f32 %v700, 1.442695
    %v704 = vpow.pop %v703
    %v705 = vadd.f32 %v702, 1.0
    %v706 = vadd.f32 %v704, 1.0
    %v707 = vrcp.pop %v705
    %v708 = vmul.f32 1.0, %v707
    %v709 = vrcp.pop %v706
    %v710 = vmul.f32 1.0, %v709
    %v711 = vtanh.pop %v681
    %v712 = vtanh.pop %v685
    %v713 = vxor.u32 %v682, 2147483648
    %v714 = vxor.u32 %v686, 2147483648
    %v715 = vmul.f32 %v713, 1.442695
    %v716 = vpow.pop %v715
    %v717 = vmul.f32 %v714, 1.442695
    %v718 = vpow.pop %v717
    %v719 = vadd.f32 %v716, 1.0
    %v720 = vadd.f32 %v718, 1.0
    %v721 = vrcp.pop %v719
    %v722 = vmul.f32 1.0, %v721
    %v723 = vrcp.pop %v720
    %v724 = vmul.f32 1.0, %v723
    %v725 = vld [vmem:[#allocation3] sm:$0xff]
    %v726 = vld [vmem:[#allocation3 + $0x8] sm:$0xff]
    %v727 = vmul.f32 %v708, %v725
    %v728 = vmul.f32 %v710, %v726
    %v729 = vmul.f32 %v696, %v711
    %v730 = vmul.f32 %v698, %v712
    %v731 = vadd.f32 %v727, %v729
    %v732 = vadd.f32 %v728, %v730
    %v733 = vtanh.pop %v731
    %v734 = vtanh.pop %v732
    %v735 = vmul.f32 %v722, %v733
    %v736 = vmul.f32 %v724, %v734
    %737 = vst [vmem:[#allocation3] sm:$0xff] %v731
    %738 = vst [vmem:[#allocation3 + $0x8] sm:$0xff] %v732
    %739 = vst [vmem:[#allocation2] sm:$0xff] %v735
    %740 = vst [vmem:[#allocation2 + $0x8] sm:$0xff] %v736
    %v741 = vpack.c.bf16 %v736, %v735
    %v743 = vunpack.c.l.b16 %v741
    %v744 = vunpack.c.h.b16 %v741
    %v745 = vpack.c.b16 %v743, %v743
    %v746 = vpack.c.b16 %v744, %v744
    %s749 = scalar_lea.vmem [#allocation9], 16
    %750 = vst [vmem:[%s749] sm:$0xf] %v745
    %751 = vst [vmem:[%s749 + $0x4] sm:$0xf] %v746
    %s752 = scalar_lea.vmem [#allocation4], 192
    %v753 = vld [vmem:[%s752] sm:$0xff]
    %v754 = vld [vmem:[%s752 + $0x8] sm:$0xff]
    %v755 = vld [vmem:[%s752 + $0x10] sm:$0xff]
    %v756 = vld [vmem:[%s752 + $0x18] sm:$0xff]
    %v757 = vld [vmem:[%s752 + $0x20] sm:$0xff]
    %v758 = vld [vmem:[%s752 + $0x28] sm:$0xff]
    %v759 = vld [vmem:[%s752 + $0x30] sm:$0xff]
    %v760 = vld [vmem:[%s752 + $0x38] sm:$0xff]
    %v761 = vld [vmem:[#allocation2] sm:$0xff]
    %v762 = vld [vmem:[#allocation2 + $0x8] sm:$0xff]
    %v763 = vpack.c.bf16 %v762, %v761
    %764 = vmatprep.subr.bf16.mxu0 %v189
    %765 = vmatpush1.bf16.msra.mxu0 %v188
    %766 = vmatprep.subr.bf16.mxu0 %v193
    %767 = vmatpush1.bf16.msra.mxu0 %v192
    %768 = vmatprep.subr.bf16.mxu0 %v197
    %769 = vmatpush1.bf16.msra.mxu0 %v196
    %770 = vmatprep.subr.bf16.mxu0 %v201
    %771 = vmatpush1.bf16.msra.mxu0 %v200
    %772 = vmatprep.subr.bf16.mxu0 %v205
    %773 = vmatpush1.bf16.msra.mxu0 %v204
    %774 = vmatprep.subr.bf16.mxu0 %v209
    %775 = vmatpush1.bf16.msra.mxu0 %v208
    %776 = vmatprep.subr.bf16.mxu0 %v213
    %777 = vmatpush1.bf16.msra.mxu0 %v212
    %778 = vmatprep.subr.bf16.mxu0 %v217
    %779 = vmatpush1.bf16.msra.mxu0 %v216
    %780 = vmatprep.subr.bf16.mxu0 0
    %781 = vmatpush1.bf16.msra.mxu0 0
    %782 = vmatprep.subr.bf16.mxu0 0
    %783 = vmatpush1.bf16.msra.mxu0 0
    %784 = vmatprep.subr.bf16.mxu0 0
    %785 = vmatpush1.bf16.msra.mxu0 0
    %786 = vmatprep.subr.bf16.mxu0 0
    %787 = vmatpush1.bf16.msra.mxu0 0
    %788 = vmatprep.subr.bf16.mxu0 0
    %789 = vmatpush1.bf16.msra.mxu0 0
    %790 = vmatprep.subr.bf16.mxu0 0
    %791 = vmatpush1.bf16.msra.mxu0 0
    %792 = vmatprep.subr.bf16.mxu0 0
    %793 = vmatpush1.bf16.msra.mxu0 0
    %794 = vmatprep.subr.bf16.mxu0 0
    %795 = vmatpush1.bf16.msra.mxu0 0
    %796 = vmatprep.mubr.bf16.mxu0 0
    %797 = vmatmul.mubr.bf16.gmra.mrb[0].mxu0 %v763
    %v798 = vpop.f32.mrb[0].mxu0
    %v799 = vadd.f32 0.0, %v798
    %v800 = vpop.f32.mrb[0].mxu0
    %v801 = vadd.f32 0.0, %v800
    %v802 = vpop.f32.mrb[0].mxu0
    %v803 = vadd.f32 0.0, %v802
    %v804 = vpop.f32.mrb[0].mxu0
    %v805 = vadd.f32 0.0, %v804
    %806 = vdwg.mxu0
    %807 = vmatprep.subr.bf16.mxu0 %v191
    %808 = vmatpush1.bf16.msra.mxu0 %v190
    %809 = vmatprep.subr.bf16.mxu0 %v195
    %810 = vmatpush1.bf16.msra.mxu0 %v194
    %811 = vmatprep.subr.bf16.mxu0 %v199
    %812 = vmatpush1.bf16.msra.mxu0 %v198
    %813 = vmatprep.subr.bf16.mxu0 %v203
    %814 = vmatpush1.bf16.msra.mxu0 %v202
    %815 = vmatprep.subr.bf16.mxu0 %v207
    %816 = vmatpush1.bf16.msra.mxu0 %v206
    %817 = vmatprep.subr.bf16.mxu0 %v211
    %818 = vmatpush1.bf16.msra.mxu0 %v210
    %819 = vmatprep.subr.bf16.mxu0 %v215
    %820 = vmatpush1.bf16.msra.mxu0 %v214
    %821 = vmatprep.subr.bf16.mxu0 %v219
    %822 = vmatpush1.bf16.msra.mxu0 %v218
    %823 = vmatprep.subr.bf16.mxu0 0
    %824 = vmatpush1.bf16.msra.mxu0 0
    %825 = vmatprep.subr.bf16.mxu0 0
    %826 = vmatpush1.bf16.msra.mxu0 0
    %827 = vmatprep.subr.bf16.mxu0 0
    %828 = vmatpush1.bf16.msra.mxu0 0
    %829 = vmatprep.subr.bf16.mxu0 0
    %830 = vmatpush1.bf16.msra.mxu0 0
    %831 = vmatprep.subr.bf16.mxu0 0
    %832 = vmatpush1.bf16.msra.mxu0 0
    %833 = vmatprep.subr.bf16.mxu0 0
    %834 = vmatpush1.bf16.msra.mxu0 0
    %835 = vmatprep.subr.bf16.mxu0 0
    %836 = vmatpush1.bf16.msra.mxu0 0
    %837 = vmatprep.subr.bf16.mxu0 0
    %838 = vmatpush1.bf16.msra.mxu0 0
    %839 = vmatprep.mubr.bf16.mxu0 0
    %840 = vmatmul.mubr.bf16.gmra.mrb[0].mxu0 %v763
    %v841 = vpop.f32.mrb[0].mxu0
    %v842 = vadd.f32 0.0, %v841
    %v843 = vpop.f32.mrb[0].mxu0
    %v844 = vadd.f32 0.0, %v843
    %v845 = vpop.f32.mrb[0].mxu0
    %v846 = vadd.f32 0.0, %v845
    %v847 = vpop.f32.mrb[0].mxu0
    %v848 = vadd.f32 0.0, %v847
    %849 = vdwg.mxu0
    %v850 = vadd.f32 %v753, %v799
    %v851 = vadd.f32 %v754, %v801
    %v852 = vadd.f32 %v755, %v842
    %v853 = vadd.f32 %v756, %v844
    %v854 = vadd.f32 %v757, %v803
    %v855 = vadd.f32 %v758, %v805
    %v856 = vadd.f32 %v759, %v846
    %v857 = vadd.f32 %v760, %v848
    %v858 = vxor.u32 %v850, 2147483648
    %v859 = vxor.u32 %v854, 2147483648
    %v860 = vmul.f32 %v858, 1.442695
    %v861 = vpow.pop %v860
    %v862 = vmul.f32 %v859, 1.442695
    %v863 = vpow.pop %v862
    %v864 = vadd.f32 %v861, 1.0
    %v865 = vadd.f32 %v863, 1.0
    %v866 = vrcp.pop %v864
    %v867 = vmul.f32 1.0, %v866
    %v868 = vrcp.pop %v865
    %v869 = vmul.f32 1.0, %v868
    %v870 = vxor.u32 %v851, 2147483648
    %v871 = vxor.u32 %v855, 2147483648
    %v872 = vmul.f32 %v870, 1.442695
    %v873 = vpow.pop %v872
    %v874 = vmul.f32 %v871, 1.442695
    %v875 = vpow.pop %v874
    %v876 = vadd.f32 %v873, 1.0
    %v877 = vadd.f32 %v875, 1.0
    %v878 = vrcp.pop %v876
    %v879 = vmul.f32 1.0, %v878
    %v880 = vrcp.pop %v877
    %v881 = vmul.f32 1.0, %v880
    %v882 = vtanh.pop %v852
    %v883 = vtanh.pop %v856
    %v884 = vxor.u32 %v853, 2147483648
    %v885 = vxor.u32 %v857, 2147483648
    %v886 = vmul.f32 %v884, 1.442695
    %v887 = vpow.pop %v886
    %v888 = vmul.f32 %v885, 1.442695
    %v889 = vpow.pop %v888
    %v890 = vadd.f32 %v887, 1.0
    %v891 = vadd.f32 %v889, 1.0
    %v892 = vrcp.pop %v890
    %v893 = vmul.f32 1.0, %v892
    %v894 = vrcp.pop %v891
    %v895 = vmul.f32 1.0, %v894
    %v896 = vld [vmem:[#allocation3] sm:$0xff]
    %v897 = vld [vmem:[#allocation3 + $0x8] sm:$0xff]
    %v898 = vmul.f32 %v879, %v896
    %v899 = vmul.f32 %v881, %v897
    %v900 = vmul.f32 %v867, %v882
    %v901 = vmul.f32 %v869, %v883
    %v902 = vadd.f32 %v898, %v900
    %v903 = vadd.f32 %v899, %v901
    %v904 = vtanh.pop %v902
    %v905 = vtanh.pop %v903
    %v906 = vmul.f32 %v893, %v904
    %v907 = vmul.f32 %v895, %v905
    %908 = vst [vmem:[#allocation3] sm:$0xff] %v902
    %909 = vst [vmem:[#allocation3 + $0x8] sm:$0xff] %v903
    %910 = vst [vmem:[#allocation2] sm:$0xff] %v906
    %911 = vst [vmem:[#allocation2 + $0x8] sm:$0xff] %v907
    %v912 = vpack.c.bf16 %v907, %v906
    %v914 = vunpack.c.l.b16 %v912
    %v915 = vunpack.c.h.b16 %v912
    %v916 = vpack.c.b16 %v914, %v914
    %v917 = vpack.c.b16 %v915, %v915
    %s920 = scalar_lea.vmem [#allocation9], 24
    %921 = vst [vmem:[%s920] sm:$0xf] %v916
    %922 = vst [vmem:[%s920 + $0x4] sm:$0xf] %v917
    %s923 = scalar_lea.vmem [#allocation4], 256
    %v924 = vld [vmem:[%s923] sm:$0xff]
    %v925 = vld [vmem:[%s923 + $0x8] sm:$0xff]
    %v926 = vld [vmem:[%s923 + $0x10] sm:$0xff]
    %v927 = vld [vmem:[%s923 + $0x18] sm:$0xff]
    %v928 = vld [vmem:[%s923 + $0x20] sm:$0xff]
    %v929 = vld [vmem:[%s923 + $0x28] sm:$0xff]
    %v930 = vld [vmem:[%s923 + $0x30] sm:$0xff]
    %v931 = vld [vmem:[%s923 + $0x38] sm:$0xff]
    %v932 = vld [vmem:[#allocation2] sm:$0xff]
    %v933 = vld [vmem:[#allocation2 + $0x8] sm:$0xff]
    %v934 = vpack.c.bf16 %v933, %v932
    %935 = vmatprep.subr.bf16.mxu0 %v189
    %936 = vmatpush1.bf16.msra.mxu0 %v188
    %937 = vmatprep.subr.bf16.mxu0 %v193
    %938 = vmatpush1.bf16.msra.mxu0 %v192
    %939 = vmatprep.subr.bf16.mxu0 %v197
    %940 = vmatpush1.bf16.msra.mxu0 %v196
    %941 = vmatprep.subr.bf16.mxu0 %v201
    %942 = vmatpush1.bf16.msra.mxu0 %v200
    %943 = vmatprep.subr.bf16.mxu0 %v205
    %944 = vmatpush1.bf16.msra.mxu0 %v204
    %945 = vmatprep.subr.bf16.mxu0 %v209
    %946 = vmatpush1.bf16.msra.mxu0 %v208
    %947 = vmatprep.subr.bf16.mxu0 %v213
    %948 = vmatpush1.bf16.msra.mxu0 %v212
    %949 = vmatprep.subr.bf16.mxu0 %v217
    %950 = vmatpush1.bf16.msra.mxu0 %v216
    %951 = vmatprep.subr.bf16.mxu0 0
    %952 = vmatpush1.bf16.msra.mxu0 0
    %953 = vmatprep.subr.bf16.mxu0 0
    %954 = vmatpush1.bf16.msra.mxu0 0
    %955 = vmatprep.subr.bf16.mxu0 0
    %956 = vmatpush1.bf16.msra.mxu0 0
    %957 = vmatprep.subr.bf16.mxu0 0
    %958 = vmatpush1.bf16.msra.mxu0 0
    %959 = vmatprep.subr.bf16.mxu0 0
    %960 = vmatpush1.bf16.msra.mxu0 0
    %961 = vmatprep.subr.bf16.mxu0 0
    %962 = vmatpush1.bf16.msra.mxu0 0
    %963 = vmatprep.subr.bf16.mxu0 0
    %964 = vmatpush1.bf16.msra.mxu0 0
    %965 = vmatprep.subr.bf16.mxu0 0
    %966 = vmatpush1.bf16.msra.mxu0 0
    %967 = vmatprep.mubr.bf16.mxu0 0
    %968 = vmatmul.mubr.bf16.gmra.mrb[0].mxu0 %v934
    %v969 = vpop.f32.mrb[0].mxu0
    %v970 = vadd.f32 0.0, %v969
    %v971 = vpop.f32.mrb[0].mxu0
    %v972 = vadd.f32 0.0, %v971
    %v973 = vpop.f32.mrb[0].mxu0
    %v974 = vadd.f32 0.0, %v973
    %v975 = vpop.f32.mrb[0].mxu0
    %v976 = vadd.f32 0.0, %v975
    %977 = vdwg.mxu0
    %978 = vmatprep.subr.bf16.mxu0 %v191
    %979 = vmatpush1.bf16.msra.mxu0 %v190
    %980 = vmatprep.subr.bf16.mxu0 %v195
    %981 = vmatpush1.bf16.msra.mxu0 %v194
    %982 = vmatprep.subr.bf16.mxu0 %v199
    %983 = vmatpush1.bf16.msra.mxu0 %v198
    %984 = vmatprep.subr.bf16.mxu0 %v203
    %985 = vmatpush1.bf16.msra.mxu0 %v202
    %986 = vmatprep.subr.bf16.mxu0 %v207
    %987 = vmatpush1.bf16.msra.mxu0 %v206
    %988 = vmatprep.subr.bf16.mxu0 %v211
    %989 = vmatpush1.bf16.msra.mxu0 %v210
    %990 = vmatprep.subr.bf16.mxu0 %v215
    %991 = vmatpush1.bf16.msra.mxu0 %v214
    %992 = vmatprep.subr.bf16.mxu0 %v219
    %993 = vmatpush1.bf16.msra.mxu0 %v218
    %994 = vmatprep.subr.bf16.mxu0 0
    %995 = vmatpush1.bf16.msra.mxu0 0
    %996 = vmatprep.subr.bf16.mxu0 0
    %997 = vmatpush1.bf16.msra.mxu0 0
    %998 = vmatprep.subr.bf16.mxu0 0
    %999 = vmatpush1.bf16.msra.mxu0 0
    %1000 = vmatprep.subr.bf16.mxu0 0
    %1001 = vmatpush1.bf16.msra.mxu0 0
    %1002 = vmatprep.subr.bf16.mxu0 0
    %1003 = vmatpush1.bf16.msra.mxu0 0
    %1004 = vmatprep.subr.bf16.mxu0 0
    %1005 = vmatpush1.bf16.msra.mxu0 0
    %1006 = vmatprep.subr.bf16.mxu0 0
    %1007 = vmatpush1.bf16.msra.mxu0 0
    %1008 = vmatprep.subr.bf16.mxu0 0
    %1009 = vmatpush1.bf16.msra.mxu0 0
    %1010 = vmatprep.mubr.bf16.mxu0 0
    %1011 = vmatmul.mubr.bf16.gmra.mrb[0].mxu0 %v934
    %v1012 = vpop.f32.mrb[0].mxu0
    %v1013 = vadd.f32 0.0, %v1012
    %v1014 = vpop.f32.mrb[0].mxu0
    %v1015 = vadd.f32 0.0, %v1014
    %v1016 = vpop.f32.mrb[0].mxu0
    %v1017 = vadd.f32 0.0, %v1016
    %v1018 = vpop.f32.mrb[0].mxu0
    %v1019 = vadd.f32 0.0, %v1018
    %1020 = vdwg.mxu0
    %v1021 = vadd.f32 %v924, %v970
    %v1022 = vadd.f32 %v925, %v972
    %v1023 = vadd.f32 %v926, %v1013
    %v1024 = vadd.f32 %v927, %v1015
    %v1025 = vadd.f32 %v928, %v974
    %v1026 = vadd.f32 %v929, %v976
    %v1027 = vadd.f32 %v930, %v1017
    %v1028 = vadd.f32 %v931, %v1019
    %v1029 = vxor.u32 %v1021, 2147483648
    %v1030 = vxor.u32 %v1025, 2147483648
    %v1031 = vmul.f32 %v1029, 1.442695
    %v1032 = vpow.pop %v1031
    %v1033 = vmul.f32 %v1030, 1.442695
    %v1034 = vpow.pop %v1033
    %v1035 = vadd.f32 %v1032, 1.0
    %v1036 = vadd.f32 %v1034, 1.0
    %v1037 = vrcp.pop %v1035
    %v1038 = vmul.f32 1.0, %v1037
    %v1039 = vrcp.pop %v1036
    %v1040 = vmul.f32 1.0, %v1039
    %v1041 = vxor.u32 %v1022, 2147483648
    %v1042 = vxor.u32 %v1026, 2147483648
    %v1043 = vmul.f32 %v1041, 1.442695
    %v1044 = vpow.pop %v1043
    %v1045 = vmul.f32 %v1042, 1.442695
    %v1046 = vpow.pop %v1045
    %v1047 = vadd.f32 %v1044, 1.0
    %v1048 = vadd.f32 %v1046, 1.0
    %v1049 = vrcp.pop %v1047
    %v1050 = vmul.f32 1.0, %v1049
    %v1051 = vrcp.pop %v1048
    %v1052 = vmul.f32 1.0, %v1051
    %v1053 = vtanh.pop %v1023
    %v1054 = vtanh.pop %v1027
    %v1055 = vxor.u32 %v1024, 2147483648
    %v1056 = vxor.u32 %v1028, 2147483648
    %v1057 = vmul.f32 %v1055, 1.442695
    %v1058 = vpow.pop %v1057
    %v1059 = vmul.f32 %v1056, 1.442695
    %v1060 = vpow.pop %v1059
    %v1061 = vadd.f32 %v1058, 1.0
    %v1062 = vadd.f32 %v1060, 1.0
    %v1063 = vrcp.pop %v1061
    %v1064 = vmul.f32 1.0, %v1063
    %v1065 = vrcp.pop %v1062
    %v1066 = vmul.f32 1.0, %v1065
    %v1067 = vld [vmem:[#allocation3] sm:$0xff]
    %v1068 = vld [vmem:[#allocation3 + $0x8] sm:$0xff]
    %v1069 = vmul.f32 %v1050, %v1067
    %v1070 = vmul.f32 %v1052, %v1068
    %v1071 = vmul.f32 %v1038, %v1053
    %v1072 = vmul.f32 %v1040, %v1054
    %v1073 = vadd.f32 %v1069, %v1071
    %v1074 = vadd.f32 %v1070, %v1072
    %v1075 = vtanh.pop %v1073
    %v1076 = vtanh.pop %v1074
    %v1077 = vmul.f32 %v1064, %v1075
    %v1078 = vmul.f32 %v1066, %v1076
    %1079 = vst [vmem:[#allocation3] sm:$0xff] %v1073
    %1080 = vst [vmem:[#allocation3 + $0x8] sm:$0xff] %v1074
    %1081 = vst [vmem:[#allocation2] sm:$0xff] %v1077
    %1082 = vst [vmem:[#allocation2 + $0x8] sm:$0xff] %v1078
    %v1083 = vpack.c.bf16 %v1078, %v1077
    %v1085 = vunpack.c.l.b16 %v1083
    %v1086 = vunpack.c.h.b16 %v1083
    %v1087 = vpack.c.b16 %v1085, %v1085
    %v1088 = vpack.c.b16 %v1086, %v1086
    %s1091 = scalar_lea.vmem [#allocation9], 32
    %1092 = vst [vmem:[%s1091] sm:$0xf] %v1087
    %1093 = vst [vmem:[%s1091 + $0x4] sm:$0xf] %v1088
    %s1094 = scalar_lea.vmem [#allocation4], 320
    %v1095 = vld [vmem:[%s1094] sm:$0xff]
    %v1096 = vld [vmem:[%s1094 + $0x8] sm:$0xff]
    %v1097 = vld [vmem:[%s1094 + $0x10] sm:$0xff]
    %v1098 = vld [vmem:[%s1094 + $0x18] sm:$0xff]
    %v1099 = vld [vmem:[%s1094 + $0x20] sm:$0xff]
    %v1100 = vld [vmem:[%s1094 + $0x28] sm:$0xff]
    %v1101 = vld [vmem:[%s1094 + $0x30] sm:$0xff]
    %v1102 = vld [vmem:[%s1094 + $0x38] sm:$0xff]
    %v1103 = vld [vmem:[#allocation2] sm:$0xff]
    %v1104 = vld [vmem:[#allocation2 + $0x8] sm:$0xff]
    %v1105 = vpack.c.bf16 %v1104, %v1103
    %1106 = vmatprep.subr.bf16.mxu0 %v189
    %1107 = vmatpush1.bf16.msra.mxu0 %v188
    %1108 = vmatprep.subr.bf16.mxu0 %v193
    %1109 = vmatpush1.bf16.msra.mxu0 %v192
    %1110 = vmatprep.subr.bf16.mxu0 %v197
    %1111 = vmatpush1.bf16.msra.mxu0 %v196
    %1112 = vmatprep.subr.bf16.mxu0 %v201
    %1113 = vmatpush1.bf16.msra.mxu0 %v200
    %1114 = vmatprep.subr.bf16.mxu0 %v205
    %1115 = vmatpush1.bf16.msra.mxu0 %v204
    %1116 = vmatprep.subr.bf16.mxu0 %v209
    %1117 = vmatpush1.bf16.msra.mxu0 %v208
    %1118 = vmatprep.subr.bf16.mxu0 %v213
    %1119 = vmatpush1.bf16.msra.mxu0 %v212
    %1120 = vmatprep.subr.bf16.mxu0 %v217
    %1121 = vmatpush1.bf16.msra.mxu0 %v216
    %1122 = vmatprep.subr.bf16.mxu0 0
    %1123 = vmatpush1.bf16.msra.mxu0 0
    %1124 = vmatprep.subr.bf16.mxu0 0
    %1125 = vmatpush1.bf16.msra.mxu0 0
    %1126 = vmatprep.subr.bf16.mxu0 0
    %1127 = vmatpush1.bf16.msra.mxu0 0
    %1128 = vmatprep.subr.bf16.mxu0 0
    %1129 = vmatpush1.bf16.msra.mxu0 0
    %1130 = vmatprep.subr.bf16.mxu0 0
    %1131 = vmatpush1.bf16.msra.mxu0 0
    %1132 = vmatprep.subr.bf16.mxu0 0
    %1133 = vmatpush1.bf16.msra.mxu0 0
    %1134 = vmatprep.subr.bf16.mxu0 0
    %1135 = vmatpush1.bf16.msra.mxu0 0
    %1136 = vmatprep.subr.bf16.mxu0 0
    %1137 = vmatpush1.bf16.msra.mxu0 0
    %1138 = vmatprep.mubr.bf16.mxu0 0
    %1139 = vmatmul.mubr.bf16.gmra.mrb[0].mxu0 %v1105
    %v1140 = vpop.f32.mrb[0].mxu0
    %v1141 = vadd.f32 0.0, %v1140
    %v1142 = vpop.f32.mrb[0].mxu0
    %v1143 = vadd.f32 0.0, %v1142
    %v1144 = vpop.f32.mrb[0].mxu0
    %v1145 = vadd.f32 0.0, %v1144
    %v1146 = vpop.f32.mrb[0].mxu0
    %v1147 = vadd.f32 0.0, %v1146
    %1148 = vdwg.mxu0
    %1149 = vmatprep.subr.bf16.mxu0 %v191
    %1150 = vmatpush1.bf16.msra.mxu0 %v190
    %1151 = vmatprep.subr.bf16.mxu0 %v195
    %1152 = vmatpush1.bf16.msra.mxu0 %v194
    %1153 = vmatprep.subr.bf16.mxu0 %v199
    %1154 = vmatpush1.bf16.msra.mxu0 %v198
    %1155 = vmatprep.subr.bf16.mxu0 %v203
    %1156 = vmatpush1.bf16.msra.mxu0 %v202
    %1157 = vmatprep.subr.bf16.mxu0 %v207
    %1158 = vmatpush1.bf16.msra.mxu0 %v206
    %1159 = vmatprep.subr.bf16.mxu0 %v211
    %1160 = vmatpush1.bf16.msra.mxu0 %v210
    %1161 = vmatprep.subr.bf16.mxu0 %v215
    %1162 = vmatpush1.bf16.msra.mxu0 %v214
    %1163 = vmatprep.subr.bf16.mxu0 %v219
    %1164 = vmatpush1.bf16.msra.mxu0 %v218
    %1165 = vmatprep.subr.bf16.mxu0 0
    %1166 = vmatpush1.bf16.msra.mxu0 0
    %1167 = vmatprep.subr.bf16.mxu0 0
    %1168 = vmatpush1.bf16.msra.mxu0 0
    %1169 = vmatprep.subr.bf16.mxu0 0
    %1170 = vmatpush1.bf16.msra.mxu0 0
    %1171 = vmatprep.subr.bf16.mxu0 0
    %1172 = vmatpush1.bf16.msra.mxu0 0
    %1173 = vmatprep.subr.bf16.mxu0 0
    %1174 = vmatpush1.bf16.msra.mxu0 0
    %1175 = vmatprep.subr.bf16.mxu0 0
    %1176 = vmatpush1.bf16.msra.mxu0 0
    %1177 = vmatprep.subr.bf16.mxu0 0
    %1178 = vmatpush1.bf16.msra.mxu0 0
    %1179 = vmatprep.subr.bf16.mxu0 0
    %1180 = vmatpush1.bf16.msra.mxu0 0
    %1181 = vmatprep.mubr.bf16.mxu0 0
    %1182 = vmatmul.mubr.bf16.gmra.mrb[0].mxu0 %v1105
    %v1183 = vpop.f32.mrb[0].mxu0
    %v1184 = vadd.f32 0.0, %v1183
    %v1185 = vpop.f32.mrb[0].mxu0
    %v1186 = vadd.f32 0.0, %v1185
    %v1187 = vpop.f32.mrb[0].mxu0
    %v1188 = vadd.f32 0.0, %v1187
    %v1189 = vpop.f32.mrb[0].mxu0
    %v1190 = vadd.f32 0.0, %v1189
    %1191 = vdwg.mxu0
    %v1192 = vadd.f32 %v1095, %v1141
    %v1193 = vadd.f32 %v1096, %v1143
    %v1194 = vadd.f32 %v1097, %v1184
    %v1195 = vadd.f32 %v1098, %v1186
    %v1196 = vadd.f32 %v1099, %v1145
    %v1197 = vadd.f32 %v1100, %v1147
    %v1198 = vadd.f32 %v1101, %v1188
    %v1199 = vadd.f32 %v1102, %v1190
    %v1200 = vxor.u32 %v1192, 2147483648
    %v1201 = vxor.u32 %v1196, 2147483648
    %v1202 = vmul.f32 %v1200, 1.442695
    %v1203 = vpow.pop %v1202
    %v1204 = vmul.f32 %v1201, 1.442695
    %v1205 = vpow.pop %v1204
    %v1206 = vadd.f32 %v1203, 1.0
    %v1207 = vadd.f32 %v1205, 1.0
    %v1208 = vrcp.pop %v1206
    %v1209 = vmul.f32 1.0, %v1208
    %v1210 = vrcp.pop %v1207
    %v1211 = vmul.f32 1.0, %v1210
    %v1212 = vxor.u32 %v1193, 2147483648
    %v1213 = vxor.u32 %v1197, 2147483648
    %v1214 = vmul.f32 %v1212, 1.442695
    %v1215 = vpow.pop %v1214
    %v1216 = vmul.f32 %v1213, 1.442695
    %v1217 = vpow.pop %v1216
    %v1218 = vadd.f32 %v1215, 1.0
    %v1219 = vadd.f32 %v1217, 1.0
    %v1220 = vrcp.pop %v1218
    %v1221 = vmul.f32 1.0, %v1220
    %v1222 = vrcp.pop %v1219
    %v1223 = vmul.f32 1.0, %v1222
    %v1224 = vtanh.pop %v1194
    %v1225 = vtanh.pop %v1198
    %v1226 = vxor.u32 %v1195, 2147483648
    %v1227 = vxor.u32 %v1199, 2147483648
    %v1228 = vmul.f32 %v1226, 1.442695
    %v1229 = vpow.pop %v1228
    %v1230 = vmul.f32 %v1227, 1.442695
    %v1231 = vpow.pop %v1230
    %v1232 = vadd.f32 %v1229, 1.0
    %v1233 = vadd.f32 %v1231, 1.0
    %v1234 = vrcp.pop %v1232
    %v1235 = vmul.f32 1.0, %v1234
    %v1236 = vrcp.pop %v1233
    %v1237 = vmul.f32 1.0, %v1236
    %v1238 = vld [vmem:[#allocation3] sm:$0xff]
    %v1239 = vld [vmem:[#allocation3 + $0x8] sm:$0xff]
    %v1240 = vmul.f32 %v1221, %v1238
    %v1241 = vmul.f32 %v1223, %v1239
    %v1242 = vmul.f32 %v1209, %v1224
    %v1243 = vmul.f32 %v1211, %v1225
    %v1244 = vadd.f32 %v1240, %v1242
    %v1245 = vadd.f32 %v1241, %v1243
    %v1246 = vtanh.pop %v1244
    %v1247 = vtanh.pop %v1245
    %v1248 = vmul.f32 %v1235, %v1246
    %v1249 = vmul.f32 %v1237, %v1247
    %1250 = vst [vmem:[#allocation3] sm:$0xff] %v1244
    %1251 = vst [vmem:[#allocation3 + $0x8] sm:$0xff] %v1245
    %1252 = vst [vmem:[#allocation2] sm:$0xff] %v1248
    %1253 = vst [vmem:[#allocation2 + $0x8] sm:$0xff] %v1249
    %v1254 = vpack.c.bf16 %v1249, %v1248
    %v1256 = vunpack.c.l.b16 %v1254
    %v1257 = vunpack.c.h.b16 %v1254
    %v1258 = vpack.c.b16 %v1256, %v1256
    %v1259 = vpack.c.b16 %v1257, %v1257
    %s1262 = scalar_lea.vmem [#allocation9], 40
    %1263 = vst [vmem:[%s1262] sm:$0xf] %v1258
    %1264 = vst [vmem:[%s1262 + $0x4] sm:$0xf] %v1259
    %s1265 = scalar_lea.vmem [#allocation4], 384
    %v1266 = vld [vmem:[%s1265] sm:$0xff]
    %v1267 = vld [vmem:[%s1265 + $0x8] sm:$0xff]
    %v1268 = vld [vmem:[%s1265 + $0x10] sm:$0xff]
    %v1269 = vld [vmem:[%s1265 + $0x18] sm:$0xff]
    %v1270 = vld [vmem:[%s1265 + $0x20] sm:$0xff]
    %v1271 = vld [vmem:[%s1265 + $0x28] sm:$0xff]
    %v1272 = vld [vmem:[%s1265 + $0x30] sm:$0xff]
    %v1273 = vld [vmem:[%s1265 + $0x38] sm:$0xff]
    %v1274 = vld [vmem:[#allocation2] sm:$0xff]
    %v1275 = vld [vmem:[#allocation2 + $0x8] sm:$0xff]
    %v1276 = vpack.c.bf16 %v1275, %v1274
    %1277 = vmatprep.subr.bf16.mxu0 %v189
    %1278 = vmatpush1.bf16.msra.mxu0 %v188
    %1279 = vmatprep.subr.bf16.mxu0 %v193
    %1280 = vmatpush1.bf16.msra.mxu0 %v192
    %1281 = vmatprep.subr.bf16.mxu0 %v197
    %1282 = vmatpush1.bf16.msra.mxu0 %v196
    %1283 = vmatprep.subr.bf16.mxu0 %v201
    %1284 = vmatpush1.bf16.msra.mxu0 %v200
    %1285 = vmatprep.subr.bf16.mxu0 %v205
    %1286 = vmatpush1.bf16.msra.mxu0 %v204
    %1287 = vmatprep.subr.bf16.mxu0 %v209
    %1288 = vmatpush1.bf16.msra.mxu0 %v208
    %1289 = vmatprep.subr.bf16.mxu0 %v213
    %1290 = vmatpush1.bf16.msra.mxu0 %v212
    %1291 = vmatprep.subr.bf16.mxu0 %v217
    %1292 = vmatpush1.bf16.msra.mxu0 %v216
    %1293 = vmatprep.subr.bf16.mxu0 0
    %1294 = vmatpush1.bf16.msra.mxu0 0
    %1295 = vmatprep.subr.bf16.mxu0 0
    %1296 = vmatpush1.bf16.msra.mxu0 0
    %1297 = vmatprep.subr.bf16.mxu0 0
    %1298 = vmatpush1.bf16.msra.mxu0 0
    %1299 = vmatprep.subr.bf16.mxu0 0
    %1300 = vmatpush1.bf16.msra.mxu0 0
    %1301 = vmatprep.subr.bf16.mxu0 0
    %1302 = vmatpush1.bf16.msra.mxu0 0
    %1303 = vmatprep.subr.bf16.mxu0 0
    %1304 = vmatpush1.bf16.msra.mxu0 0
    %1305 = vmatprep.subr.bf16.mxu0 0
    %1306 = vmatpush1.bf16.msra.mxu0 0
    %1307 = vmatprep.subr.bf16.mxu0 0
    %1308 = vmatpush1.bf16.msra.mxu0 0
    %1309 = vmatprep.mubr.bf16.mxu0 0
    %1310 = vmatmul.mubr.bf16.gmra.mrb[0].mxu0 %v1276
    %v1311 = vpop.f32.mrb[0].mxu0
    %v1312 = vadd.f32 0.0, %v1311
    %v1313 = vpop.f32.mrb[0].mxu0
    %v1314 = vadd.f32 0.0, %v1313
    %v1315 = vpop.f32.mrb[0].mxu0
    %v1316 = vadd.f32 0.0, %v1315
    %v1317 = vpop.f32.mrb[0].mxu0
    %v1318 = vadd.f32 0.0, %v1317
    %1319 = vdwg.mxu0
    %1320 = vmatprep.subr.bf16.mxu0 %v191
    %1321 = vmatpush1.bf16.msra.mxu0 %v190
    %1322 = vmatprep.subr.bf16.mxu0 %v195
    %1323 = vmatpush1.bf16.msra.mxu0 %v194
    %1324 = vmatprep.subr.bf16.mxu0 %v199
    %1325 = vmatpush1.bf16.msra.mxu0 %v198
    %1326 = vmatprep.subr.bf16.mxu0 %v203
    %1327 = vmatpush1.bf16.msra.mxu0 %v202
    %1328 = vmatprep.subr.bf16.mxu0 %v207
    %1329 = vmatpush1.bf16.msra.mxu0 %v206
    %1330 = vmatprep.subr.bf16.mxu0 %v211
    %1331 = vmatpush1.bf16.msra.mxu0 %v210
    %1332 = vmatprep.subr.bf16.mxu0 %v215
    %1333 = vmatpush1.bf16.msra.mxu0 %v214
    %1334 = vmatprep.subr.bf16.mxu0 %v219
    %1335 = vmatpush1.bf16.msra.mxu0 %v218
    %1336 = vmatprep.subr.bf16.mxu0 0
    %1337 = vmatpush1.bf16.msra.mxu0 0
    %1338 = vmatprep.subr.bf16.mxu0 0
    %1339 = vmatpush1.bf16.msra.mxu0 0
    %1340 = vmatprep.subr.bf16.mxu0 0
    %1341 = vmatpush1.bf16.msra.mxu0 0
    %1342 = vmatprep.subr.bf16.mxu0 0
    %1343 = vmatpush1.bf16.msra.mxu0 0
    %1344 = vmatprep.subr.bf16.mxu0 0
    %1345 = vmatpush1.bf16.msra.mxu0 0
    %1346 = vmatprep.subr.bf16.mxu0 0
    %1347 = vmatpush1.bf16.msra.mxu0 0
    %1348 = vmatprep.subr.bf16.mxu0 0
    %1349 = vmatpush1.bf16.msra.mxu0 0
    %1350 = vmatprep.subr.bf16.mxu0 0
    %1351 = vmatpush1.bf16.msra.mxu0 0
    %1352 = vmatprep.mubr.bf16.mxu0 0
    %1353 = vmatmul.mubr.bf16.gmra.mrb[0].mxu0 %v1276
    %v1354 = vpop.f32.mrb[0].mxu0
    %v1355 = vadd.f32 0.0, %v1354
    %v1356 = vpop.f32.mrb[0].mxu0
    %v1357 = vadd.f32 0.0, %v1356
    %v1358 = vpop.f32.mrb[0].mxu0
    %v1359 = vadd.f32 0.0, %v1358
    %v1360 = vpop.f32.mrb[0].mxu0
    %v1361 = vadd.f32 0.0, %v1360
    %1362 = vdwg.mxu0
    %v1363 = vadd.f32 %v1266, %v1312
    %v1364 = vadd.f32 %v1267, %v1314
    %v1365 = vadd.f32 %v1268, %v1355
    %v1366 = vadd.f32 %v1269, %v1357
    %v1367 = vadd.f32 %v1270, %v1316
    %v1368 = vadd.f32 %v1271, %v1318
    %v1369 = vadd.f32 %v1272, %v1359
    %v1370 = vadd.f32 %v1273, %v1361
    %v1371 = vxor.u32 %v1363, 2147483648
    %v1372 = vxor.u32 %v1367, 2147483648
    %v1373 = vmul.f32 %v1371, 1.442695
    %v1374 = vpow.pop %v1373
    %v1375 = vmul.f32 %v1372, 1.442695
    %v1376 = vpow.pop %v1375
    %v1377 = vadd.f32 %v1374, 1.0
    %v1378 = vadd.f32 %v1376, 1.0
    %v1379 = vrcp.pop %v1377
    %v1380 = vmul.f32 1.0, %v1379
    %v1381 = vrcp.pop %v1378
    %v1382 = vmul.f32 1.0, %v1381
    %v1383 = vxor.u32 %v1364, 2147483648
    %v1384 = vxor.u32 %v1368, 2147483648
    %v1385 = vmul.f32 %v1383, 1.442695
    %v1386 = vpow.pop %v1385
    %v1387 = vmul.f32 %v1384, 1.442695
    %v1388 = vpow.pop %v1387
    %v1389 = vadd.f32 %v1386, 1.0
    %v1390 = vadd.f32 %v1388, 1.0
    %v1391 = vrcp.pop %v1389
    %v1392 = vmul.f32 1.0, %v1391
    %v1393 = vrcp.pop %v1390
    %v1394 = vmul.f32 1.0, %v1393
    %v1395 = vtanh.pop %v1365
    %v1396 = vtanh.pop %v1369
    %v1397 = vxor.u32 %v1366, 2147483648
    %v1398 = vxor.u32 %v1370, 2147483648
    %v1399 = vmul.f32 %v1397, 1.442695
    %v1400 = vpow.pop %v1399
    %v1401 = vmul.f32 %v1398, 1.442695
    %v1402 = vpow.pop %v1401
    %v1403 = vadd.f32 %v1400, 1.0
    %v1404 = vadd.f32 %v1402, 1.0
    %v1405 = vrcp.pop %v1403
    %v1406 = vmul.f32 1.0, %v1405
    %v1407 = vrcp.pop %v1404
    %v1408 = vmul.f32 1.0, %v1407
    %v1409 = vld [vmem:[#allocation3] sm:$0xff]
    %v1410 = vld [vmem:[#allocation3 + $0x8] sm:$0xff]
    %v1411 = vmul.f32 %v1392, %v1409
    %v1412 = vmul.f32 %v1394, %v1410
    %v1413 = vmul.f32 %v1380, %v1395
    %v1414 = vmul.f32 %v1382, %v1396
    %v1415 = vadd.f32 %v1411, %v1413
    %v1416 = vadd.f32 %v1412, %v1414
    %v1417 = vtanh.pop %v1415
    %v1418 = vtanh.pop %v1416
    %v1419 = vmul.f32 %v1406, %v1417
    %v1420 = vmul.f32 %v1408, %v1418
    %1421 = vst [vmem:[#allocation3] sm:$0xff] %v1415
    %1422 = vst [vmem:[#allocation3 + $0x8] sm:$0xff] %v1416
    %1423 = vst [vmem:[#allocation2] sm:$0xff] %v1419
    %1424 = vst [vmem:[#allocation2 + $0x8] sm:$0xff] %v1420
    %v1425 = vpack.c.bf16 %v1420, %v1419
    %v1427 = vunpack.c.l.b16 %v1425
    %v1428 = vunpack.c.h.b16 %v1425
    %v1429 = vpack.c.b16 %v1427, %v1427
    %v1430 = vpack.c.b16 %v1428, %v1428
    %s1433 = scalar_lea.vmem [#allocation9], 48
    %1434 = vst [vmem:[%s1433] sm:$0xf] %v1429
    %1435 = vst [vmem:[%s1433 + $0x4] sm:$0xf] %v1430
    %s1436 = scalar_lea.vmem [#allocation4], 448
    %v1437 = vld [vmem:[%s1436] sm:$0xff]
    %v1438 = vld [vmem:[%s1436 + $0x8] sm:$0xff]
    %v1439 = vld [vmem:[%s1436 + $0x10] sm:$0xff]
    %v1440 = vld [vmem:[%s1436 + $0x18] sm:$0xff]
    %v1441 = vld [vmem:[%s1436 + $0x20] sm:$0xff]
    %v1442 = vld [vmem:[%s1436 + $0x28] sm:$0xff]
    %v1443 = vld [vmem:[%s1436 + $0x30] sm:$0xff]
    %v1444 = vld [vmem:[%s1436 + $0x38] sm:$0xff]
    %v1445 = vld [vmem:[#allocation2] sm:$0xff]
    %v1446 = vld [vmem:[#allocation2 + $0x8] sm:$0xff]
    %v1447 = vpack.c.bf16 %v1446, %v1445
    %1448 = vmatprep.subr.bf16.mxu0 %v189
    %1449 = vmatpush1.bf16.msra.mxu0 %v188
    %1450 = vmatprep.subr.bf16.mxu0 %v193
    %1451 = vmatpush1.bf16.msra.mxu0 %v192
    %1452 = vmatprep.subr.bf16.mxu0 %v197
    %1453 = vmatpush1.bf16.msra.mxu0 %v196
    %1454 = vmatprep.subr.bf16.mxu0 %v201
    %1455 = vmatpush1.bf16.msra.mxu0 %v200
    %1456 = vmatprep.subr.bf16.mxu0 %v205
    %1457 = vmatpush1.bf16.msra.mxu0 %v204
    %1458 = vmatprep.subr.bf16.mxu0 %v209
    %1459 = vmatpush1.bf16.msra.mxu0 %v208
    %1460 = vmatprep.subr.bf16.mxu0 %v213
    %1461 = vmatpush1.bf16.msra.mxu0 %v212
    %1462 = vmatprep.subr.bf16.mxu0 %v217
    %1463 = vmatpush1.bf16.msra.mxu0 %v216
    %1464 = vmatprep.subr.bf16.mxu0 0
    %1465 = vmatpush1.bf16.msra.mxu0 0
    %1466 = vmatprep.subr.bf16.mxu0 0
    %1467 = vmatpush1.bf16.msra.mxu0 0
    %1468 = vmatprep.subr.bf16.mxu0 0
    %1469 = vmatpush1.bf16.msra.mxu0 0
    %1470 = vmatprep.subr.bf16.mxu0 0
    %1471 = vmatpush1.bf16.msra.mxu0 0
    %1472 = vmatprep.subr.bf16.mxu0 0
    %1473 = vmatpush1.bf16.msra.mxu0 0
    %1474 = vmatprep.subr.bf16.mxu0 0
    %1475 = vmatpush1.bf16.msra.mxu0 0
    %1476 = vmatprep.subr.bf16.mxu0 0
    %1477 = vmatpush1.bf16.msra.mxu0 0
    %1478 = vmatprep.subr.bf16.mxu0 0
    %1479 = vmatpush1.bf16.msra.mxu0 0
    %1480 = vmatprep.mubr.bf16.mxu0 0
    %1481 = vmatmul.mubr.bf16.gmra.mrb[0].mxu0 %v1447
    %v1482 = vpop.f32.mrb[0].mxu0
    %v1483 = vadd.f32 0.0, %v1482
    %v1484 = vpop.f32.mrb[0].mxu0
    %v1485 = vadd.f32 0.0, %v1484
    %v1486 = vpop.f32.mrb[0].mxu0
    %v1487 = vadd.f32 0.0, %v1486
    %v1488 = vpop.f32.mrb[0].mxu0
    %v1489 = vadd.f32 0.0, %v1488
    %1490 = vdwg.mxu0
    %1491 = vmatprep.subr.bf16.mxu0 %v191
    %1492 = vmatpush1.bf16.msra.mxu0 %v190
    %1493 = vmatprep.subr.bf16.mxu0 %v195
    %1494 = vmatpush1.bf16.msra.mxu0 %v194
    %1495 = vmatprep.subr.bf16.mxu0 %v199
    %1496 = vmatpush1.bf16.msra.mxu0 %v198
    %1497 = vmatprep.subr.bf16.mxu0 %v203
    %1498 = vmatpush1.bf16.msra.mxu0 %v202
    %1499 = vmatprep.subr.bf16.mxu0 %v207
    %1500 = vmatpush1.bf16.msra.mxu0 %v206
    %1501 = vmatprep.subr.bf16.mxu0 %v211
    %1502 = vmatpush1.bf16.msra.mxu0 %v210
    %1503 = vmatprep.subr.bf16.mxu0 %v215
    %1504 = vmatpush1.bf16.msra.mxu0 %v214
    %1505 = vmatprep.subr.bf16.mxu0 %v219
    %1506 = vmatpush1.bf16.msra.mxu0 %v218
    %1507 = vmatprep.subr.bf16.mxu0 0
    %1508 = vmatpush1.bf16.msra.mxu0 0
    %1509 = vmatprep.subr.bf16.mxu0 0
    %1510 = vmatpush1.bf16.msra.mxu0 0
    %1511 = vmatprep.subr.bf16.mxu0 0
    %1512 = vmatpush1.bf16.msra.mxu0 0
    %1513 = vmatprep.subr.bf16.mxu0 0
    %1514 = vmatpush1.bf16.msra.mxu0 0
    %1515 = vmatprep.subr.bf16.mxu0 0
    %1516 = vmatpush1.bf16.msra.mxu0 0
    %1517 = vmatprep.subr.bf16.mxu0 0
    %1518 = vmatpush1.bf16.msra.mxu0 0
    %1519 = vmatprep.subr.bf16.mxu0 0
    %1520 = vmatpush1.bf16.msra.mxu0 0
    %1521 = vmatprep.subr.bf16.mxu0 0
    %1522 = vmatpush1.bf16.msra.mxu0 0
    %1523 = vmatprep.mubr.bf16.mxu0 0
    %1524 = vmatmul.mubr.bf16.gmra.mrb[0].mxu0 %v1447
    %v1525 = vpop.f32.mrb[0].mxu0
    %v1526 = vadd.f32 0.0, %v1525
    %v1527 = vpop.f32.mrb[0].mxu0
    %v1528 = vadd.f32 0.0, %v1527
    %v1529 = vpop.f32.mrb[0].mxu0
    %v1530 = vadd.f32 0.0, %v1529
    %v1531 = vpop.f32.mrb[0].mxu0
    %v1532 = vadd.f32 0.0, %v1531
    %1533 = vdwg.mxu0
    %v1534 = vadd.f32 %v1437, %v1483
    %v1535 = vadd.f32 %v1438, %v1485
    %v1536 = vadd.f32 %v1439, %v1526
    %v1537 = vadd.f32 %v1440, %v1528
    %v1538 = vadd.f32 %v1441, %v1487
    %v1539 = vadd.f32 %v1442, %v1489
    %v1540 = vadd.f32 %v1443, %v1530
    %v1541 = vadd.f32 %v1444, %v1532
    %v1542 = vxor.u32 %v1534, 2147483648
    %v1543 = vxor.u32 %v1538, 2147483648
    %v1544 = vmul.f32 %v1542, 1.442695
    %v1545 = vpow.pop %v1544
    %v1546 = vmul.f32 %v1543, 1.442695
    %v1547 = vpow.pop %v1546
    %v1548 = vadd.f32 %v1545, 1.0
    %v1549 = vadd.f32 %v1547, 1.0
    %v1550 = vrcp.pop %v1548
    %v1551 = vmul.f32 1.0, %v1550
    %v1552 = vrcp.pop %v1549
    %v1553 = vmul.f32 1.0, %v1552
    %v1554 = vxor.u32 %v1535, 2147483648
    %v1555 = vxor.u32 %v1539, 2147483648
    %v1556 = vmul.f32 %v1554, 1.442695
    %v1557 = vpow.pop %v1556
    %v1558 = vmul.f32 %v1555, 1.442695
    %v1559 = vpow.pop %v1558
    %v1560 = vadd.f32 %v1557, 1.0
    %v1561 = vadd.f32 %v1559, 1.0
    %v1562 = vrcp.pop %v1560
    %v1563 = vmul.f32 1.0, %v1562
    %v1564 = vrcp.pop %v1561
    %v1565 = vmul.f32 1.0, %v1564
    %v1566 = vtanh.pop %v1536
    %v1567 = vtanh.pop %v1540
    %v1568 = vxor.u32 %v1537, 2147483648
    %v1569 = vxor.u32 %v1541, 2147483648
    %v1570 = vmul.f32 %v1568, 1.442695
    %v1571 = vpow.pop %v1570
    %v1572 = vmul.f32 %v1569, 1.442695
    %v1573 = vpow.pop %v1572
    %v1574 = vadd.f32 %v1571, 1.0
    %v1575 = vadd.f32 %v1573, 1.0
    %v1576 = vrcp.pop %v1574
    %v1577 = vmul.f32 1.0, %v1576
    %v1578 = vrcp.pop %v1575
    %v1579 = vmul.f32 1.0, %v1578
    %v1580 = vld [vmem:[#allocation3] sm:$0xff]
    %v1581 = vld [vmem:[#allocation3 + $0x8] sm:$0xff]
    %v1582 = vmul.f32 %v1563, %v1580
    %v1583 = vmul.f32 %v1565, %v1581
    %v1584 = vmul.f32 %v1551, %v1566
    %v1585 = vmul.f32 %v1553, %v1567
    %v1586 = vadd.f32 %v1582, %v1584
    %v1587 = vadd.f32 %v1583, %v1585
    %v1588 = vtanh.pop %v1586
    %v1589 = vtanh.pop %v1587
    %v1590 = vmul.f32 %v1577, %v1588
    %v1591 = vmul.f32 %v1579, %v1589
    %1592 = vst [vmem:[#allocation3] sm:$0xff] %v1586
    %1593 = vst [vmem:[#allocation3 + $0x8] sm:$0xff] %v1587
    %1594 = vst [vmem:[#allocation2] sm:$0xff] %v1590
    %1595 = vst [vmem:[#allocation2 + $0x8] sm:$0xff] %v1591
    %v1596 = vpack.c.bf16 %v1591, %v1590
    %v1598 = vunpack.c.l.b16 %v1596
    %v1599 = vunpack.c.h.b16 %v1596
    %v1600 = vpack.c.b16 %v1598, %v1598
    %v1601 = vpack.c.b16 %v1599, %v1599
    %s1604 = scalar_lea.vmem [#allocation9], 56
    %1605 = vst [vmem:[%s1604] sm:$0xf] %v1600
    %1606 = vst [vmem:[%s1604 + $0x4] sm:$0xf] %v1601
    %s1607 = scalar_lea.vmem [#allocation4], 512
    %v1608 = vld [vmem:[%s1607] sm:$0xff]
    %v1609 = vld [vmem:[%s1607 + $0x8] sm:$0xff]
    %v1610 = vld [vmem:[%s1607 + $0x10] sm:$0xff]
    %v1611 = vld [vmem:[%s1607 + $0x18] sm:$0xff]
    %v1612 = vld [vmem:[%s1607 + $0x20] sm:$0xff]
    %v1613 = vld [vmem:[%s1607 + $0x28] sm:$0xff]
    %v1614 = vld [vmem:[%s1607 + $0x30] sm:$0xff]
    %v1615 = vld [vmem:[%s1607 + $0x38] sm:$0xff]
    %v1616 = vld [vmem:[#allocation2] sm:$0xff]
    %v1617 = vld [vmem:[#allocation2 + $0x8] sm:$0xff]
    %v1618 = vpack.c.bf16 %v1617, %v1616
    %1619 = vmatprep.subr.bf16.mxu0 %v189
    %1620 = vmatpush1.bf16.msra.mxu0 %v188
    %1621 = vmatprep.subr.bf16.mxu0 %v193
    %1622 = vmatpush1.bf16.msra.mxu0 %v192
    %1623 = vmatprep.subr.bf16.mxu0 %v197
    %1624 = vmatpush1.bf16.msra.mxu0 %v196
    %1625 = vmatprep.subr.bf16.mxu0 %v201
    %1626 = vmatpush1.bf16.msra.mxu0 %v200
    %1627 = vmatprep.subr.bf16.mxu0 %v205
    %1628 = vmatpush1.bf16.msra.mxu0 %v204
    %1629 = vmatprep.subr.bf16.mxu0 %v209
    %1630 = vmatpush1.bf16.msra.mxu0 %v208
    %1631 = vmatprep.subr.bf16.mxu0 %v213
    %1632 = vmatpush1.bf16.msra.mxu0 %v212
    %1633 = vmatprep.subr.bf16.mxu0 %v217
    %1634 = vmatpush1.bf16.msra.mxu0 %v216
    %1635 = vmatprep.subr.bf16.mxu0 0
    %1636 = vmatpush1.bf16.msra.mxu0 0
    %1637 = vmatprep.subr.bf16.mxu0 0
    %1638 = vmatpush1.bf16.msra.mxu0 0
    %1639 = vmatprep.subr.bf16.mxu0 0
    %1640 = vmatpush1.bf16.msra.mxu0 0
    %1641 = vmatprep.subr.bf16.mxu0 0
    %1642 = vmatpush1.bf16.msra.mxu0 0
    %1643 = vmatprep.subr.bf16.mxu0 0
    %1644 = vmatpush1.bf16.msra.mxu0 0
    %1645 = vmatprep.subr.bf16.mxu0 0
    %1646 = vmatpush1.bf16.msra.mxu0 0
    %1647 = vmatprep.subr.bf16.mxu0 0
    %1648 = vmatpush1.bf16.msra.mxu0 0
    %1649 = vmatprep.subr.bf16.mxu0 0
    %1650 = vmatpush1.bf16.msra.mxu0 0
    %1651 = vmatprep.mubr.bf16.mxu0 0
    %1652 = vmatmul.mubr.bf16.gmra.mrb[0].mxu0 %v1618
    %v1653 = vpop.f32.mrb[0].mxu0
    %v1654 = vadd.f32 0.0, %v1653
    %v1655 = vpop.f32.mrb[0].mxu0
    %v1656 = vadd.f32 0.0, %v1655
    %v1657 = vpop.f32.mrb[0].mxu0
    %v1658 = vadd.f32 0.0, %v1657
    %v1659 = vpop.f32.mrb[0].mxu0
    %v1660 = vadd.f32 0.0, %v1659
    %1661 = vdwg.mxu0
    %1662 = vmatprep.subr.bf16.mxu0 %v191
    %1663 = vmatpush1.bf16.msra.mxu0 %v190
    %1664 = vmatprep.subr.bf16.mxu0 %v195
    %1665 = vmatpush1.bf16.msra.mxu0 %v194
    %1666 = vmatprep.subr.bf16.mxu0 %v199
    %1667 = vmatpush1.bf16.msra.mxu0 %v198
    %1668 = vmatprep.subr.bf16.mxu0 %v203
    %1669 = vmatpush1.bf16.msra.mxu0 %v202
    %1670 = vmatprep.subr.bf16.mxu0 %v207
    %1671 = vmatpush1.bf16.msra.mxu0 %v206
    %1672 = vmatprep.subr.bf16.mxu0 %v211
    %1673 = vmatpush1.bf16.msra.mxu0 %v210
    %1674 = vmatprep.subr.bf16.mxu0 %v215
    %1675 = vmatpush1.bf16.msra.mxu0 %v214
    %1676 = vmatprep.subr.bf16.mxu0 %v219
    %1677 = vmatpush1.bf16.msra.mxu0 %v218
    %1678 = vmatprep.subr.bf16.mxu0 0
    %1679 = vmatpush1.bf16.msra.mxu0 0
    %1680 = vmatprep.subr.bf16.mxu0 0
    %1681 = vmatpush1.bf16.msra.mxu0 0
    %1682 = vmatprep.subr.bf16.mxu0 0
    %1683 = vmatpush1.bf16.msra.mxu0 0
    %1684 = vmatprep.subr.bf16.mxu0 0
    %1685 = vmatpush1.bf16.msra.mxu0 0
    %1686 = vmatprep.subr.bf16.mxu0 0
    %1687 = vmatpush1.bf16.msra.mxu0 0
    %1688 = vmatprep.subr.bf16.mxu0 0
    %1689 = vmatpush1.bf16.msra.mxu0 0
    %1690 = vmatprep.subr.bf16.mxu0 0
    %1691 = vmatpush1.bf16.msra.mxu0 0
    %1692 = vmatprep.subr.bf16.mxu0 0
    %1693 = vmatpush1.bf16.msra.mxu0 0
    %1694 = vmatprep.mubr.bf16.mxu0 0
    %1695 = vmatmul.mubr.bf16.gmra.mrb[0].mxu0 %v1618
    %v1696 = vpop.f32.mrb[0].mxu0
    %v1697 = vadd.f32 0.0, %v1696
    %v1698 = vpop.f32.mrb[0].mxu0
    %v1699 = vadd.f32 0.0, %v1698
    %v1700 = vpop.f32.mrb[0].mxu0
    %v1701 = vadd.f32 0.0, %v1700
    %v1702 = vpop.f32.mrb[0].mxu0
    %v1703 = vadd.f32 0.0, %v1702
    %1704 = vdwg.mxu0
    %v1705 = vadd.f32 %v1608, %v1654
    %v1706 = vadd.f32 %v1609, %v1656
    %v1707 = vadd.f32 %v1610, %v1697
    %v1708 = vadd.f32 %v1611, %v1699
    %v1709 = vadd.f32 %v1612, %v1658
    %v1710 = vadd.f32 %v1613, %v1660
    %v1711 = vadd.f32 %v1614, %v1701
    %v1712 = vadd.f32 %v1615, %v1703
    %v1713 = vxor.u32 %v1705, 2147483648
    %v1714 = vxor.u32 %v1709, 2147483648
    %v1715 = vmul.f32 %v1713, 1.442695
    %v1716 = vpow.pop %v1715
    %v1717 = vmul.f32 %v1714, 1.442695
    %v1718 = vpow.pop %v1717
    %v1719 = vadd.f32 %v1716, 1.0
    %v1720 = vadd.f32 %v1718, 1.0
    %v1721 = vrcp.pop %v1719
    %v1722 = vmul.f32 1.0, %v1721
    %v1723 = vrcp.pop %v1720
    %v1724 = vmul.f32 1.0, %v1723
    %v1725 = vxor.u32 %v1706, 2147483648
    %v1726 = vxor.u32 %v1710, 2147483648
    %v1727 = vmul.f32 %v1725, 1.442695
    %v1728 = vpow.pop %v1727
    %v1729 = vmul.f32 %v1726, 1.442695
    %v1730 = vpow.pop %v1729
    %v1731 = vadd.f32 %v1728, 1.0
    %v1732 = vadd.f32 %v1730, 1.0
    %v1733 = vrcp.pop %v1731
    %v1734 = vmul.f32 1.0, %v1733
    %v1735 = vrcp.pop %v1732
    %v1736 = vmul.f32 1.0, %v1735
    %v1737 = vtanh.pop %v1707
    %v1738 = vtanh.pop %v1711
    %v1739 = vxor.u32 %v1708, 2147483648
    %v1740 = vxor.u32 %v1712, 2147483648
    %v1741 = vmul.f32 %v1739, 1.442695
    %v1742 = vpow.pop %v1741
    %v1743 = vmul.f32 %v1740, 1.442695
    %v1744 = vpow.pop %v1743
    %v1745 = vadd.f32 %v1742, 1.0
    %v1746 = vadd.f32 %v1744, 1.0
    %v1747 = vrcp.pop %v1745
    %v1748 = vmul.f32 1.0, %v1747
    %v1749 = vrcp.pop %v1746
    %v1750 = vmul.f32 1.0, %v1749
    %v1751 = vld [vmem:[#allocation3] sm:$0xff]
    %v1752 = vld [vmem:[#allocation3 + $0x8] sm:$0xff]
    %v1753 = vmul.f32 %v1734, %v1751
    %v1754 = vmul.f32 %v1736, %v1752
    %v1755 = vmul.f32 %v1722, %v1737
    %v1756 = vmul.f32 %v1724, %v1738
    %v1757 = vadd.f32 %v1753, %v1755
    %v1758 = vadd.f32 %v1754, %v1756
    %v1759 = vtanh.pop %v1757
    %v1760 = vtanh.pop %v1758
    %v1761 = vmul.f32 %v1748, %v1759
    %v1762 = vmul.f32 %v1750, %v1760
    %1763 = vst [vmem:[#allocation3] sm:$0xff] %v1757
    %1764 = vst [vmem:[#allocation3 + $0x8] sm:$0xff] %v1758
    %1765 = vst [vmem:[#allocation2] sm:$0xff] %v1761
    %1766 = vst [vmem:[#allocation2 + $0x8] sm:$0xff] %v1762
    %v1767 = vpack.c.bf16 %v1762, %v1761
    %v1769 = vunpack.c.l.b16 %v1767
    %v1770 = vunpack.c.h.b16 %v1767
    %v1771 = vpack.c.b16 %v1769, %v1769
    %v1772 = vpack.c.b16 %v1770, %v1770
    %s1775 = scalar_lea.vmem [#allocation9], 64
    %1776 = vst [vmem:[%s1775] sm:$0xf] %v1771
    %1777 = vst [vmem:[%s1775 + $0x4] sm:$0xf] %v1772
    // Predicated region
    $region22: #{decoder_forward.6} parent=1 // pred_check
      _
    $region23: #{decoder_forward.6} parent=1 // pred_check_branch
      %1779 = sbr.rel (0) target = $region25
    $region24: #{decoder_forward.6} parent=1 // pred_region
      %s1781 = ssub.s32 1152, 1152
      %1782 = vsyncadd [#allocation6], %s1781
      %s1783 = sshll.u32 [#allocation9], 4
      %s1784 = int_to_ptr.vmem [resolvable:$true] %s1783
      %1789 = dma.vmem_to_hbm [thread:$0]  %s1784, 1152, %s2, [#allocation6], 64, 64, 4
    $region25: #{decoder_forward.6} parent=1 // pred_fallthru
      _
    // Predicated region
    $region26: #{decoder_forward.6} parent=1 // pred_check
      _
    $region27: #{decoder_forward.6} parent=1 // pred_check_branch
      %1791 = sbr.rel (0) target = $region29
    $region28: #{decoder_forward.6} parent=1 // pred_region
      %1792 = dma.done [#allocation6], 1152
    $region29: #{decoder_forward.6} parent=1 // pred_fallthru
      _
    %1793 = vsyncpa [#allocation5], 1
    %1794 = vsyncpa [#allocation8], 1
    %1795 = vsyncpa [#allocation6], 1

// kernel: decoder_forward.5
$region0: #{decoder_forward.5}
  #allocation0 [shape = 'u32[]', space=smem, size = 0x4, offset = 0x4, fixed_abs, tag = 'smem constant byte address 0x4 - core index']
  #allocation1 [shape = 'u32[144,128]{1,0:T(1,128)}', space=vmem, size = 0x12000, scoped, tag = 'internal scratch']
  #allocation2 [shape = 'f32[16,128]{1,0:T(8,128)}', space=vmem, size = 0x2000, scoped, tag = 'scratch operand']
  #allocation3 [shape = 'f32[16,128]{1,0:T(8,128)}', space=vmem, size = 0x2000, scoped, tag = 'scratch operand']
  #allocation4 [shape = 'f32[9,16,128]{2,1,0:T(8,128)}', space=vmem, size = 0x12000, scoped, tag = 'scratch operand']
  %s0 = inlined_call_operand.hbm [shape: f32[9,16,512], index: 0, kind: input, shape index: {}]
  %s1 = inlined_call_operand.hbm [shape: bf16[128,512], index: 1, kind: input, shape index: {}]
  %s2 = inlined_call_operand.hbm [shape: bf16[128,512], index: 2, kind: input, shape index: {}]
  %s3 = inlined_call_operand.hbm [shape: f32[1,512], index: 3, kind: input, shape index: {}]
  %s4 = inlined_call_operand.hbm [shape: f32[9,16,512], index: 4, kind: output, shape index: {}]
  %s5 = sld [smem:[#allocation0]]
  $region46: #{decoder_forward.5} parent=0
    _
  %s7 = ssub.s32 1, %s5
  %s8 = scalar_select 0, %s7, %s5
  $region1: #{decoder_forward.5} parent=0
    #allocation5 [shape = 'u8[294912]{0}', space=vmem, size = 0x48000, scoped, tag = 'input window, operand 0, single buffered']
    #allocation6 [shape = 's32[1]{0}', space=sflag, size = 0x4, scoped, tag = 'scoped memory for decoder_forward.5']
    #allocation7 [shape = 's32[1]{0}', space=sflag, size = 0x4, scoped, tag = 'scoped memory for decoder_forward.5']
    #allocation8 [shape = 'u8[131072]{0}', space=vmem, size = 0x20000, scoped, tag = 'input window, operand 1, single buffered']
    #allocation9 [shape = 's32[1]{0}', space=sflag, size = 0x4, scoped, tag = 'scoped memory for decoder_forward.5']
    #allocation10 [shape = 'u8[131072]{0}', space=vmem, size = 0x20000, scoped, tag = 'input window, operand 2, single buffered']
    #allocation11 [shape = 'u8[2048]{0}', space=vmem, size = 0x800, scoped, tag = 'input window, operand 3, single buffered']
    #allocation12 [shape = 's32[1]{0}', space=sflag, size = 0x4, scoped, tag = 'scoped memory for decoder_forward.5']
    #allocation13 [shape = 'u8[294912]{0}', space=vmem, size = 0x48000, scoped, tag = 'output window, operand 0, single buffered']
    %9 = vsyncpa [#allocation6], 0
    %10 = vsyncpa [#allocation9], 0
    %11 = vsyncpa [#allocation12], 0
    %12 = vsyncpa [#allocation7], 0
    // Predicated region
    $region2: #{decoder_forward.5} parent=1 // pred_check
      _
    $region3: #{decoder_forward.5} parent=1 // pred_check_branch
      %14 = sbr.rel (0) target = $region5
    $region4: #{decoder_forward.5} parent=1 // pred_region
      %s16 = ssub.s32 9216, 9216
      %17 = vsyncadd [#allocation6], %s16
      %s18 = sshll.u32 [#allocation5], 4
      %s19 = int_to_ptr.vmem [resolvable:$true] %s18
      %24 = dma.hbm_to_vmem [thread:$0]  %s0, 9216, %s19, [#allocation6], 512, 512, 32
    $region5: #{decoder_forward.5} parent=1 // pred_fallthru
      _
    // Predicated region
    $region6: #{decoder_forward.5} parent=1 // pred_check
      _
    $region7: #{decoder_forward.5} parent=1 // pred_check_branch
      %26 = sbr.rel (0) target = $region9
    $region8: #{decoder_forward.5} parent=1 // pred_region
      %s28 = ssub.s32 4096, 4096
      %29 = vsyncadd [#allocation9], %s28
      %s30 = sshll.u32 [#allocation8], 4
      %s31 = int_to_ptr.vmem [resolvable:$true] %s30
      %36 = dma.hbm_to_vmem [thread:$0]  %s1, 4096, %s31, [#allocation9], 256, 256, 16
    $region9: #{decoder_forward.5} parent=1 // pred_fallthru
      _
    // Predicated region
    $region10: #{decoder_forward.5} parent=1 // pred_check
      _
    $region11: #{decoder_forward.5} parent=1 // pred_check_branch
      %38 = sbr.rel (0) target = $region13
    $region12: #{decoder_forward.5} parent=1 // pred_region
      %s40 = ssub.s32 4096, 4096
      %41 = vsyncadd [#allocation9], %s40
      %s42 = sshll.u32 [#allocation10], 4
      %s43 = int_to_ptr.vmem [resolvable:$true] %s42
      %48 = dma.hbm_to_vmem [thread:$0]  %s2, 4096, %s43, [#allocation9], 256, 256, 16
    $region13: #{decoder_forward.5} parent=1 // pred_fallthru
      _
    // Predicated region
    $region14: #{decoder_forward.5} parent=1 // pred_check
      _
    $region15: #{decoder_forward.5} parent=1 // pred_check_branch
      %50 = sbr.rel (0) target = $region17
    $region16: #{decoder_forward.5} parent=1 // pred_region
      %s52 = ssub.s32 64, 64
      %53 = vsyncadd [#allocation12], %s52
      %s55 = sshll.u32 [#allocation11], 4
      %s56 = int_to_ptr.vmem [resolvable:$true] %s55
      %58 = dma.hbm_to_vmem [thread:$0]  %s3, 64, %s56, [#allocation12]
    $region17: #{decoder_forward.5} parent=1 // pred_fallthru
      _
    // Predicated region
    $region18: #{decoder_forward.5} parent=1 // pred_check
      _
    $region19: #{decoder_forward.5} parent=1 // pred_check_branch
      %60 = sbr.rel (0) target = $region21
    $region20: #{decoder_forward.5} parent=1 // pred_region
      %61 = dma.done [#allocation6], 9216
    $region21: #{decoder_forward.5} parent=1 // pred_fallthru
      _
    // Predicated region
    $region22: #{decoder_forward.5} parent=1 // pred_check
      _
    $region23: #{decoder_forward.5} parent=1 // pred_check_branch
      %63 = sbr.rel (0) target = $region25
    $region24: #{decoder_forward.5} parent=1 // pred_region
      %64 = dma.done [#allocation9], 4096
    $region25: #{decoder_forward.5} parent=1 // pred_fallthru
      _
    // Predicated region
    $region26: #{decoder_forward.5} parent=1 // pred_check
      _
    $region27: #{decoder_forward.5} parent=1 // pred_check_branch
      %66 = sbr.rel (0) target = $region29
    $region28: #{decoder_forward.5} parent=1 // pred_region
      %67 = dma.done [#allocation9], 4096
    $region29: #{decoder_forward.5} parent=1 // pred_fallthru
      _
    // Predicated region
    $region30: #{decoder_forward.5} parent=1 // pred_check
      _
    $region31: #{decoder_forward.5} parent=1 // pred_check_branch
      %69 = sbr.rel (0) target = $region33
    $region32: #{decoder_forward.5} parent=1 // pred_region
      %70 = dma.done [#allocation12], 64
    $region33: #{decoder_forward.5} parent=1 // pred_fallthru
      _
    %p72 = scmp.eq.s32.totalorder 0, 0
    // Predicated region
    $region34: #{decoder_forward.5} parent=1 // pred_check
      %p73 = pneg %p72
    $region35: #{decoder_forward.5} parent=1 // pred_check_branch
      %75 = sbr.rel (%p73) target = $region37
    $region36: #{decoder_forward.5} parent=1 // pred_region
      %76 = vst [vmem:[#allocation2] sm:$0xff] 0.0
      %77 = vst [vmem:[#allocation2 + $0x8] sm:$0xff] 0.0
      %78 = vst [vmem:[#allocation3] sm:$0xff] 0.0
      %79 = vst [vmem:[#allocation3 + $0x8] sm:$0xff] 0.0
    $region37: #{decoder_forward.5} parent=1 // pred_fallthru
      _
    %v80 = vld [vmem:[#allocation8] sm:$0xff]
    %v81 = vld [vmem:[#allocation8 + $0x8] sm:$0xff]
    %v82 = vld [vmem:[#allocation8 + $0x10] sm:$0xff]
    %v83 = vld [vmem:[#allocation8 + $0x18] sm:$0xff]
    %v84 = vld [vmem:[#allocation8 + $0x20] sm:$0xff]
    %v85 = vld [vmem:[#allocation8 + $0x28] sm:$0xff]
    %v86 = vld [vmem:[#allocation8 + $0x30] sm:$0xff]
    %v87 = vld [vmem:[#allocation8 + $0x38] sm:$0xff]
    %v88 = vld [vmem:[#allocation8 + $0x40] sm:$0xff]
    %v89 = vld [vmem:[#allocation8 + $0x48] sm:$0xff]
    %v90 = vld [vmem:[#allocation8 + $0x50] sm:$0xff]
    %v91 = vld [vmem:[#allocation8 + $0x58] sm:$0xff]
    %v92 = vld [vmem:[#allocation8 + $0x60] sm:$0xff]
    %v93 = vld [vmem:[#allocation8 + $0x68] sm:$0xff]
    %v94 = vld [vmem:[#allocation8 + $0x70] sm:$0xff]
    %v95 = vld [vmem:[#allocation8 + $0x78] sm:$0xff]
    %v96 = vld [vmem:[#allocation8 + $0x80] sm:$0xff]
    %v97 = vld [vmem:[#allocation8 + $0x88] sm:$0xff]
    %v98 = vld [vmem:[#allocation8 + $0x90] sm:$0xff]
    %v99 = vld [vmem:[#allocation8 + $0x98] sm:$0xff]
    %v100 = vld [vmem:[#allocation8 + $0xa0] sm:$0xff]
    %v101 = vld [vmem:[#allocation8 + $0xa8] sm:$0xff]
    %v102 = vld [vmem:[#allocation8 + $0xb0] sm:$0xff]
    %v103 = vld [vmem:[#allocation8 + $0xb8] sm:$0xff]
    %v104 = vld [vmem:[#allocation8 + $0xc0] sm:$0xff]
    %v105 = vld [vmem:[#allocation8 + $0xc8] sm:$0xff]
    %v106 = vld [vmem:[#allocation8 + $0xd0] sm:$0xff]
    %v107 = vld [vmem:[#allocation8 + $0xd8] sm:$0xff]
    %v108 = vld [vmem:[#allocation8 + $0xe0] sm:$0xff]
    %v109 = vld [vmem:[#allocation8 + $0xe8] sm:$0xff]
    %v110 = vld [vmem:[#allocation8 + $0xf0] sm:$0xff]
    %v111 = vld [vmem:[#allocation8 + $0xf8] sm:$0xff]
    %v112 = vld [vmem:[#allocation5] sm:$0xff]
    %v113 = vld [vmem:[#allocation5 + $0x8] sm:$0xff]
    %v114 = vld [vmem:[#allocation5 + $0x10] sm:$0xff]
    %v115 = vld [vmem:[#allocation5 + $0x18] sm:$0xff]
    %v116 = vld [vmem:[#allocation5 + $0x20] sm:$0xff]
    %v117 = vld [vmem:[#allocation5 + $0x28] sm:$0xff]
    %v118 = vld [vmem:[#allocation5 + $0x30] sm:$0xff]
    %v119 = vld [vmem:[#allocation5 + $0x38] sm:$0xff]
    %v120 = vld [vmem:[#allocation2] sm:$0xff]
    %v121 = vld [vmem:[#allocation2 + $0x8] sm:$0xff]
    %v122 = vpack.c.bf16 %v121, %v120
    %v155 = vunpack.c.l.b16 %v80
    %v156 = vunpack.c.h.b16 %v80
    %v157 = vunpack.c.l.b16 %v81
    %v158 = vunpack.c.h.b16 %v81
    %v159 = vunpack.c.l.b16 %v82
    %v160 = vunpack.c.h.b16 %v82
    %v161 = vunpack.c.l.b16 %v83
    %v162 = vunpack.c.h.b16 %v83
    %v163 = vunpack.c.l.b16 %v84
    %v164 = vunpack.c.h.b16 %v84
    %v165 = vunpack.c.l.b16 %v85
    %v166 = vunpack.c.h.b16 %v85
    %v167 = vunpack.c.l.b16 %v86
    %v168 = vunpack.c.h.b16 %v86
    %v169 = vunpack.c.l.b16 %v87
    %v170 = vunpack.c.h.b16 %v87
    %v171 = vunpack.c.l.b16 %v88
    %v172 = vunpack.c.h.b16 %v88
    %v173 = vunpack.c.l.b16 %v89
    %v174 = vunpack.c.h.b16 %v89
    %v175 = vunpack.c.l.b16 %v90
    %v176 = vunpack.c.h.b16 %v90
    %v177 = vunpack.c.l.b16 %v91
    %v178 = vunpack.c.h.b16 %v91
    %v179 = vunpack.c.l.b16 %v92
    %v180 = vunpack.c.h.b16 %v92
    %v181 = vunpack.c.l.b16 %v93
    %v182 = vunpack.c.h.b16 %v93
    %v183 = vunpack.c.l.b16 %v94
    %v184 = vunpack.c.h.b16 %v94
    %v185 = vunpack.c.l.b16 %v95
    %v186 = vunpack.c.h.b16 %v95
    %v187 = vunpack.c.l.b16 %v96
    %v188 = vunpack.c.h.b16 %v96
    %v189 = vunpack.c.l.b16 %v97
    %v190 = vunpack.c.h.b16 %v97
    %v191 = vunpack.c.l.b16 %v98
    %v192 = vunpack.c.h.b16 %v98
    %v193 = vunpack.c.l.b16 %v99
    %v194 = vunpack.c.h.b16 %v99
    %v195 = vunpack.c.l.b16 %v100
    %v196 = vunpack.c.h.b16 %v100
    %v197 = vunpack.c.l.b16 %v101
    %v198 = vunpack.c.h.b16 %v101
    %v199 = vunpack.c.l.b16 %v102
    %v200 = vunpack.c.h.b16 %v102
    %v201 = vunpack.c.l.b16 %v103
    %v202 = vunpack.c.h.b16 %v103
    %v203 = vunpack.c.l.b16 %v104
    %v204 = vunpack.c.h.b16 %v104
    %v205 = vunpack.c.l.b16 %v105
    %v206 = vunpack.c.h.b16 %v105
    %v207 = vunpack.c.l.b16 %v106
    %v208 = vunpack.c.h.b16 %v106
    %v209 = vunpack.c.l.b16 %v107
    %v210 = vunpack.c.h.b16 %v107
    %v211 = vunpack.c.l.b16 %v108
    %v212 = vunpack.c.h.b16 %v108
    %v213 = vunpack.c.l.b16 %v109
    %v214 = vunpack.c.h.b16 %v109
    %v215 = vunpack.c.l.b16 %v110
    %v216 = vunpack.c.h.b16 %v110
    %v217 = vunpack.c.l.b16 %v111
    %v218 = vunpack.c.h.b16 %v111
    %v219 = vpack.c.b16 %v159, %v155
    %v220 = vpack.c.b16 %v160, %v156
    %v221 = vpack.c.b16 %v161, %v157
    %v222 = vpack.c.b16 %v162, %v158
    %v223 = vpack.c.b16 %v167, %v163
    %v224 = vpack.c.b16 %v168, %v164
    %v225 = vpack.c.b16 %v169, %v165
    %v226 = vpack.c.b16 %v170, %v166
    %v227 = vpack.c.b16 %v175, %v171
    %v228 = vpack.c.b16 %v176, %v172
    %v229 = vpack.c.b16 %v177, %v173
    %v230 = vpack.c.b16 %v178, %v174
    %v231 = vpack.c.b16 %v183, %v179
    %v232 = vpack.c.b16 %v184, %v180
    %v233 = vpack.c.b16 %v185, %v181
    %v234 = vpack.c.b16 %v186, %v182
    %v235 = vpack.c.b16 %v191, %v187
    %v236 = vpack.c.b16 %v192, %v188
    %v237 = vpack.c.b16 %v193, %v189
    %v238 = vpack.c.b16 %v194, %v190
    %v239 = vpack.c.b16 %v199, %v195
    %v240 = vpack.c.b16 %v200, %v196
    %v241 = vpack.c.b16 %v201, %v197
    %v242 = vpack.c.b16 %v202, %v198
    %v243 = vpack.c.b16 %v207, %v203
    %v244 = vpack.c.b16 %v208, %v204
    %v245 = vpack.c.b16 %v209, %v205
    %v246 = vpack.c.b16 %v210, %v206
    %v247 = vpack.c.b16 %v215, %v211
    %v248 = vpack.c.b16 %v216, %v212
    %v249 = vpack.c.b16 %v217, %v213
    %v250 = vpack.c.b16 %v218, %v214
    %283 = vmatprep.subr.bf16.mxu0 %v220
    %284 = vmatpush1.bf16.msra.mxu0 %v219
    %285 = vmatprep.subr.bf16.mxu0 %v224
    %286 = vmatpush1.bf16.msra.mxu0 %v223
    %287 = vmatprep.subr.bf16.mxu0 %v228
    %288 = vmatpush1.bf16.msra.mxu0 %v227
    %289 = vmatprep.subr.bf16.mxu0 %v232
    %290 = vmatpush1.bf16.msra.mxu0 %v231
    %291 = vmatprep.subr.bf16.mxu0 %v236
    %292 = vmatpush1.bf16.msra.mxu0 %v235
    %293 = vmatprep.subr.bf16.mxu0 %v240
    %294 = vmatpush1.bf16.msra.mxu0 %v239
    %295 = vmatprep.subr.bf16.mxu0 %v244
    %296 = vmatpush1.bf16.msra.mxu0 %v243
    %297 = vmatprep.subr.bf16.mxu0 %v248
    %298 = vmatpush1.bf16.msra.mxu0 %v247
    %299 = vmatprep.subr.bf16.mxu0 0
    %300 = vmatpush1.bf16.msra.mxu0 0
    %301 = vmatprep.subr.bf16.mxu0 0
    %302 = vmatpush1.bf16.msra.mxu0 0
    %303 = vmatprep.subr.bf16.mxu0 0
    %304 = vmatpush1.bf16.msra.mxu0 0
    %305 = vmatprep.subr.bf16.mxu0 0
    %306 = vmatpush1.bf16.msra.mxu0 0
    %307 = vmatprep.subr.bf16.mxu0 0
    %308 = vmatpush1.bf16.msra.mxu0 0
    %309 = vmatprep.subr.bf16.mxu0 0
    %310 = vmatpush1.bf16.msra.mxu0 0
    %311 = vmatprep.subr.bf16.mxu0 0
    %312 = vmatpush1.bf16.msra.mxu0 0
    %313 = vmatprep.subr.bf16.mxu0 0
    %314 = vmatpush1.bf16.msra.mxu0 0
    %315 = vmatprep.mubr.bf16.mxu0 0
    %316 = vmatmul.mubr.bf16.gmra.mrb[0].mxu0 %v122
    %v317 = vpop.f32.mrb[0].mxu0
    %v318 = vadd.f32 0.0, %v317
    %v319 = vpop.f32.mrb[0].mxu0
    %v320 = vadd.f32 0.0, %v319
    %v321 = vpop.f32.mrb[0].mxu0
    %v322 = vadd.f32 0.0, %v321
    %v323 = vpop.f32.mrb[0].mxu0
    %v324 = vadd.f32 0.0, %v323
    %325 = vdwg.mxu0
    %326 = vmatprep.subr.bf16.mxu0 %v222
    %327 = vmatpush1.bf16.msra.mxu0 %v221
    %328 = vmatprep.subr.bf16.mxu0 %v226
    %329 = vmatpush1.bf16.msra.mxu0 %v225
    %330 = vmatprep.subr.bf16.mxu0 %v230
    %331 = vmatpush1.bf16.msra.mxu0 %v229
    %332 = vmatprep.subr.bf16.mxu0 %v234
    %333 = vmatpush1.bf16.msra.mxu0 %v233
    %334 = vmatprep.subr.bf16.mxu0 %v238
    %335 = vmatpush1.bf16.msra.mxu0 %v237
    %336 = vmatprep.subr.bf16.mxu0 %v242
    %337 = vmatpush1.bf16.msra.mxu0 %v241
    %338 = vmatprep.subr.bf16.mxu0 %v246
    %339 = vmatpush1.bf16.msra.mxu0 %v245
    %340 = vmatprep.subr.bf16.mxu0 %v250
    %341 = vmatpush1.bf16.msra.mxu0 %v249
    %342 = vmatprep.subr.bf16.mxu0 0
    %343 = vmatpush1.bf16.msra.mxu0 0
    %344 = vmatprep.subr.bf16.mxu0 0
    %345 = vmatpush1.bf16.msra.mxu0 0
    %346 = vmatprep.subr.bf16.mxu0 0
    %347 = vmatpush1.bf16.msra.mxu0 0
    %348 = vmatprep.subr.bf16.mxu0 0
    %349 = vmatpush1.bf16.msra.mxu0 0
    %350 = vmatprep.subr.bf16.mxu0 0
    %351 = vmatpush1.bf16.msra.mxu0 0
    %352 = vmatprep.subr.bf16.mxu0 0
    %353 = vmatpush1.bf16.msra.mxu0 0
    %354 = vmatprep.subr.bf16.mxu0 0
    %355 = vmatpush1.bf16.msra.mxu0 0
    %356 = vmatprep.subr.bf16.mxu0 0
    %357 = vmatpush1.bf16.msra.mxu0 0
    %358 = vmatprep.mubr.bf16.mxu0 0
    %359 = vmatmul.mubr.bf16.gmra.mrb[0].mxu0 %v122
    %v360 = vpop.f32.mrb[0].mxu0
    %v361 = vadd.f32 0.0, %v360
    %v362 = vpop.f32.mrb[0].mxu0
    %v363 = vadd.f32 0.0, %v362
    %v364 = vpop.f32.mrb[0].mxu0
    %v365 = vadd.f32 0.0, %v364
    %v366 = vpop.f32.mrb[0].mxu0
    %v367 = vadd.f32 0.0, %v366
    %368 = vdwg.mxu0
    %v369 = vadd.f32 %v112, %v318
    %v370 = vadd.f32 %v113, %v320
    %v371 = vadd.f32 %v114, %v361
    %v372 = vadd.f32 %v115, %v363
    %v373 = vadd.f32 %v116, %v322
    %v374 = vadd.f32 %v117, %v324
    %v375 = vadd.f32 %v118, %v365
    %v376 = vadd.f32 %v119, %v367
    %v377 = vxor.u32 %v369, 2147483648
    %v378 = vxor.u32 %v373, 2147483648
    %v379 = vmul.f32 %v377, 1.442695
    %v380 = vpow.pop %v379
    %v381 = vmul.f32 %v378, 1.442695
    %v382 = vpow.pop %v381
    %v383 = vadd.f32 %v380, 1.0
    %v384 = vadd.f32 %v382, 1.0
    %v385 = vrcp.pop %v383
    %v386 = vmul.f32 1.0, %v385
    %v387 = vrcp.pop %v384
    %v388 = vmul.f32 1.0, %v387
    %v389 = vxor.u32 %v370, 2147483648
    %v390 = vxor.u32 %v374, 2147483648
    %v391 = vmul.f32 %v389, 1.442695
    %v392 = vpow.pop %v391
    %v393 = vmul.f32 %v390, 1.442695
    %v394 = vpow.pop %v393
    %v395 = vadd.f32 %v392, 1.0
    %v396 = vadd.f32 %v394, 1.0
    %v397 = vrcp.pop %v395
    %v398 = vmul.f32 1.0, %v397
    %v399 = vrcp.pop %v396
    %v400 = vmul.f32 1.0, %v399
    %v401 = vtanh.pop %v371
    %v402 = vtanh.pop %v375
    %v403 = vxor.u32 %v372, 2147483648
    %v404 = vxor.u32 %v376, 2147483648
    %v405 = vmul.f32 %v403, 1.442695
    %v406 = vpow.pop %v405
    %v407 = vmul.f32 %v404, 1.442695
    %v408 = vpow.pop %v407
    %v409 = vadd.f32 %v406, 1.0
    %v410 = vadd.f32 %v408, 1.0
    %v411 = vrcp.pop %v409
    %v412 = vmul.f32 1.0, %v411
    %v413 = vrcp.pop %v410
    %v414 = vmul.f32 1.0, %v413
    %v415 = vld [vmem:[#allocation3] sm:$0xff]
    %v416 = vld [vmem:[#allocation3 + $0x8] sm:$0xff]
    %v417 = vmul.f32 %v398, %v415
    %v418 = vmul.f32 %v400, %v416
    %v419 = vmul.f32 %v386, %v401
    %v420 = vmul.f32 %v388, %v402
    %v421 = vadd.f32 %v417, %v419
    %v422 = vadd.f32 %v418, %v420
    %v423 = vtanh.pop %v421
    %v424 = vtanh.pop %v422
    %v425 = vmul.f32 %v412, %v423
    %v426 = vmul.f32 %v414, %v424
    %427 = vst [vmem:[#allocation3] sm:$0xff] %v421
    %428 = vst [vmem:[#allocation3 + $0x8] sm:$0xff] %v422
    %429 = vst [vmem:[#allocation2] sm:$0xff] %v425
    %430 = vst [vmem:[#allocation2 + $0x8] sm:$0xff] %v426
    %431 = vst [vmem:[#allocation4] sm:$0xff] %v425
    %432 = vst [vmem:[#allocation4 + $0x8] sm:$0xff] %v426
    %s433 = scalar_lea.vmem [#allocation5], 64
    %v434 = vld [vmem:[%s433] sm:$0xff]
    %v435 = vld [vmem:[%s433 + $0x8] sm:$0xff]
    %v436 = vld [vmem:[%s433 + $0x10] sm:$0xff]
    %v437 = vld [vmem:[%s433 + $0x18] sm:$0xff]
    %v438 = vld [vmem:[%s433 + $0x20] sm:$0xff]
    %v439 = vld [vmem:[%s433 + $0x28] sm:$0xff]
    %v440 = vld [vmem:[%s433 + $0x30] sm:$0xff]
    %v441 = vld [vmem:[%s433 + $0x38] sm:$0xff]
    %v442 = vld [vmem:[#allocation2] sm:$0xff]
    %v443 = vld [vmem:[#allocation2 + $0x8] sm:$0xff]
    %v444 = vpack.c.bf16 %v443, %v442
    %445 = vmatprep.subr.bf16.mxu0 %v220
    %446 = vmatpush1.bf16.msra.mxu0 %v219
    %447 = vmatprep.subr.bf16.mxu0 %v224
    %448 = vmatpush1.bf16.msra.mxu0 %v223
    %449 = vmatprep.subr.bf16.mxu0 %v228
    %450 = vmatpush1.bf16.msra.mxu0 %v227
    %451 = vmatprep.subr.bf16.mxu0 %v232
    %452 = vmatpush1.bf16.msra.mxu0 %v231
    %453 = vmatprep.subr.bf16.mxu0 %v236
    %454 = vmatpush1.bf16.msra.mxu0 %v235
    %455 = vmatprep.subr.bf16.mxu0 %v240
    %456 = vmatpush1.bf16.msra.mxu0 %v239
    %457 = vmatprep.subr.bf16.mxu0 %v244
    %458 = vmatpush1.bf16.msra.mxu0 %v243
    %459 = vmatprep.subr.bf16.mxu0 %v248
    %460 = vmatpush1.bf16.msra.mxu0 %v247
    %461 = vmatprep.subr.bf16.mxu0 0
    %462 = vmatpush1.bf16.msra.mxu0 0
    %463 = vmatprep.subr.bf16.mxu0 0
    %464 = vmatpush1.bf16.msra.mxu0 0
    %465 = vmatprep.subr.bf16.mxu0 0
    %466 = vmatpush1.bf16.msra.mxu0 0
    %467 = vmatprep.subr.bf16.mxu0 0
    %468 = vmatpush1.bf16.msra.mxu0 0
    %469 = vmatprep.subr.bf16.mxu0 0
    %470 = vmatpush1.bf16.msra.mxu0 0
    %471 = vmatprep.subr.bf16.mxu0 0
    %472 = vmatpush1.bf16.msra.mxu0 0
    %473 = vmatprep.subr.bf16.mxu0 0
    %474 = vmatpush1.bf16.msra.mxu0 0
    %475 = vmatprep.subr.bf16.mxu0 0
    %476 = vmatpush1.bf16.msra.mxu0 0
    %477 = vmatprep.mubr.bf16.mxu0 0
    %478 = vmatmul.mubr.bf16.gmra.mrb[0].mxu0 %v444
    %v479 = vpop.f32.mrb[0].mxu0
    %v480 = vadd.f32 0.0, %v479
    %v481 = vpop.f32.mrb[0].mxu0
    %v482 = vadd.f32 0.0, %v481
    %v483 = vpop.f32.mrb[0].mxu0
    %v484 = vadd.f32 0.0, %v483
    %v485 = vpop.f32.mrb[0].mxu0
    %v486 = vadd.f32 0.0, %v485
    %487 = vdwg.mxu0
    %488 = vmatprep.subr.bf16.mxu0 %v222
    %489 = vmatpush1.bf16.msra.mxu0 %v221
    %490 = vmatprep.subr.bf16.mxu0 %v226
    %491 = vmatpush1.bf16.msra.mxu0 %v225
    %492 = vmatprep.subr.bf16.mxu0 %v230
    %493 = vmatpush1.bf16.msra.mxu0 %v229
    %494 = vmatprep.subr.bf16.mxu0 %v234
    %495 = vmatpush1.bf16.msra.mxu0 %v233
    %496 = vmatprep.subr.bf16.mxu0 %v238
    %497 = vmatpush1.bf16.msra.mxu0 %v237
    %498 = vmatprep.subr.bf16.mxu0 %v242
    %499 = vmatpush1.bf16.msra.mxu0 %v241
    %500 = vmatprep.subr.bf16.mxu0 %v246
    %501 = vmatpush1.bf16.msra.mxu0 %v245
    %502 = vmatprep.subr.bf16.mxu0 %v250
    %503 = vmatpush1.bf16.msra.mxu0 %v249
    %504 = vmatprep.subr.bf16.mxu0 0
    %505 = vmatpush1.bf16.msra.mxu0 0
    %506 = vmatprep.subr.bf16.mxu0 0
    %507 = vmatpush1.bf16.msra.mxu0 0
    %508 = vmatprep.subr.bf16.mxu0 0
    %509 = vmatpush1.bf16.msra.mxu0 0
    %510 = vmatprep.subr.bf16.mxu0 0
    %511 = vmatpush1.bf16.msra.mxu0 0
    %512 = vmatprep.subr.bf16.mxu0 0
    %513 = vmatpush1.bf16.msra.mxu0 0
    %514 = vmatprep.subr.bf16.mxu0 0
    %515 = vmatpush1.bf16.msra.mxu0 0
    %516 = vmatprep.subr.bf16.mxu0 0
    %517 = vmatpush1.bf16.msra.mxu0 0
    %518 = vmatprep.subr.bf16.mxu0 0
    %519 = vmatpush1.bf16.msra.mxu0 0
    %520 = vmatprep.mubr.bf16.mxu0 0
    %521 = vmatmul.mubr.bf16.gmra.mrb[0].mxu0 %v444
    %v522 = vpop.f32.mrb[0].mxu0
    %v523 = vadd.f32 0.0, %v522
    %v524 = vpop.f32.mrb[0].mxu0
    %v525 = vadd.f32 0.0, %v524
    %v526 = vpop.f32.mrb[0].mxu0
    %v527 = vadd.f32 0.0, %v526
    %v528 = vpop.f32.mrb[0].mxu0
    %v529 = vadd.f32 0.0, %v528
    %530 = vdwg.mxu0
    %v531 = vadd.f32 %v434, %v480
    %v532 = vadd.f32 %v435, %v482
    %v533 = vadd.f32 %v436, %v523
    %v534 = vadd.f32 %v437, %v525
    %v535 = vadd.f32 %v438, %v484
    %v536 = vadd.f32 %v439, %v486
    %v537 = vadd.f32 %v440, %v527
    %v538 = vadd.f32 %v441, %v529
    %v539 = vxor.u32 %v531, 2147483648
    %v540 = vxor.u32 %v535, 2147483648
    %v541 = vmul.f32 %v539, 1.442695
    %v542 = vpow.pop %v541
    %v543 = vmul.f32 %v540, 1.442695
    %v544 = vpow.pop %v543
    %v545 = vadd.f32 %v542, 1.0
    %v546 = vadd.f32 %v544, 1.0
    %v547 = vrcp.pop %v545
    %v548 = vmul.f32 1.0, %v547
    %v549 = vrcp.pop %v546
    %v550 = vmul.f32 1.0, %v549
    %v551 = vxor.u32 %v532, 2147483648
    %v552 = vxor.u32 %v536, 2147483648
    %v553 = vmul.f32 %v551, 1.442695
    %v554 = vpow.pop %v553
    %v555 = vmul.f32 %v552, 1.442695
    %v556 = vpow.pop %v555
    %v557 = vadd.f32 %v554, 1.0
    %v558 = vadd.f32 %v556, 1.0
    %v559 = vrcp.pop %v557
    %v560 = vmul.f32 1.0, %v559
    %v561 = vrcp.pop %v558
    %v562 = vmul.f32 1.0, %v561
    %v563 = vtanh.pop %v533
    %v564 = vtanh.pop %v537
    %v565 = vxor.u32 %v534, 2147483648
    %v566 = vxor.u32 %v538, 2147483648
    %v567 = vmul.f32 %v565, 1.442695
    %v568 = vpow.pop %v567
    %v569 = vmul.f32 %v566, 1.442695
    %v570 = vpow.pop %v569
    %v571 = vadd.f32 %v568, 1.0
    %v572 = vadd.f32 %v570, 1.0
    %v573 = vrcp.pop %v571
    %v574 = vmul.f32 1.0, %v573
    %v575 = vrcp.pop %v572
    %v576 = vmul.f32 1.0, %v575
    %v577 = vld [vmem:[#allocation3] sm:$0xff]
    %v578 = vld [vmem:[#allocation3 + $0x8] sm:$0xff]
    %v579 = vmul.f32 %v560, %v577
    %v580 = vmul.f32 %v562, %v578
    %v581 = vmul.f32 %v548, %v563
    %v582 = vmul.f32 %v550, %v564
    %v583 = vadd.f32 %v579, %v581
    %v584 = vadd.f32 %v580, %v582
    %v585 = vtanh.pop %v583
    %v586 = vtanh.pop %v584
    %v587 = vmul.f32 %v574, %v585
    %v588 = vmul.f32 %v576, %v586
    %589 = vst [vmem:[#allocation3] sm:$0xff] %v583
    %590 = vst [vmem:[#allocation3 + $0x8] sm:$0xff] %v584
    %591 = vst [vmem:[#allocation2] sm:$0xff] %v587
    %592 = vst [vmem:[#allocation2 + $0x8] sm:$0xff] %v588
    %s593 = scalar_lea.vmem [#allocation4], 16
    %594 = vst [vmem:[%s593] sm:$0xff] %v587
    %595 = vst [vmem:[%s593 + $0x8] sm:$0xff] %v588
    %s596 = scalar_lea.vmem [#allocation5], 128
    %v597 = vld [vmem:[%s596] sm:$0xff]
    %v598 = vld [vmem:[%s596 + $0x8] sm:$0xff]
    %v599 = vld [vmem:[%s596 + $0x10] sm:$0xff]
    %v600 = vld [vmem:[%s596 + $0x18] sm:$0xff]
    %v601 = vld [vmem:[%s596 + $0x20] sm:$0xff]
    %v602 = vld [vmem:[%s596 + $0x28] sm:$0xff]
    %v603 = vld [vmem:[%s596 + $0x30] sm:$0xff]
    %v604 = vld [vmem:[%s596 + $0x38] sm:$0xff]
    %v605 = vld [vmem:[#allocation2] sm:$0xff]
    %v606 = vld [vmem:[#allocation2 + $0x8] sm:$0xff]
    %v607 = vpack.c.bf16 %v606, %v605
    %608 = vmatprep.subr.bf16.mxu0 %v220
    %609 = vmatpush1.bf16.msra.mxu0 %v219
    %610 = vmatprep.subr.bf16.mxu0 %v224
    %611 = vmatpush1.bf16.msra.mxu0 %v223
    %612 = vmatprep.subr.bf16.mxu0 %v228
    %613 = vmatpush1.bf16.msra.mxu0 %v227
    %614 = vmatprep.subr.bf16.mxu0 %v232
    %615 = vmatpush1.bf16.msra.mxu0 %v231
    %616 = vmatprep.subr.bf16.mxu0 %v236
    %617 = vmatpush1.bf16.msra.mxu0 %v235
    %618 = vmatprep.subr.bf16.mxu0 %v240
    %619 = vmatpush1.bf16.msra.mxu0 %v239
    %620 = vmatprep.subr.bf16.mxu0 %v244
    %621 = vmatpush1.bf16.msra.mxu0 %v243
    %622 = vmatprep.subr.bf16.mxu0 %v248
    %623 = vmatpush1.bf16.msra.mxu0 %v247
    %624 = vmatprep.subr.bf16.mxu0 0
    %625 = vmatpush1.bf16.msra.mxu0 0
    %626 = vmatprep.subr.bf16.mxu0 0
    %627 = vmatpush1.bf16.msra.mxu0 0
    %628 = vmatprep.subr.bf16.mxu0 0
    %629 = vmatpush1.bf16.msra.mxu0 0
    %630 = vmatprep.subr.bf16.mxu0 0
    %631 = vmatpush1.bf16.msra.mxu0 0
    %632 = vmatprep.subr.bf16.mxu0 0
    %633 = vmatpush1.bf16.msra.mxu0 0
    %634 = vmatprep.subr.bf16.mxu0 0
    %635 = vmatpush1.bf16.msra.mxu0 0
    %636 = vmatprep.subr.bf16.mxu0 0
    %637 = vmatpush1.bf16.msra.mxu0 0
    %638 = vmatprep.subr.bf16.mxu0 0
    %639 = vmatpush1.bf16.msra.mxu0 0
    %640 = vmatprep.mubr.bf16.mxu0 0
    %641 = vmatmul.mubr.bf16.gmra.mrb[0].mxu0 %v607
    %v642 = vpop.f32.mrb[0].mxu0
    %v643 = vadd.f32 0.0, %v642
    %v644 = vpop.f32.mrb[0].mxu0
    %v645 = vadd.f32 0.0, %v644
    %v646 = vpop.f32.mrb[0].mxu0
    %v647 = vadd.f32 0.0, %v646
    %v648 = vpop.f32.mrb[0].mxu0
    %v649 = vadd.f32 0.0, %v648
    %650 = vdwg.mxu0
    %651 = vmatprep.subr.bf16.mxu0 %v222
    %652 = vmatpush1.bf16.msra.mxu0 %v221
    %653 = vmatprep.subr.bf16.mxu0 %v226
    %654 = vmatpush1.bf16.msra.mxu0 %v225
    %655 = vmatprep.subr.bf16.mxu0 %v230
    %656 = vmatpush1.bf16.msra.mxu0 %v229
    %657 = vmatprep.subr.bf16.mxu0 %v234
    %658 = vmatpush1.bf16.msra.mxu0 %v233
    %659 = vmatprep.subr.bf16.mxu0 %v238
    %660 = vmatpush1.bf16.msra.mxu0 %v237
    %661 = vmatprep.subr.bf16.mxu0 %v242
    %662 = vmatpush1.bf16.msra.mxu0 %v241
    %663 = vmatprep.subr.bf16.mxu0 %v246
    %664 = vmatpush1.bf16.msra.mxu0 %v245
    %665 = vmatprep.subr.bf16.mxu0 %v250
    %666 = vmatpush1.bf16.msra.mxu0 %v249
    %667 = vmatprep.subr.bf16.mxu0 0
    %668 = vmatpush1.bf16.msra.mxu0 0
    %669 = vmatprep.subr.bf16.mxu0 0
    %670 = vmatpush1.bf16.msra.mxu0 0
    %671 = vmatprep.subr.bf16.mxu0 0
    %672 = vmatpush1.bf16.msra.mxu0 0
    %673 = vmatprep.subr.bf16.mxu0 0
    %674 = vmatpush1.bf16.msra.mxu0 0
    %675 = vmatprep.subr.bf16.mxu0 0
    %676 = vmatpush1.bf16.msra.mxu0 0
    %677 = vmatprep.subr.bf16.mxu0 0
    %678 = vmatpush1.bf16.msra.mxu0 0
    %679 = vmatprep.subr.bf16.mxu0 0
    %680 = vmatpush1.bf16.msra.mxu0 0
    %681 = vmatprep.subr.bf16.mxu0 0
    %682 = vmatpush1.bf16.msra.mxu0 0
    %683 = vmatprep.mubr.bf16.mxu0 0
    %684 = vmatmul.mubr.bf16.gmra.mrb[0].mxu0 %v607
    %v685 = vpop.f32.mrb[0].mxu0
    %v686 = vadd.f32 0.0, %v685
    %v687 = vpop.f32.mrb[0].mxu0
    %v688 = vadd.f32 0.0, %v687
    %v689 = vpop.f32.mrb[0].mxu0
    %v690 = vadd.f32 0.0, %v689
    %v691 = vpop.f32.mrb[0].mxu0
    %v692 = vadd.f32 0.0, %v691
    %693 = vdwg.mxu0
    %v694 = vadd.f32 %v597, %v643
    %v695 = vadd.f32 %v598, %v645
    %v696 = vadd.f32 %v599, %v686
    %v697 = vadd.f32 %v600, %v688
    %v698 = vadd.f32 %v601, %v647
    %v699 = vadd.f32 %v602, %v649
    %v700 = vadd.f32 %v603, %v690
    %v701 = vadd.f32 %v604, %v692
    %v702 = vxor.u32 %v694, 2147483648
    %v703 = vxor.u32 %v698, 2147483648
    %v704 = vmul.f32 %v702, 1.442695
    %v705 = vpow.pop %v704
    %v706 = vmul.f32 %v703, 1.442695
    %v707 = vpow.pop %v706
    %v708 = vadd.f32 %v705, 1.0
    %v709 = vadd.f32 %v707, 1.0
    %v710 = vrcp.pop %v708
    %v711 = vmul.f32 1.0, %v710
    %v712 = vrcp.pop %v709
    %v713 = vmul.f32 1.0, %v712
    %v714 = vxor.u32 %v695, 2147483648
    %v715 = vxor.u32 %v699, 2147483648
    %v716 = vmul.f32 %v714, 1.442695
    %v717 = vpow.pop %v716
    %v718 = vmul.f32 %v715, 1.442695
    %v719 = vpow.pop %v718
    %v720 = vadd.f32 %v717, 1.0
    %v721 = vadd.f32 %v719, 1.0
    %v722 = vrcp.pop %v720
    %v723 = vmul.f32 1.0, %v722
    %v724 = vrcp.pop %v721
    %v725 = vmul.f32 1.0, %v724
    %v726 = vtanh.pop %v696
    %v727 = vtanh.pop %v700
    %v728 = vxor.u32 %v697, 2147483648
    %v729 = vxor.u32 %v701, 2147483648
    %v730 = vmul.f32 %v728, 1.442695
    %v731 = vpow.pop %v730
    %v732 = vmul.f32 %v729, 1.442695
    %v733 = vpow.pop %v732
    %v734 = vadd.f32 %v731, 1.0
    %v735 = vadd.f32 %v733, 1.0
    %v736 = vrcp.pop %v734
    %v737 = vmul.f32 1.0, %v736
    %v738 = vrcp.pop %v735
    %v739 = vmul.f32 1.0, %v738
    %v740 = vld [vmem:[#allocation3] sm:$0xff]
    %v741 = vld [vmem:[#allocation3 + $0x8] sm:$0xff]
    %v742 = vmul.f32 %v723, %v740
    %v743 = vmul.f32 %v725, %v741
    %v744 = vmul.f32 %v711, %v726
    %v745 = vmul.f32 %v713, %v727
    %v746 = vadd.f32 %v742, %v744
    %v747 = vadd.f32 %v743, %v745
    %v748 = vtanh.pop %v746
    %v749 = vtanh.pop %v747
    %v750 = vmul.f32 %v737, %v748
    %v751 = vmul.f32 %v739, %v749
    %752 = vst [vmem:[#allocation3] sm:$0xff] %v746
    %753 = vst [vmem:[#allocation3 + $0x8] sm:$0xff] %v747
    %754 = vst [vmem:[#allocation2] sm:$0xff] %v750
    %755 = vst [vmem:[#allocation2 + $0x8] sm:$0xff] %v751
    %s756 = scalar_lea.vmem [#allocation4], 32
    %757 = vst [vmem:[%s756] sm:$0xff] %v750
    %758 = vst [vmem:[%s756 + $0x8] sm:$0xff] %v751
    %s759 = scalar_lea.vmem [#allocation5], 192
    %v760 = vld [vmem:[%s759] sm:$0xff]
    %v761 = vld [vmem:[%s759 + $0x8] sm:$0xff]
    %v762 = vld [vmem:[%s759 + $0x10] sm:$0xff]
    %v763 = vld [vmem:[%s759 + $0x18] sm:$0xff]
    %v764 = vld [vmem:[%s759 + $0x20] sm:$0xff]
    %v765 = vld [vmem:[%s759 + $0x28] sm:$0xff]
    %v766 = vld [vmem:[%s759 + $0x30] sm:$0xff]
    %v767 = vld [vmem:[%s759 + $0x38] sm:$0xff]
    %v768 = vld [vmem:[#allocation2] sm:$0xff]
    %v769 = vld [vmem:[#allocation2 + $0x8] sm:$0xff]
    %v770 = vpack.c.bf16 %v769, %v768
    %771 = vmatprep.subr.bf16.mxu0 %v220
    %772 = vmatpush1.bf16.msra.mxu0 %v219
    %773 = vmatprep.subr.bf16.mxu0 %v224
    %774 = vmatpush1.bf16.msra.mxu0 %v223
    %775 = vmatprep.subr.bf16.mxu0 %v228
    %776 = vmatpush1.bf16.msra.mxu0 %v227
    %777 = vmatprep.subr.bf16.mxu0 %v232
    %778 = vmatpush1.bf16.msra.mxu0 %v231
    %779 = vmatprep.subr.bf16.mxu0 %v236
    %780 = vmatpush1.bf16.msra.mxu0 %v235
    %781 = vmatprep.subr.bf16.mxu0 %v240
    %782 = vmatpush1.bf16.msra.mxu0 %v239
    %783 = vmatprep.subr.bf16.mxu0 %v244
    %784 = vmatpush1.bf16.msra.mxu0 %v243
    %785 = vmatprep.subr.bf16.mxu0 %v248
    %786 = vmatpush1.bf16.msra.mxu0 %v247
    %787 = vmatprep.subr.bf16.mxu0 0
    %788 = vmatpush1.bf16.msra.mxu0 0
    %789 = vmatprep.subr.bf16.mxu0 0
    %790 = vmatpush1.bf16.msra.mxu0 0
    %791 = vmatprep.subr.bf16.mxu0 0
    %792 = vmatpush1.bf16.msra.mxu0 0
    %793 = vmatprep.subr.bf16.mxu0 0
    %794 = vmatpush1.bf16.msra.mxu0 0
    %795 = vmatprep.subr.bf16.mxu0 0
    %796 = vmatpush1.bf16.msra.mxu0 0
    %797 = vmatprep.subr.bf16.mxu0 0
    %798 = vmatpush1.bf16.msra.mxu0 0
    %799 = vmatprep.subr.bf16.mxu0 0
    %800 = vmatpush1.bf16.msra.mxu0 0
    %801 = vmatprep.subr.bf16.mxu0 0
    %802 = vmatpush1.bf16.msra.mxu0 0
    %803 = vmatprep.mubr.bf16.mxu0 0
    %804 = vmatmul.mubr.bf16.gmra.mrb[0].mxu0 %v770
    %v805 = vpop.f32.mrb[0].mxu0
    %v806 = vadd.f32 0.0, %v805
    %v807 = vpop.f32.mrb[0].mxu0
    %v808 = vadd.f32 0.0, %v807
    %v809 = vpop.f32.mrb[0].mxu0
    %v810 = vadd.f32 0.0, %v809
    %v811 = vpop.f32.mrb[0].mxu0
    %v812 = vadd.f32 0.0, %v811
    %813 = vdwg.mxu0
    %814 = vmatprep.subr.bf16.mxu0 %v222
    %815 = vmatpush1.bf16.msra.mxu0 %v221
    %816 = vmatprep.subr.bf16.mxu0 %v226
    %817 = vmatpush1.bf16.msra.mxu0 %v225
    %818 = vmatprep.subr.bf16.mxu0 %v230
    %819 = vmatpush1.bf16.msra.mxu0 %v229
    %820 = vmatprep.subr.bf16.mxu0 %v234
    %821 = vmatpush1.bf16.msra.mxu0 %v233
    %822 = vmatprep.subr.bf16.mxu0 %v238
    %823 = vmatpush1.bf16.msra.mxu0 %v237
    %824 = vmatprep.subr.bf16.mxu0 %v242
    %825 = vmatpush1.bf16.msra.mxu0 %v241
    %826 = vmatprep.subr.bf16.mxu0 %v246
    %827 = vmatpush1.bf16.msra.mxu0 %v245
    %828 = vmatprep.subr.bf16.mxu0 %v250
    %829 = vmatpush1.bf16.msra.mxu0 %v249
    %830 = vmatprep.subr.bf16.mxu0 0
    %831 = vmatpush1.bf16.msra.mxu0 0
    %832 = vmatprep.subr.bf16.mxu0 0
    %833 = vmatpush1.bf16.msra.mxu0 0
    %834 = vmatprep.subr.bf16.mxu0 0
    %835 = vmatpush1.bf16.msra.mxu0 0
    %836 = vmatprep.subr.bf16.mxu0 0
    %837 = vmatpush1.bf16.msra.mxu0 0
    %838 = vmatprep.subr.bf16.mxu0 0
    %839 = vmatpush1.bf16.msra.mxu0 0
    %840 = vmatprep.subr.bf16.mxu0 0
    %841 = vmatpush1.bf16.msra.mxu0 0
    %842 = vmatprep.subr.bf16.mxu0 0
    %843 = vmatpush1.bf16.msra.mxu0 0
    %844 = vmatprep.subr.bf16.mxu0 0
    %845 = vmatpush1.bf16.msra.mxu0 0
    %846 = vmatprep.mubr.bf16.mxu0 0
    %847 = vmatmul.mubr.bf16.gmra.mrb[0].mxu0 %v770
    %v848 = vpop.f32.mrb[0].mxu0
    %v849 = vadd.f32 0.0, %v848
    %v850 = vpop.f32.mrb[0].mxu0
    %v851 = vadd.f32 0.0, %v850
    %v852 = vpop.f32.mrb[0].mxu0
    %v853 = vadd.f32 0.0, %v852
    %v854 = vpop.f32.mrb[0].mxu0
    %v855 = vadd.f32 0.0, %v854
    %856 = vdwg.mxu0
    %v857 = vadd.f32 %v760, %v806
    %v858 = vadd.f32 %v761, %v808
    %v859 = vadd.f32 %v762, %v849
    %v860 = vadd.f32 %v763, %v851
    %v861 = vadd.f32 %v764, %v810
    %v862 = vadd.f32 %v765, %v812
    %v863 = vadd.f32 %v766, %v853
    %v864 = vadd.f32 %v767, %v855
    %v865 = vxor.u32 %v857, 2147483648
    %v866 = vxor.u32 %v861, 2147483648
    %v867 = vmul.f32 %v865, 1.442695
    %v868 = vpow.pop %v867
    %v869 = vmul.f32 %v866, 1.442695
    %v870 = vpow.pop %v869
    %v871 = vadd.f32 %v868, 1.0
    %v872 = vadd.f32 %v870, 1.0
    %v873 = vrcp.pop %v871
    %v874 = vmul.f32 1.0, %v873
    %v875 = vrcp.pop %v872
    %v876 = vmul.f32 1.0, %v875
    %v877 = vxor.u32 %v858, 2147483648
    %v878 = vxor.u32 %v862, 2147483648
    %v879 = vmul.f32 %v877, 1.442695
    %v880 = vpow.pop %v879
    %v881 = vmul.f32 %v878, 1.442695
    %v882 = vpow.pop %v881
    %v883 = vadd.f32 %v880, 1.0
    %v884 = vadd.f32 %v882, 1.0
    %v885 = vrcp.pop %v883
    %v886 = vmul.f32 1.0, %v885
    %v887 = vrcp.pop %v884
    %v888 = vmul.f32 1.0, %v887
    %v889 = vtanh.pop %v859
    %v890 = vtanh.pop %v863
    %v891 = vxor.u32 %v860, 2147483648
    %v892 = vxor.u32 %v864, 2147483648
    %v893 = vmul.f32 %v891, 1.442695
    %v894 = vpow.pop %v893
    %v895 = vmul.f32 %v892, 1.442695
    %v896 = vpow.pop %v895
    %v897 = vadd.f32 %v894, 1.0
    %v898 = vadd.f32 %v896, 1.0
    %v899 = vrcp.pop %v897
    %v900 = vmul.f32 1.0, %v899
    %v901 = vrcp.pop %v898
    %v902 = vmul.f32 1.0, %v901
    %v903 = vld [vmem:[#allocation3] sm:$0xff]
    %v904 = vld [vmem:[#allocation3 + $0x8] sm:$0xff]
    %v905 = vmul.f32 %v886, %v903
    %v906 = vmul.f32 %v888, %v904
    %v907 = vmul.f32 %v874, %v889
    %v908 = vmul.f32 %v876, %v890
    %v909 = vadd.f32 %v905, %v907
    %v910 = vadd.f32 %v906, %v908
    %v911 = vtanh.pop %v909
    %v912 = vtanh.pop %v910
    %v913 = vmul.f32 %v900, %v911
    %v914 = vmul.f32 %v902, %v912
    %915 = vst [vmem:[#allocation3] sm:$0xff] %v909
    %916 = vst [vmem:[#allocation3 + $0x8] sm:$0xff] %v910
    %917 = vst [vmem:[#allocation2] sm:$0xff] %v913
    %918 = vst [vmem:[#allocation2 + $0x8] sm:$0xff] %v914
    %s919 = scalar_lea.vmem [#allocation4], 48
    %920 = vst [vmem:[%s919] sm:$0xff] %v913
    %921 = vst [vmem:[%s919 + $0x8] sm:$0xff] %v914
    %s922 = scalar_lea.vmem [#allocation5], 256
    %v923 = vld [vmem:[%s922] sm:$0xff]
    %v924 = vld [vmem:[%s922 + $0x8] sm:$0xff]
    %v925 = vld [vmem:[%s922 + $0x10] sm:$0xff]
    %v926 = vld [vmem:[%s922 + $0x18] sm:$0xff]
    %v927 = vld [vmem:[%s922 + $0x20] sm:$0xff]
    %v928 = vld [vmem:[%s922 + $0x28] sm:$0xff]
    %v929 = vld [vmem:[%s922 + $0x30] sm:$0xff]
    %v930 = vld [vmem:[%s922 + $0x38] sm:$0xff]
    %v931 = vld [vmem:[#allocation2] sm:$0xff]
    %v932 = vld [vmem:[#allocation2 + $0x8] sm:$0xff]
    %v933 = vpack.c.bf16 %v932, %v931
    %934 = vmatprep.subr.bf16.mxu0 %v220
    %935 = vmatpush1.bf16.msra.mxu0 %v219
    %936 = vmatprep.subr.bf16.mxu0 %v224
    %937 = vmatpush1.bf16.msra.mxu0 %v223
    %938 = vmatprep.subr.bf16.mxu0 %v228
    %939 = vmatpush1.bf16.msra.mxu0 %v227
    %940 = vmatprep.subr.bf16.mxu0 %v232
    %941 = vmatpush1.bf16.msra.mxu0 %v231
    %942 = vmatprep.subr.bf16.mxu0 %v236
    %943 = vmatpush1.bf16.msra.mxu0 %v235
    %944 = vmatprep.subr.bf16.mxu0 %v240
    %945 = vmatpush1.bf16.msra.mxu0 %v239
    %946 = vmatprep.subr.bf16.mxu0 %v244
    %947 = vmatpush1.bf16.msra.mxu0 %v243
    %948 = vmatprep.subr.bf16.mxu0 %v248
    %949 = vmatpush1.bf16.msra.mxu0 %v247
    %950 = vmatprep.subr.bf16.mxu0 0
    %951 = vmatpush1.bf16.msra.mxu0 0
    %952 = vmatprep.subr.bf16.mxu0 0
    %953 = vmatpush1.bf16.msra.mxu0 0
    %954 = vmatprep.subr.bf16.mxu0 0
    %955 = vmatpush1.bf16.msra.mxu0 0
    %956 = vmatprep.subr.bf16.mxu0 0
    %957 = vmatpush1.bf16.msra.mxu0 0
    %958 = vmatprep.subr.bf16.mxu0 0
    %959 = vmatpush1.bf16.msra.mxu0 0
    %960 = vmatprep.subr.bf16.mxu0 0
    %961 = vmatpush1.bf16.msra.mxu0 0
    %962 = vmatprep.subr.bf16.mxu0 0
    %963 = vmatpush1.bf16.msra.mxu0 0
    %964 = vmatprep.subr.bf16.mxu0 0
    %965 = vmatpush1.bf16.msra.mxu0 0
    %966 = vmatprep.mubr.bf16.mxu0 0
    %967 = vmatmul.mubr.bf16.gmra.mrb[0].mxu0 %v933
    %v968 = vpop.f32.mrb[0].mxu0
    %v969 = vadd.f32 0.0, %v968
    %v970 = vpop.f32.mrb[0].mxu0
    %v971 = vadd.f32 0.0, %v970
    %v972 = vpop.f32.mrb[0].mxu0
    %v973 = vadd.f32 0.0, %v972
    %v974 = vpop.f32.mrb[0].mxu0
    %v975 = vadd.f32 0.0, %v974
    %976 = vdwg.mxu0
    %977 = vmatprep.subr.bf16.mxu0 %v222
    %978 = vmatpush1.bf16.msra.mxu0 %v221
    %979 = vmatprep.subr.bf16.mxu0 %v226
    %980 = vmatpush1.bf16.msra.mxu0 %v225
    %981 = vmatprep.subr.bf16.mxu0 %v230
    %982 = vmatpush1.bf16.msra.mxu0 %v229
    %983 = vmatprep.subr.bf16.mxu0 %v234
    %984 = vmatpush1.bf16.msra.mxu0 %v233
    %985 = vmatprep.subr.bf16.mxu0 %v238
    %986 = vmatpush1.bf16.msra.mxu0 %v237
    %987 = vmatprep.subr.bf16.mxu0 %v242
    %988 = vmatpush1.bf16.msra.mxu0 %v241
    %989 = vmatprep.subr.bf16.mxu0 %v246
    %990 = vmatpush1.bf16.msra.mxu0 %v245
    %991 = vmatprep.subr.bf16.mxu0 %v250
    %992 = vmatpush1.bf16.msra.mxu0 %v249
    %993 = vmatprep.subr.bf16.mxu0 0
    %994 = vmatpush1.bf16.msra.mxu0 0
    %995 = vmatprep.subr.bf16.mxu0 0
    %996 = vmatpush1.bf16.msra.mxu0 0
    %997 = vmatprep.subr.bf16.mxu0 0
    %998 = vmatpush1.bf16.msra.mxu0 0
    %999 = vmatprep.subr.bf16.mxu0 0
    %1000 = vmatpush1.bf16.msra.mxu0 0
    %1001 = vmatprep.subr.bf16.mxu0 0
    %1002 = vmatpush1.bf16.msra.mxu0 0
    %1003 = vmatprep.subr.bf16.mxu0 0
    %1004 = vmatpush1.bf16.msra.mxu0 0
    %1005 = vmatprep.subr.bf16.mxu0 0
    %1006 = vmatpush1.bf16.msra.mxu0 0
    %1007 = vmatprep.subr.bf16.mxu0 0
    %1008 = vmatpush1.bf16.msra.mxu0 0
    %1009 = vmatprep.mubr.bf16.mxu0 0
    %1010 = vmatmul.mubr.bf16.gmra.mrb[0].mxu0 %v933
    %v1011 = vpop.f32.mrb[0].mxu0
    %v1012 = vadd.f32 0.0, %v1011
    %v1013 = vpop.f32.mrb[0].mxu0
    %v1014 = vadd.f32 0.0, %v1013
    %v1015 = vpop.f32.mrb[0].mxu0
    %v1016 = vadd.f32 0.0, %v1015
    %v1017 = vpop.f32.mrb[0].mxu0
    %v1018 = vadd.f32 0.0, %v1017
    %1019 = vdwg.mxu0
    %v1020 = vadd.f32 %v923, %v969
    %v1021 = vadd.f32 %v924, %v971
    %v1022 = vadd.f32 %v925, %v1012
    %v1023 = vadd.f32 %v926, %v1014
    %v1024 = vadd.f32 %v927, %v973
    %v1025 = vadd.f32 %v928, %v975
    %v1026 = vadd.f32 %v929, %v1016
    %v1027 = vadd.f32 %v930, %v1018
    %v1028 = vxor.u32 %v1020, 2147483648
    %v1029 = vxor.u32 %v1024, 2147483648
    %v1030 = vmul.f32 %v1028, 1.442695
    %v1031 = vpow.pop %v1030
    %v1032 = vmul.f32 %v1029, 1.442695
    %v1033 = vpow.pop %v1032
    %v1034 = vadd.f32 %v1031, 1.0
    %v1035 = vadd.f32 %v1033, 1.0
    %v1036 = vrcp.pop %v1034
    %v1037 = vmul.f32 1.0, %v1036
    %v1038 = vrcp.pop %v1035
    %v1039 = vmul.f32 1.0, %v1038
    %v1040 = vxor.u32 %v1021, 2147483648
    %v1041 = vxor.u32 %v1025, 2147483648
    %v1042 = vmul.f32 %v1040, 1.442695
    %v1043 = vpow.pop %v1042
    %v1044 = vmul.f32 %v1041, 1.442695
    %v1045 = vpow.pop %v1044
    %v1046 = vadd.f32 %v1043, 1.0
    %v1047 = vadd.f32 %v1045, 1.0
    %v1048 = vrcp.pop %v1046
    %v1049 = vmul.f32 1.0, %v1048
    %v1050 = vrcp.pop %v1047
    %v1051 = vmul.f32 1.0, %v1050
    %v1052 = vtanh.pop %v1022
    %v1053 = vtanh.pop %v1026
    %v1054 = vxor.u32 %v1023, 2147483648
    %v1055 = vxor.u32 %v1027, 2147483648
    %v1056 = vmul.f32 %v1054, 1.442695
    %v1057 = vpow.pop %v1056
    %v1058 = vmul.f32 %v1055, 1.442695
    %v1059 = vpow.pop %v1058
    %v1060 = vadd.f32 %v1057, 1.0
    %v1061 = vadd.f32 %v1059, 1.0
    %v1062 = vrcp.pop %v1060
    %v1063 = vmul.f32 1.0, %v1062
    %v1064 = vrcp.pop %v1061
    %v1065 = vmul.f32 1.0, %v1064
    %v1066 = vld [vmem:[#allocation3] sm:$0xff]
    %v1067 = vld [vmem:[#allocation3 + $0x8] sm:$0xff]
    %v1068 = vmul.f32 %v1049, %v1066
    %v1069 = vmul.f32 %v1051, %v1067
    %v1070 = vmul.f32 %v1037, %v1052
    %v1071 = vmul.f32 %v1039, %v1053
    %v1072 = vadd.f32 %v1068, %v1070
    %v1073 = vadd.f32 %v1069, %v1071
    %v1074 = vtanh.pop %v1072
    %v1075 = vtanh.pop %v1073
    %v1076 = vmul.f32 %v1063, %v1074
    %v1077 = vmul.f32 %v1065, %v1075
    %1078 = vst [vmem:[#allocation3] sm:$0xff] %v1072
    %1079 = vst [vmem:[#allocation3 + $0x8] sm:$0xff] %v1073
    %1080 = vst [vmem:[#allocation2] sm:$0xff] %v1076
    %1081 = vst [vmem:[#allocation2 + $0x8] sm:$0xff] %v1077
    %s1082 = scalar_lea.vmem [#allocation4], 64
    %1083 = vst [vmem:[%s1082] sm:$0xff] %v1076
    %1084 = vst [vmem:[%s1082 + $0x8] sm:$0xff] %v1077
    %s1085 = scalar_lea.vmem [#allocation5], 320
    %v1086 = vld [vmem:[%s1085] sm:$0xff]
    %v1087 = vld [vmem:[%s1085 + $0x8] sm:$0xff]
    %v1088 = vld [vmem:[%s1085 + $0x10] sm:$0xff]
    %v1089 = vld [vmem:[%s1085 + $0x18] sm:$0xff]
    %v1090 = vld [vmem:[%s1085 + $0x20] sm:$0xff]
    %v1091 = vld [vmem:[%s1085 + $0x28] sm:$0xff]
    %v1092 = vld [vmem:[%s1085 + $0x30] sm:$0xff]
    %v1093 = vld [vmem:[%s1085 + $0x38] sm:$0xff]
    %v1094 = vld [vmem:[#allocation2] sm:$0xff]
    %v1095 = vld [vmem:[#allocation2 + $0x8] sm:$0xff]
    %v1096 = vpack.c.bf16 %v1095, %v1094
    %1097 = vmatprep.subr.bf16.mxu0 %v220
    %1098 = vmatpush1.bf16.msra.mxu0 %v219
    %1099 = vmatprep.subr.bf16.mxu0 %v224
    %1100 = vmatpush1.bf16.msra.mxu0 %v223
    %1101 = vmatprep.subr.bf16.mxu0 %v228
    %1102 = vmatpush1.bf16.msra.mxu0 %v227
    %1103 = vmatprep.subr.bf16.mxu0 %v232
    %1104 = vmatpush1.bf16.msra.mxu0 %v231
    %1105 = vmatprep.subr.bf16.mxu0 %v236
    %1106 = vmatpush1.bf16.msra.mxu0 %v235
    %1107 = vmatprep.subr.bf16.mxu0 %v240
    %1108 = vmatpush1.bf16.msra.mxu0 %v239
    %1109 = vmatprep.subr.bf16.mxu0 %v244
    %1110 = vmatpush1.bf16.msra.mxu0 %v243
    %1111 = vmatprep.subr.bf16.mxu0 %v248
    %1112 = vmatpush1.bf16.msra.mxu0 %v247
    %1113 = vmatprep.subr.bf16.mxu0 0
    %1114 = vmatpush1.bf16.msra.mxu0 0
    %1115 = vmatprep.subr.bf16.mxu0 0
    %1116 = vmatpush1.bf16.msra.mxu0 0
    %1117 = vmatprep.subr.bf16.mxu0 0
    %1118 = vmatpush1.bf16.msra.mxu0 0
    %1119 = vmatprep.subr.bf16.mxu0 0
    %1120 = vmatpush1.bf16.msra.mxu0 0
    %1121 = vmatprep.subr.bf16.mxu0 0
    %1122 = vmatpush1.bf16.msra.mxu0 0
    %1123 = vmatprep.subr.bf16.mxu0 0
    %1124 = vmatpush1.bf16.msra.mxu0 0
    %1125 = vmatprep.subr.bf16.mxu0 0
    %1126 = vmatpush1.bf16.msra.mxu0 0
    %1127 = vmatprep.subr.bf16.mxu0 0
    %1128 = vmatpush1.bf16.msra.mxu0 0
    %1129 = vmatprep.mubr.bf16.mxu0 0
    %1130 = vmatmul.mubr.bf16.gmra.mrb[0].mxu0 %v1096
    %v1131 = vpop.f32.mrb[0].mxu0
    %v1132 = vadd.f32 0.0, %v1131
    %v1133 = vpop.f32.mrb[0].mxu0
    %v1134 = vadd.f32 0.0, %v1133
    %v1135 = vpop.f32.mrb[0].mxu0
    %v1136 = vadd.f32 0.0, %v1135
    %v1137 = vpop.f32.mrb[0].mxu0
    %v1138 = vadd.f32 0.0, %v1137
    %1139 = vdwg.mxu0
    %1140 = vmatprep.subr.bf16.mxu0 %v222
    %1141 = vmatpush1.bf16.msra.mxu0 %v221
    %1142 = vmatprep.subr.bf16.mxu0 %v226
    %1143 = vmatpush1.bf16.msra.mxu0 %v225
    %1144 = vmatprep.subr.bf16.mxu0 %v230
    %1145 = vmatpush1.bf16.msra.mxu0 %v229
    %1146 = vmatprep.subr.bf16.mxu0 %v234
    %1147 = vmatpush1.bf16.msra.mxu0 %v233
    %1148 = vmatprep.subr.bf16.mxu0 %v238
    %1149 = vmatpush1.bf16.msra.mxu0 %v237
    %1150 = vmatprep.subr.bf16.mxu0 %v242
    %1151 = vmatpush1.bf16.msra.mxu0 %v241
    %1152 = vmatprep.subr.bf16.mxu0 %v246
    %1153 = vmatpush1.bf16.msra.mxu0 %v245
    %1154 = vmatprep.subr.bf16.mxu0 %v250
    %1155 = vmatpush1.bf16.msra.mxu0 %v249
    %1156 = vmatprep.subr.bf16.mxu0 0
    %1157 = vmatpush1.bf16.msra.mxu0 0
    %1158 = vmatprep.subr.bf16.mxu0 0
    %1159 = vmatpush1.bf16.msra.mxu0 0
    %1160 = vmatprep.subr.bf16.mxu0 0
    %1161 = vmatpush1.bf16.msra.mxu0 0
    %1162 = vmatprep.subr.bf16.mxu0 0
    %1163 = vmatpush1.bf16.msra.mxu0 0
    %1164 = vmatprep.subr.bf16.mxu0 0
    %1165 = vmatpush1.bf16.msra.mxu0 0
    %1166 = vmatprep.subr.bf16.mxu0 0
    %1167 = vmatpush1.bf16.msra.mxu0 0
    %1168 = vmatprep.subr.bf16.mxu0 0
    %1169 = vmatpush1.bf16.msra.mxu0 0
    %1170 = vmatprep.subr.bf16.mxu0 0
    %1171 = vmatpush1.bf16.msra.mxu0 0
    %1172 = vmatprep.mubr.bf16.mxu0 0
    %1173 = vmatmul.mubr.bf16.gmra.mrb[0].mxu0 %v1096
    %v1174 = vpop.f32.mrb[0].mxu0
    %v1175 = vadd.f32 0.0, %v1174
    %v1176 = vpop.f32.mrb[0].mxu0
    %v1177 = vadd.f32 0.0, %v1176
    %v1178 = vpop.f32.mrb[0].mxu0
    %v1179 = vadd.f32 0.0, %v1178
    %v1180 = vpop.f32.mrb[0].mxu0
    %v1181 = vadd.f32 0.0, %v1180
    %1182 = vdwg.mxu0
    %v1183 = vadd.f32 %v1086, %v1132
    %v1184 = vadd.f32 %v1087, %v1134
    %v1185 = vadd.f32 %v1088, %v1175
    %v1186 = vadd.f32 %v1089, %v1177
    %v1187 = vadd.f32 %v1090, %v1136
    %v1188 = vadd.f32 %v1091, %v1138
    %v1189 = vadd.f32 %v1092, %v1179
    %v1190 = vadd.f32 %v1093, %v1181
    %v1191 = vxor.u32 %v1183, 2147483648
    %v1192 = vxor.u32 %v1187, 2147483648
    %v1193 = vmul.f32 %v1191, 1.442695
    %v1194 = vpow.pop %v1193
    %v1195 = vmul.f32 %v1192, 1.442695
    %v1196 = vpow.pop %v1195
    %v1197 = vadd.f32 %v1194, 1.0
    %v1198 = vadd.f32 %v1196, 1.0
    %v1199 = vrcp.pop %v1197
    %v1200 = vmul.f32 1.0, %v1199
    %v1201 = vrcp.pop %v1198
    %v1202 = vmul.f32 1.0, %v1201
    %v1203 = vxor.u32 %v1184, 2147483648
    %v1204 = vxor.u32 %v1188, 2147483648
    %v1205 = vmul.f32 %v1203, 1.442695
    %v1206 = vpow.pop %v1205
    %v1207 = vmul.f32 %v1204, 1.442695
    %v1208 = vpow.pop %v1207
    %v1209 = vadd.f32 %v1206, 1.0
    %v1210 = vadd.f32 %v1208, 1.0
    %v1211 = vrcp.pop %v1209
    %v1212 = vmul.f32 1.0, %v1211
    %v1213 = vrcp.pop %v1210
    %v1214 = vmul.f32 1.0, %v1213
    %v1215 = vtanh.pop %v1185
    %v1216 = vtanh.pop %v1189
    %v1217 = vxor.u32 %v1186, 2147483648
    %v1218 = vxor.u32 %v1190, 2147483648
    %v1219 = vmul.f32 %v1217, 1.442695
    %v1220 = vpow.pop %v1219
    %v1221 = vmul.f32 %v1218, 1.442695
    %v1222 = vpow.pop %v1221
    %v1223 = vadd.f32 %v1220, 1.0
    %v1224 = vadd.f32 %v1222, 1.0
    %v1225 = vrcp.pop %v1223
    %v1226 = vmul.f32 1.0, %v1225
    %v1227 = vrcp.pop %v1224
    %v1228 = vmul.f32 1.0, %v1227
    %v1229 = vld [vmem:[#allocation3] sm:$0xff]
    %v1230 = vld [vmem:[#allocation3 + $0x8] sm:$0xff]
    %v1231 = vmul.f32 %v1212, %v1229
    %v1232 = vmul.f32 %v1214, %v1230
    %v1233 = vmul.f32 %v1200, %v1215
    %v1234 = vmul.f32 %v1202, %v1216
    %v1235 = vadd.f32 %v1231, %v1233
    %v1236 = vadd.f32 %v1232, %v1234
    %v1237 = vtanh.pop %v1235
    %v1238 = vtanh.pop %v1236
    %v1239 = vmul.f32 %v1226, %v1237
    %v1240 = vmul.f32 %v1228, %v1238
    %1241 = vst [vmem:[#allocation3] sm:$0xff] %v1235
    %1242 = vst [vmem:[#allocation3 + $0x8] sm:$0xff] %v1236
    %1243 = vst [vmem:[#allocation2] sm:$0xff] %v1239
    %1244 = vst [vmem:[#allocation2 + $0x8] sm:$0xff] %v1240
    %s1245 = scalar_lea.vmem [#allocation4], 80
    %1246 = vst [vmem:[%s1245] sm:$0xff] %v1239
    %1247 = vst [vmem:[%s1245 + $0x8] sm:$0xff] %v1240
    %s1248 = scalar_lea.vmem [#allocation5], 384
    %v1249 = vld [vmem:[%s1248] sm:$0xff]
    %v1250 = vld [vmem:[%s1248 + $0x8] sm:$0xff]
    %v1251 = vld [vmem:[%s1248 + $0x10] sm:$0xff]
    %v1252 = vld [vmem:[%s1248 + $0x18] sm:$0xff]
    %v1253 = vld [vmem:[%s1248 + $0x20] sm:$0xff]
    %v1254 = vld [vmem:[%s1248 + $0x28] sm:$0xff]
    %v1255 = vld [vmem:[%s1248 + $0x30] sm:$0xff]
    %v1256 = vld [vmem:[%s1248 + $0x38] sm:$0xff]
    %v1257 = vld [vmem:[#allocation2] sm:$0xff]
    %v1258 = vld [vmem:[#allocation2 + $0x8] sm:$0xff]
    %v1259 = vpack.c.bf16 %v1258, %v1257
    %1260 = vmatprep.subr.bf16.mxu0 %v220
    %1261 = vmatpush1.bf16.msra.mxu0 %v219
    %1262 = vmatprep.subr.bf16.mxu0 %v224
    %1263 = vmatpush1.bf16.msra.mxu0 %v223
    %1264 = vmatprep.subr.bf16.mxu0 %v228
    %1265 = vmatpush1.bf16.msra.mxu0 %v227
    %1266 = vmatprep.subr.bf16.mxu0 %v232
    %1267 = vmatpush1.bf16.msra.mxu0 %v231
    %1268 = vmatprep.subr.bf16.mxu0 %v236
    %1269 = vmatpush1.bf16.msra.mxu0 %v235
    %1270 = vmatprep.subr.bf16.mxu0 %v240
    %1271 = vmatpush1.bf16.msra.mxu0 %v239
    %1272 = vmatprep.subr.bf16.mxu0 %v244
    %1273 = vmatpush1.bf16.msra.mxu0 %v243
    %1274 = vmatprep.subr.bf16.mxu0 %v248
    %1275 = vmatpush1.bf16.msra.mxu0 %v247
    %1276 = vmatprep.subr.bf16.mxu0 0
    %1277 = vmatpush1.bf16.msra.mxu0 0
    %1278 = vmatprep.subr.bf16.mxu0 0
    %1279 = vmatpush1.bf16.msra.mxu0 0
    %1280 = vmatprep.subr.bf16.mxu0 0
    %1281 = vmatpush1.bf16.msra.mxu0 0
    %1282 = vmatprep.subr.bf16.mxu0 0
    %1283 = vmatpush1.bf16.msra.mxu0 0
    %1284 = vmatprep.subr.bf16.mxu0 0
    %1285 = vmatpush1.bf16.msra.mxu0 0
    %1286 = vmatprep.subr.bf16.mxu0 0
    %1287 = vmatpush1.bf16.msra.mxu0 0
    %1288 = vmatprep.subr.bf16.mxu0 0
    %1289 = vmatpush1.bf16.msra.mxu0 0
    %1290 = vmatprep.subr.bf16.mxu0 0
    %1291 = vmatpush1.bf16.msra.mxu0 0
    %1292 = vmatprep.mubr.bf16.mxu0 0
    %1293 = vmatmul.mubr.bf16.gmra.mrb[0].mxu0 %v1259
    %v1294 = vpop.f32.mrb[0].mxu0
    %v1295 = vadd.f32 0.0, %v1294
    %v1296 = vpop.f32.mrb[0].mxu0
    %v1297 = vadd.f32 0.0, %v1296
    %v1298 = vpop.f32.mrb[0].mxu0
    %v1299 = vadd.f32 0.0, %v1298
    %v1300 = vpop.f32.mrb[0].mxu0
    %v1301 = vadd.f32 0.0, %v1300
    %1302 = vdwg.mxu0
    %1303 = vmatprep.subr.bf16.mxu0 %v222
    %1304 = vmatpush1.bf16.msra.mxu0 %v221
    %1305 = vmatprep.subr.bf16.mxu0 %v226
    %1306 = vmatpush1.bf16.msra.mxu0 %v225
    %1307 = vmatprep.subr.bf16.mxu0 %v230
    %1308 = vmatpush1.bf16.msra.mxu0 %v229
    %1309 = vmatprep.subr.bf16.mxu0 %v234
    %1310 = vmatpush1.bf16.msra.mxu0 %v233
    %1311 = vmatprep.subr.bf16.mxu0 %v238
    %1312 = vmatpush1.bf16.msra.mxu0 %v237
    %1313 = vmatprep.subr.bf16.mxu0 %v242
    %1314 = vmatpush1.bf16.msra.mxu0 %v241
    %1315 = vmatprep.subr.bf16.mxu0 %v246
    %1316 = vmatpush1.bf16.msra.mxu0 %v245
    %1317 = vmatprep.subr.bf16.mxu0 %v250
    %1318 = vmatpush1.bf16.msra.mxu0 %v249
    %1319 = vmatprep.subr.bf16.mxu0 0
    %1320 = vmatpush1.bf16.msra.mxu0 0
    %1321 = vmatprep.subr.bf16.mxu0 0
    %1322 = vmatpush1.bf16.msra.mxu0 0
    %1323 = vmatprep.subr.bf16.mxu0 0
    %1324 = vmatpush1.bf16.msra.mxu0 0
    %1325 = vmatprep.subr.bf16.mxu0 0
    %1326 = vmatpush1.bf16.msra.mxu0 0
    %1327 = vmatprep.subr.bf16.mxu0 0
    %1328 = vmatpush1.bf16.msra.mxu0 0
    %1329 = vmatprep.subr.bf16.mxu0 0
    %1330 = vmatpush1.bf16.msra.mxu0 0
    %1331 = vmatprep.subr.bf16.mxu0 0
    %1332 = vmatpush1.bf16.msra.mxu0 0
    %1333 = vmatprep.subr.bf16.mxu0 0
    %1334 = vmatpush1.bf16.msra.mxu0 0
    %1335 = vmatprep.mubr.bf16.mxu0 0
    %1336 = vmatmul.mubr.bf16.gmra.mrb[0].mxu0 %v1259
    %v1337 = vpop.f32.mrb[0].mxu0
    %v1338 = vadd.f32 0.0, %v1337
    %v1339 = vpop.f32.mrb[0].mxu0
    %v1340 = vadd.f32 0.0, %v1339
    %v1341 = vpop.f32.mrb[0].mxu0
    %v1342 = vadd.f32 0.0, %v1341
    %v1343 = vpop.f32.mrb[0].mxu0
    %v1344 = vadd.f32 0.0, %v1343
    %1345 = vdwg.mxu0
    %v1346 = vadd.f32 %v1249, %v1295
    %v1347 = vadd.f32 %v1250, %v1297
    %v1348 = vadd.f32 %v1251, %v1338
    %v1349 = vadd.f32 %v1252, %v1340
    %v1350 = vadd.f32 %v1253, %v1299
    %v1351 = vadd.f32 %v1254, %v1301
    %v1352 = vadd.f32 %v1255, %v1342
    %v1353 = vadd.f32 %v1256, %v1344
    %v1354 = vxor.u32 %v1346, 2147483648
    %v1355 = vxor.u32 %v1350, 2147483648
    %v1356 = vmul.f32 %v1354, 1.442695
    %v1357 = vpow.pop %v1356
    %v1358 = vmul.f32 %v1355, 1.442695
    %v1359 = vpow.pop %v1358
    %v1360 = vadd.f32 %v1357, 1.0
    %v1361 = vadd.f32 %v1359, 1.0
    %v1362 = vrcp.pop %v1360
    %v1363 = vmul.f32 1.0, %v1362
    %v1364 = vrcp.pop %v1361
    %v1365 = vmul.f32 1.0, %v1364
    %v1366 = vxor.u32 %v1347, 2147483648
    %v1367 = vxor.u32 %v1351, 2147483648
    %v1368 = vmul.f32 %v1366, 1.442695
    %v1369 = vpow.pop %v1368
    %v1370 = vmul.f32 %v1367, 1.442695
    %v1371 = vpow.pop %v1370
    %v1372 = vadd.f32 %v1369, 1.0
    %v1373 = vadd.f32 %v1371, 1.0
    %v1374 = vrcp.pop %v1372
    %v1375 = vmul.f32 1.0, %v1374
    %v1376 = vrcp.pop %v1373
    %v1377 = vmul.f32 1.0, %v1376
    %v1378 = vtanh.pop %v1348
    %v1379 = vtanh.pop %v1352
    %v1380 = vxor.u32 %v1349, 2147483648
    %v1381 = vxor.u32 %v1353, 2147483648
    %v1382 = vmul.f32 %v1380, 1.442695
    %v1383 = vpow.pop %v1382
    %v1384 = vmul.f32 %v1381, 1.442695
    %v1385 = vpow.pop %v1384
    %v1386 = vadd.f32 %v1383, 1.0
    %v1387 = vadd.f32 %v1385, 1.0
    %v1388 = vrcp.pop %v1386
    %v1389 = vmul.f32 1.0, %v1388
    %v1390 = vrcp.pop %v1387
    %v1391 = vmul.f32 1.0, %v1390
    %v1392 = vld [vmem:[#allocation3] sm:$0xff]
    %v1393 = vld [vmem:[#allocation3 + $0x8] sm:$0xff]
    %v1394 = vmul.f32 %v1375, %v1392
    %v1395 = vmul.f32 %v1377, %v1393
    %v1396 = vmul.f32 %v1363, %v1378
    %v1397 = vmul.f32 %v1365, %v1379
    %v1398 = vadd.f32 %v1394, %v1396
    %v1399 = vadd.f32 %v1395, %v1397
    %v1400 = vtanh.pop %v1398
    %v1401 = vtanh.pop %v1399
    %v1402 = vmul.f32 %v1389, %v1400
    %v1403 = vmul.f32 %v1391, %v1401
    %1404 = vst [vmem:[#allocation3] sm:$0xff] %v1398
    %1405 = vst [vmem:[#allocation3 + $0x8] sm:$0xff] %v1399
    %1406 = vst [vmem:[#allocation2] sm:$0xff] %v1402
    %1407 = vst [vmem:[#allocation2 + $0x8] sm:$0xff] %v1403
    %s1408 = scalar_lea.vmem [#allocation4], 96
    %1409 = vst [vmem:[%s1408] sm:$0xff] %v1402
    %1410 = vst [vmem:[%s1408 + $0x8] sm:$0xff] %v1403
    %s1411 = scalar_lea.vmem [#allocation5], 448
    %v1412 = vld [vmem:[%s1411] sm:$0xff]
    %v1413 = vld [vmem:[%s1411 + $0x8] sm:$0xff]
    %v1414 = vld [vmem:[%s1411 + $0x10] sm:$0xff]
    %v1415 = vld [vmem:[%s1411 + $0x18] sm:$0xff]
    %v1416 = vld [vmem:[%s1411 + $0x20] sm:$0xff]
    %v1417 = vld [vmem:[%s1411 + $0x28] sm:$0xff]
    %v1418 = vld [vmem:[%s1411 + $0x30] sm:$0xff]
    %v1419 = vld [vmem:[%s1411 + $0x38] sm:$0xff]
    %v1420 = vld [vmem:[#allocation2] sm:$0xff]
    %v1421 = vld [vmem:[#allocation2 + $0x8] sm:$0xff]
    %v1422 = vpack.c.bf16 %v1421, %v1420
    %1423 = vmatprep.subr.bf16.mxu0 %v220
    %1424 = vmatpush1.bf16.msra.mxu0 %v219
    %1425 = vmatprep.subr.bf16.mxu0 %v224
    %1426 = vmatpush1.bf16.msra.mxu0 %v223
    %1427 = vmatprep.subr.bf16.mxu0 %v228
    %1428 = vmatpush1.bf16.msra.mxu0 %v227
    %1429 = vmatprep.subr.bf16.mxu0 %v232
    %1430 = vmatpush1.bf16.msra.mxu0 %v231
    %1431 = vmatprep.subr.bf16.mxu0 %v236
    %1432 = vmatpush1.bf16.msra.mxu0 %v235
    %1433 = vmatprep.subr.bf16.mxu0 %v240
    %1434 = vmatpush1.bf16.msra.mxu0 %v239
    %1435 = vmatprep.subr.bf16.mxu0 %v244
    %1436 = vmatpush1.bf16.msra.mxu0 %v243
    %1437 = vmatprep.subr.bf16.mxu0 %v248
    %1438 = vmatpush1.bf16.msra.mxu0 %v247
    %1439 = vmatprep.subr.bf16.mxu0 0
    %1440 = vmatpush1.bf16.msra.mxu0 0
    %1441 = vmatprep.subr.bf16.mxu0 0
    %1442 = vmatpush1.bf16.msra.mxu0 0
    %1443 = vmatprep.subr.bf16.mxu0 0
    %1444 = vmatpush1.bf16.msra.mxu0 0
    %1445 = vmatprep.subr.bf16.mxu0 0
    %1446 = vmatpush1.bf16.msra.mxu0 0
    %1447 = vmatprep.subr.bf16.mxu0 0
    %1448 = vmatpush1.bf16.msra.mxu0 0
    %1449 = vmatprep.subr.bf16.mxu0 0
    %1450 = vmatpush1.bf16.msra.mxu0 0
    %1451 = vmatprep.subr.bf16.mxu0 0
    %1452 = vmatpush1.bf16.msra.mxu0 0
    %1453 = vmatprep.subr.bf16.mxu0 0
    %1454 = vmatpush1.bf16.msra.mxu0 0
    %1455 = vmatprep.mubr.bf16.mxu0 0
    %1456 = vmatmul.mubr.bf16.gmra.mrb[0].mxu0 %v1422
    %v1457 = vpop.f32.mrb[0].mxu0
    %v1458 = vadd.f32 0.0, %v1457
    %v1459 = vpop.f32.mrb[0].mxu0
    %v1460 = vadd.f32 0.0, %v1459
    %v1461 = vpop.f32.mrb[0].mxu0
    %v1462 = vadd.f32 0.0, %v1461
    %v1463 = vpop.f32.mrb[0].mxu0
    %v1464 = vadd.f32 0.0, %v1463
    %1465 = vdwg.mxu0
    %1466 = vmatprep.subr.bf16.mxu0 %v222
    %1467 = vmatpush1.bf16.msra.mxu0 %v221
    %1468 = vmatprep.subr.bf16.mxu0 %v226
    %1469 = vmatpush1.bf16.msra.mxu0 %v225
    %1470 = vmatprep.subr.bf16.mxu0 %v230
    %1471 = vmatpush1.bf16.msra.mxu0 %v229
    %1472 = vmatprep.subr.bf16.mxu0 %v234
    %1473 = vmatpush1.bf16.msra.mxu0 %v233
    %1474 = vmatprep.subr.bf16.mxu0 %v238
    %1475 = vmatpush1.bf16.msra.mxu0 %v237
    %1476 = vmatprep.subr.bf16.mxu0 %v242
    %1477 = vmatpush1.bf16.msra.mxu0 %v241
    %1478 = vmatprep.subr.bf16.mxu0 %v246
    %1479 = vmatpush1.bf16.msra.mxu0 %v245
    %1480 = vmatprep.subr.bf16.mxu0 %v250
    %1481 = vmatpush1.bf16.msra.mxu0 %v249
    %1482 = vmatprep.subr.bf16.mxu0 0
    %1483 = vmatpush1.bf16.msra.mxu0 0
    %1484 = vmatprep.subr.bf16.mxu0 0
    %1485 = vmatpush1.bf16.msra.mxu0 0
    %1486 = vmatprep.subr.bf16.mxu0 0
    %1487 = vmatpush1.bf16.msra.mxu0 0
    %1488 = vmatprep.subr.bf16.mxu0 0
    %1489 = vmatpush1.bf16.msra.mxu0 0
    %1490 = vmatprep.subr.bf16.mxu0 0
    %1491 = vmatpush1.bf16.msra.mxu0 0
    %1492 = vmatprep.subr.bf16.mxu0 0
    %1493 = vmatpush1.bf16.msra.mxu0 0
    %1494 = vmatprep.subr.bf16.mxu0 0
    %1495 = vmatpush1.bf16.msra.mxu0 0
    %1496 = vmatprep.subr.bf16.mxu0 0
    %1497 = vmatpush1.bf16.msra.mxu0 0
    %1498 = vmatprep.mubr.bf16.mxu0 0
    %1499 = vmatmul.mubr.bf16.gmra.mrb[0].mxu0 %v1422
    %v1500 = vpop.f32.mrb[0].mxu0
    %v1501 = vadd.f32 0.0, %v1500
    %v1502 = vpop.f32.mrb[0].mxu0
    %v1503 = vadd.f32 0.0, %v1502
    %v1504 = vpop.f32.mrb[0].mxu0
    %v1505 = vadd.f32 0.0, %v1504
    %v1506 = vpop.f32.mrb[0].mxu0
    %v1507 = vadd.f32 0.0, %v1506
    %1508 = vdwg.mxu0
    %v1509 = vadd.f32 %v1412, %v1458
    %v1510 = vadd.f32 %v1413, %v1460
    %v1511 = vadd.f32 %v1414, %v1501
    %v1512 = vadd.f32 %v1415, %v1503
    %v1513 = vadd.f32 %v1416, %v1462
    %v1514 = vadd.f32 %v1417, %v1464
    %v1515 = vadd.f32 %v1418, %v1505
    %v1516 = vadd.f32 %v1419, %v1507
    %v1517 = vxor.u32 %v1509, 2147483648
    %v1518 = vxor.u32 %v1513, 2147483648
    %v1519 = vmul.f32 %v1517, 1.442695
    %v1520 = vpow.pop %v1519
    %v1521 = vmul.f32 %v1518, 1.442695
    %v1522 = vpow.pop %v1521
    %v1523 = vadd.f32 %v1520, 1.0
    %v1524 = vadd.f32 %v1522, 1.0
    %v1525 = vrcp.pop %v1523
    %v1526 = vmul.f32 1.0, %v1525
    %v1527 = vrcp.pop %v1524
    %v1528 = vmul.f32 1.0, %v1527
    %v1529 = vxor.u32 %v1510, 2147483648
    %v1530 = vxor.u32 %v1514, 2147483648
    %v1531 = vmul.f32 %v1529, 1.442695
    %v1532 = vpow.pop %v1531
    %v1533 = vmul.f32 %v1530, 1.442695
    %v1534 = vpow.pop %v1533
    %v1535 = vadd.f32 %v1532, 1.0
    %v1536 = vadd.f32 %v1534, 1.0
    %v1537 = vrcp.pop %v1535
    %v1538 = vmul.f32 1.0, %v1537
    %v1539 = vrcp.pop %v1536
    %v1540 = vmul.f32 1.0, %v1539
    %v1541 = vtanh.pop %v1511
    %v1542 = vtanh.pop %v1515
    %v1543 = vxor.u32 %v1512, 2147483648
    %v1544 = vxor.u32 %v1516, 2147483648
    %v1545 = vmul.f32 %v1543, 1.442695
    %v1546 = vpow.pop %v1545
    %v1547 = vmul.f32 %v1544, 1.442695
    %v1548 = vpow.pop %v1547
    %v1549 = vadd.f32 %v1546, 1.0
    %v1550 = vadd.f32 %v1548, 1.0
    %v1551 = vrcp.pop %v1549
    %v1552 = vmul.f32 1.0, %v1551
    %v1553 = vrcp.pop %v1550
    %v1554 = vmul.f32 1.0, %v1553
    %v1555 = vld [vmem:[#allocation3] sm:$0xff]
    %v1556 = vld [vmem:[#allocation3 + $0x8] sm:$0xff]
    %v1557 = vmul.f32 %v1538, %v1555
    %v1558 = vmul.f32 %v1540, %v1556
    %v1559 = vmul.f32 %v1526, %v1541
    %v1560 = vmul.f32 %v1528, %v1542
    %v1561 = vadd.f32 %v1557, %v1559
    %v1562 = vadd.f32 %v1558, %v1560
    %v1563 = vtanh.pop %v1561
    %v1564 = vtanh.pop %v1562
    %v1565 = vmul.f32 %v1552, %v1563
    %v1566 = vmul.f32 %v1554, %v1564
    %1567 = vst [vmem:[#allocation3] sm:$0xff] %v1561
    %1568 = vst [vmem:[#allocation3 + $0x8] sm:$0xff] %v1562
    %1569 = vst [vmem:[#allocation2] sm:$0xff] %v1565
    %1570 = vst [vmem:[#allocation2 + $0x8] sm:$0xff] %v1566
    %s1571 = scalar_lea.vmem [#allocation4], 112
    %1572 = vst [vmem:[%s1571] sm:$0xff] %v1565
    %1573 = vst [vmem:[%s1571 + $0x8] sm:$0xff] %v1566
    %s1574 = scalar_lea.vmem [#allocation5], 512
    %v1575 = vld [vmem:[%s1574] sm:$0xff]
    %v1576 = vld [vmem:[%s1574 + $0x8] sm:$0xff]
    %v1577 = vld [vmem:[%s1574 + $0x10] sm:$0xff]
    %v1578 = vld [vmem:[%s1574 + $0x18] sm:$0xff]
    %v1579 = vld [vmem:[%s1574 + $0x20] sm:$0xff]
    %v1580 = vld [vmem:[%s1574 + $0x28] sm:$0xff]
    %v1581 = vld [vmem:[%s1574 + $0x30] sm:$0xff]
    %v1582 = vld [vmem:[%s1574 + $0x38] sm:$0xff]
    %v1583 = vld [vmem:[#allocation2] sm:$0xff]
    %v1584 = vld [vmem:[#allocation2 + $0x8] sm:$0xff]
    %v1585 = vpack.c.bf16 %v1584, %v1583
    %1586 = vmatprep.subr.bf16.mxu0 %v220
    %1587 = vmatpush1.bf16.msra.mxu0 %v219
    %1588 = vmatprep.subr.bf16.mxu0 %v224
    %1589 = vmatpush1.bf16.msra.mxu0 %v223
    %1590 = vmatprep.subr.bf16.mxu0 %v228
    %1591 = vmatpush1.bf16.msra.mxu0 %v227
    %1592 = vmatprep.subr.bf16.mxu0 %v232
    %1593 = vmatpush1.bf16.msra.mxu0 %v231
    %1594 = vmatprep.subr.bf16.mxu0 %v236
    %1595 = vmatpush1.bf16.msra.mxu0 %v235
    %1596 = vmatprep.subr.bf16.mxu0 %v240
    %1597 = vmatpush1.bf16.msra.mxu0 %v239
    %1598 = vmatprep.subr.bf16.mxu0 %v244
    %1599 = vmatpush1.bf16.msra.mxu0 %v243
    %1600 = vmatprep.subr.bf16.mxu0 %v248
    %1601 = vmatpush1.bf16.msra.mxu0 %v247
    %1602 = vmatprep.subr.bf16.mxu0 0
    %1603 = vmatpush1.bf16.msra.mxu0 0
    %1604 = vmatprep.subr.bf16.mxu0 0
    %1605 = vmatpush1.bf16.msra.mxu0 0
    %1606 = vmatprep.subr.bf16.mxu0 0
    %1607 = vmatpush1.bf16.msra.mxu0 0
    %1608 = vmatprep.subr.bf16.mxu0 0
    %1609 = vmatpush1.bf16.msra.mxu0 0
    %1610 = vmatprep.subr.bf16.mxu0 0
    %1611 = vmatpush1.bf16.msra.mxu0 0
    %1612 = vmatprep.subr.bf16.mxu0 0
    %1613 = vmatpush1.bf16.msra.mxu0 0
    %1614 = vmatprep.subr.bf16.mxu0 0
    %1615 = vmatpush1.bf16.msra.mxu0 0
    %1616 = vmatprep.subr.bf16.mxu0 0
    %1617 = vmatpush1.bf16.msra.mxu0 0
    %1618 = vmatprep.mubr.bf16.mxu0 0
    %1619 = vmatmul.mubr.bf16.gmra.mrb[0].mxu0 %v1585
    %v1620 = vpop.f32.mrb[0].mxu0
    %v1621 = vadd.f32 0.0, %v1620
    %v1622 = vpop.f32.mrb[0].mxu0
    %v1623 = vadd.f32 0.0, %v1622
    %v1624 = vpop.f32.mrb[0].mxu0
    %v1625 = vadd.f32 0.0, %v1624
    %v1626 = vpop.f32.mrb[0].mxu0
    %v1627 = vadd.f32 0.0, %v1626
    %1628 = vdwg.mxu0
    %1629 = vmatprep.subr.bf16.mxu0 %v222
    %1630 = vmatpush1.bf16.msra.mxu0 %v221
    %1631 = vmatprep.subr.bf16.mxu0 %v226
    %1632 = vmatpush1.bf16.msra.mxu0 %v225
    %1633 = vmatprep.subr.bf16.mxu0 %v230
    %1634 = vmatpush1.bf16.msra.mxu0 %v229
    %1635 = vmatprep.subr.bf16.mxu0 %v234
    %1636 = vmatpush1.bf16.msra.mxu0 %v233
    %1637 = vmatprep.subr.bf16.mxu0 %v238
    %1638 = vmatpush1.bf16.msra.mxu0 %v237
    %1639 = vmatprep.subr.bf16.mxu0 %v242
    %1640 = vmatpush1.bf16.msra.mxu0 %v241
    %1641 = vmatprep.subr.bf16.mxu0 %v246
    %1642 = vmatpush1.bf16.msra.mxu0 %v245
    %1643 = vmatprep.subr.bf16.mxu0 %v250
    %1644 = vmatpush1.bf16.msra.mxu0 %v249
    %1645 = vmatprep.subr.bf16.mxu0 0
    %1646 = vmatpush1.bf16.msra.mxu0 0
    %1647 = vmatprep.subr.bf16.mxu0 0
    %1648 = vmatpush1.bf16.msra.mxu0 0
    %1649 = vmatprep.subr.bf16.mxu0 0
    %1650 = vmatpush1.bf16.msra.mxu0 0
    %1651 = vmatprep.subr.bf16.mxu0 0
    %1652 = vmatpush1.bf16.msra.mxu0 0
    %1653 = vmatprep.subr.bf16.mxu0 0
    %1654 = vmatpush1.bf16.msra.mxu0 0
    %1655 = vmatprep.subr.bf16.mxu0 0
    %1656 = vmatpush1.bf16.msra.mxu0 0
    %1657 = vmatprep.subr.bf16.mxu0 0
    %1658 = vmatpush1.bf16.msra.mxu0 0
    %1659 = vmatprep.subr.bf16.mxu0 0
    %1660 = vmatpush1.bf16.msra.mxu0 0
    %1661 = vmatprep.mubr.bf16.mxu0 0
    %1662 = vmatmul.mubr.bf16.gmra.mrb[0].mxu0 %v1585
    %v1663 = vpop.f32.mrb[0].mxu0
    %v1664 = vadd.f32 0.0, %v1663
    %v1665 = vpop.f32.mrb[0].mxu0
    %v1666 = vadd.f32 0.0, %v1665
    %v1667 = vpop.f32.mrb[0].mxu0
    %v1668 = vadd.f32 0.0, %v1667
    %v1669 = vpop.f32.mrb[0].mxu0
    %v1670 = vadd.f32 0.0, %v1669
    %1671 = vdwg.mxu0
    %v1672 = vadd.f32 %v1575, %v1621
    %v1673 = vadd.f32 %v1576, %v1623
    %v1674 = vadd.f32 %v1577, %v1664
    %v1675 = vadd.f32 %v1578, %v1666
    %v1676 = vadd.f32 %v1579, %v1625
    %v1677 = vadd.f32 %v1580, %v1627
    %v1678 = vadd.f32 %v1581, %v1668
    %v1679 = vadd.f32 %v1582, %v1670
    %v1680 = vxor.u32 %v1672, 2147483648
    %v1681 = vxor.u32 %v1676, 2147483648
    %v1682 = vmul.f32 %v1680, 1.442695
    %v1683 = vpow.pop %v1682
    %v1684 = vmul.f32 %v1681, 1.442695
    %v1685 = vpow.pop %v1684
    %v1686 = vadd.f32 %v1683, 1.0
    %v1687 = vadd.f32 %v1685, 1.0
    %v1688 = vrcp.pop %v1686
    %v1689 = vmul.f32 1.0, %v1688
    %v1690 = vrcp.pop %v1687
    %v1691 = vmul.f32 1.0, %v1690
    %v1692 = vxor.u32 %v1673, 2147483648
    %v1693 = vxor.u32 %v1677, 2147483648
    %v1694 = vmul.f32 %v1692, 1.442695
    %v1695 = vpow.pop %v1694
    %v1696 = vmul.f32 %v1693, 1.442695
    %v1697 = vpow.pop %v1696
    %v1698 = vadd.f32 %v1695, 1.0
    %v1699 = vadd.f32 %v1697, 1.0
    %v1700 = vrcp.pop %v1698
    %v1701 = vmul.f32 1.0, %v1700
    %v1702 = vrcp.pop %v1699
    %v1703 = vmul.f32 1.0, %v1702
    %v1704 = vtanh.pop %v1674
    %v1705 = vtanh.pop %v1678
    %v1706 = vxor.u32 %v1675, 2147483648
    %v1707 = vxor.u32 %v1679, 2147483648
    %v1708 = vmul.f32 %v1706, 1.442695
    %v1709 = vpow.pop %v1708
    %v1710 = vmul.f32 %v1707, 1.442695
    %v1711 = vpow.pop %v1710
    %v1712 = vadd.f32 %v1709, 1.0
    %v1713 = vadd.f32 %v1711, 1.0
    %v1714 = vrcp.pop %v1712
    %v1715 = vmul.f32 1.0, %v1714
    %v1716 = vrcp.pop %v1713
    %v1717 = vmul.f32 1.0, %v1716
    %v1718 = vld [vmem:[#allocation3] sm:$0xff]
    %v1719 = vld [vmem:[#allocation3 + $0x8] sm:$0xff]
    %v1720 = vmul.f32 %v1701, %v1718
    %v1721 = vmul.f32 %v1703, %v1719
    %v1722 = vmul.f32 %v1689, %v1704
    %v1723 = vmul.f32 %v1691, %v1705
    %v1724 = vadd.f32 %v1720, %v1722
    %v1725 = vadd.f32 %v1721, %v1723
    %v1726 = vtanh.pop %v1724
    %v1727 = vtanh.pop %v1725
    %v1728 = vmul.f32 %v1715, %v1726
    %v1729 = vmul.f32 %v1717, %v1727
    %1730 = vst [vmem:[#allocation3] sm:$0xff] %v1724
    %1731 = vst [vmem:[#allocation3 + $0x8] sm:$0xff] %v1725
    %1732 = vst [vmem:[#allocation2] sm:$0xff] %v1728
    %1733 = vst [vmem:[#allocation2 + $0x8] sm:$0xff] %v1729
    %s1734 = scalar_lea.vmem [#allocation4], 128
    %1735 = vst [vmem:[%s1734] sm:$0xff] %v1728
    %1736 = vst [vmem:[%s1734 + $0x8] sm:$0xff] %v1729
    %v1737 = vld [vmem:[#allocation4] sm:$0xff]
    %v1738 = vld [vmem:[#allocation4 + $0x8] sm:$0xff]
    %v1739 = vld [vmem:[#allocation4 + $0x10] sm:$0xff]
    %v1740 = vld [vmem:[#allocation4 + $0x18] sm:$0xff]
    %v1741 = vld [vmem:[#allocation4 + $0x20] sm:$0xff]
    %v1742 = vld [vmem:[#allocation4 + $0x28] sm:$0xff]
    %v1743 = vld [vmem:[#allocation4 + $0x30] sm:$0xff]
    %v1744 = vld [vmem:[#allocation4 + $0x38] sm:$0xff]
    %v1745 = vld [vmem:[#allocation4 + $0x40] sm:$0xff]
    %v1746 = vld [vmem:[#allocation4 + $0x48] sm:$0xff]
    %v1747 = vld [vmem:[#allocation4 + $0x50] sm:$0xff]
    %v1748 = vld [vmem:[#allocation4 + $0x58] sm:$0xff]
    %v1749 = vld [vmem:[#allocation4 + $0x60] sm:$0xff]
    %v1750 = vld [vmem:[#allocation4 + $0x68] sm:$0xff]
    %v1751 = vld [vmem:[#allocation4 + $0x70] sm:$0xff]
    %v1752 = vld [vmem:[#allocation4 + $0x78] sm:$0xff]
    %v1753 = vld [vmem:[#allocation4 + $0x80] sm:$0xff]
    %v1754 = vld [vmem:[#allocation4 + $0x88] sm:$0xff]
    %v1755 = vpack.c.bf16 %v1738, %v1737
    %v1756 = vpack.c.bf16 %v1740, %v1739
    %v1757 = vpack.c.bf16 %v1742, %v1741
    %v1758 = vpack.c.bf16 %v1744, %v1743
    %v1759 = vpack.c.bf16 %v1746, %v1745
    %v1760 = vpack.c.bf16 %v1748, %v1747
    %v1761 = vpack.c.bf16 %v1750, %v1749
    %v1762 = vpack.c.bf16 %v1752, %v1751
    %v1763 = vpack.c.bf16 %v1754, %v1753
    %v1764 = vld [vmem:[#allocation10] sm:$0xff]
    %v1765 = vld [vmem:[#allocation10 + $0x8] sm:$0xff]
    %v1766 = vld [vmem:[#allocation10 + $0x10] sm:$0xff]
    %v1767 = vld [vmem:[#allocation10 + $0x18] sm:$0xff]
    %v1768 = vld [vmem:[#allocation10 + $0x20] sm:$0xff]
    %v1769 = vld [vmem:[#allocation10 + $0x28] sm:$0xff]
    %v1770 = vld [vmem:[#allocation10 + $0x30] sm:$0xff]
    %v1771 = vld [vmem:[#allocation10 + $0x38] sm:$0xff]
    %v1772 = vld [vmem:[#allocation10 + $0x40] sm:$0xff]
    %v1773 = vld [vmem:[#allocation10 + $0x48] sm:$0xff]
    %v1774 = vld [vmem:[#allocation10 + $0x50] sm:$0xff]
    %v1775 = vld [vmem:[#allocation10 + $0x58] sm:$0xff]
    %v1776 = vld [vmem:[#allocation10 + $0x60] sm:$0xff]
    %v1777 = vld [vmem:[#allocation10 + $0x68] sm:$0xff]
    %v1778 = vld [vmem:[#allocation10 + $0x70] sm:$0xff]
    %v1779 = vld [vmem:[#allocation10 + $0x78] sm:$0xff]
    %v1780 = vld [vmem:[#allocation10 + $0x80] sm:$0xff]
    %v1781 = vld [vmem:[#allocation10 + $0x88] sm:$0xff]
    %v1782 = vld [vmem:[#allocation10 + $0x90] sm:$0xff]
    %v1783 = vld [vmem:[#allocation10 + $0x98] sm:$0xff]
    %v1784 = vld [vmem:[#allocation10 + $0xa0] sm:$0xff]
    %v1785 = vld [vmem:[#allocation10 + $0xa8] sm:$0xff]
    %v1786 = vld [vmem:[#allocation10 + $0xb0] sm:$0xff]
    %v1787 = vld [vmem:[#allocation10 + $0xb8] sm:$0xff]
    %v1788 = vld [vmem:[#allocation10 + $0xc0] sm:$0xff]
    %v1789 = vld [vmem:[#allocation10 + $0xc8] sm:$0xff]
    %v1790 = vld [vmem:[#allocation10 + $0xd0] sm:$0xff]
    %v1791 = vld [vmem:[#allocation10 + $0xd8] sm:$0xff]
    %v1792 = vld [vmem:[#allocation10 + $0xe0] sm:$0xff]
    %v1793 = vld [vmem:[#allocation10 + $0xe8] sm:$0xff]
    %v1794 = vld [vmem:[#allocation10 + $0xf0] sm:$0xff]
    %v1795 = vld [vmem:[#allocation10 + $0xf8] sm:$0xff]
    %v1796 = vld [vmem:[#allocation11] sm:$0xf]
    %v1798 = vlaneseq
    %v1799 = vshrl.u32 %v1798, 7
    %v1800 = vsub.s32 0, %v1799
    %v1801 = vrot.slane %v1796, %v1800
    %v1802 = vlaneseq
    %v1803 = vshrl.u32 %v1802, 7
    %v1804 = vsub.s32 1, %v1803
    %v1805 = vrot.slane %v1796, %v1804
    %v1806 = vlaneseq
    %v1807 = vshrl.u32 %v1806, 7
    %v1808 = vsub.s32 2, %v1807
    %v1809 = vrot.slane %v1796, %v1808
    %v1810 = vlaneseq
    %v1811 = vshrl.u32 %v1810, 7
    %v1812 = vsub.s32 3, %v1811
    %v1813 = vrot.slane %v1796, %v1812
    %v1850 = vunpack.c.l.b16 %v1764
    %v1851 = vunpack.c.h.b16 %v1764
    %v1852 = vunpack.c.l.b16 %v1765
    %v1853 = vunpack.c.h.b16 %v1765
    %v1854 = vunpack.c.l.b16 %v1766
    %v1855 = vunpack.c.h.b16 %v1766
    %v1856 = vunpack.c.l.b16 %v1767
    %v1857 = vunpack.c.h.b16 %v1767
    %v1858 = vunpack.c.l.b16 %v1768
    %v1859 = vunpack.c.h.b16 %v1768
    %v1860 = vunpack.c.l.b16 %v1769
    %v1861 = vunpack.c.h.b16 %v1769
    %v1862 = vunpack.c.l.b16 %v1770
    %v1863 = vunpack.c.h.b16 %v1770
    %v1864 = vunpack.c.l.b16 %v1771
    %v1865 = vunpack.c.h.b16 %v1771
    %v1866 = vunpack.c.l.b16 %v1772
    %v1867 = vunpack.c.h.b16 %v1772
    %v1868 = vunpack.c.l.b16 %v1773
    %v1869 = vunpack.c.h.b16 %v1773
    %v1870 = vunpack.c.l.b16 %v1774
    %v1871 = vunpack.c.h.b16 %v1774
    %v1872 = vunpack.c.l.b16 %v1775
    %v1873 = vunpack.c.h.b16 %v1775
    %v1874 = vunpack.c.l.b16 %v1776
    %v1875 = vunpack.c.h.b16 %v1776
    %v1876 = vunpack.c.l.b16 %v1777
    %v1877 = vunpack.c.h.b16 %v1777
    %v1878 = vunpack.c.l.b16 %v1778
    %v1879 = vunpack.c.h.b16 %v1778
    %v1880 = vunpack.c.l.b16 %v1779
    %v1881 = vunpack.c.h.b16 %v1779
    %v1882 = vunpack.c.l.b16 %v1780
    %v1883 = vunpack.c.h.b16 %v1780
    %v1884 = vunpack.c.l.b16 %v1781
    %v1885 = vunpack.c.h.b16 %v1781
    %v1886 = vunpack.c.l.b16 %v1782
    %v1887 = vunpack.c.h.b16 %v1782
    %v1888 = vunpack.c.l.b16 %v1783
    %v1889 = vunpack.c.h.b16 %v1783
    %v1890 = vunpack.c.l.b16 %v1784
    %v1891 = vunpack.c.h.b16 %v1784
    %v1892 = vunpack.c.l.b16 %v1785
    %v1893 = vunpack.c.h.b16 %v1785
    %v1894 = vunpack.c.l.b16 %v1786
    %v1895 = vunpack.c.h.b16 %v1786
    %v1896 = vunpack.c.l.b16 %v1787
    %v1897 = vunpack.c.h.b16 %v1787
    %v1898 = vunpack.c.l.b16 %v1788
    %v1899 = vunpack.c.h.b16 %v1788
    %v1900 = vunpack.c.l.b16 %v1789
    %v1901 = vunpack.c.h.b16 %v1789
    %v1902 = vunpack.c.l.b16 %v1790
    %v1903 = vunpack.c.h.b16 %v1790
    %v1904 = vunpack.c.l.b16 %v1791
    %v1905 = vunpack.c.h.b16 %v1791
    %v1906 = vunpack.c.l.b16 %v1792
    %v1907 = vunpack.c.h.b16 %v1792
    %v1908 = vunpack.c.l.b16 %v1793
    %v1909 = vunpack.c.h.b16 %v1793
    %v1910 = vunpack.c.l.b16 %v1794
    %v1911 = vunpack.c.h.b16 %v1794
    %v1912 = vunpack.c.l.b16 %v1795
    %v1913 = vunpack.c.h.b16 %v1795
    %v1914 = vpack.c.b16 %v1854, %v1850
    %v1915 = vpack.c.b16 %v1855, %v1851
    %v1916 = vpack.c.b16 %v1856, %v1852
    %v1917 = vpack.c.b16 %v1857, %v1853
    %v1918 = vpack.c.b16 %v1862, %v1858
    %v1919 = vpack.c.b16 %v1863, %v1859
    %v1920 = vpack.c.b16 %v1864, %v1860
    %v1921 = vpack.c.b16 %v1865, %v1861
    %v1922 = vpack.c.b16 %v1870, %v1866
    %v1923 = vpack.c.b16 %v1871, %v1867
    %v1924 = vpack.c.b16 %v1872, %v1868
    %v1925 = vpack.c.b16 %v1873, %v1869
    %v1926 = vpack.c.b16 %v1878, %v1874
    %v1927 = vpack.c.b16 %v1879, %v1875
    %v1928 = vpack.c.b16 %v1880, %v1876
    %v1929 = vpack.c.b16 %v1881, %v1877
    %v1930 = vpack.c.b16 %v1886, %v1882
    %v1931 = vpack.c.b16 %v1887, %v1883
    %v1932 = vpack.c.b16 %v1888, %v1884
    %v1933 = vpack.c.b16 %v1889, %v1885
    %v1934 = vpack.c.b16 %v1894, %v1890
    %v1935 = vpack.c.b16 %v1895, %v1891
    %v1936 = vpack.c.b16 %v1896, %v1892
    %v1937 = vpack.c.b16 %v1897, %v1893
    %v1938 = vpack.c.b16 %v1902, %v1898
    %v1939 = vpack.c.b16 %v1903, %v1899
    %v1940 = vpack.c.b16 %v1904, %v1900
    %v1941 = vpack.c.b16 %v1905, %v1901
    %v1942 = vpack.c.b16 %v1910, %v1906
    %v1943 = vpack.c.b16 %v1911, %v1907
    %v1944 = vpack.c.b16 %v1912, %v1908
    %v1945 = vpack.c.b16 %v1913, %v1909
    %1978 = vmatprep.subr.bf16.mxu0 %v1915
    %1979 = vmatpush1.bf16.msra.mxu0 %v1914
    %1980 = vmatprep.subr.bf16.mxu0 %v1919
    %1981 = vmatpush1.bf16.msra.mxu0 %v1918
    %1982 = vmatprep.subr.bf16.mxu0 %v1923
    %1983 = vmatpush1.bf16.msra.mxu0 %v1922
    %1984 = vmatprep.subr.bf16.mxu0 %v1927
    %1985 = vmatpush1.bf16.msra.mxu0 %v1926
    %1986 = vmatprep.subr.bf16.mxu0 %v1931
    %1987 = vmatpush1.bf16.msra.mxu0 %v1930
    %1988 = vmatprep.subr.bf16.mxu0 %v1935
    %1989 = vmatpush1.bf16.msra.mxu0 %v1934
    %1990 = vmatprep.subr.bf16.mxu0 %v1939
    %1991 = vmatpush1.bf16.msra.mxu0 %v1938
    %1992 = vmatprep.subr.bf16.mxu0 %v1943
    %1993 = vmatpush1.bf16.msra.mxu0 %v1942
    %1994 = vmatprep.subr.bf16.mxu0 0
    %1995 = vmatpush1.bf16.msra.mxu0 0
    %1996 = vmatprep.subr.bf16.mxu0 0
    %1997 = vmatpush1.bf16.msra.mxu0 0
    %1998 = vmatprep.subr.bf16.mxu0 0
    %1999 = vmatpush1.bf16.msra.mxu0 0
    %2000 = vmatprep.subr.bf16.mxu0 0
    %2001 = vmatpush1.bf16.msra.mxu0 0
    %2002 = vmatprep.subr.bf16.mxu0 0
    %2003 = vmatpush1.bf16.msra.mxu0 0
    %2004 = vmatprep.subr.bf16.mxu0 0
    %2005 = vmatpush1.bf16.msra.mxu0 0
    %2006 = vmatprep.subr.bf16.mxu0 0
    %2007 = vmatpush1.bf16.msra.mxu0 0
    %2008 = vmatprep.subr.bf16.mxu0 0
    %2009 = vmatpush1.bf16.msra.mxu0 0
    %2010 = vmatprep.mubr.bf16.mxu0 0
    %2011 = vmatmul.mubr.bf16.gmra.mrb[0].mxu0 %v1755
    %v2012 = vpop.f32.mrb[0].mxu0
    %v2013 = vadd.f32 %v1801, %v2012
    %v2014 = vpop.f32.mrb[0].mxu0
    %v2015 = vadd.f32 %v1805, %v2014
    %v2016 = vpop.f32.mrb[0].mxu0
    %v2017 = vadd.f32 %v1801, %v2016
    %v2018 = vpop.f32.mrb[0].mxu0
    %v2019 = vadd.f32 %v1805, %v2018
    %2020 = vmatprep.mubr.bf16.mxu0 0
    %2021 = vmatmul.mubr.bf16.gmra.mrb[0].mxu0 %v1756
    %v2022 = vpop.f32.mrb[0].mxu0
    %v2023 = vadd.f32 %v1801, %v2022
    %v2024 = vpop.f32.mrb[0].mxu0
    %v2025 = vadd.f32 %v1805, %v2024
    %v2026 = vpop.f32.mrb[0].mxu0
    %v2027 = vadd.f32 %v1801, %v2026
    %v2028 = vpop.f32.mrb[0].mxu0
    %v2029 = vadd.f32 %v1805, %v2028
    %2030 = vmatprep.mubr.bf16.mxu0 0
    %2031 = vmatmul.mubr.bf16.gmra.mrb[0].mxu0 %v1757
    %v2032 = vpop.f32.mrb[0].mxu0
    %v2033 = vadd.f32 %v1801, %v2032
    %v2034 = vpop.f32.mrb[0].mxu0
    %v2035 = vadd.f32 %v1805, %v2034
    %v2036 = vpop.f32.mrb[0].mxu0
    %v2037 = vadd.f32 %v1801, %v2036
    %v2038 = vpop.f32.mrb[0].mxu0
    %v2039 = vadd.f32 %v1805, %v2038
    %2040 = vmatprep.mubr.bf16.mxu0 0
    %2041 = vmatmul.mubr.bf16.gmra.mrb[0].mxu0 %v1758
    %v2042 = vpop.f32.mrb[0].mxu0
    %v2043 = vadd.f32 %v1801, %v2042
    %v2044 = vpop.f32.mrb[0].mxu0
    %v2045 = vadd.f32 %v1805, %v2044
    %v2046 = vpop.f32.mrb[0].mxu0
    %v2047 = vadd.f32 %v1801, %v2046
    %v2048 = vpop.f32.mrb[0].mxu0
    %v2049 = vadd.f32 %v1805, %v2048
    %2050 = vmatprep.mubr.bf16.mxu0 0
    %2051 = vmatmul.mubr.bf16.gmra.mrb[0].mxu0 %v1759
    %v2052 = vpop.f32.mrb[0].mxu0
    %v2053 = vadd.f32 %v1801, %v2052
    %v2054 = vpop.f32.mrb[0].mxu0
    %v2055 = vadd.f32 %v1805, %v2054
    %v2056 = vpop.f32.mrb[0].mxu0
    %v2057 = vadd.f32 %v1801, %v2056
    %v2058 = vpop.f32.mrb[0].mxu0
    %v2059 = vadd.f32 %v1805, %v2058
    %2060 = vmatprep.mubr.bf16.mxu0 0
    %2061 = vmatmul.mubr.bf16.gmra.mrb[0].mxu0 %v1760
    %v2062 = vpop.f32.mrb[0].mxu0
    %v2063 = vadd.f32 %v1801, %v2062
    %v2064 = vpop.f32.mrb[0].mxu0
    %v2065 = vadd.f32 %v1805, %v2064
    %v2066 = vpop.f32.mrb[0].mxu0
    %v2067 = vadd.f32 %v1801, %v2066
    %v2068 = vpop.f32.mrb[0].mxu0
    %v2069 = vadd.f32 %v1805, %v2068
    %2070 = vmatprep.mubr.bf16.mxu0 0
    %2071 = vmatmul.mubr.bf16.gmra.mrb[0].mxu0 %v1761
    %v2072 = vpop.f32.mrb[0].mxu0
    %v2073 = vadd.f32 %v1801, %v2072
    %v2074 = vpop.f32.mrb[0].mxu0
    %v2075 = vadd.f32 %v1805, %v2074
    %v2076 = vpop.f32.mrb[0].mxu0
    %v2077 = vadd.f32 %v1801, %v2076
    %v2078 = vpop.f32.mrb[0].mxu0
    %v2079 = vadd.f32 %v1805, %v2078
    %2080 = vmatprep.mubr.bf16.mxu0 0
    %2081 = vmatmul.mubr.bf16.gmra.mrb[0].mxu0 %v1762
    %v2082 = vpop.f32.mrb[0].mxu0
    %v2083 = vadd.f32 %v1801, %v2082
    %v2084 = vpop.f32.mrb[0].mxu0
    %v2085 = vadd.f32 %v1805, %v2084
    %v2086 = vpop.f32.mrb[0].mxu0
    %v2087 = vadd.f32 %v1801, %v2086
    %v2088 = vpop.f32.mrb[0].mxu0
    %v2089 = vadd.f32 %v1805, %v2088
    %2090 = vmatprep.mubr.bf16.mxu0 0
    %2091 = vmatmul.mubr.bf16.gmra.mrb[0].mxu0 %v1763
    %v2092 = vpop.f32.mrb[0].mxu0
    %v2093 = vadd.f32 %v1801, %v2092
    %v2094 = vpop.f32.mrb[0].mxu0
    %v2095 = vadd.f32 %v1805, %v2094
    %v2096 = vpop.f32.mrb[0].mxu0
    %v2097 = vadd.f32 %v1801, %v2096
    %v2098 = vpop.f32.mrb[0].mxu0
    %v2099 = vadd.f32 %v1805, %v2098
    %2100 = vdwg.mxu0
    %2101 = vmatprep.subr.bf16.mxu0 %v1917
    %2102 = vmatpush1.bf16.msra.mxu0 %v1916
    %2103 = vmatprep.subr.bf16.mxu0 %v1921
    %2104 = vmatpush1.bf16.msra.mxu0 %v1920
    %2105 = vmatprep.subr.bf16.mxu0 %v1925
    %2106 = vmatpush1.bf16.msra.mxu0 %v1924
    %2107 = vmatprep.subr.bf16.mxu0 %v1929
    %2108 = vmatpush1.bf16.msra.mxu0 %v1928
    %2109 = vmatprep.subr.bf16.mxu0 %v1933
    %2110 = vmatpush1.bf16.msra.mxu0 %v1932
    %2111 = vmatprep.subr.bf16.mxu0 %v1937
    %2112 = vmatpush1.bf16.msra.mxu0 %v1936
    %2113 = vmatprep.subr.bf16.mxu0 %v1941
    %2114 = vmatpush1.bf16.msra.mxu0 %v1940
    %2115 = vmatprep.subr.bf16.mxu0 %v1945
    %2116 = vmatpush1.bf16.msra.mxu0 %v1944
    %2117 = vmatprep.subr.bf16.mxu0 0
    %2118 = vmatpush1.bf16.msra.mxu0 0
    %2119 = vmatprep.subr.bf16.mxu0 0
    %2120 = vmatpush1.bf16.msra.mxu0 0
    %2121 = vmatprep.subr.bf16.mxu0 0
    %2122 = vmatpush1.bf16.msra.mxu0 0
    %2123 = vmatprep.subr.bf16.mxu0 0
    %2124 = vmatpush1.bf16.msra.mxu0 0
    %2125 = vmatprep.subr.bf16.mxu0 0
    %2126 = vmatpush1.bf16.msra.mxu0 0
    %2127 = vmatprep.subr.bf16.mxu0 0
    %2128 = vmatpush1.bf16.msra.mxu0 0
    %2129 = vmatprep.subr.bf16.mxu0 0
    %2130 = vmatpush1.bf16.msra.mxu0 0
    %2131 = vmatprep.subr.bf16.mxu0 0
    %2132 = vmatpush1.bf16.msra.mxu0 0
    %2133 = vmatprep.mubr.bf16.mxu0 0
    %2134 = vmatmul.mubr.bf16.gmra.mrb[0].mxu0 %v1755
    %v2135 = vpop.f32.mrb[0].mxu0
    %v2136 = vadd.f32 %v1809, %v2135
    %v2137 = vpop.f32.mrb[0].mxu0
    %v2138 = vadd.f32 %v1813, %v2137
    %v2139 = vpop.f32.mrb[0].mxu0
    %v2140 = vadd.f32 %v1809, %v2139
    %v2141 = vpop.f32.mrb[0].mxu0
    %v2142 = vadd.f32 %v1813, %v2141
    %2143 = vmatprep.mubr.bf16.mxu0 0
    %2144 = vmatmul.mubr.bf16.gmra.mrb[0].mxu0 %v1756
    %v2145 = vpop.f32.mrb[0].mxu0
    %v2146 = vadd.f32 %v1809, %v2145
    %v2147 = vpop.f32.mrb[0].mxu0
    %v2148 = vadd.f32 %v1813, %v2147
    %v2149 = vpop.f32.mrb[0].mxu0
    %v2150 = vadd.f32 %v1809, %v2149
    %v2151 = vpop.f32.mrb[0].mxu0
    %v2152 = vadd.f32 %v1813, %v2151
    %2153 = vmatprep.mubr.bf16.mxu0 0
    %2154 = vmatmul.mubr.bf16.gmra.mrb[0].mxu0 %v1757
    %v2155 = vpop.f32.mrb[0].mxu0
    %v2156 = vadd.f32 %v1809, %v2155
    %v2157 = vpop.f32.mrb[0].mxu0
    %v2158 = vadd.f32 %v1813, %v2157
    %v2159 = vpop.f32.mrb[0].mxu0
    %v2160 = vadd.f32 %v1809, %v2159
    %v2161 = vpop.f32.mrb[0].mxu0
    %v2162 = vadd.f32 %v1813, %v2161
    %2163 = vmatprep.mubr.bf16.mxu0 0
    %2164 = vmatmul.mubr.bf16.gmra.mrb[0].mxu0 %v1758
    %v2165 = vpop.f32.mrb[0].mxu0
    %v2166 = vadd.f32 %v1809, %v2165
    %v2167 = vpop.f32.mrb[0].mxu0
    %v2168 = vadd.f32 %v1813, %v2167
    %v2169 = vpop.f32.mrb[0].mxu0
    %v2170 = vadd.f32 %v1809, %v2169
    %v2171 = vpop.f32.mrb[0].mxu0
    %v2172 = vadd.f32 %v1813, %v2171
    %2173 = vmatprep.mubr.bf16.mxu0 0
    %2174 = vmatmul.mubr.bf16.gmra.mrb[0].mxu0 %v1759
    %v2175 = vpop.f32.mrb[0].mxu0
    %v2176 = vadd.f32 %v1809, %v2175
    %v2177 = vpop.f32.mrb[0].mxu0
    %v2178 = vadd.f32 %v1813, %v2177
    %v2179 = vpop.f32.mrb[0].mxu0
    %v2180 = vadd.f32 %v1809, %v2179
    %v2181 = vpop.f32.mrb[0].mxu0
    %v2182 = vadd.f32 %v1813, %v2181
    %2183 = vmatprep.mubr.bf16.mxu0 0
    %2184 = vmatmul.mubr.bf16.gmra.mrb[0].mxu0 %v1760
    %v2185 = vpop.f32.mrb[0].mxu0
    %v2186 = vadd.f32 %v1809, %v2185
    %v2187 = vpop.f32.mrb[0].mxu0
    %v2188 = vadd.f32 %v1813, %v2187
    %v2189 = vpop.f32.mrb[0].mxu0
    %v2190 = vadd.f32 %v1809, %v2189
    %v2191 = vpop.f32.mrb[0].mxu0
    %v2192 = vadd.f32 %v1813, %v2191
    %2193 = vmatprep.mubr.bf16.mxu0 0
    %2194 = vmatmul.mubr.bf16.gmra.mrb[0].mxu0 %v1761
    %v2195 = vpop.f32.mrb[0].mxu0
    %v2196 = vadd.f32 %v1809, %v2195
    %v2197 = vpop.f32.mrb[0].mxu0
    %v2198 = vadd.f32 %v1813, %v2197
    %v2199 = vpop.f32.mrb[0].mxu0
    %v2200 = vadd.f32 %v1809, %v2199
    %v2201 = vpop.f32.mrb[0].mxu0
    %v2202 = vadd.f32 %v1813, %v2201
    %2203 = vmatprep.mubr.bf16.mxu0 0
    %2204 = vmatmul.mubr.bf16.gmra.mrb[0].mxu0 %v1762
    %v2205 = vpop.f32.mrb[0].mxu0
    %v2206 = vadd.f32 %v1809, %v2205
    %v2207 = vpop.f32.mrb[0].mxu0
    %v2208 = vadd.f32 %v1813, %v2207
    %v2209 = vpop.f32.mrb[0].mxu0
    %v2210 = vadd.f32 %v1809, %v2209
    %v2211 = vpop.f32.mrb[0].mxu0
    %v2212 = vadd.f32 %v1813, %v2211
    %2213 = vmatprep.mubr.bf16.mxu0 0
    %2214 = vmatmul.mubr.bf16.gmra.mrb[0].mxu0 %v1763
    %v2215 = vpop.f32.mrb[0].mxu0
    %v2216 = vadd.f32 %v1809, %v2215
    %v2217 = vpop.f32.mrb[0].mxu0
    %v2218 = vadd.f32 %v1813, %v2217
    %v2219 = vpop.f32.mrb[0].mxu0
    %v2220 = vadd.f32 %v1809, %v2219
    %v2221 = vpop.f32.mrb[0].mxu0
    %v2222 = vadd.f32 %v1813, %v2221
    %2223 = vdwg.mxu0
    %2224 = vst [vmem:[#allocation13] sm:$0xff] %v2013
    %2225 = vst [vmem:[#allocation13 + $0x8] sm:$0xff] %v2015
    %2226 = vst [vmem:[#allocation13 + $0x10] sm:$0xff] %v2136
    %2227 = vst [vmem:[#allocation13 + $0x18] sm:$0xff] %v2138
    %2228 = vst [vmem:[#allocation13 + $0x20] sm:$0xff] %v2017
    %2229 = vst [vmem:[#allocation13 + $0x28] sm:$0xff] %v2019
    %2230 = vst [vmem:[#allocation13 + $0x30] sm:$0xff] %v2140
    %2231 = vst [vmem:[#allocation13 + $0x38] sm:$0xff] %v2142
    %2232 = vst [vmem:[#allocation13 + $0x40] sm:$0xff] %v2023
    %2233 = vst [vmem:[#allocation13 + $0x48] sm:$0xff] %v2025
    %2234 = vst [vmem:[#allocation13 + $0x50] sm:$0xff] %v2146
    %2235 = vst [vmem:[#allocation13 + $0x58] sm:$0xff] %v2148
    %2236 = vst [vmem:[#allocation13 + $0x60] sm:$0xff] %v2027
    %2237 = vst [vmem:[#allocation13 + $0x68] sm:$0xff] %v2029
    %2238 = vst [vmem:[#allocation13 + $0x70] sm:$0xff] %v2150
    %2239 = vst [vmem:[#allocation13 + $0x78] sm:$0xff] %v2152
    %2240 = vst [vmem:[#allocation13 + $0x80] sm:$0xff] %v2033
    %2241 = vst [vmem:[#allocation13 + $0x88] sm:$0xff] %v2035
    %2242 = vst [vmem:[#allocation13 + $0x90] sm:$0xff] %v2156
    %2243 = vst [vmem:[#allocation13 + $0x98] sm:$0xff] %v2158
    %2244 = vst [vmem:[#allocation13 + $0xa0] sm:$0xff] %v2037
    %2245 = vst [vmem:[#allocation13 + $0xa8] sm:$0xff] %v2039
    %2246 = vst [vmem:[#allocation13 + $0xb0] sm:$0xff] %v2160
    %2247 = vst [vmem:[#allocation13 + $0xb8] sm:$0xff] %v2162
    %2248 = vst [vmem:[#allocation13 + $0xc0] sm:$0xff] %v2043
    %2249 = vst [vmem:[#allocation13 + $0xc8] sm:$0xff] %v2045
    %2250 = vst [vmem:[#allocation13 + $0xd0] sm:$0xff] %v2166
    %2251 = vst [vmem:[#allocation13 + $0xd8] sm:$0xff] %v2168
    %2252 = vst [vmem:[#allocation13 + $0xe0] sm:$0xff] %v2047
    %2253 = vst [vmem:[#allocation13 + $0xe8] sm:$0xff] %v2049
    %2254 = vst [vmem:[#allocation13 + $0xf0] sm:$0xff] %v2170
    %2255 = vst [vmem:[#allocation13 + $0xf8] sm:$0xff] %v2172
    %2256 = vst [vmem:[#allocation13 + $0x100] sm:$0xff] %v2053
    %2257 = vst [vmem:[#allocation13 + $0x108] sm:$0xff] %v2055
    %2258 = vst [vmem:[#allocation13 + $0x110] sm:$0xff] %v2176
    %2259 = vst [vmem:[#allocation13 + $0x118] sm:$0xff] %v2178
    %2260 = vst [vmem:[#allocation13 + $0x120] sm:$0xff] %v2057
    %2261 = vst [vmem:[#allocation13 + $0x128] sm:$0xff] %v2059
    %2262 = vst [vmem:[#allocation13 + $0x130] sm:$0xff] %v2180
    %2263 = vst [vmem:[#allocation13 + $0x138] sm:$0xff] %v2182
    %2264 = vst [vmem:[#allocation13 + $0x140] sm:$0xff] %v2063
    %2265 = vst [vmem:[#allocation13 + $0x148] sm:$0xff] %v2065
    %2266 = vst [vmem:[#allocation13 + $0x150] sm:$0xff] %v2186
    %2267 = vst [vmem:[#allocation13 + $0x158] sm:$0xff] %v2188
    %2268 = vst [vmem:[#allocation13 + $0x160] sm:$0xff] %v2067
    %2269 = vst [vmem:[#allocation13 + $0x168] sm:$0xff] %v2069
    %2270 = vst [vmem:[#allocation13 + $0x170] sm:$0xff] %v2190
    %2271 = vst [vmem:[#allocation13 + $0x178] sm:$0xff] %v2192
    %2272 = vst [vmem:[#allocation13 + $0x180] sm:$0xff] %v2073
    %2273 = vst [vmem:[#allocation13 + $0x188] sm:$0xff] %v2075
    %2274 = vst [vmem:[#allocation13 + $0x190] sm:$0xff] %v2196
    %2275 = vst [vmem:[#allocation13 + $0x198] sm:$0xff] %v2198
    %2276 = vst [vmem:[#allocation13 + $0x1a0] sm:$0xff] %v2077
    %2277 = vst [vmem:[#allocation13 + $0x1a8] sm:$0xff] %v2079
    %2278 = vst [vmem:[#allocation13 + $0x1b0] sm:$0xff] %v2200
    %2279 = vst [vmem:[#allocation13 + $0x1b8] sm:$0xff] %v2202
    %2280 = vst [vmem:[#allocation13 + $0x1c0] sm:$0xff] %v2083
    %2281 = vst [vmem:[#allocation13 + $0x1c8] sm:$0xff] %v2085
    %2282 = vst [vmem:[#allocation13 + $0x1d0] sm:$0xff] %v2206
    %2283 = vst [vmem:[#allocation13 + $0x1d8] sm:$0xff] %v2208
    %2284 = vst [vmem:[#allocation13 + $0x1e0] sm:$0xff] %v2087
    %2285 = vst [vmem:[#allocation13 + $0x1e8] sm:$0xff] %v2089
    %2286 = vst [vmem:[#allocation13 + $0x1f0] sm:$0xff] %v2210
    %2287 = vst [vmem:[#allocation13 + $0x1f8] sm:$0xff] %v2212
    %2288 = vst [vmem:[#allocation13 + $0x200] sm:$0xff] %v2093
    %2289 = vst [vmem:[#allocation13 + $0x208] sm:$0xff] %v2095
    %2290 = vst [vmem:[#allocation13 + $0x210] sm:$0xff] %v2216
    %2291 = vst [vmem:[#allocation13 + $0x218] sm:$0xff] %v2218
    %2292 = vst [vmem:[#allocation13 + $0x220] sm:$0xff] %v2097
    %2293 = vst [vmem:[#allocation13 + $0x228] sm:$0xff] %v2099
    %2294 = vst [vmem:[#allocation13 + $0x230] sm:$0xff] %v2220
    %2295 = vst [vmem:[#allocation13 + $0x238] sm:$0xff] %v2222
    // Predicated region
    $region38: #{decoder_forward.5} parent=1 // pred_check
      _
    $region39: #{decoder_forward.5} parent=1 // pred_check_branch
      %2297 = sbr.rel (0) target = $region41
    $region40: #{decoder_forward.5} parent=1 // pred_region
      %s2299 = ssub.s32 9216, 9216
      %2300 = vsyncadd [#allocation7], %s2299
      %s2301 = sshll.u32 [#allocation13], 4
      %s2302 = int_to_ptr.vmem [resolvable:$true] %s2301
      %2307 = dma.vmem_to_hbm [thread:$0]  %s2302, 9216, %s4, [#allocation7], 512, 512, 32
    $region41: #{decoder_forward.5} parent=1 // pred_fallthru
      _
    // Predicated region
    $region42: #{decoder_forward.5} parent=1 // pred_check
      _
    $region43: #{decoder_forward.5} parent=1 // pred_check_branch
      %2309 = sbr.rel (0) target = $region45
    $region44: #{decoder_forward.5} parent=1 // pred_region
      %2310 = dma.done [#allocation7], 9216
    $region45: #{decoder_forward.5} parent=1 // pred_fallthru
      _
    %2311 = vsyncpa [#allocation6], 1
    %2312 = vsyncpa [#allocation9], 1
    %2313 = vsyncpa [#allocation12], 1
    %2314 = vsyncpa [#allocation7], 1

</llo_original>
